<compile_context>
chip_gen: v6e
topology: v6e:2x2x1
jax: 0.10.0
libtpu: 0.0.40
codegen_flags: <defaults>
</compile_context>

<pallas_src>
import functools
import math

import jax
import jax.numpy as jnp
from jax.experimental import pallas as pl
from jax.experimental.pallas import tpu as pltpu


def _gelu_tanh(x):
    c = math.sqrt(2.0 / math.pi)
    return 0.5 * x * (1.0 + jnp.tanh(c * (x + 0.044715 * x * x * x)))


def _layernorm(x, w, b, eps=1e-5):
    mu = jnp.mean(x, axis=-1, keepdims=True)
    xc = x - mu
    var = jnp.mean(xc * xc, axis=-1, keepdims=True)
    return xc * jax.lax.rsqrt(var + eps) * w + b


def block_kernel(x_ref,
                 ln1_w_ref, ln1_b_ref,
                 wq_ref, bq_ref, wk_ref, bk_ref, wv_ref, bv_ref,
                 w_ap_ref, b_ap_ref,
                 ln2_w_ref, ln2_b_ref,
                 w_fc_ref, b_fc_ref,
                 w_mp_ref, b_mp_ref,
                 o_ref,
                 q_s, k_cache, v_cache, att_s, m_s, l_s, acc_s,
                 *, n_head):
    f32 = jnp.float32
    qi = pl.program_id(1)              # sequence-tile index (runs sequentially)
    x = x_ref[0]                       # (TQ, C) f32 residual-stream tile
    TQ, C = x.shape
    hd = C // n_head
    scale = 1.0 / math.sqrt(hd)
    cdt = wq_ref.dtype                 # matmul compute dtype (f32 or bf16)

    def proj(h, w_ref, b_ref):         # full-width MXU matmul, f32 accumulation
        return jnp.dot(h.astype(cdt), w_ref[...],
                       preferred_element_type=f32) + b_ref[...]

    # ---- QKV projection for this tile; K/V cached for later q-tiles ----
    h1 = _layernorm(x, ln1_w_ref[...], ln1_b_ref[...])
    q_full = proj(h1, wq_ref, bq_ref) * scale          # (TQ, C) f32
    k_full = proj(h1, wk_ref, bk_ref)
    v_full = proj(h1, wv_ref, bv_ref)
    for h in range(n_head):            # once per tile (NOT per kv step)
        sl = slice(h * hd, (h + 1) * hd)
        q_s[h] = q_full[:, sl].astype(cdt)
        k_cache[qi, h] = k_full[:, sl].astype(cdt)
        v_cache[qi, h] = v_full[:, sl].astype(cdt)

    # ---- flash attention over the causal prefix of KV tiles (0..qi) ----
    m_s[...] = jnp.full_like(m_s, -1e30)
    l_s[...] = jnp.zeros_like(l_s)
    acc_s[...] = jnp.zeros_like(acc_s)

    row = jax.lax.broadcasted_iota(jnp.int32, (TQ, TQ), 0)
    col = jax.lax.broadcasted_iota(jnp.int32, (TQ, TQ), 1)
    diag_mask = row >= col             # only used on the diagonal tile

    @pl.loop(0, qi + 1)                # tiles strictly above the diagonal are skipped
    def _(kv):
        q_t = q_s[...]                 # (H, TQ, hd)
        k_t = k_cache[kv]              # (H, TQ, hd)
        v_t = v_cache[kv]
        s = jnp.einsum('hqd,hkd->hqk', q_t, k_t,
                       preferred_element_type=f32)     # (H, TQ, TQ)
        keep = jnp.logical_or(kv < qi, diag_mask)      # mask only the diagonal tile
        s = jnp.where(keep, s, -1e30)                  # finite fill -> no NaNs
        m_new = jnp.maximum(m_s[...], jnp.max(s, axis=-1, keepdims=True))
        alpha = jnp.exp(m_s[...] - m_new)
        p = jnp.exp(s - m_new)
        l_s[...] = alpha * l_s[...] + jnp.sum(p, axis=-1, keepdims=True)
        acc_s[...] = alpha * acc_s[...] + jnp.einsum(
            'hqk,hkd->hqd', p.astype(cdt), v_t, preferred_element_type=f32)
        m_s[...] = m_new

    att = acc_s[...] * pl.reciprocal(l_s[...], approx=True)   # (H, TQ, hd) f32
    for h in range(n_head):            # heads -> lane-dense (TQ, C) scratch (no concat)
        att_s[:, h * hd:(h + 1) * hd] = att[h].astype(att_s.dtype)

    y = proj(att_s[...], w_ap_ref, b_ap_ref)
    x1 = x + y                         # residual 1 (f32)

    # ---- MLP branch: x + c_proj(gelu(c_fc(ln_2(x)))) ----
    h2 = _layernorm(x1, ln2_w_ref[...], ln2_b_ref[...])
    h2 = proj(h2, w_fc_ref, b_fc_ref)
    h2 = _gelu_tanh(h2)
    h2 = proj(h2, w_mp_ref, b_mp_ref)
    o_ref[0] = (x1 + h2).astype(o_ref.dtype)


def gpt2_block(x, params, n_head, *, tq=128, matmul_dtype=jnp.float32):
    B, T, C = x.shape
    assert C % n_head == 0
    hd = C // n_head
    if T % tq != 0:                    # small / odd sequences: one tile
        tq = T
    nq = T // tq
    cdt = matmul_dtype

    # Pre-split the fused QKV weight/bias on the host (avoids in-kernel
    # lane-slicing of the 3C dimension). Weights are (in, out) so the kernel
    # computes y = x @ W + b directly on the MXU.
    wq, wk, wv = jnp.split(params["w_attn"], 3, axis=1)
    bq, bk, bv = jnp.split(params["b_attn"], 3, axis=1)

    inputs = [
        x,
        params["ln1_w"], params["ln1_b"],
        wq.astype(cdt), bq, wk.astype(cdt), bk, wv.astype(cdt), bv,
        params["w_aproj"].astype(cdt), params["b_aproj"],
        params["ln2_w"], params["ln2_b"],
        params["w_fc"].astype(cdt), params["b_fc"],
        params["w_mproj"].astype(cdt), params["b_mproj"],
    ]

    def const_spec(a):                 # constant index map -> DMA'd once, resident
        return pl.BlockSpec(a.shape, lambda b, q: (0,) * a.ndim)

    in_specs = [pl.BlockSpec((1, tq, C), lambda b, q: (b, q, 0))]
    in_specs += [const_spec(a) for a in inputs[1:]]

    scratch_shapes = [
        pltpu.VMEM((n_head, tq, hd), cdt),            # q (pre-scaled), head-major
        pltpu.VMEM((nq, n_head, tq, hd), cdt),        # K cache (whole sequence)
        pltpu.VMEM((nq, n_head, tq, hd), cdt),        # V cache
        pltpu.VMEM((tq, C), cdt),                     # attention output (lane-dense)
        pltpu.VMEM((n_head, tq, 1), jnp.float32),     # running max
        pltpu.VMEM((n_head, tq, 1), jnp.float32),     # running denominator
        pltpu.VMEM((n_head, tq, hd), jnp.float32),    # output accumulator
    ]

    return pl.pallas_call(
        functools.partial(block_kernel, n_head=n_head),
        out_shape=jax.ShapeDtypeStruct((B, T, C), x.dtype),
        grid_spec=pltpu.PrefetchScalarGridSpec(
            num_scalar_prefetch=0,
            grid=(B, nq),
            in_specs=in_specs,
            out_specs=pl.BlockSpec((1, tq, C), lambda b, q: (b, q, 0)),
            scratch_shapes=scratch_shapes,
        ),
        compiler_params=pltpu.CompilerParams(
            # The q-tile axis carries the K/V cache across steps -> must run
            # sequentially ("arbitrary"); the batch axis is safe to split
            # across TensorCores on v7x.
            dimension_semantics=("parallel", "arbitrary"),
            vmem_limit_bytes=48 * 1024 * 1024,
        ),
    )(*inputs)


def init_params(key, C):
    ks = jax.random.split(key, 4)
    std = 0.02
    return {
        "ln1_w":   jnp.ones((1, C), jnp.float32),
        "ln1_b":   jnp.zeros((1, C), jnp.float32),
        "w_attn":  std * jax.random.normal(ks[0], (C, 3 * C), jnp.float32),
        "b_attn":  jnp.zeros((1, 3 * C), jnp.float32),
        "w_aproj": std * jax.random.normal(ks[1], (C, C), jnp.float32),
        "b_aproj": jnp.zeros((1, C), jnp.float32),
        "ln2_w":   jnp.ones((1, C), jnp.float32),
        "ln2_b":   jnp.zeros((1, C), jnp.float32),
        "w_fc":    std * jax.random.normal(ks[2], (C, 4 * C), jnp.float32),
        "b_fc":    jnp.zeros((1, 4 * C), jnp.float32),
        "w_mproj": std * jax.random.normal(ks[3], (4 * C, C), jnp.float32),
        "b_mproj": jnp.zeros((1, C), jnp.float32),
    }


def ref_block(x, p, n_head):
    # Pure-JAX reference mirroring the PyTorch module semantics.
    def ln(x, w, b, eps=1e-5):
        mu = x.mean(-1, keepdims=True)
        var = ((x - mu) ** 2).mean(-1, keepdims=True)
        return (x - mu) / jnp.sqrt(var + eps) * w + b

    B, T, C = x.shape
    hd = C // n_head
    h = ln(x, p["ln1_w"][0], p["ln1_b"][0])
    qkv = h @ p["w_attn"] + p["b_attn"][0]
    q, k, v = jnp.split(qkv, 3, axis=-1)
    q = q.reshape(B, T, n_head, hd).transpose(0, 2, 1, 3)
    k = k.reshape(B, T, n_head, hd).transpose(0, 2, 1, 3)
    v = v.reshape(B, T, n_head, hd).transpose(0, 2, 1, 3)
    att = (q @ k.transpose(0, 1, 3, 2)) / math.sqrt(hd)
    mask = jnp.tril(jnp.ones((T, T), bool))
    att = jnp.where(mask, att, -jnp.inf)
    att = jax.nn.softmax(att, axis=-1)
    y = (att @ v).transpose(0, 2, 1, 3).reshape(B, T, C)
    y = y @ p["w_aproj"] + p["b_aproj"][0]
    x = x + y
    h2 = ln(x, p["ln2_w"][0], p["ln2_b"][0])
    h2 = h2 @ p["w_fc"] + p["b_fc"][0]
    h2 = 0.5 * h2 * (1.0 + jnp.tanh(math.sqrt(2.0 / math.pi) * (h2 + 0.044715 * h2 ** 3)))
    h2 = h2 @ p["w_mproj"] + p["b_mproj"][0]
    return x + h2


if __name__ == "__main__":
    # Small but representative config: 2 sequence tiles of 128, 4 heads (hd=32).
    B, T, C, n_head = 2, 256, 128, 4
    key = jax.random.PRNGKey(0)
    kx, kp = jax.random.split(key)
    x = jax.random.normal(kx, (B, T, C), jnp.float32)
    params = init_params(kp, C)

    ref = ref_block(x, params, n_head)

    out = jax.block_until_ready(gpt2_block(x, params, n_head))
    assert out.shape == (B, T, C)
    assert jnp.allclose(out, ref, atol=5e-3, rtol=5e-3), "f32 kernel mismatch"

    # bf16 MXU path (production setting on v6e/v7x), f32 accumulation.
    out_bf16 = jax.block_until_ready(
        gpt2_block(x, params, n_head, matmul_dtype=jnp.bfloat16))
    assert jnp.allclose(out_bf16, ref, atol=6e-2, rtol=6e-2), "bf16 kernel mismatch"

    print("KERNEL_OK")
</pallas_src>

<mosaic_0001>
module attributes {stable_mosaic.version = 11 : i64} {
  func.func @block_kernel(%arg0: i32, %arg1: i32, %arg2: memref<1x128x128xf32, #tpu.memory_space<vmem>>, %arg3: memref<1x128xf32, #tpu.memory_space<vmem>>, %arg4: memref<1x128xf32, #tpu.memory_space<vmem>>, %arg5: memref<128x128xf32, #tpu.memory_space<vmem>>, %arg6: memref<1x128xf32, #tpu.memory_space<vmem>>, %arg7: memref<128x128xf32, #tpu.memory_space<vmem>>, %arg8: memref<1x128xf32, #tpu.memory_space<vmem>>, %arg9: memref<128x128xf32, #tpu.memory_space<vmem>>, %arg10: memref<1x128xf32, #tpu.memory_space<vmem>>, %arg11: memref<128x128xf32, #tpu.memory_space<vmem>>, %arg12: memref<1x128xf32, #tpu.memory_space<vmem>>, %arg13: memref<1x128xf32, #tpu.memory_space<vmem>>, %arg14: memref<1x128xf32, #tpu.memory_space<vmem>>, %arg15: memref<128x512xf32, #tpu.memory_space<vmem>>, %arg16: memref<1x512xf32, #tpu.memory_space<vmem>>, %arg17: memref<512x128xf32, #tpu.memory_space<vmem>>, %arg18: memref<1x128xf32, #tpu.memory_space<vmem>>, %arg19: memref<1x128x128xf32, #tpu.memory_space<vmem>>, %arg20: memref<4x128x32xf32, #tpu.memory_space<vmem>>, %arg21: memref<2x4x128x32xf32, #tpu.memory_space<vmem>>, %arg22: memref<2x4x128x32xf32, #tpu.memory_space<vmem>>, %arg23: memref<128x128xf32, #tpu.memory_space<vmem>>, %arg24: memref<4x128x1xf32, #tpu.memory_space<vmem>>, %arg25: memref<4x128x1xf32, #tpu.memory_space<vmem>>, %arg26: memref<4x128x32xf32, #tpu.memory_space<vmem>>) attributes {dimension_semantics = [#tpu.dimension_semantics<parallel>, #tpu.dimension_semantics<arbitrary>], iteration_bounds = array<i64: 2, 2>, scalar_prefetch = 0 : i64, scratch_operands = 7 : i64, tpu.core_type = #tpu.core_type<tc>, window_params = [{transform_indices = @transform_0, window_bounds = array<i64: 1, 128, 128>}, {pipeline_mode = #tpu.pipeline_mode<synchronous>, transform_indices = @transform_1, window_bounds = array<i64: 1, 128>}, {pipeline_mode = #tpu.pipeline_mode<synchronous>, transform_indices = @transform_2, window_bounds = array<i64: 1, 128>}, {pipeline_mode = #tpu.pipeline_mode<synchronous>, transform_indices = @transform_3, window_bounds = array<i64: 128, 128>}, {pipeline_mode = #tpu.pipeline_mode<synchronous>, transform_indices = @transform_4, window_bounds = array<i64: 1, 128>}, {pipeline_mode = #tpu.pipeline_mode<synchronous>, transform_indices = @transform_5, window_bounds = array<i64: 128, 128>}, {pipeline_mode = #tpu.pipeline_mode<synchronous>, transform_indices = @transform_6, window_bounds = array<i64: 1, 128>}, {pipeline_mode = #tpu.pipeline_mode<synchronous>, transform_indices = @transform_7, window_bounds = array<i64: 128, 128>}, {pipeline_mode = #tpu.pipeline_mode<synchronous>, transform_indices = @transform_8, window_bounds = array<i64: 1, 128>}, {pipeline_mode = #tpu.pipeline_mode<synchronous>, transform_indices = @transform_9, window_bounds = array<i64: 128, 128>}, {pipeline_mode = #tpu.pipeline_mode<synchronous>, transform_indices = @transform_10, window_bounds = array<i64: 1, 128>}, {pipeline_mode = #tpu.pipeline_mode<synchronous>, transform_indices = @transform_11, window_bounds = array<i64: 1, 128>}, {pipeline_mode = #tpu.pipeline_mode<synchronous>, transform_indices = @transform_12, window_bounds = array<i64: 1, 128>}, {pipeline_mode = #tpu.pipeline_mode<synchronous>, transform_indices = @transform_13, window_bounds = array<i64: 128, 512>}, {pipeline_mode = #tpu.pipeline_mode<synchronous>, transform_indices = @transform_14, window_bounds = array<i64: 1, 512>}, {pipeline_mode = #tpu.pipeline_mode<synchronous>, transform_indices = @transform_15, window_bounds = array<i64: 512, 128>}, {pipeline_mode = #tpu.pipeline_mode<synchronous>, transform_indices = @transform_16, window_bounds = array<i64: 1, 128>}, {transform_indices = @transform_17, window_bounds = array<i64: 1, 128, 128>}]} {
    %c0 = arith.constant 0 : index
    %c0_0 = arith.constant 0 : index
    %c0_1 = arith.constant 0 : index
    %0 = vector.load %arg2[%c0, %c0_0, %c0_1] : memref<1x128x128xf32, #tpu.memory_space<vmem>>, vector<1x128x128xf32>
    %1 = vector.shape_cast %0 : vector<1x128x128xf32> to vector<128x128xf32>
    %c0_2 = arith.constant 0 : index
    %c0_3 = arith.constant 0 : index
    %2 = vector.load %arg3[%c0_2, %c0_3] : memref<1x128xf32, #tpu.memory_space<vmem>>, vector<1x128xf32>
    %c0_4 = arith.constant 0 : index
    %c0_5 = arith.constant 0 : index
    %3 = vector.load %arg4[%c0_4, %c0_5] : memref<1x128xf32, #tpu.memory_space<vmem>>, vector<1x128xf32>
    %cst = arith.constant dense<0.000000e+00> : vector<128xf32>
    %4 = vector.multi_reduction <add>, %1, %cst [1] : vector<128x128xf32> to vector<128xf32>
    %5 = vector.shape_cast %4 : vector<128xf32> to vector<128x1xf32>
    %cst_6 = arith.constant 1.280000e+02 : f32
    %6 = vector.broadcast %cst_6 : f32 to vector<128x1xf32>
    %7 = arith.divf %5, %6 : vector<128x1xf32>
    %8 = vector.broadcast %7 : vector<128x1xf32> to vector<128x128xf32>
    %9 = arith.subf %1, %8 : vector<128x128xf32>
    %10 = arith.mulf %9, %9 : vector<128x128xf32>
    %cst_7 = arith.constant dense<0.000000e+00> : vector<128xf32>
    %11 = vector.multi_reduction <add>, %10, %cst_7 [1] : vector<128x128xf32> to vector<128xf32>
    %12 = vector.shape_cast %11 : vector<128xf32> to vector<128x1xf32>
    %cst_8 = arith.constant 1.280000e+02 : f32
    %13 = vector.broadcast %cst_8 : f32 to vector<128x1xf32>
    %14 = arith.divf %12, %13 : vector<128x1xf32>
    %cst_9 = arith.constant 9.99999974E-6 : f32
    %15 = vector.broadcast %cst_9 : f32 to vector<128x1xf32>
    %16 = arith.addf %14, %15 : vector<128x1xf32>
    %17 = math.rsqrt %16 : vector<128x1xf32>
    %18 = vector.broadcast %17 : vector<128x1xf32> to vector<128x128xf32>
    %19 = arith.mulf %9, %18 : vector<128x128xf32>
    %20 = vector.broadcast %2 : vector<1x128xf32> to vector<128x128xf32>
    %21 = arith.mulf %19, %20 : vector<128x128xf32>
    %22 = vector.broadcast %3 : vector<1x128xf32> to vector<128x128xf32>
    %23 = arith.addf %21, %22 : vector<128x128xf32>
    %c0_10 = arith.constant 0 : index
    %c0_11 = arith.constant 0 : index
    %24 = vector.load %arg5[%c0_10, %c0_11] : memref<128x128xf32, #tpu.memory_space<vmem>>, vector<128x128xf32>
    %cst_12 = arith.constant dense<0.000000e+00> : vector<128x128xf32>
    %25 = tpu.matmul %23, %24, %cst_12 {dimension_numbers = #tpu.dot_dimension_numbers<[1], [0], [0], [1], [0, 0, 1, 1], [], []>} : vector<128x128xf32>, vector<128x128xf32>, vector<128x128xf32> -> vector<128x128xf32>
    %c0_13 = arith.constant 0 : index
    %c0_14 = arith.constant 0 : index
    %26 = vector.load %arg6[%c0_13, %c0_14] : memref<1x128xf32, #tpu.memory_space<vmem>>, vector<1x128xf32>
    %27 = vector.broadcast %26 : vector<1x128xf32> to vector<128x128xf32>
    %28 = arith.addf %25, %27 : vector<128x128xf32>
    %cst_15 = arith.constant 0.176776692 : f32
    %29 = vector.broadcast %cst_15 : f32 to vector<128x128xf32>
    %30 = arith.mulf %28, %29 : vector<128x128xf32>
    %c0_16 = arith.constant 0 : index
    %c0_17 = arith.constant 0 : index
    %31 = vector.load %arg7[%c0_16, %c0_17] : memref<128x128xf32, #tpu.memory_space<vmem>>, vector<128x128xf32>
    %cst_18 = arith.constant dense<0.000000e+00> : vector<128x128xf32>
    %32 = tpu.matmul %23, %31, %cst_18 {dimension_numbers = #tpu.dot_dimension_numbers<[1], [0], [0], [1], [0, 0, 1, 1], [], []>} : vector<128x128xf32>, vector<128x128xf32>, vector<128x128xf32> -> vector<128x128xf32>
    %c0_19 = arith.constant 0 : index
    %c0_20 = arith.constant 0 : index
    %33 = vector.load %arg8[%c0_19, %c0_20] : memref<1x128xf32, #tpu.memory_space<vmem>>, vector<1x128xf32>
    %34 = vector.broadcast %33 : vector<1x128xf32> to vector<128x128xf32>
    %35 = arith.addf %32, %34 : vector<128x128xf32>
    %c0_21 = arith.constant 0 : index
    %c0_22 = arith.constant 0 : index
    %36 = vector.load %arg9[%c0_21, %c0_22] : memref<128x128xf32, #tpu.memory_space<vmem>>, vector<128x128xf32>
    %cst_23 = arith.constant dense<0.000000e+00> : vector<128x128xf32>
    %37 = tpu.matmul %23, %36, %cst_23 {dimension_numbers = #tpu.dot_dimension_numbers<[1], [0], [0], [1], [0, 0, 1, 1], [], []>} : vector<128x128xf32>, vector<128x128xf32>, vector<128x128xf32> -> vector<128x128xf32>
    %c0_24 = arith.constant 0 : index
    %c0_25 = arith.constant 0 : index
    %38 = vector.load %arg10[%c0_24, %c0_25] : memref<1x128xf32, #tpu.memory_space<vmem>>, vector<1x128xf32>
    %39 = vector.broadcast %38 : vector<1x128xf32> to vector<128x128xf32>
    %40 = arith.addf %37, %39 : vector<128x128xf32>
    %41 = vector.extract_strided_slice %30 {offsets = [0, 0], sizes = [128, 32], strides = [1, 1]} : vector<128x128xf32> to vector<128x32xf32>
    %c0_26 = arith.constant 0 : index
    %c0_27 = arith.constant 0 : index
    %c0_28 = arith.constant 0 : index
    %42 = vector.load %arg20[%c0_26, %c0_27, %c0_28] : memref<4x128x32xf32, #tpu.memory_space<vmem>>, vector<1x128x32xf32>
    %43 = vector.shape_cast %42 : vector<1x128x32xf32> to vector<128x32xf32>
    %44 = vector.shape_cast %41 : vector<128x32xf32> to vector<1x128x32xf32>
    tpu.vector_store %arg20[%c0_26, %c0_27, %c0_28], %44 {strides = array<i32>} : memref<4x128x32xf32, #tpu.memory_space<vmem>>, vector<1x128x32xf32>,
    %45 = vector.extract_strided_slice %35 {offsets = [0, 0], sizes = [128, 32], strides = [1, 1]} : vector<128x128xf32> to vector<128x32xf32>
    %46 = arith.index_cast %arg1 : i32 to index
    %c0_29 = arith.constant 0 : index
    %c0_30 = arith.constant 0 : index
    %c0_31 = arith.constant 0 : index
    %47 = vector.load %arg21[%46, %c0_29, %c0_30, %c0_31] : memref<2x4x128x32xf32, #tpu.memory_space<vmem>>, vector<1x1x128x32xf32>
    %48 = vector.shape_cast %47 : vector<1x1x128x32xf32> to vector<128x32xf32>
    %49 = vector.shape_cast %45 : vector<128x32xf32> to vector<1x1x128x32xf32>
    tpu.vector_store %arg21[%46, %c0_29, %c0_30, %c0_31], %49 {strides = array<i32>} : memref<2x4x128x32xf32, #tpu.memory_space<vmem>>, vector<1x1x128x32xf32>,
    %50 = vector.extract_strided_slice %40 {offsets = [0, 0], sizes = [128, 32], strides = [1, 1]} : vector<128x128xf32> to vector<128x32xf32>
    %51 = arith.index_cast %arg1 : i32 to index
    %c0_32 = arith.constant 0 : index
    %c0_33 = arith.constant 0 : index
    %c0_34 = arith.constant 0 : index
    %52 = vector.load %arg22[%51, %c0_32, %c0_33, %c0_34] : memref<2x4x128x32xf32, #tpu.memory_space<vmem>>, vector<1x1x128x32xf32>
    %53 = vector.shape_cast %52 : vector<1x1x128x32xf32> to vector<128x32xf32>
    %54 = vector.shape_cast %50 : vector<128x32xf32> to vector<1x1x128x32xf32>
    tpu.vector_store %arg22[%51, %c0_32, %c0_33, %c0_34], %54 {strides = array<i32>} : memref<2x4x128x32xf32, #tpu.memory_space<vmem>>, vector<1x1x128x32xf32>,
    %55 = vector.extract_strided_slice %30 {offsets = [0, 32], sizes = [128, 32], strides = [1, 1]} : vector<128x128xf32> to vector<128x32xf32>
    %c1 = arith.constant 1 : index
    %c0_35 = arith.constant 0 : index
    %c0_36 = arith.constant 0 : index
    %56 = vector.load %arg20[%c1, %c0_35, %c0_36] : memref<4x128x32xf32, #tpu.memory_space<vmem>>, vector<1x128x32xf32>
    %57 = vector.shape_cast %56 : vector<1x128x32xf32> to vector<128x32xf32>
    %58 = vector.shape_cast %55 : vector<128x32xf32> to vector<1x128x32xf32>
    tpu.vector_store %arg20[%c1, %c0_35, %c0_36], %58 {strides = array<i32>} : memref<4x128x32xf32, #tpu.memory_space<vmem>>, vector<1x128x32xf32>,
    %59 = vector.extract_strided_slice %35 {offsets = [0, 32], sizes = [128, 32], strides = [1, 1]} : vector<128x128xf32> to vector<128x32xf32>
    %60 = arith.index_cast %arg1 : i32 to index
    %c1_37 = arith.constant 1 : index
    %c0_38 = arith.constant 0 : index
    %c0_39 = arith.constant 0 : index
    %61 = vector.load %arg21[%60, %c1_37, %c0_38, %c0_39] : memref<2x4x128x32xf32, #tpu.memory_space<vmem>>, vector<1x1x128x32xf32>
    %62 = vector.shape_cast %61 : vector<1x1x128x32xf32> to vector<128x32xf32>
    %63 = vector.shape_cast %59 : vector<128x32xf32> to vector<1x1x128x32xf32>
    tpu.vector_store %arg21[%60, %c1_37, %c0_38, %c0_39], %63 {strides = array<i32>} : memref<2x4x128x32xf32, #tpu.memory_space<vmem>>, vector<1x1x128x32xf32>,
    %64 = vector.extract_strided_slice %40 {offsets = [0, 32], sizes = [128, 32], strides = [1, 1]} : vector<128x128xf32> to vector<128x32xf32>
    %65 = arith.index_cast %arg1 : i32 to index
    %c1_40 = arith.constant 1 : index
    %c0_41 = arith.constant 0 : index
    %c0_42 = arith.constant 0 : index
    %66 = vector.load %arg22[%65, %c1_40, %c0_41, %c0_42] : memref<2x4x128x32xf32, #tpu.memory_space<vmem>>, vector<1x1x128x32xf32>
    %67 = vector.shape_cast %66 : vector<1x1x128x32xf32> to vector<128x32xf32>
    %68 = vector.shape_cast %64 : vector<128x32xf32> to vector<1x1x128x32xf32>
    tpu.vector_store %arg22[%65, %c1_40, %c0_41, %c0_42], %68 {strides = array<i32>} : memref<2x4x128x32xf32, #tpu.memory_space<vmem>>, vector<1x1x128x32xf32>,
    %69 = vector.extract_strided_slice %30 {offsets = [0, 64], sizes = [128, 32], strides = [1, 1]} : vector<128x128xf32> to vector<128x32xf32>
    %c2 = arith.constant 2 : index
    %c0_43 = arith.constant 0 : index
    %c0_44 = arith.constant 0 : index
    %70 = vector.load %arg20[%c2, %c0_43, %c0_44] : memref<4x128x32xf32, #tpu.memory_space<vmem>>, vector<1x128x32xf32>
    %71 = vector.shape_cast %70 : vector<1x128x32xf32> to vector<128x32xf32>
    %72 = vector.shape_cast %69 : vector<128x32xf32> to vector<1x128x32xf32>
    tpu.vector_store %arg20[%c2, %c0_43, %c0_44], %72 {strides = array<i32>} : memref<4x128x32xf32, #tpu.memory_space<vmem>>, vector<1x128x32xf32>,
    %73 = vector.extract_strided_slice %35 {offsets = [0, 64], sizes = [128, 32], strides = [1, 1]} : vector<128x128xf32> to vector<128x32xf32>
    %74 = arith.index_cast %arg1 : i32 to index
    %c2_45 = arith.constant 2 : index
    %c0_46 = arith.constant 0 : index
    %c0_47 = arith.constant 0 : index
    %75 = vector.load %arg21[%74, %c2_45, %c0_46, %c0_47] : memref<2x4x128x32xf32, #tpu.memory_space<vmem>>, vector<1x1x128x32xf32>
    %76 = vector.shape_cast %75 : vector<1x1x128x32xf32> to vector<128x32xf32>
    %77 = vector.shape_cast %73 : vector<128x32xf32> to vector<1x1x128x32xf32>
    tpu.vector_store %arg21[%74, %c2_45, %c0_46, %c0_47], %77 {strides = array<i32>} : memref<2x4x128x32xf32, #tpu.memory_space<vmem>>, vector<1x1x128x32xf32>,
    %78 = vector.extract_strided_slice %40 {offsets = [0, 64], sizes = [128, 32], strides = [1, 1]} : vector<128x128xf32> to vector<128x32xf32>
    %79 = arith.index_cast %arg1 : i32 to index
    %c2_48 = arith.constant 2 : index
    %c0_49 = arith.constant 0 : index
    %c0_50 = arith.constant 0 : index
    %80 = vector.load %arg22[%79, %c2_48, %c0_49, %c0_50] : memref<2x4x128x32xf32, #tpu.memory_space<vmem>>, vector<1x1x128x32xf32>
    %81 = vector.shape_cast %80 : vector<1x1x128x32xf32> to vector<128x32xf32>
    %82 = vector.shape_cast %78 : vector<128x32xf32> to vector<1x1x128x32xf32>
    tpu.vector_store %arg22[%79, %c2_48, %c0_49, %c0_50], %82 {strides = array<i32>} : memref<2x4x128x32xf32, #tpu.memory_space<vmem>>, vector<1x1x128x32xf32>,
    %83 = vector.extract_strided_slice %30 {offsets = [0, 96], sizes = [128, 32], strides = [1, 1]} : vector<128x128xf32> to vector<128x32xf32>
    %c3 = arith.constant 3 : index
    %c0_51 = arith.constant 0 : index
    %c0_52 = arith.constant 0 : index
    %84 = vector.load %arg20[%c3, %c0_51, %c0_52] : memref<4x128x32xf32, #tpu.memory_space<vmem>>, vector<1x128x32xf32>
    %85 = vector.shape_cast %84 : vector<1x128x32xf32> to vector<128x32xf32>
    %86 = vector.shape_cast %83 : vector<128x32xf32> to vector<1x128x32xf32>
    tpu.vector_store %arg20[%c3, %c0_51, %c0_52], %86 {strides = array<i32>} : memref<4x128x32xf32, #tpu.memory_space<vmem>>, vector<1x128x32xf32>,
    %87 = vector.extract_strided_slice %35 {offsets = [0, 96], sizes = [128, 32], strides = [1, 1]} : vector<128x128xf32> to vector<128x32xf32>
    %88 = arith.index_cast %arg1 : i32 to index
    %c3_53 = arith.constant 3 : index
    %c0_54 = arith.constant 0 : index
    %c0_55 = arith.constant 0 : index
    %89 = vector.load %arg21[%88, %c3_53, %c0_54, %c0_55] : memref<2x4x128x32xf32, #tpu.memory_space<vmem>>, vector<1x1x128x32xf32>
    %90 = vector.shape_cast %89 : vector<1x1x128x32xf32> to vector<128x32xf32>
    %91 = vector.shape_cast %87 : vector<128x32xf32> to vector<1x1x128x32xf32>
    tpu.vector_store %arg21[%88, %c3_53, %c0_54, %c0_55], %91 {strides = array<i32>} : memref<2x4x128x32xf32, #tpu.memory_space<vmem>>, vector<1x1x128x32xf32>,
    %92 = vector.extract_strided_slice %40 {offsets = [0, 96], sizes = [128, 32], strides = [1, 1]} : vector<128x128xf32> to vector<128x32xf32>
    %93 = arith.index_cast %arg1 : i32 to index
    %c3_56 = arith.constant 3 : index
    %c0_57 = arith.constant 0 : index
    %c0_58 = arith.constant 0 : index
    %94 = vector.load %arg22[%93, %c3_56, %c0_57, %c0_58] : memref<2x4x128x32xf32, #tpu.memory_space<vmem>>, vector<1x1x128x32xf32>
    %95 = vector.shape_cast %94 : vector<1x1x128x32xf32> to vector<128x32xf32>
    %96 = vector.shape_cast %92 : vector<128x32xf32> to vector<1x1x128x32xf32>
    tpu.vector_store %arg22[%93, %c3_56, %c0_57, %c0_58], %96 {strides = array<i32>} : memref<2x4x128x32xf32, #tpu.memory_space<vmem>>, vector<1x1x128x32xf32>,
    %cst_59 = arith.constant -1.000000e+30 : f32
    %97 = vector.broadcast %cst_59 : f32 to vector<4x128x1xf32>
    %c0_60 = arith.constant 0 : index
    %c0_61 = arith.constant 0 : index
    %c0_62 = arith.constant 0 : index
    %98 = vector.load %arg24[%c0_60, %c0_61, %c0_62] : memref<4x128x1xf32, #tpu.memory_space<vmem>>, vector<4x128x1xf32>
    tpu.vector_store %arg24[%c0_60, %c0_61, %c0_62], %97 {strides = array<i32>} : memref<4x128x1xf32, #tpu.memory_space<vmem>>, vector<4x128x1xf32>,
    %cst_63 = arith.constant 0.000000e+00 : f32
    %99 = vector.broadcast %cst_63 : f32 to vector<4x128x1xf32>
    %c0_64 = arith.constant 0 : index
    %c0_65 = arith.constant 0 : index
    %c0_66 = arith.constant 0 : index
    %100 = vector.load %arg25[%c0_64, %c0_65, %c0_66] : memref<4x128x1xf32, #tpu.memory_space<vmem>>, vector<4x128x1xf32>
    tpu.vector_store %arg25[%c0_64, %c0_65, %c0_66], %99 {strides = array<i32>} : memref<4x128x1xf32, #tpu.memory_space<vmem>>, vector<4x128x1xf32>,
    %cst_67 = arith.constant 0.000000e+00 : f32
    %101 = vector.broadcast %cst_67 : f32 to vector<4x128x32xf32>
    %c0_68 = arith.constant 0 : index
    %c0_69 = arith.constant 0 : index
    %c0_70 = arith.constant 0 : index
    %102 = vector.load %arg26[%c0_68, %c0_69, %c0_70] : memref<4x128x32xf32, #tpu.memory_space<vmem>>, vector<4x128x32xf32>
    tpu.vector_store %arg26[%c0_68, %c0_69, %c0_70], %101 {strides = array<i32>} : memref<4x128x32xf32, #tpu.memory_space<vmem>>, vector<4x128x32xf32>,
    %103 = tpu.iota {dimensions = array<i32: 0>} : vector<128x128xi32>
    %104 = tpu.iota {dimensions = array<i32: 1>} : vector<128x128xi32>
    %105 = arith.cmpi sge, %103, %104 : vector<128x128xi32>
    %c1_i32 = arith.constant 1 : i32
    %106 = arith.addi %arg1, %c1_i32 : i32
    %c0_i32 = arith.constant 0 : i32
    %107 = arith.subi %106, %c0_i32 : i32
    %c1_i32_71 = arith.constant 1 : i32
    %c1_i32_72 = arith.constant 1 : i32
    %108 = arith.subi %c1_i32_71, %c1_i32_72 : i32
    %109 = arith.addi %107, %108 : i32
    %c1_i32_73 = arith.constant 1 : i32
    %110 = arith.divsi %109, %c1_i32_73 : i32
    %c1_i32_74 = arith.constant 1 : i32
    %c0_i32_75 = arith.constant 0 : i32
    %c0_i32_76 = arith.constant 0 : i32
    %111 = arith.subi %110, %c0_i32_76 : i32
    %112 = arith.addi %c0_i32_76, %111 : i32
    %c1_i32_77 = arith.constant 1 : i32
    scf.for %arg27 = %c0_i32_76 to %112 step %c1_i32_77  : i32 {
      %186 = arith.muli %arg27, %c1_i32_74 : i32
      %187 = arith.addi %c0_i32_75, %186 : i32
      %c0_122 = arith.constant 0 : index
      %c0_123 = arith.constant 0 : index
      %c0_124 = arith.constant 0 : index
      %188 = vector.load %arg20[%c0_122, %c0_123, %c0_124] : memref<4x128x32xf32, #tpu.memory_space<vmem>>, vector<4x128x32xf32>
      %189 = arith.index_cast %187 : i32 to index
      %c0_125 = arith.constant 0 : index
      %c0_126 = arith.constant 0 : index
      %c0_127 = arith.constant 0 : index
      %190 = vector.load %arg21[%189, %c0_125, %c0_126, %c0_127] : memref<2x4x128x32xf32, #tpu.memory_space<vmem>>, vector<1x4x128x32xf32>
      %191 = vector.shape_cast %190 : vector<1x4x128x32xf32> to vector<4x128x32xf32>
      %192 = arith.index_cast %187 : i32 to index
      %c0_128 = arith.constant 0 : index
      %c0_129 = arith.constant 0 : index
      %c0_130 = arith.constant 0 : index
      %193 = vector.load %arg22[%192, %c0_128, %c0_129, %c0_130] : memref<2x4x128x32xf32, #tpu.memory_space<vmem>>, vector<1x4x128x32xf32>
      %194 = vector.shape_cast %193 : vector<1x4x128x32xf32> to vector<4x128x32xf32>
      "tpu.trace_start"() <{level = 10 : i32, message = "hqd,hkd->hqk"}> : () -> ()
      %cst_131 = arith.constant dense<0.000000e+00> : vector<4x128x128xf32>
      %195 = tpu.matmul %188, %191, %cst_131 {dimension_numbers = #tpu.dot_dimension_numbers<[2], [2], [1], [1], [0, 0, 0, 1, 1, 1], [0], [0]>} : vector<4x128x32xf32>, vector<4x128x32xf32>, vector<4x128x128xf32> -> vector<4x128x128xf32>
      "tpu.trace_stop"() : () -> ()
      %196 = arith.cmpi slt, %187, %arg1 : i32
      %197 = vector.broadcast %196 : i1 to vector<128x128xi1>
      %198 = arith.ori %197, %105 : vector<128x128xi1>
      %cst_132 = arith.constant -1.000000e+30 : f32
      %199 = vector.shape_cast %198 : vector<128x128xi1> to vector<1x128x128xi1>
      %200 = vector.broadcast %199 : vector<1x128x128xi1> to vector<4x128x128xi1>
      %201 = vector.broadcast %cst_132 : f32 to vector<4x128x128xf32>
      %202 = arith.select %200, %195, %201 : vector<4x128x128xi1>, vector<4x128x128xf32>
      %c0_133 = arith.constant 0 : index
      %c0_134 = arith.constant 0 : index
      %c0_135 = arith.constant 0 : index
      %203 = vector.load %arg24[%c0_133, %c0_134, %c0_135] : memref<4x128x1xf32, #tpu.memory_space<vmem>>, vector<4x128x1xf32>
      %cst_136 = arith.constant dense<0xFF800000> : vector<4x128xf32>
      %204 = vector.multi_reduction <maximumf>, %202, %cst_136 [2] : vector<4x128x128xf32> to vector<4x128xf32>
      %205 = vector.shape_cast %204 : vector<4x128xf32> to vector<4x128x1xf32>
      %206 = arith.maximumf %203, %205 : vector<4x128x1xf32>
      %c0_137 = arith.constant 0 : index
      %c0_138 = arith.constant 0 : index
      %c0_139 = arith.constant 0 : index
      %207 = vector.load %arg24[%c0_137, %c0_138, %c0_139] : memref<4x128x1xf32, #tpu.memory_space<vmem>>, vector<4x128x1xf32>
      %208 = arith.subf %207, %206 : vector<4x128x1xf32>
      %209 = math.exp %208 : vector<4x128x1xf32>
      %210 = vector.broadcast %206 : vector<4x128x1xf32> to vector<4x128x128xf32>
      %211 = arith.subf %202, %210 : vector<4x128x128xf32>
      %212 = math.exp %211 : vector<4x128x128xf32>
      %c0_140 = arith.constant 0 : index
      %c0_141 = arith.constant 0 : index
      %c0_142 = arith.constant 0 : index
      %213 = vector.load %arg25[%c0_140, %c0_141, %c0_142] : memref<4x128x1xf32, #tpu.memory_space<vmem>>, vector<4x128x1xf32>
      %214 = arith.mulf %209, %213 : vector<4x128x1xf32>
      %cst_143 = arith.constant dense<0.000000e+00> : vector<4x128xf32>
      %215 = vector.multi_reduction <add>, %212, %cst_143 [2] : vector<4x128x128xf32> to vector<4x128xf32>
      %216 = vector.shape_cast %215 : vector<4x128xf32> to vector<4x128x1xf32>
      %217 = arith.addf %214, %216 : vector<4x128x1xf32>
      %c0_144 = arith.constant 0 : index
      %c0_145 = arith.constant 0 : index
      %c0_146 = arith.constant 0 : index
      %218 = vector.load %arg25[%c0_144, %c0_145, %c0_146] : memref<4x128x1xf32, #tpu.memory_space<vmem>>, vector<4x128x1xf32>
      tpu.vector_store %arg25[%c0_144, %c0_145, %c0_146], %217 {strides = array<i32>} : memref<4x128x1xf32, #tpu.memory_space<vmem>>, vector<4x128x1xf32>,
      %c0_147 = arith.constant 0 : index
      %c0_148 = arith.constant 0 : index
      %c0_149 = arith.constant 0 : index
      %219 = vector.load %arg26[%c0_147, %c0_148, %c0_149] : memref<4x128x32xf32, #tpu.memory_space<vmem>>, vector<4x128x32xf32>
      %220 = vector.broadcast %209 : vector<4x128x1xf32> to vector<4x128x32xf32>
      %221 = arith.mulf %220, %219 : vector<4x128x32xf32>
      "tpu.trace_start"() <{level = 10 : i32, message = "hqk,hkd->hqd"}> : () -> ()
      %cst_150 = arith.constant dense<0.000000e+00> : vector<4x128x32xf32>
      %222 = tpu.matmul %212, %194, %cst_150 {dimension_numbers = #tpu.dot_dimension_numbers<[2], [1], [1], [2], [0, 0, 0, 1, 1, 2], [0], [0]>} : vector<4x128x128xf32>, vector<4x128x32xf32>, vector<4x128x32xf32> -> vector<4x128x32xf32>
      "tpu.trace_stop"() : () -> ()
      %223 = arith.addf %221, %222 : vector<4x128x32xf32>
      %c0_151 = arith.constant 0 : index
      %c0_152 = arith.constant 0 : index
      %c0_153 = arith.constant 0 : index
      %224 = vector.load %arg26[%c0_151, %c0_152, %c0_153] : memref<4x128x32xf32, #tpu.memory_space<vmem>>, vector<4x128x32xf32>
      tpu.vector_store %arg26[%c0_151, %c0_152, %c0_153], %223 {strides = array<i32>} : memref<4x128x32xf32, #tpu.memory_space<vmem>>, vector<4x128x32xf32>,
      %c0_154 = arith.constant 0 : index
      %c0_155 = arith.constant 0 : index
      %c0_156 = arith.constant 0 : index
      %225 = vector.load %arg24[%c0_154, %c0_155, %c0_156] : memref<4x128x1xf32, #tpu.memory_space<vmem>>, vector<4x128x1xf32>
      tpu.vector_store %arg24[%c0_154, %c0_155, %c0_156], %206 {strides = array<i32>} : memref<4x128x1xf32, #tpu.memory_space<vmem>>, vector<4x128x1xf32>,
    }
    %c0_78 = arith.constant 0 : index
    %c0_79 = arith.constant 0 : index
    %c0_80 = arith.constant 0 : index
    %113 = vector.load %arg26[%c0_78, %c0_79, %c0_80] : memref<4x128x32xf32, #tpu.memory_space<vmem>>, vector<4x128x32xf32>
    %c0_81 = arith.constant 0 : index
    %c0_82 = arith.constant 0 : index
    %c0_83 = arith.constant 0 : index
    %114 = vector.load %arg25[%c0_81, %c0_82, %c0_83] : memref<4x128x1xf32, #tpu.memory_space<vmem>>, vector<4x128x1xf32>
    %115 = tpu.reciprocal %114 {approx = true} : vector<4x128x1xf32> -> vector<4x128x1xf32>
    %116 = vector.broadcast %115 : vector<4x128x1xf32> to vector<4x128x32xf32>
    %117 = arith.mulf %113, %116 : vector<4x128x32xf32>
    %118 = vector.extract_strided_slice %117 {offsets = [0, 0, 0], sizes = [1, 128, 32], strides = [1, 1, 1]} : vector<4x128x32xf32> to vector<1x128x32xf32>
    %119 = vector.shape_cast %118 : vector<1x128x32xf32> to vector<128x32xf32>
    %c0_84 = arith.constant 0 : index
    %c0_85 = arith.constant 0 : index
    %120 = vector.load %arg23[%c0_84, %c0_85] : memref<128x128xf32, #tpu.memory_space<vmem>>, vector<128x32xf32>
    tpu.vector_store %arg23[%c0_84, %c0_85], %119 {strides = array<i32>} : memref<128x128xf32, #tpu.memory_space<vmem>>, vector<128x32xf32>,
    %121 = vector.extract_strided_slice %117 {offsets = [1, 0, 0], sizes = [1, 128, 32], strides = [1, 1, 1]} : vector<4x128x32xf32> to vector<1x128x32xf32>
    %122 = vector.shape_cast %121 : vector<1x128x32xf32> to vector<128x32xf32>
    %c0_86 = arith.constant 0 : index
    %c32 = arith.constant 32 : index
    %123 = vector.load %arg23[%c0_86, %c32] : memref<128x128xf32, #tpu.memory_space<vmem>>, vector<128x32xf32>
    tpu.vector_store %arg23[%c0_86, %c32], %122 {strides = array<i32>} : memref<128x128xf32, #tpu.memory_space<vmem>>, vector<128x32xf32>,
    %124 = vector.extract_strided_slice %117 {offsets = [2, 0, 0], sizes = [1, 128, 32], strides = [1, 1, 1]} : vector<4x128x32xf32> to vector<1x128x32xf32>
    %125 = vector.shape_cast %124 : vector<1x128x32xf32> to vector<128x32xf32>
    %c0_87 = arith.constant 0 : index
    %c64 = arith.constant 64 : index
    %126 = vector.load %arg23[%c0_87, %c64] : memref<128x128xf32, #tpu.memory_space<vmem>>, vector<128x32xf32>
    tpu.vector_store %arg23[%c0_87, %c64], %125 {strides = array<i32>} : memref<128x128xf32, #tpu.memory_space<vmem>>, vector<128x32xf32>,
    %127 = vector.extract_strided_slice %117 {offsets = [3, 0, 0], sizes = [1, 128, 32], strides = [1, 1, 1]} : vector<4x128x32xf32> to vector<1x128x32xf32>
    %128 = vector.shape_cast %127 : vector<1x128x32xf32> to vector<128x32xf32>
    %c0_88 = arith.constant 0 : index
    %c96 = arith.constant 96 : index
    %129 = vector.load %arg23[%c0_88, %c96] : memref<128x128xf32, #tpu.memory_space<vmem>>, vector<128x32xf32>
    tpu.vector_store %arg23[%c0_88, %c96], %128 {strides = array<i32>} : memref<128x128xf32, #tpu.memory_space<vmem>>, vector<128x32xf32>,
    %c0_89 = arith.constant 0 : index
    %c0_90 = arith.constant 0 : index
    %130 = vector.load %arg23[%c0_89, %c0_90] : memref<128x128xf32, #tpu.memory_space<vmem>>, vector<128x128xf32>
    %c0_91 = arith.constant 0 : index
    %c0_92 = arith.constant 0 : index
    %131 = vector.load %arg11[%c0_91, %c0_92] : memref<128x128xf32, #tpu.memory_space<vmem>>, vector<128x128xf32>
    %cst_93 = arith.constant dense<0.000000e+00> : vector<128x128xf32>
    %132 = tpu.matmul %130, %131, %cst_93 {dimension_numbers = #tpu.dot_dimension_numbers<[1], [0], [0], [1], [0, 0, 1, 1], [], []>} : vector<128x128xf32>, vector<128x128xf32>, vector<128x128xf32> -> vector<128x128xf32>
    %c0_94 = arith.constant 0 : index
    %c0_95 = arith.constant 0 : index
    %133 = vector.load %arg12[%c0_94, %c0_95] : memref<1x128xf32, #tpu.memory_space<vmem>>, vector<1x128xf32>
    %134 = vector.broadcast %133 : vector<1x128xf32> to vector<128x128xf32>
    %135 = arith.addf %132, %134 : vector<128x128xf32>
    %136 = arith.addf %1, %135 : vector<128x128xf32>
    %c0_96 = arith.constant 0 : index
    %c0_97 = arith.constant 0 : index
    %137 = vector.load %arg13[%c0_96, %c0_97] : memref<1x128xf32, #tpu.memory_space<vmem>>, vector<1x128xf32>
    %c0_98 = arith.constant 0 : index
    %c0_99 = arith.constant 0 : index
    %138 = vector.load %arg14[%c0_98, %c0_99] : memref<1x128xf32, #tpu.memory_space<vmem>>, vector<1x128xf32>
    %cst_100 = arith.constant dense<0.000000e+00> : vector<128xf32>
    %139 = vector.multi_reduction <add>, %136, %cst_100 [1] : vector<128x128xf32> to vector<128xf32>
    %140 = vector.shape_cast %139 : vector<128xf32> to vector<128x1xf32>
    %cst_101 = arith.constant 1.280000e+02 : f32
    %141 = vector.broadcast %cst_101 : f32 to vector<128x1xf32>
    %142 = arith.divf %140, %141 : vector<128x1xf32>
    %143 = vector.broadcast %142 : vector<128x1xf32> to vector<128x128xf32>
    %144 = arith.subf %136, %143 : vector<128x128xf32>
    %145 = arith.mulf %144, %144 : vector<128x128xf32>
    %cst_102 = arith.constant dense<0.000000e+00> : vector<128xf32>
    %146 = vector.multi_reduction <add>, %145, %cst_102 [1] : vector<128x128xf32> to vector<128xf32>
    %147 = vector.shape_cast %146 : vector<128xf32> to vector<128x1xf32>
    %cst_103 = arith.constant 1.280000e+02 : f32
    %148 = vector.broadcast %cst_103 : f32 to vector<128x1xf32>
    %149 = arith.divf %147, %148 : vector<128x1xf32>
    %cst_104 = arith.constant 9.99999974E-6 : f32
    %150 = vector.broadcast %cst_104 : f32 to vector<128x1xf32>
    %151 = arith.addf %149, %150 : vector<128x1xf32>
    %152 = math.rsqrt %151 : vector<128x1xf32>
    %153 = vector.broadcast %152 : vector<128x1xf32> to vector<128x128xf32>
    %154 = arith.mulf %144, %153 : vector<128x128xf32>
    %155 = vector.broadcast %137 : vector<1x128xf32> to vector<128x128xf32>
    %156 = arith.mulf %154, %155 : vector<128x128xf32>
    %157 = vector.broadcast %138 : vector<1x128xf32> to vector<128x128xf32>
    %158 = arith.addf %156, %157 : vector<128x128xf32>
    %c0_105 = arith.constant 0 : index
    %c0_106 = arith.constant 0 : index
    %159 = vector.load %arg15[%c0_105, %c0_106] : memref<128x512xf32, #tpu.memory_space<vmem>>, vector<128x512xf32>
    %cst_107 = arith.constant dense<0.000000e+00> : vector<128x512xf32>
    %160 = tpu.matmul %158, %159, %cst_107 {dimension_numbers = #tpu.dot_dimension_numbers<[1], [0], [0], [1], [0, 0, 1, 1], [], []>} : vector<128x128xf32>, vector<128x512xf32>, vector<128x512xf32> -> vector<128x512xf32>
    %c0_108 = arith.constant 0 : index
    %c0_109 = arith.constant 0 : index
    %161 = vector.load %arg16[%c0_108, %c0_109] : memref<1x512xf32, #tpu.memory_space<vmem>>, vector<1x512xf32>
    %162 = vector.broadcast %161 : vector<1x512xf32> to vector<128x512xf32>
    %163 = arith.addf %160, %162 : vector<128x512xf32>
    %cst_110 = arith.constant 5.000000e-01 : f32
    %164 = vector.broadcast %cst_110 : f32 to vector<128x512xf32>
    %165 = arith.mulf %164, %163 : vector<128x512xf32>
    %cst_111 = arith.constant 4.471500e-02 : f32
    %166 = vector.broadcast %cst_111 : f32 to vector<128x512xf32>
    %167 = arith.mulf %166, %163 : vector<128x512xf32>
    %168 = arith.mulf %167, %163 : vector<128x512xf32>
    %169 = arith.mulf %168, %163 : vector<128x512xf32>
    %170 = arith.addf %163, %169 : vector<128x512xf32>
    %cst_112 = arith.constant 0.797884583 : f32
    %171 = vector.broadcast %cst_112 : f32 to vector<128x512xf32>
    %172 = arith.mulf %171, %170 : vector<128x512xf32>
    %173 = math.tanh %172 : vector<128x512xf32>
    %cst_113 = arith.constant 1.000000e+00 : f32
    %174 = vector.broadcast %cst_113 : f32 to vector<128x512xf32>
    %175 = arith.addf %174, %173 : vector<128x512xf32>
    %176 = arith.mulf %165, %175 : vector<128x512xf32>
    %c0_114 = arith.constant 0 : index
    %c0_115 = arith.constant 0 : index
    %177 = vector.load %arg17[%c0_114, %c0_115] : memref<512x128xf32, #tpu.memory_space<vmem>>, vector<512x128xf32>
    %cst_116 = arith.constant dense<0.000000e+00> : vector<128x128xf32>
    %178 = tpu.matmul %176, %177, %cst_116 {dimension_numbers = #tpu.dot_dimension_numbers<[1], [0], [0], [1], [0, 0, 1, 1], [], []>} : vector<128x512xf32>, vector<512x128xf32>, vector<128x128xf32> -> vector<128x128xf32>
    %c0_117 = arith.constant 0 : index
    %c0_118 = arith.constant 0 : index
    %179 = vector.load %arg18[%c0_117, %c0_118] : memref<1x128xf32, #tpu.memory_space<vmem>>, vector<1x128xf32>
    %180 = vector.broadcast %179 : vector<1x128xf32> to vector<128x128xf32>
    %181 = arith.addf %178, %180 : vector<128x128xf32>
    %182 = arith.addf %136, %181 : vector<128x128xf32>
    %c0_119 = arith.constant 0 : index
    %c0_120 = arith.constant 0 : index
    %c0_121 = arith.constant 0 : index
    %183 = vector.load %arg19[%c0_119, %c0_120, %c0_121] : memref<1x128x128xf32, #tpu.memory_space<vmem>>, vector<1x128x128xf32>
    %184 = vector.shape_cast %183 : vector<1x128x128xf32> to vector<128x128xf32>
    %185 = vector.shape_cast %182 : vector<128x128xf32> to vector<1x128x128xf32>
    tpu.vector_store %arg19[%c0_119, %c0_120, %c0_121], %185 {strides = array<i32>} : memref<1x128x128xf32, #tpu.memory_space<vmem>>, vector<1x128x128xf32>,
    return
  }
  func.func @transform_0(%arg0: i32, %arg1: i32) -> (i32, i32, i32) {
    %c0_i32 = arith.constant 0 : i32
    %c0_i32_0 = arith.constant 0 : i32
    return %arg0, %arg1, %c0_i32 : i32, i32, i32
  }
  func.func @transform_1(%arg0: i32, %arg1: i32) -> (i32, i32) {
    %c0_i32 = arith.constant 0 : i32
    %c0_i32_0 = arith.constant 0 : i32
    %c0_i32_1 = arith.constant 0 : i32
    return %c0_i32, %c0_i32_0 : i32, i32
  }
  func.func @transform_2(%arg0: i32, %arg1: i32) -> (i32, i32) {
    %c0_i32 = arith.constant 0 : i32
    %c0_i32_0 = arith.constant 0 : i32
    %c0_i32_1 = arith.constant 0 : i32
    return %c0_i32, %c0_i32_0 : i32, i32
  }
  func.func @transform_3(%arg0: i32, %arg1: i32) -> (i32, i32) {
    %c0_i32 = arith.constant 0 : i32
    %c0_i32_0 = arith.constant 0 : i32
    %c0_i32_1 = arith.constant 0 : i32
    return %c0_i32, %c0_i32_0 : i32, i32
  }
  func.func @transform_4(%arg0: i32, %arg1: i32) -> (i32, i32) {
    %c0_i32 = arith.constant 0 : i32
    %c0_i32_0 = arith.constant 0 : i32
    %c0_i32_1 = arith.constant 0 : i32
    return %c0_i32, %c0_i32_0 : i32, i32
  }
  func.func @transform_5(%arg0: i32, %arg1: i32) -> (i32, i32) {
    %c0_i32 = arith.constant 0 : i32
    %c0_i32_0 = arith.constant 0 : i32
    %c0_i32_1 = arith.constant 0 : i32
    return %c0_i32, %c0_i32_0 : i32, i32
  }
  func.func @transform_6(%arg0: i32, %arg1: i32) -> (i32, i32) {
    %c0_i32 = arith.constant 0 : i32
    %c0_i32_0 = arith.constant 0 : i32
    %c0_i32_1 = arith.constant 0 : i32
    return %c0_i32, %c0_i32_0 : i32, i32
  }
  func.func @transform_7(%arg0: i32, %arg1: i32) -> (i32, i32) {
    %c0_i32 = arith.constant 0 : i32
    %c0_i32_0 = arith.constant 0 : i32
    %c0_i32_1 = arith.constant 0 : i32
    return %c0_i32, %c0_i32_0 : i32, i32
  }
  func.func @transform_8(%arg0: i32, %arg1: i32) -> (i32, i32) {
    %c0_i32 = arith.constant 0 : i32
    %c0_i32_0 = arith.constant 0 : i32
    %c0_i32_1 = arith.constant 0 : i32
    return %c0_i32, %c0_i32_0 : i32, i32
  }
  func.func @transform_9(%arg0: i32, %arg1: i32) -> (i32, i32) {
    %c0_i32 = arith.constant 0 : i32
    %c0_i32_0 = arith.constant 0 : i32
    %c0_i32_1 = arith.constant 0 : i32
    return %c0_i32, %c0_i32_0 : i32, i32
  }
  func.func @transform_10(%arg0: i32, %arg1: i32) -> (i32, i32) {
    %c0_i32 = arith.constant 0 : i32
    %c0_i32_0 = arith.constant 0 : i32
    %c0_i32_1 = arith.constant 0 : i32
    return %c0_i32, %c0_i32_0 : i32, i32
  }
  func.func @transform_11(%arg0: i32, %arg1: i32) -> (i32, i32) {
    %c0_i32 = arith.constant 0 : i32
    %c0_i32_0 = arith.constant 0 : i32
    %c0_i32_1 = arith.constant 0 : i32
    return %c0_i32, %c0_i32_0 : i32, i32
  }
  func.func @transform_12(%arg0: i32, %arg1: i32) -> (i32, i32) {
    %c0_i32 = arith.constant 0 : i32
    %c0_i32_0 = arith.constant 0 : i32
    %c0_i32_1 = arith.constant 0 : i32
    return %c0_i32, %c0_i32_0 : i32, i32
  }
  func.func @transform_13(%arg0: i32, %arg1: i32) -> (i32, i32) {
    %c0_i32 = arith.constant 0 : i32
    %c0_i32_0 = arith.constant 0 : i32
    %c0_i32_1 = arith.constant 0 : i32
    return %c0_i32, %c0_i32_0 : i32, i32
  }
  func.func @transform_14(%arg0: i32, %arg1: i32) -> (i32, i32) {
    %c0_i32 = arith.constant 0 : i32
    %c0_i32_0 = arith.constant 0 : i32
    %c0_i32_1 = arith.constant 0 : i32
    return %c0_i32, %c0_i32_0 : i32, i32
  }
  func.func @transform_15(%arg0: i32, %arg1: i32) -> (i32, i32) {
    %c0_i32 = arith.constant 0 : i32
    %c0_i32_0 = arith.constant 0 : i32
    %c0_i32_1 = arith.constant 0 : i32
    return %c0_i32, %c0_i32_0 : i32, i32
  }
  func.func @transform_16(%arg0: i32, %arg1: i32) -> (i32, i32) {
    %c0_i32 = arith.constant 0 : i32
    %c0_i32_0 = arith.constant 0 : i32
    %c0_i32_1 = arith.constant 0 : i32
    return %c0_i32, %c0_i32_0 : i32, i32
  }
  func.func @transform_17(%arg0: i32, %arg1: i32) -> (i32, i32, i32) {
    %c0_i32 = arith.constant 0 : i32
    %c0_i32_0 = arith.constant 0 : i32
    return %arg0, %arg1, %c0_i32 : i32, i32, i32
  }
}

</mosaic_0001>

<llo_original>
// kernel: tpu_custom_call.1
$region0: #{tpu_custom_call.1}
  #allocation0 [shape = 'u32[]', space=smem, size = 0x4, offset = 0x4, fixed_abs, tag = 'smem constant byte address 0x4 - core index']
  #allocation1 [shape = 'u32[144,128]{1,0:T(1,128)}', space=vmem, size = 0x12000, scoped, tag = 'internal scratch']
  #allocation2 [shape = 'f32[4,128,32]{2,1,0:T(8,128)}', space=vmem, size = 0x40000, scoped, tag = 'scratch operand']
  #allocation3 [shape = 'f32[2,4,128,32]{3,2,1,0:T(8,128)}', space=vmem, size = 0x80000, scoped, tag = 'scratch operand']
  #allocation4 [shape = 'f32[2,4,128,32]{3,2,1,0:T(8,128)}', space=vmem, size = 0x80000, scoped, tag = 'scratch operand']
  #allocation5 [shape = 'f32[128,128]{1,0:T(8,128)}', space=vmem, size = 0x10000, scoped, tag = 'scratch operand']
  #allocation6 [shape = 'f32[4,128,1]{2,1,0:T(8,128)}', space=vmem, size = 0x40000, scoped, tag = 'scratch operand']
  #allocation7 [shape = 'f32[4,128,1]{2,1,0:T(8,128)}', space=vmem, size = 0x40000, scoped, tag = 'scratch operand']
  #allocation8 [shape = 'f32[4,128,32]{2,1,0:T(8,128)}', space=vmem, size = 0x40000, scoped, tag = 'scratch operand']
  %s0 = inlined_call_operand.hbm [shape: f32[2,256,128], index: 0, kind: input, shape index: {}]
  %s1 = inlined_call_operand.vmem [shape: f32[1,128], index: 1, kind: input, shape index: {}]
  %s2 = inlined_call_operand.vmem [shape: f32[1,128], index: 2, kind: input, shape index: {}]
  %s3 = inlined_call_operand.hbm [shape: f32[128,128], index: 3, kind: input, shape index: {}]
  %s4 = inlined_call_operand.vmem [shape: f32[1,128], index: 4, kind: input, shape index: {}]
  %s5 = inlined_call_operand.hbm [shape: f32[128,128], index: 5, kind: input, shape index: {}]
  %s6 = inlined_call_operand.vmem [shape: f32[1,128], index: 6, kind: input, shape index: {}]
  %s7 = inlined_call_operand.hbm [shape: f32[128,128], index: 7, kind: input, shape index: {}]
  %s8 = inlined_call_operand.vmem [shape: f32[1,128], index: 8, kind: input, shape index: {}]
  %s9 = inlined_call_operand.hbm [shape: f32[128,128], index: 9, kind: input, shape index: {}]
  %s10 = inlined_call_operand.vmem [shape: f32[1,128], index: 10, kind: input, shape index: {}]
  %s11 = inlined_call_operand.vmem [shape: f32[1,128], index: 11, kind: input, shape index: {}]
  %s12 = inlined_call_operand.vmem [shape: f32[1,128], index: 12, kind: input, shape index: {}]
  %s13 = inlined_call_operand.hbm [shape: f32[128,512], index: 13, kind: input, shape index: {}]
  %s14 = inlined_call_operand.vmem [shape: f32[1,512], index: 14, kind: input, shape index: {}]
  %s15 = inlined_call_operand.hbm [shape: f32[512,128], index: 15, kind: input, shape index: {}]
  %s16 = inlined_call_operand.vmem [shape: f32[1,128], index: 16, kind: input, shape index: {}]
  %s17 = inlined_call_operand.hbm [shape: f32[2,256,128], index: 17, kind: output, shape index: {}]
  %s18 = sld [smem:[#allocation0]]
  $region136: #{tpu_custom_call.1} parent=0
    _
  %s20 = ssub.s32 1, %s18
  %s21 = scalar_select 0, %s20, %s18
  $region1: #{tpu_custom_call.1} parent=0
    #allocation9 [shape = 'u8[131072]{0}', space=vmem, size = 0x20000, scoped, tag = 'input window, operand 0']
    #allocation10 [shape = 's32[2]{0}', space=sflag, size = 0x8, scoped, tag = 'scoped memory for tpu_custom_call.1']
    #allocation11 [shape = 's32[2]{0}', space=sflag, size = 0x8, scoped, tag = 'scoped memory for tpu_custom_call.1']
    #allocation12 [shape = 'u8[65536]{0}', space=vmem, size = 0x10000, scoped, tag = 'input window, operand 3, single buffered']
    #allocation13 [shape = 's32[1]{0}', space=sflag, size = 0x4, scoped, tag = 'scoped memory for tpu_custom_call.1']
    #allocation14 [shape = 'u8[65536]{0}', space=vmem, size = 0x10000, scoped, tag = 'input window, operand 5, single buffered']
    #allocation15 [shape = 'u8[65536]{0}', space=vmem, size = 0x10000, scoped, tag = 'input window, operand 7, single buffered']
    #allocation16 [shape = 's32[1]{0}', space=sflag, size = 0x4, scoped, tag = 'scoped memory for tpu_custom_call.1']
    #allocation17 [shape = 'u8[65536]{0}', space=vmem, size = 0x10000, scoped, tag = 'input window, operand 9, single buffered']
    #allocation18 [shape = 'u8[262144]{0}', space=vmem, size = 0x40000, scoped, tag = 'input window, operand 13, single buffered']
    #allocation19 [shape = 's32[1]{0}', space=sflag, size = 0x4, scoped, tag = 'scoped memory for tpu_custom_call.1']
    #allocation20 [shape = 'u8[262144]{0}', space=vmem, size = 0x40000, scoped, tag = 'input window, operand 15, single buffered']
    #allocation21 [shape = 'u8[131072]{0}', space=vmem, size = 0x20000, scoped, tag = 'output window, operand 0']
    %22 = vsyncpa [#allocation10], 0
    %s23 = scalar_lea.sflag [#allocation10], 1
    %24 = vsyncpa %s23, 0
    %25 = vsyncpa [#allocation13], 0
    %26 = vsyncpa [#allocation16], 0
    %27 = vsyncpa [#allocation19], 0
    %28 = vsyncpa [#allocation11], 0
    %s29 = scalar_lea.sflag [#allocation11], 1
    %30 = vsyncpa %s29, 0
    loop: start=0, step=1, limit=6
    $region2: #{tpu_custom_call.1} parent=1 // loop_pre_header
      _
    $region3: #{tpu_custom_call.1} parent=1 // loop_header
      %s32 = sphi 0, %s36
      %p33 = scmp.ge.s32.totalorder %s32, 6
      %s39 = sphi 0, %s51
      %s40 = sphi 0, %s47
      %s41 = sphi 0, %s39
      %s42 = sphi 0, %s40
      %s43 = sphi 0, %s41
      %s44 = sphi 0, %s42
      %s56 = sphi 0, %s58
      %s59 = sphi 0, %s56
      %s60 = sphi 0, %s59
      %s76 = sphi 0, %s60
      %s80 = sphi 0, %s80
      %s82 = sphi 0, %s80
      %s83 = sphi 0, %s82
      %s97 = sphi 0, %s83
      %s101 = sphi 0, %s101
      %s103 = sphi 0, %s101
      %s104 = sphi 0, %s103
      %s118 = sphi 0, %s104
      %s122 = sphi 0, %s122
      %s124 = sphi 0, %s122
      %s125 = sphi 0, %s124
      %s139 = sphi 0, %s125
      %s143 = sphi 0, %s143
      %s145 = sphi 0, %s143
      %s146 = sphi 0, %s145
      %s160 = sphi 0, %s146
      %s164 = sphi 0, %s164
      %s166 = sphi 0, %s164
      %s167 = sphi 0, %s166
      %s181 = sphi 0, %s167
      %s185 = sphi 0, %s185
      %s187 = sphi 0, %s185
      %s188 = sphi 0, %s187
      %s202 = sphi 0, %s188
      %s206 = sphi 0, %s206
      %s208 = sphi 0, %s206
      %s209 = sphi 0, %s208
      %s223 = sphi 0, %s209
      %s227 = sphi 0, %s227
      %s229 = sphi 0, %s227
      %s230 = sphi 0, %s229
      %s244 = sphi 0, %s230
      %s248 = sphi 0, %s248
      %s250 = sphi 0, %s248
      %s251 = sphi 0, %s250
      %s265 = sphi 0, %s251
      %s269 = sphi 0, %s269
      %s271 = sphi 0, %s269
      %s272 = sphi 0, %s271
      %s286 = sphi 0, %s272
      %s290 = sphi 0, %s290
      %s292 = sphi 0, %s290
      %s293 = sphi 0, %s292
      %s307 = sphi 0, %s293
      %s311 = sphi 0, %s311
      %s313 = sphi 0, %s311
      %s314 = sphi 0, %s313
      %s328 = sphi 0, %s314
      %s332 = sphi 0, %s332
      %s334 = sphi 0, %s332
      %s335 = sphi 0, %s334
      %s349 = sphi 0, %s335
      %s353 = sphi 0, %s353
      %s355 = sphi 0, %s353
      %s356 = sphi 0, %s355
      %s370 = sphi 0, %s356
      %s374 = sphi 0, %s374
      %s376 = sphi 0, %s374
      %s377 = sphi 0, %s376
      %s391 = sphi 0, %s377
      %s395 = sphi 0, %s395
      %s397 = sphi 0, %s395
      %s398 = sphi 0, %s397
      %s412 = sphi 0, %s398
      %s420 = sphi 0, %s422
      %s423 = sphi 0, %s420
      %s424 = sphi 0, %s423
      %s440 = sphi 0, %s424
    $region4: #{tpu_custom_call.1} parent=1 // loop_header_branch
      %35 = sbr.rel (%p33) target = $region8
    $region5: #{tpu_custom_call.1} parent=1 // loop_body
      %s37 = ssub.s32 %s32, 1
      %s38 = ssub.s32 %s32, 2
      %s45 = sadd.s32 1, %s40
      %p46 = scmp.ge.s32.totalorder %s45, 2
      %s47 = scalar_select %p46, 0, %s45
      %s48 = sadd.s32 1, %s39
      %s49 = scalar_select %p46, %s48, %s39
      %p50 = scmp.ge.s32.totalorder %s49, 2
      %s51 = scalar_select %p50, 0, %s49
      %s52 = ssub.s32 %s39, %s51
      %s53 = ssub.s32 %s40, %s47
      %s54 = sor.u32 %s52, %s53
      %p55 = scmp.eq.s32.totalorder %s54, 0
      %s57 = sadd.s32 %s56, 1
      %s58 = scalar_select %p55, %s56, %s57
      %p61 = pneg %p55
      %p62 = scmp.eq.s32.totalorder %s32, 3
      %p63 = por %p61, %p62
      %p64 = scmp.ne.s32.totalorder %s56, %s59
      %p65 = scmp.eq.s32.totalorder %s32, 0
      %p66 = por %p64, %p65
      %p67 = scmp.ne.s32.totalorder %s56, %s59
      %p68 = scmp.eq.s32.totalorder %s37, 3
      %p69 = por %p67, %p68
      %p70 = scmp.ne.s32.totalorder %s59, %s60
      %p71 = scmp.eq.s32.totalorder %s37, 0
      %p72 = por %p70, %p71
      %p73 = scmp.ne.s32.totalorder %s59, %s60
      %p74 = scmp.eq.s32.totalorder %s38, 3
      %p75 = por %p73, %p74
      %p77 = scmp.ne.s32.totalorder %s60, %s76
      %p78 = scmp.eq.s32.totalorder %s38, 0
      %p79 = por %p77, %p78
      %s81 = sadd.s32 %s80, 1
      %p84 = scmp.eq.s32.totalorder %s32, 3
      %p85 = scmp.ne.s32.totalorder %s80, %s82
      %p86 = scmp.eq.s32.totalorder %s32, 0
      %p87 = por %p85, %p86
      %p88 = scmp.ne.s32.totalorder %s80, %s82
      %p89 = scmp.eq.s32.totalorder %s37, 3
      %p90 = por %p88, %p89
      %p91 = scmp.ne.s32.totalorder %s82, %s83
      %p92 = scmp.eq.s32.totalorder %s37, 0
      %p93 = por %p91, %p92
      %p94 = scmp.ne.s32.totalorder %s82, %s83
      %p95 = scmp.eq.s32.totalorder %s38, 3
      %p96 = por %p94, %p95
      %p98 = scmp.ne.s32.totalorder %s83, %s97
      %p99 = scmp.eq.s32.totalorder %s38, 0
      %p100 = por %p98, %p99
      %s102 = sadd.s32 %s101, 1
      %p105 = scmp.eq.s32.totalorder %s32, 3
      %p106 = scmp.ne.s32.totalorder %s101, %s103
      %p107 = scmp.eq.s32.totalorder %s32, 0
      %p108 = por %p106, %p107
      %p109 = scmp.ne.s32.totalorder %s101, %s103
      %p110 = scmp.eq.s32.totalorder %s37, 3
      %p111 = por %p109, %p110
      %p112 = scmp.ne.s32.totalorder %s103, %s104
      %p113 = scmp.eq.s32.totalorder %s37, 0
      %p114 = por %p112, %p113
      %p115 = scmp.ne.s32.totalorder %s103, %s104
      %p116 = scmp.eq.s32.totalorder %s38, 3
      %p117 = por %p115, %p116
      %p119 = scmp.ne.s32.totalorder %s104, %s118
      %p120 = scmp.eq.s32.totalorder %s38, 0
      %p121 = por %p119, %p120
      %s123 = sadd.s32 %s122, 1
      %p126 = scmp.eq.s32.totalorder %s32, 3
      %p127 = scmp.ne.s32.totalorder %s122, %s124
      %p128 = scmp.eq.s32.totalorder %s32, 0
      %p129 = por %p127, %p128
      %p130 = scmp.ne.s32.totalorder %s122, %s124
      %p131 = scmp.eq.s32.totalorder %s37, 3
      %p132 = por %p130, %p131
      %p133 = scmp.ne.s32.totalorder %s124, %s125
      %p134 = scmp.eq.s32.totalorder %s37, 0
      %p135 = por %p133, %p134
      %p136 = scmp.ne.s32.totalorder %s124, %s125
      %p137 = scmp.eq.s32.totalorder %s38, 3
      %p138 = por %p136, %p137
      %p140 = scmp.ne.s32.totalorder %s125, %s139
      %p141 = scmp.eq.s32.totalorder %s38, 0
      %p142 = por %p140, %p141
      %s144 = sadd.s32 %s143, 1
      %p147 = scmp.eq.s32.totalorder %s32, 3
      %p148 = scmp.ne.s32.totalorder %s143, %s145
      %p149 = scmp.eq.s32.totalorder %s32, 0
      %p150 = por %p148, %p149
      %p151 = scmp.ne.s32.totalorder %s143, %s145
      %p152 = scmp.eq.s32.totalorder %s37, 3
      %p153 = por %p151, %p152
      %p154 = scmp.ne.s32.totalorder %s145, %s146
      %p155 = scmp.eq.s32.totalorder %s37, 0
      %p156 = por %p154, %p155
      %p157 = scmp.ne.s32.totalorder %s145, %s146
      %p158 = scmp.eq.s32.totalorder %s38, 3
      %p159 = por %p157, %p158
      %p161 = scmp.ne.s32.totalorder %s146, %s160
      %p162 = scmp.eq.s32.totalorder %s38, 0
      %p163 = por %p161, %p162
      %s165 = sadd.s32 %s164, 1
      %p168 = scmp.eq.s32.totalorder %s32, 3
      %p169 = scmp.ne.s32.totalorder %s164, %s166
      %p170 = scmp.eq.s32.totalorder %s32, 0
      %p171 = por %p169, %p170
      %p172 = scmp.ne.s32.totalorder %s164, %s166
      %p173 = scmp.eq.s32.totalorder %s37, 3
      %p174 = por %p172, %p173
      %p175 = scmp.ne.s32.totalorder %s166, %s167
      %p176 = scmp.eq.s32.totalorder %s37, 0
      %p177 = por %p175, %p176
      %p178 = scmp.ne.s32.totalorder %s166, %s167
      %p179 = scmp.eq.s32.totalorder %s38, 3
      %p180 = por %p178, %p179
      %p182 = scmp.ne.s32.totalorder %s167, %s181
      %p183 = scmp.eq.s32.totalorder %s38, 0
      %p184 = por %p182, %p183
      %s186 = sadd.s32 %s185, 1
      %p189 = scmp.eq.s32.totalorder %s32, 3
      %p190 = scmp.ne.s32.totalorder %s185, %s187
      %p191 = scmp.eq.s32.totalorder %s32, 0
      %p192 = por %p190, %p191
      %p193 = scmp.ne.s32.totalorder %s185, %s187
      %p194 = scmp.eq.s32.totalorder %s37, 3
      %p195 = por %p193, %p194
      %p196 = scmp.ne.s32.totalorder %s187, %s188
      %p197 = scmp.eq.s32.totalorder %s37, 0
      %p198 = por %p196, %p197
      %p199 = scmp.ne.s32.totalorder %s187, %s188
      %p200 = scmp.eq.s32.totalorder %s38, 3
      %p201 = por %p199, %p200
      %p203 = scmp.ne.s32.totalorder %s188, %s202
      %p204 = scmp.eq.s32.totalorder %s38, 0
      %p205 = por %p203, %p204
      %s207 = sadd.s32 %s206, 1
      %p210 = scmp.eq.s32.totalorder %s32, 3
      %p211 = scmp.ne.s32.totalorder %s206, %s208
      %p212 = scmp.eq.s32.totalorder %s32, 0
      %p213 = por %p211, %p212
      %p214 = scmp.ne.s32.totalorder %s206, %s208
      %p215 = scmp.eq.s32.totalorder %s37, 3
      %p216 = por %p214, %p215
      %p217 = scmp.ne.s32.totalorder %s208, %s209
      %p218 = scmp.eq.s32.totalorder %s37, 0
      %p219 = por %p217, %p218
      %p220 = scmp.ne.s32.totalorder %s208, %s209
      %p221 = scmp.eq.s32.totalorder %s38, 3
      %p222 = por %p220, %p221
      %p224 = scmp.ne.s32.totalorder %s209, %s223
      %p225 = scmp.eq.s32.totalorder %s38, 0
      %p226 = por %p224, %p225
      %s228 = sadd.s32 %s227, 1
      %p231 = scmp.eq.s32.totalorder %s32, 3
      %p232 = scmp.ne.s32.totalorder %s227, %s229
      %p233 = scmp.eq.s32.totalorder %s32, 0
      %p234 = por %p232, %p233
      %p235 = scmp.ne.s32.totalorder %s227, %s229
      %p236 = scmp.eq.s32.totalorder %s37, 3
      %p237 = por %p235, %p236
      %p238 = scmp.ne.s32.totalorder %s229, %s230
      %p239 = scmp.eq.s32.totalorder %s37, 0
      %p240 = por %p238, %p239
      %p241 = scmp.ne.s32.totalorder %s229, %s230
      %p242 = scmp.eq.s32.totalorder %s38, 3
      %p243 = por %p241, %p242
      %p245 = scmp.ne.s32.totalorder %s230, %s244
      %p246 = scmp.eq.s32.totalorder %s38, 0
      %p247 = por %p245, %p246
      %s249 = sadd.s32 %s248, 1
      %p252 = scmp.eq.s32.totalorder %s32, 3
      %p253 = scmp.ne.s32.totalorder %s248, %s250
      %p254 = scmp.eq.s32.totalorder %s32, 0
      %p255 = por %p253, %p254
      %p256 = scmp.ne.s32.totalorder %s248, %s250
      %p257 = scmp.eq.s32.totalorder %s37, 3
      %p258 = por %p256, %p257
      %p259 = scmp.ne.s32.totalorder %s250, %s251
      %p260 = scmp.eq.s32.totalorder %s37, 0
      %p261 = por %p259, %p260
      %p262 = scmp.ne.s32.totalorder %s250, %s251
      %p263 = scmp.eq.s32.totalorder %s38, 3
      %p264 = por %p262, %p263
      %p266 = scmp.ne.s32.totalorder %s251, %s265
      %p267 = scmp.eq.s32.totalorder %s38, 0
      %p268 = por %p266, %p267
      %s270 = sadd.s32 %s269, 1
      %p273 = scmp.eq.s32.totalorder %s32, 3
      %p274 = scmp.ne.s32.totalorder %s269, %s271
      %p275 = scmp.eq.s32.totalorder %s32, 0
      %p276 = por %p274, %p275
      %p277 = scmp.ne.s32.totalorder %s269, %s271
      %p278 = scmp.eq.s32.totalorder %s37, 3
      %p279 = por %p277, %p278
      %p280 = scmp.ne.s32.totalorder %s271, %s272
      %p281 = scmp.eq.s32.totalorder %s37, 0
      %p282 = por %p280, %p281
      %p283 = scmp.ne.s32.totalorder %s271, %s272
      %p284 = scmp.eq.s32.totalorder %s38, 3
      %p285 = por %p283, %p284
      %p287 = scmp.ne.s32.totalorder %s272, %s286
      %p288 = scmp.eq.s32.totalorder %s38, 0
      %p289 = por %p287, %p288
      %s291 = sadd.s32 %s290, 1
      %p294 = scmp.eq.s32.totalorder %s32, 3
      %p295 = scmp.ne.s32.totalorder %s290, %s292
      %p296 = scmp.eq.s32.totalorder %s32, 0
      %p297 = por %p295, %p296
      %p298 = scmp.ne.s32.totalorder %s290, %s292
      %p299 = scmp.eq.s32.totalorder %s37, 3
      %p300 = por %p298, %p299
      %p301 = scmp.ne.s32.totalorder %s292, %s293
      %p302 = scmp.eq.s32.totalorder %s37, 0
      %p303 = por %p301, %p302
      %p304 = scmp.ne.s32.totalorder %s292, %s293
      %p305 = scmp.eq.s32.totalorder %s38, 3
      %p306 = por %p304, %p305
      %p308 = scmp.ne.s32.totalorder %s293, %s307
      %p309 = scmp.eq.s32.totalorder %s38, 0
      %p310 = por %p308, %p309
      %s312 = sadd.s32 %s311, 1
      %p315 = scmp.eq.s32.totalorder %s32, 3
      %p316 = scmp.ne.s32.totalorder %s311, %s313
      %p317 = scmp.eq.s32.totalorder %s32, 0
      %p318 = por %p316, %p317
      %p319 = scmp.ne.s32.totalorder %s311, %s313
      %p320 = scmp.eq.s32.totalorder %s37, 3
      %p321 = por %p319, %p320
      %p322 = scmp.ne.s32.totalorder %s313, %s314
      %p323 = scmp.eq.s32.totalorder %s37, 0
      %p324 = por %p322, %p323
      %p325 = scmp.ne.s32.totalorder %s313, %s314
      %p326 = scmp.eq.s32.totalorder %s38, 3
      %p327 = por %p325, %p326
      %p329 = scmp.ne.s32.totalorder %s314, %s328
      %p330 = scmp.eq.s32.totalorder %s38, 0
      %p331 = por %p329, %p330
      %s333 = sadd.s32 %s332, 1
      %p336 = scmp.eq.s32.totalorder %s32, 3
      %p337 = scmp.ne.s32.totalorder %s332, %s334
      %p338 = scmp.eq.s32.totalorder %s32, 0
      %p339 = por %p337, %p338
      %p340 = scmp.ne.s32.totalorder %s332, %s334
      %p341 = scmp.eq.s32.totalorder %s37, 3
      %p342 = por %p340, %p341
      %p343 = scmp.ne.s32.totalorder %s334, %s335
      %p344 = scmp.eq.s32.totalorder %s37, 0
      %p345 = por %p343, %p344
      %p346 = scmp.ne.s32.totalorder %s334, %s335
      %p347 = scmp.eq.s32.totalorder %s38, 3
      %p348 = por %p346, %p347
      %p350 = scmp.ne.s32.totalorder %s335, %s349
      %p351 = scmp.eq.s32.totalorder %s38, 0
      %p352 = por %p350, %p351
      %s354 = sadd.s32 %s353, 1
      %p357 = scmp.eq.s32.totalorder %s32, 3
      %p358 = scmp.ne.s32.totalorder %s353, %s355
      %p359 = scmp.eq.s32.totalorder %s32, 0
      %p360 = por %p358, %p359
      %p361 = scmp.ne.s32.totalorder %s353, %s355
      %p362 = scmp.eq.s32.totalorder %s37, 3
      %p363 = por %p361, %p362
      %p364 = scmp.ne.s32.totalorder %s355, %s356
      %p365 = scmp.eq.s32.totalorder %s37, 0
      %p366 = por %p364, %p365
      %p367 = scmp.ne.s32.totalorder %s355, %s356
      %p368 = scmp.eq.s32.totalorder %s38, 3
      %p369 = por %p367, %p368
      %p371 = scmp.ne.s32.totalorder %s356, %s370
      %p372 = scmp.eq.s32.totalorder %s38, 0
      %p373 = por %p371, %p372
      %s375 = sadd.s32 %s374, 1
      %p378 = scmp.eq.s32.totalorder %s32, 3
      %p379 = scmp.ne.s32.totalorder %s374, %s376
      %p380 = scmp.eq.s32.totalorder %s32, 0
      %p381 = por %p379, %p380
      %p382 = scmp.ne.s32.totalorder %s374, %s376
      %p383 = scmp.eq.s32.totalorder %s37, 3
      %p384 = por %p382, %p383
      %p385 = scmp.ne.s32.totalorder %s376, %s377
      %p386 = scmp.eq.s32.totalorder %s37, 0
      %p387 = por %p385, %p386
      %p388 = scmp.ne.s32.totalorder %s376, %s377
      %p389 = scmp.eq.s32.totalorder %s38, 3
      %p390 = por %p388, %p389
      %p392 = scmp.ne.s32.totalorder %s377, %s391
      %p393 = scmp.eq.s32.totalorder %s38, 0
      %p394 = por %p392, %p393
      %s396 = sadd.s32 %s395, 1
      %p399 = scmp.eq.s32.totalorder %s32, 3
      %p400 = scmp.ne.s32.totalorder %s395, %s397
      %p401 = scmp.eq.s32.totalorder %s32, 0
      %p402 = por %p400, %p401
      %p403 = scmp.ne.s32.totalorder %s395, %s397
      %p404 = scmp.eq.s32.totalorder %s37, 3
      %p405 = por %p403, %p404
      %p406 = scmp.ne.s32.totalorder %s397, %s398
      %p407 = scmp.eq.s32.totalorder %s37, 0
      %p408 = por %p406, %p407
      %p409 = scmp.ne.s32.totalorder %s397, %s398
      %p410 = scmp.eq.s32.totalorder %s38, 3
      %p411 = por %p409, %p410
      %p413 = scmp.ne.s32.totalorder %s398, %s412
      %p414 = scmp.eq.s32.totalorder %s38, 0
      %p415 = por %p413, %p414
      %s416 = ssub.s32 %s39, %s51
      %s417 = ssub.s32 %s40, %s47
      %s418 = sor.u32 %s416, %s417
      %p419 = scmp.eq.s32.totalorder %s418, 0
      %s421 = sadd.s32 %s420, 1
      %s422 = scalar_select %p419, %s420, %s421
      %p425 = pneg %p419
      %p426 = scmp.eq.s32.totalorder %s32, 3
      %p427 = por %p425, %p426
      %p428 = scmp.ne.s32.totalorder %s420, %s423
      %p429 = scmp.eq.s32.totalorder %s32, 0
      %p430 = por %p428, %p429
      %p431 = scmp.ne.s32.totalorder %s420, %s423
      %p432 = scmp.eq.s32.totalorder %s37, 3
      %p433 = por %p431, %p432
      %p434 = scmp.ne.s32.totalorder %s423, %s424
      %p435 = scmp.eq.s32.totalorder %s37, 0
      %p436 = por %p434, %p435
      %p437 = scmp.ne.s32.totalorder %s423, %s424
      %p438 = scmp.eq.s32.totalorder %s38, 3
      %p439 = por %p437, %p438
      %p441 = scmp.ne.s32.totalorder %s424, %s440
      %p442 = scmp.eq.s32.totalorder %s38, 0
      %p443 = por %p441, %p442
      %p444 = scmp.le.s32.totalorder 1, %s32
      %p445 = scmp.lt.s32.totalorder %s32, 5
      %p446 = pnand %p444, %p445
      %p447 = pneg %p446
      // Predicated region
      $region9: #{tpu_custom_call.1} parent=5 // pred_check
        _
      $region10: #{tpu_custom_call.1} parent=5 // pred_check_branch
        %449 = sbr.rel (%p446) target = $region12
      $region11: #{tpu_custom_call.1} parent=5 // pred_region
        %s450 = ssub.s32 %s32, 1
        // Predicated region
        $region13: #{tpu_custom_call.1} parent=11 // pred_check
          %p451 = pneg %p93
        $region14: #{tpu_custom_call.1} parent=11 // pred_check_branch
          %453 = sbr.rel (%p451) target = $region16
        $region15: #{tpu_custom_call.1} parent=11 // pred_region
          _
        $region16: #{tpu_custom_call.1} parent=11 // pred_fallthru
          _
        // Predicated region
        $region17: #{tpu_custom_call.1} parent=11 // pred_check
          %p454 = pneg %p114
        $region18: #{tpu_custom_call.1} parent=11 // pred_check_branch
          %456 = sbr.rel (%p454) target = $region20
        $region19: #{tpu_custom_call.1} parent=11 // pred_region
          _
        $region20: #{tpu_custom_call.1} parent=11 // pred_fallthru
          _
        // Predicated region
        $region21: #{tpu_custom_call.1} parent=11 // pred_check
          %p457 = pneg %p135
        $region22: #{tpu_custom_call.1} parent=11 // pred_check_branch
          %459 = sbr.rel (%p457) target = $region24
        $region23: #{tpu_custom_call.1} parent=11 // pred_region
          %s461 = ssub.s32 2048, 2048
          %462 = vsyncadd [#allocation13], %s461
          %s463 = sshll.u32 [#allocation12], 4
          %s464 = int_to_ptr.vmem [resolvable:$true] %s463
          %469 = dma.hbm_to_vmem [thread:$0]  %s3, 2048, %s464, [#allocation13], 128, 128, 8
        $region24: #{tpu_custom_call.1} parent=11 // pred_fallthru
          _
        // Predicated region
        $region25: #{tpu_custom_call.1} parent=11 // pred_check
          %p470 = pneg %p156
        $region26: #{tpu_custom_call.1} parent=11 // pred_check_branch
          %472 = sbr.rel (%p470) target = $region28
        $region27: #{tpu_custom_call.1} parent=11 // pred_region
          _
        $region28: #{tpu_custom_call.1} parent=11 // pred_fallthru
          _
        // Predicated region
        $region29: #{tpu_custom_call.1} parent=11 // pred_check
          %p473 = pneg %p177
        $region30: #{tpu_custom_call.1} parent=11 // pred_check_branch
          %475 = sbr.rel (%p473) target = $region32
        $region31: #{tpu_custom_call.1} parent=11 // pred_region
          %s477 = ssub.s32 2048, 2048
          %478 = vsyncadd [#allocation13], %s477
          %s479 = sshll.u32 [#allocation14], 4
          %s480 = int_to_ptr.vmem [resolvable:$true] %s479
          %485 = dma.hbm_to_vmem [thread:$0]  %s5, 2048, %s480, [#allocation13], 128, 128, 8
        $region32: #{tpu_custom_call.1} parent=11 // pred_fallthru
          _
        // Predicated region
        $region33: #{tpu_custom_call.1} parent=11 // pred_check
          %p486 = pneg %p198
        $region34: #{tpu_custom_call.1} parent=11 // pred_check_branch
          %488 = sbr.rel (%p486) target = $region36
        $region35: #{tpu_custom_call.1} parent=11 // pred_region
          _
        $region36: #{tpu_custom_call.1} parent=11 // pred_fallthru
          _
        // Predicated region
        $region37: #{tpu_custom_call.1} parent=11 // pred_check
          %p489 = pneg %p219
        $region38: #{tpu_custom_call.1} parent=11 // pred_check_branch
          %491 = sbr.rel (%p489) target = $region40
        $region39: #{tpu_custom_call.1} parent=11 // pred_region
          %s493 = ssub.s32 2048, 2048
          %494 = vsyncadd [#allocation16], %s493
          %s495 = sshll.u32 [#allocation15], 4
          %s496 = int_to_ptr.vmem [resolvable:$true] %s495
          %501 = dma.hbm_to_vmem [thread:$0]  %s7, 2048, %s496, [#allocation16], 128, 128, 8
        $region40: #{tpu_custom_call.1} parent=11 // pred_fallthru
          _
        // Predicated region
        $region41: #{tpu_custom_call.1} parent=11 // pred_check
          %p502 = pneg %p240
        $region42: #{tpu_custom_call.1} parent=11 // pred_check_branch
          %504 = sbr.rel (%p502) target = $region44
        $region43: #{tpu_custom_call.1} parent=11 // pred_region
          _
        $region44: #{tpu_custom_call.1} parent=11 // pred_fallthru
          _
        // Predicated region
        $region45: #{tpu_custom_call.1} parent=11 // pred_check
          %p505 = pneg %p261
        $region46: #{tpu_custom_call.1} parent=11 // pred_check_branch
          %507 = sbr.rel (%p505) target = $region48
        $region47: #{tpu_custom_call.1} parent=11 // pred_region
          %s509 = ssub.s32 2048, 2048
          %510 = vsyncadd [#allocation16], %s509
          %s511 = sshll.u32 [#allocation17], 4
          %s512 = int_to_ptr.vmem [resolvable:$true] %s511
          %517 = dma.hbm_to_vmem [thread:$0]  %s9, 2048, %s512, [#allocation16], 128, 128, 8
        $region48: #{tpu_custom_call.1} parent=11 // pred_fallthru
          _
        // Predicated region
        $region49: #{tpu_custom_call.1} parent=11 // pred_check
          %p518 = pneg %p282
        $region50: #{tpu_custom_call.1} parent=11 // pred_check_branch
          %520 = sbr.rel (%p518) target = $region52
        $region51: #{tpu_custom_call.1} parent=11 // pred_region
          _
        $region52: #{tpu_custom_call.1} parent=11 // pred_fallthru
          _
        // Predicated region
        $region53: #{tpu_custom_call.1} parent=11 // pred_check
          %p521 = pneg %p303
        $region54: #{tpu_custom_call.1} parent=11 // pred_check_branch
          %523 = sbr.rel (%p521) target = $region56
        $region55: #{tpu_custom_call.1} parent=11 // pred_region
          _
        $region56: #{tpu_custom_call.1} parent=11 // pred_fallthru
          _
        // Predicated region
        $region57: #{tpu_custom_call.1} parent=11 // pred_check
          %p524 = pneg %p324
        $region58: #{tpu_custom_call.1} parent=11 // pred_check_branch
          %526 = sbr.rel (%p524) target = $region60
        $region59: #{tpu_custom_call.1} parent=11 // pred_region
          _
        $region60: #{tpu_custom_call.1} parent=11 // pred_fallthru
          _
        // Predicated region
        $region61: #{tpu_custom_call.1} parent=11 // pred_check
          %p527 = pneg %p345
        $region62: #{tpu_custom_call.1} parent=11 // pred_check_branch
          %529 = sbr.rel (%p527) target = $region64
        $region63: #{tpu_custom_call.1} parent=11 // pred_region
          %s531 = ssub.s32 8192, 8192
          %532 = vsyncadd [#allocation19], %s531
          %s533 = sshll.u32 [#allocation18], 4
          %s534 = int_to_ptr.vmem [resolvable:$true] %s533
          %539 = dma.hbm_to_vmem [thread:$0]  %s13, 8192, %s534, [#allocation19], 512, 512, 32
        $region64: #{tpu_custom_call.1} parent=11 // pred_fallthru
          _
        // Predicated region
        $region65: #{tpu_custom_call.1} parent=11 // pred_check
          %p540 = pneg %p366
        $region66: #{tpu_custom_call.1} parent=11 // pred_check_branch
          %542 = sbr.rel (%p540) target = $region68
        $region67: #{tpu_custom_call.1} parent=11 // pred_region
          _
        $region68: #{tpu_custom_call.1} parent=11 // pred_fallthru
          _
        // Predicated region
        $region69: #{tpu_custom_call.1} parent=11 // pred_check
          %p543 = pneg %p387
        $region70: #{tpu_custom_call.1} parent=11 // pred_check_branch
          %545 = sbr.rel (%p543) target = $region72
        $region71: #{tpu_custom_call.1} parent=11 // pred_region
          %s547 = ssub.s32 8192, 8192
          %548 = vsyncadd [#allocation19], %s547
          %s549 = sshll.u32 [#allocation20], 4
          %s550 = int_to_ptr.vmem [resolvable:$true] %s549
          %555 = dma.hbm_to_vmem [thread:$0]  %s15, 8192, %s550, [#allocation19], 128, 128, 8
        $region72: #{tpu_custom_call.1} parent=11 // pred_fallthru
          _
        // Predicated region
        $region73: #{tpu_custom_call.1} parent=11 // pred_check
          %p556 = pneg %p408
        $region74: #{tpu_custom_call.1} parent=11 // pred_check_branch
          %558 = sbr.rel (%p556) target = $region76
        $region75: #{tpu_custom_call.1} parent=11 // pred_region
          _
        $region76: #{tpu_custom_call.1} parent=11 // pred_fallthru
          _
      $region12: #{tpu_custom_call.1} parent=5 // pred_fallthru
        _
      %p559 = scmp.lt.s32.totalorder %s32, 4
      // Predicated region
      $region77: #{tpu_custom_call.1} parent=5 // pred_check
        %p560 = pneg %p559
      $region78: #{tpu_custom_call.1} parent=5 // pred_check_branch
        %562 = sbr.rel (%p560) target = $region80
      $region79: #{tpu_custom_call.1} parent=5 // pred_region
        // Predicated region
        $region81: #{tpu_custom_call.1} parent=79 // pred_check
          %p563 = pneg %p66
        $region82: #{tpu_custom_call.1} parent=79 // pred_check_branch
          %565 = sbr.rel (%p563) target = $region84
        $region83: #{tpu_custom_call.1} parent=79 // pred_region
          %s566 = sand.u32 %s56, 1
          %s567 = scalar_lea.sflag [#allocation10], %s566
          %s568 = sand.u32 %s56, 1
          %s569 = smul.addr %s568, 128
          %s570 = scalar_lea.vmem [#allocation9], %s569
          %s571 = smul.u32 16, %s40
          %s573 = ssub.s32 2048, 2048
          %574 = vsyncadd %s567, %s573
          %s575 = smul.addr %s39, 32
          %s576 = sadd.s32 %s571, %s575
          %s577 = smul.addr %s576, 128
          %s578 = scalar_lea.hbm %s0, %s577
          %s579 = sshll.u32 %s570, 4
          %s580 = int_to_ptr.vmem [resolvable:$true] %s579
          %585 = dma.hbm_to_vmem [thread:$0]  %s578, 2048, %s580, %s567, 128, 128, 8
        $region84: #{tpu_custom_call.1} parent=79 // pred_fallthru
          _
      $region80: #{tpu_custom_call.1} parent=5 // pred_fallthru
        _
      %p586 = scmp.le.s32.totalorder 1, %s32
      %p587 = scmp.lt.s32.totalorder %s32, 5
      %p588 = pnand %p586, %p587
      %p589 = pneg %p588
      // Predicated region
      $region85: #{tpu_custom_call.1} parent=5 // pred_check
        _
      $region86: #{tpu_custom_call.1} parent=5 // pred_check_branch
        %591 = sbr.rel (%p588) target = $region88
      $region87: #{tpu_custom_call.1} parent=5 // pred_region
        %s592 = ssub.s32 %s32, 1
        %s593 = sand.u32 %s59, 1
        %s594 = scalar_lea.sflag [#allocation10], %s593
        %s595 = sand.u32 %s59, 1
        %s596 = smul.addr %s595, 128
        %s597 = scalar_lea.vmem [#allocation9], %s596
        // Predicated region
        $region89: #{tpu_custom_call.1} parent=87 // pred_check
          %p598 = pneg %p72
        $region90: #{tpu_custom_call.1} parent=87 // pred_check_branch
          %600 = sbr.rel (%p598) target = $region92
        $region91: #{tpu_custom_call.1} parent=87 // pred_region
          %601 = dma.done %s594, 2048
        $region92: #{tpu_custom_call.1} parent=87 // pred_fallthru
          _
        // Predicated region
        $region93: #{tpu_custom_call.1} parent=87 // pred_check
          %p602 = pneg %p135
        $region94: #{tpu_custom_call.1} parent=87 // pred_check_branch
          %604 = sbr.rel (%p602) target = $region96
        $region95: #{tpu_custom_call.1} parent=87 // pred_region
          %605 = dma.done [#allocation13], 2048
        $region96: #{tpu_custom_call.1} parent=87 // pred_fallthru
          _
        // Predicated region
        $region97: #{tpu_custom_call.1} parent=87 // pred_check
          %p606 = pneg %p177
        $region98: #{tpu_custom_call.1} parent=87 // pred_check_branch
          %608 = sbr.rel (%p606) target = $region100
        $region99: #{tpu_custom_call.1} parent=87 // pred_region
          %609 = dma.done [#allocation13], 2048
        $region100: #{tpu_custom_call.1} parent=87 // pred_fallthru
          _
        // Predicated region
        $region101: #{tpu_custom_call.1} parent=87 // pred_check
          %p610 = pneg %p219
        $region102: #{tpu_custom_call.1} parent=87 // pred_check_branch
          %612 = sbr.rel (%p610) target = $region104
        $region103: #{tpu_custom_call.1} parent=87 // pred_region
          %613 = dma.done [#allocation16], 2048
        $region104: #{tpu_custom_call.1} parent=87 // pred_fallthru
          _
        // Predicated region
        $region105: #{tpu_custom_call.1} parent=87 // pred_check
          %p614 = pneg %p261
        $region106: #{tpu_custom_call.1} parent=87 // pred_check_branch
          %616 = sbr.rel (%p614) target = $region108
        $region107: #{tpu_custom_call.1} parent=87 // pred_region
          %617 = dma.done [#allocation16], 2048
        $region108: #{tpu_custom_call.1} parent=87 // pred_fallthru
          _
        // Predicated region
        $region109: #{tpu_custom_call.1} parent=87 // pred_check
          %p618 = pneg %p345
        $region110: #{tpu_custom_call.1} parent=87 // pred_check_branch
          %620 = sbr.rel (%p618) target = $region112
        $region111: #{tpu_custom_call.1} parent=87 // pred_region
          %621 = dma.done [#allocation19], 8192
        $region112: #{tpu_custom_call.1} parent=87 // pred_fallthru
          _
        // Predicated region
        $region113: #{tpu_custom_call.1} parent=87 // pred_check
          %p622 = pneg %p387
        $region114: #{tpu_custom_call.1} parent=87 // pred_check_branch
          %624 = sbr.rel (%p622) target = $region116
        $region115: #{tpu_custom_call.1} parent=87 // pred_region
          %625 = dma.done [#allocation19], 8192
        $region116: #{tpu_custom_call.1} parent=87 // pred_fallthru
          _
        %s626 = sand.u32 %s59, 1
        %s627 = scalar_lea.sflag [#allocation10], %s626
        %s628 = sand.u32 %s59, 1
        %s629 = smul.addr %s628, 128
        %s630 = scalar_lea.vmem [#allocation9], %s629
        %p631 = pneg %p72
        %p632 = pneg %p69
        %p633 = pneg %p93
        %p634 = pneg %p90
        %p635 = pneg %p114
        %p636 = pneg %p111
        %p637 = pneg %p135
        %p638 = pneg %p132
        %p639 = pneg %p156
        %p640 = pneg %p153
        %p641 = pneg %p177
        %p642 = pneg %p174
        %p643 = pneg %p198
        %p644 = pneg %p195
        %p645 = pneg %p219
        %p646 = pneg %p216
        %p647 = pneg %p240
        %p648 = pneg %p237
        %p649 = pneg %p261
        %p650 = pneg %p258
        %p651 = pneg %p282
        %p652 = pneg %p279
        %p653 = pneg %p303
        %p654 = pneg %p300
        %p655 = pneg %p324
        %p656 = pneg %p321
        %p657 = pneg %p345
        %p658 = pneg %p342
        %p659 = pneg %p366
        %p660 = pneg %p363
        %p661 = pneg %p387
        %p662 = pneg %p384
        %p663 = pneg %p408
        %p664 = pneg %p405
        %p665 = pneg %p436
        %p666 = pneg %p433
        %s667 = sand.u32 %s423, 1
        %s668 = scalar_lea.sflag [#allocation11], %s667
        %s669 = sand.u32 %s423, 1
        %s670 = smul.addr %s669, 128
        %s671 = scalar_lea.vmem [#allocation21], %s670
        %s672 = smul.u32 16, %s42
        %s673 = smul.u32 16, %s42
        %v674 = vld [vmem:[%s597] sm:$0xff]
        %v675 = vld [vmem:[%s597 + $0x8] sm:$0xff]
        %v676 = vld [vmem:[%s597 + $0x10] sm:$0xff]
        %v677 = vld [vmem:[%s597 + $0x18] sm:$0xff]
        %v678 = vld [vmem:[%s597 + $0x20] sm:$0xff]
        %v679 = vld [vmem:[%s597 + $0x28] sm:$0xff]
        %v680 = vld [vmem:[%s597 + $0x30] sm:$0xff]
        %v681 = vld [vmem:[%s597 + $0x38] sm:$0xff]
        %v682 = vld [vmem:[%s597 + $0x40] sm:$0xff]
        %v683 = vld [vmem:[%s597 + $0x48] sm:$0xff]
        %v684 = vld [vmem:[%s597 + $0x50] sm:$0xff]
        %v685 = vld [vmem:[%s597 + $0x58] sm:$0xff]
        %v686 = vld [vmem:[%s597 + $0x60] sm:$0xff]
        %v687 = vld [vmem:[%s597 + $0x68] sm:$0xff]
        %v688 = vld [vmem:[%s597 + $0x70] sm:$0xff]
        %v689 = vld [vmem:[%s597 + $0x78] sm:$0xff]
        %v690 = vld [vmem:[%s1] sm:$0x1]
        %v691 = vld [vmem:[%s2] sm:$0x1]
        %692 = vadd.xlane.f32.xlu0 %v674
        %v693 = vpop.xlane.xlu0 %692
        %694 = vadd.xlane.f32.xlu0 %v675
        %v695 = vpop.xlane.xlu0 %694
        %696 = vadd.xlane.f32.xlu0 %v676
        %v697 = vpop.xlane.xlu0 %696
        %698 = vadd.xlane.f32.xlu0 %v677
        %v699 = vpop.xlane.xlu0 %698
        %700 = vadd.xlane.f32.xlu0 %v678
        %v701 = vpop.xlane.xlu0 %700
        %702 = vadd.xlane.f32.xlu0 %v679
        %v703 = vpop.xlane.xlu0 %702
        %704 = vadd.xlane.f32.xlu0 %v680
        %v705 = vpop.xlane.xlu0 %704
        %706 = vadd.xlane.f32.xlu0 %v681
        %v707 = vpop.xlane.xlu0 %706
        %708 = vadd.xlane.f32.xlu0 %v682
        %v709 = vpop.xlane.xlu0 %708
        %710 = vadd.xlane.f32.xlu0 %v683
        %v711 = vpop.xlane.xlu0 %710
        %712 = vadd.xlane.f32.xlu0 %v684
        %v713 = vpop.xlane.xlu0 %712
        %714 = vadd.xlane.f32.xlu0 %v685
        %v715 = vpop.xlane.xlu0 %714
        %716 = vadd.xlane.f32.xlu0 %v686
        %v717 = vpop.xlane.xlu0 %716
        %718 = vadd.xlane.f32.xlu0 %v687
        %v719 = vpop.xlane.xlu0 %718
        %720 = vadd.xlane.f32.xlu0 %v688
        %v721 = vpop.xlane.xlu0 %720
        %722 = vadd.xlane.f32.xlu0 %v689
        %v723 = vpop.xlane.xlu0 %722
        %v724 = vrcp.pop 128.0
        %v725 = vmul.f32 %v693, %v724
        %v726 = vmul.f32 %v695, %v724
        %v727 = vmul.f32 %v697, %v724
        %v728 = vmul.f32 %v699, %v724
        %v729 = vmul.f32 %v701, %v724
        %v730 = vmul.f32 %v703, %v724
        %v731 = vmul.f32 %v705, %v724
        %v732 = vmul.f32 %v707, %v724
        %v733 = vmul.f32 %v709, %v724
        %v734 = vmul.f32 %v711, %v724
        %v735 = vmul.f32 %v713, %v724
        %v736 = vmul.f32 %v715, %v724
        %v737 = vmul.f32 %v717, %v724
        %v738 = vmul.f32 %v719, %v724
        %v739 = vmul.f32 %v721, %v724
        %v740 = vmul.f32 %v723, %v724
        %v741 = vsub.f32 %v674, %v725
        %v742 = vsub.f32 %v675, %v726
        %v743 = vsub.f32 %v676, %v727
        %v744 = vsub.f32 %v677, %v728
        %v745 = vsub.f32 %v678, %v729
        %v746 = vsub.f32 %v679, %v730
        %v747 = vsub.f32 %v680, %v731
        %v748 = vsub.f32 %v681, %v732
        %v749 = vsub.f32 %v682, %v733
        %v750 = vsub.f32 %v683, %v734
        %v751 = vsub.f32 %v684, %v735
        %v752 = vsub.f32 %v685, %v736
        %v753 = vsub.f32 %v686, %v737
        %v754 = vsub.f32 %v687, %v738
        %v755 = vsub.f32 %v688, %v739
        %v756 = vsub.f32 %v689, %v740
        %v757 = vmul.f32 %v741, %v741
        %v758 = vmul.f32 %v742, %v742
        %v759 = vmul.f32 %v743, %v743
        %v760 = vmul.f32 %v744, %v744
        %v761 = vmul.f32 %v745, %v745
        %v762 = vmul.f32 %v746, %v746
        %v763 = vmul.f32 %v747, %v747
        %v764 = vmul.f32 %v748, %v748
        %v765 = vmul.f32 %v749, %v749
        %v766 = vmul.f32 %v750, %v750
        %v767 = vmul.f32 %v751, %v751
        %v768 = vmul.f32 %v752, %v752
        %v769 = vmul.f32 %v753, %v753
        %v770 = vmul.f32 %v754, %v754
        %v771 = vmul.f32 %v755, %v755
        %v772 = vmul.f32 %v756, %v756
        %773 = vadd.xlane.f32.xlu0 %v757
        %v774 = vpop.xlane.xlu0 %773
        %775 = vadd.xlane.f32.xlu0 %v758
        %v776 = vpop.xlane.xlu0 %775
        %777 = vadd.xlane.f32.xlu0 %v759
        %v778 = vpop.xlane.xlu0 %777
        %779 = vadd.xlane.f32.xlu0 %v760
        %v780 = vpop.xlane.xlu0 %779
        %781 = vadd.xlane.f32.xlu0 %v761
        %v782 = vpop.xlane.xlu0 %781
        %783 = vadd.xlane.f32.xlu0 %v762
        %v784 = vpop.xlane.xlu0 %783
        %785 = vadd.xlane.f32.xlu0 %v763
        %v786 = vpop.xlane.xlu0 %785
        %787 = vadd.xlane.f32.xlu0 %v764
        %v788 = vpop.xlane.xlu0 %787
        %789 = vadd.xlane.f32.xlu0 %v765
        %v790 = vpop.xlane.xlu0 %789
        %791 = vadd.xlane.f32.xlu0 %v766
        %v792 = vpop.xlane.xlu0 %791
        %793 = vadd.xlane.f32.xlu0 %v767
        %v794 = vpop.xlane.xlu0 %793
        %795 = vadd.xlane.f32.xlu0 %v768
        %v796 = vpop.xlane.xlu0 %795
        %797 = vadd.xlane.f32.xlu0 %v769
        %v798 = vpop.xlane.xlu0 %797
        %799 = vadd.xlane.f32.xlu0 %v770
        %v800 = vpop.xlane.xlu0 %799
        %801 = vadd.xlane.f32.xlu0 %v771
        %v802 = vpop.xlane.xlu0 %801
        %803 = vadd.xlane.f32.xlu0 %v772
        %v804 = vpop.xlane.xlu0 %803
        %v805 = vmul.f32 %v774, %v724
        %v806 = vmul.f32 %v776, %v724
        %v807 = vmul.f32 %v778, %v724
        %v808 = vmul.f32 %v780, %v724
        %v809 = vmul.f32 %v782, %v724
        %v810 = vmul.f32 %v784, %v724
        %v811 = vmul.f32 %v786, %v724
        %v812 = vmul.f32 %v788, %v724
        %v813 = vmul.f32 %v790, %v724
        %v814 = vmul.f32 %v792, %v724
        %v815 = vmul.f32 %v794, %v724
        %v816 = vmul.f32 %v796, %v724
        %v817 = vmul.f32 %v798, %v724
        %v818 = vmul.f32 %v800, %v724
        %v819 = vmul.f32 %v802, %v724
        %v820 = vmul.f32 %v804, %v724
        %v821 = vadd.f32 %v805, 1e-05
        %v822 = vadd.f32 %v806, 1e-05
        %v823 = vadd.f32 %v807, 1e-05
        %v824 = vadd.f32 %v808, 1e-05
        %v825 = vadd.f32 %v809, 1e-05
        %v826 = vadd.f32 %v810, 1e-05
        %v827 = vadd.f32 %v811, 1e-05
        %v828 = vadd.f32 %v812, 1e-05
        %v829 = vadd.f32 %v813, 1e-05
        %v830 = vadd.f32 %v814, 1e-05
        %v831 = vadd.f32 %v815, 1e-05
        %v832 = vadd.f32 %v816, 1e-05
        %v833 = vadd.f32 %v817, 1e-05
        %v834 = vadd.f32 %v818, 1e-05
        %v835 = vadd.f32 %v819, 1e-05
        %v836 = vadd.f32 %v820, 1e-05
        %v837 = vrsqrt.pop %v821
        %v838 = vrsqrt.pop %v822
        %v839 = vrsqrt.pop %v823
        %v840 = vrsqrt.pop %v824
        %v841 = vrsqrt.pop %v825
        %v842 = vrsqrt.pop %v826
        %v843 = vrsqrt.pop %v827
        %v844 = vrsqrt.pop %v828
        %v845 = vrsqrt.pop %v829
        %v846 = vrsqrt.pop %v830
        %v847 = vrsqrt.pop %v831
        %v848 = vrsqrt.pop %v832
        %v849 = vrsqrt.pop %v833
        %v850 = vrsqrt.pop %v834
        %v851 = vrsqrt.pop %v835
        %v852 = vrsqrt.pop %v836
        %v853 = vmul.f32 %v741, %v837
        %v854 = vmul.f32 %v742, %v838
        %v855 = vmul.f32 %v743, %v839
        %v856 = vmul.f32 %v744, %v840
        %v857 = vmul.f32 %v745, %v841
        %v858 = vmul.f32 %v746, %v842
        %v859 = vmul.f32 %v747, %v843
        %v860 = vmul.f32 %v748, %v844
        %v861 = vmul.f32 %v749, %v845
        %v862 = vmul.f32 %v750, %v846
        %v863 = vmul.f32 %v751, %v847
        %v864 = vmul.f32 %v752, %v848
        %v865 = vmul.f32 %v753, %v849
        %v866 = vmul.f32 %v754, %v850
        %v867 = vmul.f32 %v755, %v851
        %v868 = vmul.f32 %v756, %v852
        %v870 = vlaneseq
        %v871 = vshrl.u32 %v870, 7
        %v872 = vsub.s32 0, %v871
        %v873 = vrot.slane %v690, %v872
        %v875 = vmul.f32 %v853, %v873
        %v876 = vmul.f32 %v854, %v873
        %v877 = vmul.f32 %v855, %v873
        %v878 = vmul.f32 %v856, %v873
        %v879 = vmul.f32 %v857, %v873
        %v880 = vmul.f32 %v858, %v873
        %v881 = vmul.f32 %v859, %v873
        %v882 = vmul.f32 %v860, %v873
        %v883 = vmul.f32 %v861, %v873
        %v884 = vmul.f32 %v862, %v873
        %v885 = vmul.f32 %v863, %v873
        %v886 = vmul.f32 %v864, %v873
        %v887 = vmul.f32 %v865, %v873
        %v888 = vmul.f32 %v866, %v873
        %v889 = vmul.f32 %v867, %v873
        %v890 = vmul.f32 %v868, %v873
        %v892 = vlaneseq
        %v893 = vshrl.u32 %v892, 7
        %v894 = vsub.s32 0, %v893
        %v895 = vrot.slane %v691, %v894
        %v897 = vadd.f32 %v875, %v895
        %v898 = vadd.f32 %v876, %v895
        %v899 = vadd.f32 %v877, %v895
        %v900 = vadd.f32 %v878, %v895
        %v901 = vadd.f32 %v879, %v895
        %v902 = vadd.f32 %v880, %v895
        %v903 = vadd.f32 %v881, %v895
        %v904 = vadd.f32 %v882, %v895
        %v905 = vadd.f32 %v883, %v895
        %v906 = vadd.f32 %v884, %v895
        %v907 = vadd.f32 %v885, %v895
        %v908 = vadd.f32 %v886, %v895
        %v909 = vadd.f32 %v887, %v895
        %v910 = vadd.f32 %v888, %v895
        %v911 = vadd.f32 %v889, %v895
        %v912 = vadd.f32 %v890, %v895
        %v913 = vld [vmem:[#allocation12] sm:$0xff]
        %v914 = vld [vmem:[#allocation12 + $0x8] sm:$0xff]
        %v915 = vld [vmem:[#allocation12 + $0x10] sm:$0xff]
        %v916 = vld [vmem:[#allocation12 + $0x18] sm:$0xff]
        %v917 = vld [vmem:[#allocation12 + $0x20] sm:$0xff]
        %v918 = vld [vmem:[#allocation12 + $0x28] sm:$0xff]
        %v919 = vld [vmem:[#allocation12 + $0x30] sm:$0xff]
        %v920 = vld [vmem:[#allocation12 + $0x38] sm:$0xff]
        %v921 = vld [vmem:[#allocation12 + $0x40] sm:$0xff]
        %v922 = vld [vmem:[#allocation12 + $0x48] sm:$0xff]
        %v923 = vld [vmem:[#allocation12 + $0x50] sm:$0xff]
        %v924 = vld [vmem:[#allocation12 + $0x58] sm:$0xff]
        %v925 = vld [vmem:[#allocation12 + $0x60] sm:$0xff]
        %v926 = vld [vmem:[#allocation12 + $0x68] sm:$0xff]
        %v927 = vld [vmem:[#allocation12 + $0x70] sm:$0xff]
        %v928 = vld [vmem:[#allocation12 + $0x78] sm:$0xff]
        %v929 = vld [vmem:[%s4] sm:$0x1]
        %v931 = vlaneseq
        %v932 = vshrl.u32 %v931, 7
        %v933 = vsub.s32 0, %v932
        %v934 = vrot.slane %v929, %v933
        %936 = vmatprep.subr.mxu0 0.0
        %937 = vmatpush1.msra.mxu0 %v928
        %938 = vmatprep.subr.mxu0 0.0
        %939 = vmatpush1.msra.mxu0 %v927
        %940 = vmatprep.subr.mxu0 0.0
        %941 = vmatpush1.msra.mxu0 %v926
        %942 = vmatprep.subr.mxu0 0.0
        %943 = vmatpush1.msra.mxu0 %v925
        %944 = vmatprep.subr.mxu0 0.0
        %945 = vmatpush1.msra.mxu0 %v924
        %946 = vmatprep.subr.mxu0 0.0
        %947 = vmatpush1.msra.mxu0 %v923
        %948 = vmatprep.subr.mxu0 0.0
        %949 = vmatpush1.msra.mxu0 %v922
        %950 = vmatprep.subr.mxu0 0.0
        %951 = vmatpush1.msra.mxu0 %v921
        %952 = vmatprep.subr.mxu0 0.0
        %953 = vmatpush1.msra.mxu0 %v920
        %954 = vmatprep.subr.mxu0 0.0
        %955 = vmatpush1.msra.mxu0 %v919
        %956 = vmatprep.subr.mxu0 0.0
        %957 = vmatpush1.msra.mxu0 %v918
        %958 = vmatprep.subr.mxu0 0.0
        %959 = vmatpush1.msra.mxu0 %v917
        %960 = vmatprep.subr.mxu0 0.0
        %961 = vmatpush1.msra.mxu0 %v916
        %962 = vmatprep.subr.mxu0 0.0
        %963 = vmatpush1.msra.mxu0 %v915
        %964 = vmatprep.subr.mxu0 0.0
        %965 = vmatpush1.msra.mxu0 %v914
        %966 = vmatprep.subr.mxu0 0.0
        %967 = vmatpush1.msra.mxu0 %v913
        %968 = vmatprep.subr.mxu0 0.0
        %969 = vmatpush2.msra.mxu0 0.0
        %970 = vmatprep.subr.mxu0 0.0
        %971 = vmatpush2.msra.mxu0 0.0
        %972 = vmatprep.subr.mxu0 0.0
        %973 = vmatpush2.msra.mxu0 0.0
        %974 = vmatprep.subr.mxu0 0.0
        %975 = vmatpush2.msra.mxu0 0.0
        %976 = vmatprep.subr.mxu0 0.0
        %977 = vmatpush2.msra.mxu0 0.0
        %978 = vmatprep.subr.mxu0 0.0
        %979 = vmatpush2.msra.mxu0 0.0
        %980 = vmatprep.subr.mxu0 0.0
        %981 = vmatpush2.msra.mxu0 0.0
        %982 = vmatprep.subr.mxu0 0.0
        %983 = vmatpush2.msra.mxu0 0.0
        %984 = vmatprep.subr.mxu0 0.0
        %985 = vmatpush2.msra.mxu0 0.0
        %986 = vmatprep.subr.mxu0 0.0
        %987 = vmatpush2.msra.mxu0 0.0
        %988 = vmatprep.subr.mxu0 0.0
        %989 = vmatpush2.msra.mxu0 0.0
        %990 = vmatprep.subr.mxu0 0.0
        %991 = vmatpush2.msra.mxu0 0.0
        %992 = vmatprep.subr.mxu0 0.0
        %993 = vmatpush2.msra.mxu0 0.0
        %994 = vmatprep.subr.mxu0 0.0
        %995 = vmatpush2.msra.mxu0 0.0
        %996 = vmatprep.subr.mxu0 0.0
        %997 = vmatpush2.msra.mxu0 0.0
        %998 = vmatprep.subr.mxu0 0.0
        %999 = vmatpush2.msra.mxu0 0.0
        %1000 = vmatprep.mubr.f32.mxu0 0.0
        %1001 = vmatmul.mubr.f32.gmra.mxu0 %v897
        %v1002 = vpop.f32.mrf.mxu0
        %v1003 = vadd.f32 %v934, %v1002
        %v1004 = vpop.f32.mrf.mxu0
        %1005 = vmatprep.mubr.f32.mxu0 0.0
        %1006 = vmatmul.mubr.f32.gmra.mxu0 %v898
        %v1007 = vpop.f32.mrf.mxu0
        %v1008 = vadd.f32 %v934, %v1007
        %v1009 = vpop.f32.mrf.mxu0
        %1010 = vmatprep.mubr.f32.mxu0 0.0
        %1011 = vmatmul.mubr.f32.gmra.mxu0 %v899
        %v1012 = vpop.f32.mrf.mxu0
        %v1013 = vadd.f32 %v934, %v1012
        %v1014 = vpop.f32.mrf.mxu0
        %1015 = vmatprep.mubr.f32.mxu0 0.0
        %1016 = vmatmul.mubr.f32.gmra.mxu0 %v900
        %v1017 = vpop.f32.mrf.mxu0
        %v1018 = vadd.f32 %v934, %v1017
        %v1019 = vpop.f32.mrf.mxu0
        %1020 = vmatprep.mubr.f32.mxu0 0.0
        %1021 = vmatmul.mubr.f32.gmra.mxu0 %v901
        %v1022 = vpop.f32.mrf.mxu0
        %v1023 = vadd.f32 %v934, %v1022
        %v1024 = vpop.f32.mrf.mxu0
        %1025 = vmatprep.mubr.f32.mxu0 0.0
        %1026 = vmatmul.mubr.f32.gmra.mxu0 %v902
        %v1027 = vpop.f32.mrf.mxu0
        %v1028 = vadd.f32 %v934, %v1027
        %v1029 = vpop.f32.mrf.mxu0
        %1030 = vmatprep.mubr.f32.mxu0 0.0
        %1031 = vmatmul.mubr.f32.gmra.mxu0 %v903
        %v1032 = vpop.f32.mrf.mxu0
        %v1033 = vadd.f32 %v934, %v1032
        %v1034 = vpop.f32.mrf.mxu0
        %1035 = vmatprep.mubr.f32.mxu0 0.0
        %1036 = vmatmul.mubr.f32.gmra.mxu0 %v904
        %v1037 = vpop.f32.mrf.mxu0
        %v1038 = vadd.f32 %v934, %v1037
        %v1039 = vpop.f32.mrf.mxu0
        %1040 = vmatprep.mubr.f32.mxu0 0.0
        %1041 = vmatmul.mubr.f32.gmra.mxu0 %v905
        %v1042 = vpop.f32.mrf.mxu0
        %v1043 = vadd.f32 %v934, %v1042
        %v1044 = vpop.f32.mrf.mxu0
        %1045 = vmatprep.mubr.f32.mxu0 0.0
        %1046 = vmatmul.mubr.f32.gmra.mxu0 %v906
        %v1047 = vpop.f32.mrf.mxu0
        %v1048 = vadd.f32 %v934, %v1047
        %v1049 = vpop.f32.mrf.mxu0
        %1050 = vmatprep.mubr.f32.mxu0 0.0
        %1051 = vmatmul.mubr.f32.gmra.mxu0 %v907
        %v1052 = vpop.f32.mrf.mxu0
        %v1053 = vadd.f32 %v934, %v1052
        %v1054 = vpop.f32.mrf.mxu0
        %1055 = vmatprep.mubr.f32.mxu0 0.0
        %1056 = vmatmul.mubr.f32.gmra.mxu0 %v908
        %v1057 = vpop.f32.mrf.mxu0
        %v1058 = vadd.f32 %v934, %v1057
        %v1059 = vpop.f32.mrf.mxu0
        %1060 = vmatprep.mubr.f32.mxu0 0.0
        %1061 = vmatmul.mubr.f32.gmra.mxu0 %v909
        %v1062 = vpop.f32.mrf.mxu0
        %v1063 = vadd.f32 %v934, %v1062
        %v1064 = vpop.f32.mrf.mxu0
        %1065 = vmatprep.mubr.f32.mxu0 0.0
        %1066 = vmatmul.mubr.f32.gmra.mxu0 %v910
        %v1067 = vpop.f32.mrf.mxu0
        %v1068 = vadd.f32 %v934, %v1067
        %v1069 = vpop.f32.mrf.mxu0
        %1070 = vmatprep.mubr.f32.mxu0 0.0
        %1071 = vmatmul.mubr.f32.gmra.mxu0 %v911
        %v1072 = vpop.f32.mrf.mxu0
        %v1073 = vadd.f32 %v934, %v1072
        %v1074 = vpop.f32.mrf.mxu0
        %1075 = vmatprep.mubr.f32.mxu0 0.0
        %1076 = vmatmul.mubr.f32.gmra.mxu0 %v912
        %v1077 = vpop.f32.mrf.mxu0
        %v1078 = vadd.f32 %v934, %v1077
        %v1079 = vpop.f32.mrf.mxu0
        %1080 = vdwg.mxu0
        %v1081 = vmul.f32 %v1003, 0.17677669
        %v1082 = vmul.f32 %v1008, 0.17677669
        %v1083 = vmul.f32 %v1013, 0.17677669
        %v1084 = vmul.f32 %v1018, 0.17677669
        %v1085 = vmul.f32 %v1023, 0.17677669
        %v1086 = vmul.f32 %v1028, 0.17677669
        %v1087 = vmul.f32 %v1033, 0.17677669
        %v1088 = vmul.f32 %v1038, 0.17677669
        %v1089 = vmul.f32 %v1043, 0.17677669
        %v1090 = vmul.f32 %v1048, 0.17677669
        %v1091 = vmul.f32 %v1053, 0.17677669
        %v1092 = vmul.f32 %v1058, 0.17677669
        %v1093 = vmul.f32 %v1063, 0.17677669
        %v1094 = vmul.f32 %v1068, 0.17677669
        %v1095 = vmul.f32 %v1073, 0.17677669
        %v1096 = vmul.f32 %v1078, 0.17677669
        %v1097 = vld [vmem:[#allocation14] sm:$0xff]
        %v1098 = vld [vmem:[#allocation14 + $0x8] sm:$0xff]
        %v1099 = vld [vmem:[#allocation14 + $0x10] sm:$0xff]
        %v1100 = vld [vmem:[#allocation14 + $0x18] sm:$0xff]
        %v1101 = vld [vmem:[#allocation14 + $0x20] sm:$0xff]
        %v1102 = vld [vmem:[#allocation14 + $0x28] sm:$0xff]
        %v1103 = vld [vmem:[#allocation14 + $0x30] sm:$0xff]
        %v1104 = vld [vmem:[#allocation14 + $0x38] sm:$0xff]
        %v1105 = vld [vmem:[#allocation14 + $0x40] sm:$0xff]
        %v1106 = vld [vmem:[#allocation14 + $0x48] sm:$0xff]
        %v1107 = vld [vmem:[#allocation14 + $0x50] sm:$0xff]
        %v1108 = vld [vmem:[#allocation14 + $0x58] sm:$0xff]
        %v1109 = vld [vmem:[#allocation14 + $0x60] sm:$0xff]
        %v1110 = vld [vmem:[#allocation14 + $0x68] sm:$0xff]
        %v1111 = vld [vmem:[#allocation14 + $0x70] sm:$0xff]
        %v1112 = vld [vmem:[#allocation14 + $0x78] sm:$0xff]
        %v1113 = vld [vmem:[%s6] sm:$0x1]
        %v1115 = vlaneseq
        %v1116 = vshrl.u32 %v1115, 7
        %v1117 = vsub.s32 0, %v1116
        %v1118 = vrot.slane %v1113, %v1117
        %1120 = vmatprep.subr.mxu0 0.0
        %1121 = vmatpush1.msra.mxu0 %v1112
        %1122 = vmatprep.subr.mxu0 0.0
        %1123 = vmatpush1.msra.mxu0 %v1111
        %1124 = vmatprep.subr.mxu0 0.0
        %1125 = vmatpush1.msra.mxu0 %v1110
        %1126 = vmatprep.subr.mxu0 0.0
        %1127 = vmatpush1.msra.mxu0 %v1109
        %1128 = vmatprep.subr.mxu0 0.0
        %1129 = vmatpush1.msra.mxu0 %v1108
        %1130 = vmatprep.subr.mxu0 0.0
        %1131 = vmatpush1.msra.mxu0 %v1107
        %1132 = vmatprep.subr.mxu0 0.0
        %1133 = vmatpush1.msra.mxu0 %v1106
        %1134 = vmatprep.subr.mxu0 0.0
        %1135 = vmatpush1.msra.mxu0 %v1105
        %1136 = vmatprep.subr.mxu0 0.0
        %1137 = vmatpush1.msra.mxu0 %v1104
        %1138 = vmatprep.subr.mxu0 0.0
        %1139 = vmatpush1.msra.mxu0 %v1103
        %1140 = vmatprep.subr.mxu0 0.0
        %1141 = vmatpush1.msra.mxu0 %v1102
        %1142 = vmatprep.subr.mxu0 0.0
        %1143 = vmatpush1.msra.mxu0 %v1101
        %1144 = vmatprep.subr.mxu0 0.0
        %1145 = vmatpush1.msra.mxu0 %v1100
        %1146 = vmatprep.subr.mxu0 0.0
        %1147 = vmatpush1.msra.mxu0 %v1099
        %1148 = vmatprep.subr.mxu0 0.0
        %1149 = vmatpush1.msra.mxu0 %v1098
        %1150 = vmatprep.subr.mxu0 0.0
        %1151 = vmatpush1.msra.mxu0 %v1097
        %1152 = vmatprep.subr.mxu0 0.0
        %1153 = vmatpush2.msra.mxu0 0.0
        %1154 = vmatprep.subr.mxu0 0.0
        %1155 = vmatpush2.msra.mxu0 0.0
        %1156 = vmatprep.subr.mxu0 0.0
        %1157 = vmatpush2.msra.mxu0 0.0
        %1158 = vmatprep.subr.mxu0 0.0
        %1159 = vmatpush2.msra.mxu0 0.0
        %1160 = vmatprep.subr.mxu0 0.0
        %1161 = vmatpush2.msra.mxu0 0.0
        %1162 = vmatprep.subr.mxu0 0.0
        %1163 = vmatpush2.msra.mxu0 0.0
        %1164 = vmatprep.subr.mxu0 0.0
        %1165 = vmatpush2.msra.mxu0 0.0
        %1166 = vmatprep.subr.mxu0 0.0
        %1167 = vmatpush2.msra.mxu0 0.0
        %1168 = vmatprep.subr.mxu0 0.0
        %1169 = vmatpush2.msra.mxu0 0.0
        %1170 = vmatprep.subr.mxu0 0.0
        %1171 = vmatpush2.msra.mxu0 0.0
        %1172 = vmatprep.subr.mxu0 0.0
        %1173 = vmatpush2.msra.mxu0 0.0
        %1174 = vmatprep.subr.mxu0 0.0
        %1175 = vmatpush2.msra.mxu0 0.0
        %1176 = vmatprep.subr.mxu0 0.0
        %1177 = vmatpush2.msra.mxu0 0.0
        %1178 = vmatprep.subr.mxu0 0.0
        %1179 = vmatpush2.msra.mxu0 0.0
        %1180 = vmatprep.subr.mxu0 0.0
        %1181 = vmatpush2.msra.mxu0 0.0
        %1182 = vmatprep.subr.mxu0 0.0
        %1183 = vmatpush2.msra.mxu0 0.0
        %1184 = vmatprep.mubr.f32.mxu0 0.0
        %1185 = vmatmul.mubr.f32.gmra.mxu0 %v897
        %v1186 = vpop.f32.mrf.mxu0
        %v1187 = vadd.f32 %v1118, %v1186
        %v1188 = vpop.f32.mrf.mxu0
        %1189 = vmatprep.mubr.f32.mxu0 0.0
        %1190 = vmatmul.mubr.f32.gmra.mxu0 %v898
        %v1191 = vpop.f32.mrf.mxu0
        %v1192 = vadd.f32 %v1118, %v1191
        %v1193 = vpop.f32.mrf.mxu0
        %1194 = vmatprep.mubr.f32.mxu0 0.0
        %1195 = vmatmul.mubr.f32.gmra.mxu0 %v899
        %v1196 = vpop.f32.mrf.mxu0
        %v1197 = vadd.f32 %v1118, %v1196
        %v1198 = vpop.f32.mrf.mxu0
        %1199 = vmatprep.mubr.f32.mxu0 0.0
        %1200 = vmatmul.mubr.f32.gmra.mxu0 %v900
        %v1201 = vpop.f32.mrf.mxu0
        %v1202 = vadd.f32 %v1118, %v1201
        %v1203 = vpop.f32.mrf.mxu0
        %1204 = vmatprep.mubr.f32.mxu0 0.0
        %1205 = vmatmul.mubr.f32.gmra.mxu0 %v901
        %v1206 = vpop.f32.mrf.mxu0
        %v1207 = vadd.f32 %v1118, %v1206
        %v1208 = vpop.f32.mrf.mxu0
        %1209 = vmatprep.mubr.f32.mxu0 0.0
        %1210 = vmatmul.mubr.f32.gmra.mxu0 %v902
        %v1211 = vpop.f32.mrf.mxu0
        %v1212 = vadd.f32 %v1118, %v1211
        %v1213 = vpop.f32.mrf.mxu0
        %1214 = vmatprep.mubr.f32.mxu0 0.0
        %1215 = vmatmul.mubr.f32.gmra.mxu0 %v903
        %v1216 = vpop.f32.mrf.mxu0
        %v1217 = vadd.f32 %v1118, %v1216
        %v1218 = vpop.f32.mrf.mxu0
        %1219 = vmatprep.mubr.f32.mxu0 0.0
        %1220 = vmatmul.mubr.f32.gmra.mxu0 %v904
        %v1221 = vpop.f32.mrf.mxu0
        %v1222 = vadd.f32 %v1118, %v1221
        %v1223 = vpop.f32.mrf.mxu0
        %1224 = vmatprep.mubr.f32.mxu0 0.0
        %1225 = vmatmul.mubr.f32.gmra.mxu0 %v905
        %v1226 = vpop.f32.mrf.mxu0
        %v1227 = vadd.f32 %v1118, %v1226
        %v1228 = vpop.f32.mrf.mxu0
        %1229 = vmatprep.mubr.f32.mxu0 0.0
        %1230 = vmatmul.mubr.f32.gmra.mxu0 %v906
        %v1231 = vpop.f32.mrf.mxu0
        %v1232 = vadd.f32 %v1118, %v1231
        %v1233 = vpop.f32.mrf.mxu0
        %1234 = vmatprep.mubr.f32.mxu0 0.0
        %1235 = vmatmul.mubr.f32.gmra.mxu0 %v907
        %v1236 = vpop.f32.mrf.mxu0
        %v1237 = vadd.f32 %v1118, %v1236
        %v1238 = vpop.f32.mrf.mxu0
        %1239 = vmatprep.mubr.f32.mxu0 0.0
        %1240 = vmatmul.mubr.f32.gmra.mxu0 %v908
        %v1241 = vpop.f32.mrf.mxu0
        %v1242 = vadd.f32 %v1118, %v1241
        %v1243 = vpop.f32.mrf.mxu0
        %1244 = vmatprep.mubr.f32.mxu0 0.0
        %1245 = vmatmul.mubr.f32.gmra.mxu0 %v909
        %v1246 = vpop.f32.mrf.mxu0
        %v1247 = vadd.f32 %v1118, %v1246
        %v1248 = vpop.f32.mrf.mxu0
        %1249 = vmatprep.mubr.f32.mxu0 0.0
        %1250 = vmatmul.mubr.f32.gmra.mxu0 %v910
        %v1251 = vpop.f32.mrf.mxu0
        %v1252 = vadd.f32 %v1118, %v1251
        %v1253 = vpop.f32.mrf.mxu0
        %1254 = vmatprep.mubr.f32.mxu0 0.0
        %1255 = vmatmul.mubr.f32.gmra.mxu0 %v911
        %v1256 = vpop.f32.mrf.mxu0
        %v1257 = vadd.f32 %v1118, %v1256
        %v1258 = vpop.f32.mrf.mxu0
        %1259 = vmatprep.mubr.f32.mxu0 0.0
        %1260 = vmatmul.mubr.f32.gmra.mxu0 %v912
        %v1261 = vpop.f32.mrf.mxu0
        %v1262 = vadd.f32 %v1118, %v1261
        %v1263 = vpop.f32.mrf.mxu0
        %1264 = vdwg.mxu0
        %v1265 = vld [vmem:[#allocation15] sm:$0xff]
        %v1266 = vld [vmem:[#allocation15 + $0x8] sm:$0xff]
        %v1267 = vld [vmem:[#allocation15 + $0x10] sm:$0xff]
        %v1268 = vld [vmem:[#allocation15 + $0x18] sm:$0xff]
        %v1269 = vld [vmem:[#allocation15 + $0x20] sm:$0xff]
        %v1270 = vld [vmem:[#allocation15 + $0x28] sm:$0xff]
        %v1271 = vld [vmem:[#allocation15 + $0x30] sm:$0xff]
        %v1272 = vld [vmem:[#allocation15 + $0x38] sm:$0xff]
        %v1273 = vld [vmem:[#allocation15 + $0x40] sm:$0xff]
        %v1274 = vld [vmem:[#allocation15 + $0x48] sm:$0xff]
        %v1275 = vld [vmem:[#allocation15 + $0x50] sm:$0xff]
        %v1276 = vld [vmem:[#allocation15 + $0x58] sm:$0xff]
        %v1277 = vld [vmem:[#allocation15 + $0x60] sm:$0xff]
        %v1278 = vld [vmem:[#allocation15 + $0x68] sm:$0xff]
        %v1279 = vld [vmem:[#allocation15 + $0x70] sm:$0xff]
        %v1280 = vld [vmem:[#allocation15 + $0x78] sm:$0xff]
        %v1281 = vld [vmem:[%s8] sm:$0x1]
        %v1283 = vlaneseq
        %v1284 = vshrl.u32 %v1283, 7
        %v1285 = vsub.s32 0, %v1284
        %v1286 = vrot.slane %v1281, %v1285
        %1288 = vmatprep.subr.mxu0 0.0
        %1289 = vmatpush1.msra.mxu0 %v1280
        %1290 = vmatprep.subr.mxu0 0.0
        %1291 = vmatpush1.msra.mxu0 %v1279
        %1292 = vmatprep.subr.mxu0 0.0
        %1293 = vmatpush1.msra.mxu0 %v1278
        %1294 = vmatprep.subr.mxu0 0.0
        %1295 = vmatpush1.msra.mxu0 %v1277
        %1296 = vmatprep.subr.mxu0 0.0
        %1297 = vmatpush1.msra.mxu0 %v1276
        %1298 = vmatprep.subr.mxu0 0.0
        %1299 = vmatpush1.msra.mxu0 %v1275
        %1300 = vmatprep.subr.mxu0 0.0
        %1301 = vmatpush1.msra.mxu0 %v1274
        %1302 = vmatprep.subr.mxu0 0.0
        %1303 = vmatpush1.msra.mxu0 %v1273
        %1304 = vmatprep.subr.mxu0 0.0
        %1305 = vmatpush1.msra.mxu0 %v1272
        %1306 = vmatprep.subr.mxu0 0.0
        %1307 = vmatpush1.msra.mxu0 %v1271
        %1308 = vmatprep.subr.mxu0 0.0
        %1309 = vmatpush1.msra.mxu0 %v1270
        %1310 = vmatprep.subr.mxu0 0.0
        %1311 = vmatpush1.msra.mxu0 %v1269
        %1312 = vmatprep.subr.mxu0 0.0
        %1313 = vmatpush1.msra.mxu0 %v1268
        %1314 = vmatprep.subr.mxu0 0.0
        %1315 = vmatpush1.msra.mxu0 %v1267
        %1316 = vmatprep.subr.mxu0 0.0
        %1317 = vmatpush1.msra.mxu0 %v1266
        %1318 = vmatprep.subr.mxu0 0.0
        %1319 = vmatpush1.msra.mxu0 %v1265
        %1320 = vmatprep.subr.mxu0 0.0
        %1321 = vmatpush2.msra.mxu0 0.0
        %1322 = vmatprep.subr.mxu0 0.0
        %1323 = vmatpush2.msra.mxu0 0.0
        %1324 = vmatprep.subr.mxu0 0.0
        %1325 = vmatpush2.msra.mxu0 0.0
        %1326 = vmatprep.subr.mxu0 0.0
        %1327 = vmatpush2.msra.mxu0 0.0
        %1328 = vmatprep.subr.mxu0 0.0
        %1329 = vmatpush2.msra.mxu0 0.0
        %1330 = vmatprep.subr.mxu0 0.0
        %1331 = vmatpush2.msra.mxu0 0.0
        %1332 = vmatprep.subr.mxu0 0.0
        %1333 = vmatpush2.msra.mxu0 0.0
        %1334 = vmatprep.subr.mxu0 0.0
        %1335 = vmatpush2.msra.mxu0 0.0
        %1336 = vmatprep.subr.mxu0 0.0
        %1337 = vmatpush2.msra.mxu0 0.0
        %1338 = vmatprep.subr.mxu0 0.0
        %1339 = vmatpush2.msra.mxu0 0.0
        %1340 = vmatprep.subr.mxu0 0.0
        %1341 = vmatpush2.msra.mxu0 0.0
        %1342 = vmatprep.subr.mxu0 0.0
        %1343 = vmatpush2.msra.mxu0 0.0
        %1344 = vmatprep.subr.mxu0 0.0
        %1345 = vmatpush2.msra.mxu0 0.0
        %1346 = vmatprep.subr.mxu0 0.0
        %1347 = vmatpush2.msra.mxu0 0.0
        %1348 = vmatprep.subr.mxu0 0.0
        %1349 = vmatpush2.msra.mxu0 0.0
        %1350 = vmatprep.subr.mxu0 0.0
        %1351 = vmatpush2.msra.mxu0 0.0
        %1352 = vmatprep.mubr.f32.mxu0 0.0
        %1353 = vmatmul.mubr.f32.gmra.mxu0 %v897
        %v1354 = vpop.f32.mrf.mxu0
        %v1355 = vadd.f32 %v1286, %v1354
        %v1356 = vpop.f32.mrf.mxu0
        %1357 = vmatprep.mubr.f32.mxu0 0.0
        %1358 = vmatmul.mubr.f32.gmra.mxu0 %v898
        %v1359 = vpop.f32.mrf.mxu0
        %v1360 = vadd.f32 %v1286, %v1359
        %v1361 = vpop.f32.mrf.mxu0
        %1362 = vmatprep.mubr.f32.mxu0 0.0
        %1363 = vmatmul.mubr.f32.gmra.mxu0 %v899
        %v1364 = vpop.f32.mrf.mxu0
        %v1365 = vadd.f32 %v1286, %v1364
        %v1366 = vpop.f32.mrf.mxu0
        %1367 = vmatprep.mubr.f32.mxu0 0.0
        %1368 = vmatmul.mubr.f32.gmra.mxu0 %v900
        %v1369 = vpop.f32.mrf.mxu0
        %v1370 = vadd.f32 %v1286, %v1369
        %v1371 = vpop.f32.mrf.mxu0
        %1372 = vmatprep.mubr.f32.mxu0 0.0
        %1373 = vmatmul.mubr.f32.gmra.mxu0 %v901
        %v1374 = vpop.f32.mrf.mxu0
        %v1375 = vadd.f32 %v1286, %v1374
        %v1376 = vpop.f32.mrf.mxu0
        %1377 = vmatprep.mubr.f32.mxu0 0.0
        %1378 = vmatmul.mubr.f32.gmra.mxu0 %v902
        %v1379 = vpop.f32.mrf.mxu0
        %v1380 = vadd.f32 %v1286, %v1379
        %v1381 = vpop.f32.mrf.mxu0
        %1382 = vmatprep.mubr.f32.mxu0 0.0
        %1383 = vmatmul.mubr.f32.gmra.mxu0 %v903
        %v1384 = vpop.f32.mrf.mxu0
        %v1385 = vadd.f32 %v1286, %v1384
        %v1386 = vpop.f32.mrf.mxu0
        %1387 = vmatprep.mubr.f32.mxu0 0.0
        %1388 = vmatmul.mubr.f32.gmra.mxu0 %v904
        %v1389 = vpop.f32.mrf.mxu0
        %v1390 = vadd.f32 %v1286, %v1389
        %v1391 = vpop.f32.mrf.mxu0
        %1392 = vmatprep.mubr.f32.mxu0 0.0
        %1393 = vmatmul.mubr.f32.gmra.mxu0 %v905
        %v1394 = vpop.f32.mrf.mxu0
        %v1395 = vadd.f32 %v1286, %v1394
        %v1396 = vpop.f32.mrf.mxu0
        %1397 = vmatprep.mubr.f32.mxu0 0.0
        %1398 = vmatmul.mubr.f32.gmra.mxu0 %v906
        %v1399 = vpop.f32.mrf.mxu0
        %v1400 = vadd.f32 %v1286, %v1399
        %v1401 = vpop.f32.mrf.mxu0
        %1402 = vmatprep.mubr.f32.mxu0 0.0
        %1403 = vmatmul.mubr.f32.gmra.mxu0 %v907
        %v1404 = vpop.f32.mrf.mxu0
        %v1405 = vadd.f32 %v1286, %v1404
        %v1406 = vpop.f32.mrf.mxu0
        %1407 = vmatprep.mubr.f32.mxu0 0.0
        %1408 = vmatmul.mubr.f32.gmra.mxu0 %v908
        %v1409 = vpop.f32.mrf.mxu0
        %v1410 = vadd.f32 %v1286, %v1409
        %v1411 = vpop.f32.mrf.mxu0
        %1412 = vmatprep.mubr.f32.mxu0 0.0
        %1413 = vmatmul.mubr.f32.gmra.mxu0 %v909
        %v1414 = vpop.f32.mrf.mxu0
        %v1415 = vadd.f32 %v1286, %v1414
        %v1416 = vpop.f32.mrf.mxu0
        %1417 = vmatprep.mubr.f32.mxu0 0.0
        %1418 = vmatmul.mubr.f32.gmra.mxu0 %v910
        %v1419 = vpop.f32.mrf.mxu0
        %v1420 = vadd.f32 %v1286, %v1419
        %v1421 = vpop.f32.mrf.mxu0
        %1422 = vmatprep.mubr.f32.mxu0 0.0
        %1423 = vmatmul.mubr.f32.gmra.mxu0 %v911
        %v1424 = vpop.f32.mrf.mxu0
        %v1425 = vadd.f32 %v1286, %v1424
        %v1426 = vpop.f32.mrf.mxu0
        %1427 = vmatprep.mubr.f32.mxu0 0.0
        %1428 = vmatmul.mubr.f32.gmra.mxu0 %v912
        %v1429 = vpop.f32.mrf.mxu0
        %v1430 = vadd.f32 %v1286, %v1429
        %v1431 = vpop.f32.mrf.mxu0
        %1432 = vdwg.mxu0
        %vm1433 = vcmask 261120
        %1434 = vst.msk [vmem:[#allocation2] sm:$0xff] %vm1433, %v1081
        %1435 = vst.msk [vmem:[#allocation2 + $0x8] sm:$0xff] %vm1433, %v1082
        %1436 = vst.msk [vmem:[#allocation2 + $0x10] sm:$0xff] %vm1433, %v1083
        %1437 = vst.msk [vmem:[#allocation2 + $0x18] sm:$0xff] %vm1433, %v1084
        %1438 = vst.msk [vmem:[#allocation2 + $0x20] sm:$0xff] %vm1433, %v1085
        %1439 = vst.msk [vmem:[#allocation2 + $0x28] sm:$0xff] %vm1433, %v1086
        %1440 = vst.msk [vmem:[#allocation2 + $0x30] sm:$0xff] %vm1433, %v1087
        %1441 = vst.msk [vmem:[#allocation2 + $0x38] sm:$0xff] %vm1433, %v1088
        %1442 = vst.msk [vmem:[#allocation2 + $0x40] sm:$0xff] %vm1433, %v1089
        %1443 = vst.msk [vmem:[#allocation2 + $0x48] sm:$0xff] %vm1433, %v1090
        %1444 = vst.msk [vmem:[#allocation2 + $0x50] sm:$0xff] %vm1433, %v1091
        %1445 = vst.msk [vmem:[#allocation2 + $0x58] sm:$0xff] %vm1433, %v1092
        %1446 = vst.msk [vmem:[#allocation2 + $0x60] sm:$0xff] %vm1433, %v1093
        %1447 = vst.msk [vmem:[#allocation2 + $0x68] sm:$0xff] %vm1433, %v1094
        %1448 = vst.msk [vmem:[#allocation2 + $0x70] sm:$0xff] %vm1433, %v1095
        %1449 = vst.msk [vmem:[#allocation2 + $0x78] sm:$0xff] %vm1433, %v1096
        %s1450 = smul.u32 %s42, 512
        %s1451 = scalar_lea.vmem [#allocation3], %s1450
        %1452 = vst.msk [vmem:[%s1451] sm:$0xff] %vm1433, %v1187
        %1453 = vst.msk [vmem:[%s1451 + $0x8] sm:$0xff] %vm1433, %v1192
        %1454 = vst.msk [vmem:[%s1451 + $0x10] sm:$0xff] %vm1433, %v1197
        %1455 = vst.msk [vmem:[%s1451 + $0x18] sm:$0xff] %vm1433, %v1202
        %1456 = vst.msk [vmem:[%s1451 + $0x20] sm:$0xff] %vm1433, %v1207
        %1457 = vst.msk [vmem:[%s1451 + $0x28] sm:$0xff] %vm1433, %v1212
        %1458 = vst.msk [vmem:[%s1451 + $0x30] sm:$0xff] %vm1433, %v1217
        %1459 = vst.msk [vmem:[%s1451 + $0x38] sm:$0xff] %vm1433, %v1222
        %1460 = vst.msk [vmem:[%s1451 + $0x40] sm:$0xff] %vm1433, %v1227
        %1461 = vst.msk [vmem:[%s1451 + $0x48] sm:$0xff] %vm1433, %v1232
        %1462 = vst.msk [vmem:[%s1451 + $0x50] sm:$0xff] %vm1433, %v1237
        %1463 = vst.msk [vmem:[%s1451 + $0x58] sm:$0xff] %vm1433, %v1242
        %1464 = vst.msk [vmem:[%s1451 + $0x60] sm:$0xff] %vm1433, %v1247
        %1465 = vst.msk [vmem:[%s1451 + $0x68] sm:$0xff] %vm1433, %v1252
        %1466 = vst.msk [vmem:[%s1451 + $0x70] sm:$0xff] %vm1433, %v1257
        %1467 = vst.msk [vmem:[%s1451 + $0x78] sm:$0xff] %vm1433, %v1262
        %s1468 = scalar_lea.vmem [#allocation4], %s1450
        %1469 = vst.msk [vmem:[%s1468] sm:$0xff] %vm1433, %v1355
        %1470 = vst.msk [vmem:[%s1468 + $0x8] sm:$0xff] %vm1433, %v1360
        %1471 = vst.msk [vmem:[%s1468 + $0x10] sm:$0xff] %vm1433, %v1365
        %1472 = vst.msk [vmem:[%s1468 + $0x18] sm:$0xff] %vm1433, %v1370
        %1473 = vst.msk [vmem:[%s1468 + $0x20] sm:$0xff] %vm1433, %v1375
        %1474 = vst.msk [vmem:[%s1468 + $0x28] sm:$0xff] %vm1433, %v1380
        %1475 = vst.msk [vmem:[%s1468 + $0x30] sm:$0xff] %vm1433, %v1385
        %1476 = vst.msk [vmem:[%s1468 + $0x38] sm:$0xff] %vm1433, %v1390
        %1477 = vst.msk [vmem:[%s1468 + $0x40] sm:$0xff] %vm1433, %v1395
        %1478 = vst.msk [vmem:[%s1468 + $0x48] sm:$0xff] %vm1433, %v1400
        %1479 = vst.msk [vmem:[%s1468 + $0x50] sm:$0xff] %vm1433, %v1405
        %1480 = vst.msk [vmem:[%s1468 + $0x58] sm:$0xff] %vm1433, %v1410
        %1481 = vst.msk [vmem:[%s1468 + $0x60] sm:$0xff] %vm1433, %v1415
        %1482 = vst.msk [vmem:[%s1468 + $0x68] sm:$0xff] %vm1433, %v1420
        %1483 = vst.msk [vmem:[%s1468 + $0x70] sm:$0xff] %vm1433, %v1425
        %1484 = vst.msk [vmem:[%s1468 + $0x78] sm:$0xff] %vm1433, %v1430
        %1501 = vrot.lane.b32.xlu0 %v1081, 96
        %v1502 = vpop.permute.xlu0 %1501
        %1503 = vrot.lane.b32.xlu0 %v1082, 96
        %v1504 = vpop.permute.xlu0 %1503
        %1505 = vrot.lane.b32.xlu0 %v1083, 96
        %v1506 = vpop.permute.xlu0 %1505
        %1507 = vrot.lane.b32.xlu0 %v1084, 96
        %v1508 = vpop.permute.xlu0 %1507
        %1509 = vrot.lane.b32.xlu0 %v1085, 96
        %v1510 = vpop.permute.xlu0 %1509
        %1511 = vrot.lane.b32.xlu0 %v1086, 96
        %v1512 = vpop.permute.xlu0 %1511
        %1513 = vrot.lane.b32.xlu0 %v1087, 96
        %v1514 = vpop.permute.xlu0 %1513
        %1515 = vrot.lane.b32.xlu0 %v1088, 96
        %v1516 = vpop.permute.xlu0 %1515
        %1517 = vrot.lane.b32.xlu0 %v1089, 96
        %v1518 = vpop.permute.xlu0 %1517
        %1519 = vrot.lane.b32.xlu0 %v1090, 96
        %v1520 = vpop.permute.xlu0 %1519
        %1521 = vrot.lane.b32.xlu0 %v1091, 96
        %v1522 = vpop.permute.xlu0 %1521
        %1523 = vrot.lane.b32.xlu0 %v1092, 96
        %v1524 = vpop.permute.xlu0 %1523
        %1525 = vrot.lane.b32.xlu0 %v1093, 96
        %v1526 = vpop.permute.xlu0 %1525
        %1527 = vrot.lane.b32.xlu0 %v1094, 96
        %v1528 = vpop.permute.xlu0 %1527
        %1529 = vrot.lane.b32.xlu0 %v1095, 96
        %v1530 = vpop.permute.xlu0 %1529
        %1531 = vrot.lane.b32.xlu0 %v1096, 96
        %v1532 = vpop.permute.xlu0 %1531
        %s1549 = scalar_lea.vmem [#allocation2], 128
        %1550 = vst.msk [vmem:[%s1549] sm:$0xff] %vm1433, %v1502
        %1551 = vst.msk [vmem:[%s1549 + $0x8] sm:$0xff] %vm1433, %v1504
        %1552 = vst.msk [vmem:[%s1549 + $0x10] sm:$0xff] %vm1433, %v1506
        %1553 = vst.msk [vmem:[%s1549 + $0x18] sm:$0xff] %vm1433, %v1508
        %1554 = vst.msk [vmem:[%s1549 + $0x20] sm:$0xff] %vm1433, %v1510
        %1555 = vst.msk [vmem:[%s1549 + $0x28] sm:$0xff] %vm1433, %v1512
        %1556 = vst.msk [vmem:[%s1549 + $0x30] sm:$0xff] %vm1433, %v1514
        %1557 = vst.msk [vmem:[%s1549 + $0x38] sm:$0xff] %vm1433, %v1516
        %1558 = vst.msk [vmem:[%s1549 + $0x40] sm:$0xff] %vm1433, %v1518
        %1559 = vst.msk [vmem:[%s1549 + $0x48] sm:$0xff] %vm1433, %v1520
        %1560 = vst.msk [vmem:[%s1549 + $0x50] sm:$0xff] %vm1433, %v1522
        %1561 = vst.msk [vmem:[%s1549 + $0x58] sm:$0xff] %vm1433, %v1524
        %1562 = vst.msk [vmem:[%s1549 + $0x60] sm:$0xff] %vm1433, %v1526
        %1563 = vst.msk [vmem:[%s1549 + $0x68] sm:$0xff] %vm1433, %v1528
        %1564 = vst.msk [vmem:[%s1549 + $0x70] sm:$0xff] %vm1433, %v1530
        %1565 = vst.msk [vmem:[%s1549 + $0x78] sm:$0xff] %vm1433, %v1532
        %1582 = vrot.lane.b32.xlu0 %v1187, 96
        %v1583 = vpop.permute.xlu0 %1582
        %1584 = vrot.lane.b32.xlu0 %v1192, 96
        %v1585 = vpop.permute.xlu0 %1584
        %1586 = vrot.lane.b32.xlu0 %v1197, 96
        %v1587 = vpop.permute.xlu0 %1586
        %1588 = vrot.lane.b32.xlu0 %v1202, 96
        %v1589 = vpop.permute.xlu0 %1588
        %1590 = vrot.lane.b32.xlu0 %v1207, 96
        %v1591 = vpop.permute.xlu0 %1590
        %1592 = vrot.lane.b32.xlu0 %v1212, 96
        %v1593 = vpop.permute.xlu0 %1592
        %1594 = vrot.lane.b32.xlu0 %v1217, 96
        %v1595 = vpop.permute.xlu0 %1594
        %1596 = vrot.lane.b32.xlu0 %v1222, 96
        %v1597 = vpop.permute.xlu0 %1596
        %1598 = vrot.lane.b32.xlu0 %v1227, 96
        %v1599 = vpop.permute.xlu0 %1598
        %1600 = vrot.lane.b32.xlu0 %v1232, 96
        %v1601 = vpop.permute.xlu0 %1600
        %1602 = vrot.lane.b32.xlu0 %v1237, 96
        %v1603 = vpop.permute.xlu0 %1602
        %1604 = vrot.lane.b32.xlu0 %v1242, 96
        %v1605 = vpop.permute.xlu0 %1604
        %1606 = vrot.lane.b32.xlu0 %v1247, 96
        %v1607 = vpop.permute.xlu0 %1606
        %1608 = vrot.lane.b32.xlu0 %v1252, 96
        %v1609 = vpop.permute.xlu0 %1608
        %1610 = vrot.lane.b32.xlu0 %v1257, 96
        %v1611 = vpop.permute.xlu0 %1610
        %1612 = vrot.lane.b32.xlu0 %v1262, 96
        %v1613 = vpop.permute.xlu0 %1612
        %s1630 = sadd.s32 128, %s1450
        %s1631 = scalar_lea.vmem [#allocation3], %s1630
        %1632 = vst.msk [vmem:[%s1631] sm:$0xff] %vm1433, %v1583
        %1633 = vst.msk [vmem:[%s1631 + $0x8] sm:$0xff] %vm1433, %v1585
        %1634 = vst.msk [vmem:[%s1631 + $0x10] sm:$0xff] %vm1433, %v1587
        %1635 = vst.msk [vmem:[%s1631 + $0x18] sm:$0xff] %vm1433, %v1589
        %1636 = vst.msk [vmem:[%s1631 + $0x20] sm:$0xff] %vm1433, %v1591
        %1637 = vst.msk [vmem:[%s1631 + $0x28] sm:$0xff] %vm1433, %v1593
        %1638 = vst.msk [vmem:[%s1631 + $0x30] sm:$0xff] %vm1433, %v1595
        %1639 = vst.msk [vmem:[%s1631 + $0x38] sm:$0xff] %vm1433, %v1597
        %1640 = vst.msk [vmem:[%s1631 + $0x40] sm:$0xff] %vm1433, %v1599
        %1641 = vst.msk [vmem:[%s1631 + $0x48] sm:$0xff] %vm1433, %v1601
        %1642 = vst.msk [vmem:[%s1631 + $0x50] sm:$0xff] %vm1433, %v1603
        %1643 = vst.msk [vmem:[%s1631 + $0x58] sm:$0xff] %vm1433, %v1605
        %1644 = vst.msk [vmem:[%s1631 + $0x60] sm:$0xff] %vm1433, %v1607
        %1645 = vst.msk [vmem:[%s1631 + $0x68] sm:$0xff] %vm1433, %v1609
        %1646 = vst.msk [vmem:[%s1631 + $0x70] sm:$0xff] %vm1433, %v1611
        %1647 = vst.msk [vmem:[%s1631 + $0x78] sm:$0xff] %vm1433, %v1613
        %1664 = vrot.lane.b32.xlu0 %v1355, 96
        %v1665 = vpop.permute.xlu0 %1664
        %1666 = vrot.lane.b32.xlu0 %v1360, 96
        %v1667 = vpop.permute.xlu0 %1666
        %1668 = vrot.lane.b32.xlu0 %v1365, 96
        %v1669 = vpop.permute.xlu0 %1668
        %1670 = vrot.lane.b32.xlu0 %v1370, 96
        %v1671 = vpop.permute.xlu0 %1670
        %1672 = vrot.lane.b32.xlu0 %v1375, 96
        %v1673 = vpop.permute.xlu0 %1672
        %1674 = vrot.lane.b32.xlu0 %v1380, 96
        %v1675 = vpop.permute.xlu0 %1674
        %1676 = vrot.lane.b32.xlu0 %v1385, 96
        %v1677 = vpop.permute.xlu0 %1676
        %1678 = vrot.lane.b32.xlu0 %v1390, 96
        %v1679 = vpop.permute.xlu0 %1678
        %1680 = vrot.lane.b32.xlu0 %v1395, 96
        %v1681 = vpop.permute.xlu0 %1680
        %1682 = vrot.lane.b32.xlu0 %v1400, 96
        %v1683 = vpop.permute.xlu0 %1682
        %1684 = vrot.lane.b32.xlu0 %v1405, 96
        %v1685 = vpop.permute.xlu0 %1684
        %1686 = vrot.lane.b32.xlu0 %v1410, 96
        %v1687 = vpop.permute.xlu0 %1686
        %1688 = vrot.lane.b32.xlu0 %v1415, 96
        %v1689 = vpop.permute.xlu0 %1688
        %1690 = vrot.lane.b32.xlu0 %v1420, 96
        %v1691 = vpop.permute.xlu0 %1690
        %1692 = vrot.lane.b32.xlu0 %v1425, 96
        %v1693 = vpop.permute.xlu0 %1692
        %1694 = vrot.lane.b32.xlu0 %v1430, 96
        %v1695 = vpop.permute.xlu0 %1694
        %s1712 = scalar_lea.vmem [#allocation4], %s1630
        %1713 = vst.msk [vmem:[%s1712] sm:$0xff] %vm1433, %v1665
        %1714 = vst.msk [vmem:[%s1712 + $0x8] sm:$0xff] %vm1433, %v1667
        %1715 = vst.msk [vmem:[%s1712 + $0x10] sm:$0xff] %vm1433, %v1669
        %1716 = vst.msk [vmem:[%s1712 + $0x18] sm:$0xff] %vm1433, %v1671
        %1717 = vst.msk [vmem:[%s1712 + $0x20] sm:$0xff] %vm1433, %v1673
        %1718 = vst.msk [vmem:[%s1712 + $0x28] sm:$0xff] %vm1433, %v1675
        %1719 = vst.msk [vmem:[%s1712 + $0x30] sm:$0xff] %vm1433, %v1677
        %1720 = vst.msk [vmem:[%s1712 + $0x38] sm:$0xff] %vm1433, %v1679
        %1721 = vst.msk [vmem:[%s1712 + $0x40] sm:$0xff] %vm1433, %v1681
        %1722 = vst.msk [vmem:[%s1712 + $0x48] sm:$0xff] %vm1433, %v1683
        %1723 = vst.msk [vmem:[%s1712 + $0x50] sm:$0xff] %vm1433, %v1685
        %1724 = vst.msk [vmem:[%s1712 + $0x58] sm:$0xff] %vm1433, %v1687
        %1725 = vst.msk [vmem:[%s1712 + $0x60] sm:$0xff] %vm1433, %v1689
        %1726 = vst.msk [vmem:[%s1712 + $0x68] sm:$0xff] %vm1433, %v1691
        %1727 = vst.msk [vmem:[%s1712 + $0x70] sm:$0xff] %vm1433, %v1693
        %1728 = vst.msk [vmem:[%s1712 + $0x78] sm:$0xff] %vm1433, %v1695
        %1729 = vrot.lane.b32.xlu0 %v1081, 64
        %v1730 = vpop.permute.xlu0 %1729
        %1731 = vrot.lane.b32.xlu0 %v1082, 64
        %v1732 = vpop.permute.xlu0 %1731
        %1733 = vrot.lane.b32.xlu0 %v1083, 64
        %v1734 = vpop.permute.xlu0 %1733
        %1735 = vrot.lane.b32.xlu0 %v1084, 64
        %v1736 = vpop.permute.xlu0 %1735
        %1737 = vrot.lane.b32.xlu0 %v1085, 64
        %v1738 = vpop.permute.xlu0 %1737
        %1739 = vrot.lane.b32.xlu0 %v1086, 64
        %v1740 = vpop.permute.xlu0 %1739
        %1741 = vrot.lane.b32.xlu0 %v1087, 64
        %v1742 = vpop.permute.xlu0 %1741
        %1743 = vrot.lane.b32.xlu0 %v1088, 64
        %v1744 = vpop.permute.xlu0 %1743
        %1745 = vrot.lane.b32.xlu0 %v1089, 64
        %v1746 = vpop.permute.xlu0 %1745
        %1747 = vrot.lane.b32.xlu0 %v1090, 64
        %v1748 = vpop.permute.xlu0 %1747
        %1749 = vrot.lane.b32.xlu0 %v1091, 64
        %v1750 = vpop.permute.xlu0 %1749
        %1751 = vrot.lane.b32.xlu0 %v1092, 64
        %v1752 = vpop.permute.xlu0 %1751
        %1753 = vrot.lane.b32.xlu0 %v1093, 64
        %v1754 = vpop.permute.xlu0 %1753
        %1755 = vrot.lane.b32.xlu0 %v1094, 64
        %v1756 = vpop.permute.xlu0 %1755
        %1757 = vrot.lane.b32.xlu0 %v1095, 64
        %v1758 = vpop.permute.xlu0 %1757
        %1759 = vrot.lane.b32.xlu0 %v1096, 64
        %v1760 = vpop.permute.xlu0 %1759
        %s1777 = scalar_lea.vmem [#allocation2], 256
        %1778 = vst.msk [vmem:[%s1777] sm:$0xff] %vm1433, %v1730
        %1779 = vst.msk [vmem:[%s1777 + $0x8] sm:$0xff] %vm1433, %v1732
        %1780 = vst.msk [vmem:[%s1777 + $0x10] sm:$0xff] %vm1433, %v1734
        %1781 = vst.msk [vmem:[%s1777 + $0x18] sm:$0xff] %vm1433, %v1736
        %1782 = vst.msk [vmem:[%s1777 + $0x20] sm:$0xff] %vm1433, %v1738
        %1783 = vst.msk [vmem:[%s1777 + $0x28] sm:$0xff] %vm1433, %v1740
        %1784 = vst.msk [vmem:[%s1777 + $0x30] sm:$0xff] %vm1433, %v1742
        %1785 = vst.msk [vmem:[%s1777 + $0x38] sm:$0xff] %vm1433, %v1744
        %1786 = vst.msk [vmem:[%s1777 + $0x40] sm:$0xff] %vm1433, %v1746
        %1787 = vst.msk [vmem:[%s1777 + $0x48] sm:$0xff] %vm1433, %v1748
        %1788 = vst.msk [vmem:[%s1777 + $0x50] sm:$0xff] %vm1433, %v1750
        %1789 = vst.msk [vmem:[%s1777 + $0x58] sm:$0xff] %vm1433, %v1752
        %1790 = vst.msk [vmem:[%s1777 + $0x60] sm:$0xff] %vm1433, %v1754
        %1791 = vst.msk [vmem:[%s1777 + $0x68] sm:$0xff] %vm1433, %v1756
        %1792 = vst.msk [vmem:[%s1777 + $0x70] sm:$0xff] %vm1433, %v1758
        %1793 = vst.msk [vmem:[%s1777 + $0x78] sm:$0xff] %vm1433, %v1760
        %1794 = vrot.lane.b32.xlu0 %v1187, 64
        %v1795 = vpop.permute.xlu0 %1794
        %1796 = vrot.lane.b32.xlu0 %v1192, 64
        %v1797 = vpop.permute.xlu0 %1796
        %1798 = vrot.lane.b32.xlu0 %v1197, 64
        %v1799 = vpop.permute.xlu0 %1798
        %1800 = vrot.lane.b32.xlu0 %v1202, 64
        %v1801 = vpop.permute.xlu0 %1800
        %1802 = vrot.lane.b32.xlu0 %v1207, 64
        %v1803 = vpop.permute.xlu0 %1802
        %1804 = vrot.lane.b32.xlu0 %v1212, 64
        %v1805 = vpop.permute.xlu0 %1804
        %1806 = vrot.lane.b32.xlu0 %v1217, 64
        %v1807 = vpop.permute.xlu0 %1806
        %1808 = vrot.lane.b32.xlu0 %v1222, 64
        %v1809 = vpop.permute.xlu0 %1808
        %1810 = vrot.lane.b32.xlu0 %v1227, 64
        %v1811 = vpop.permute.xlu0 %1810
        %1812 = vrot.lane.b32.xlu0 %v1232, 64
        %v1813 = vpop.permute.xlu0 %1812
        %1814 = vrot.lane.b32.xlu0 %v1237, 64
        %v1815 = vpop.permute.xlu0 %1814
        %1816 = vrot.lane.b32.xlu0 %v1242, 64
        %v1817 = vpop.permute.xlu0 %1816
        %1818 = vrot.lane.b32.xlu0 %v1247, 64
        %v1819 = vpop.permute.xlu0 %1818
        %1820 = vrot.lane.b32.xlu0 %v1252, 64
        %v1821 = vpop.permute.xlu0 %1820
        %1822 = vrot.lane.b32.xlu0 %v1257, 64
        %v1823 = vpop.permute.xlu0 %1822
        %1824 = vrot.lane.b32.xlu0 %v1262, 64
        %v1825 = vpop.permute.xlu0 %1824
        %s1842 = sadd.s32 256, %s1450
        %s1843 = scalar_lea.vmem [#allocation3], %s1842
        %1844 = vst.msk [vmem:[%s1843] sm:$0xff] %vm1433, %v1795
        %1845 = vst.msk [vmem:[%s1843 + $0x8] sm:$0xff] %vm1433, %v1797
        %1846 = vst.msk [vmem:[%s1843 + $0x10] sm:$0xff] %vm1433, %v1799
        %1847 = vst.msk [vmem:[%s1843 + $0x18] sm:$0xff] %vm1433, %v1801
        %1848 = vst.msk [vmem:[%s1843 + $0x20] sm:$0xff] %vm1433, %v1803
        %1849 = vst.msk [vmem:[%s1843 + $0x28] sm:$0xff] %vm1433, %v1805
        %1850 = vst.msk [vmem:[%s1843 + $0x30] sm:$0xff] %vm1433, %v1807
        %1851 = vst.msk [vmem:[%s1843 + $0x38] sm:$0xff] %vm1433, %v1809
        %1852 = vst.msk [vmem:[%s1843 + $0x40] sm:$0xff] %vm1433, %v1811
        %1853 = vst.msk [vmem:[%s1843 + $0x48] sm:$0xff] %vm1433, %v1813
        %1854 = vst.msk [vmem:[%s1843 + $0x50] sm:$0xff] %vm1433, %v1815
        %1855 = vst.msk [vmem:[%s1843 + $0x58] sm:$0xff] %vm1433, %v1817
        %1856 = vst.msk [vmem:[%s1843 + $0x60] sm:$0xff] %vm1433, %v1819
        %1857 = vst.msk [vmem:[%s1843 + $0x68] sm:$0xff] %vm1433, %v1821
        %1858 = vst.msk [vmem:[%s1843 + $0x70] sm:$0xff] %vm1433, %v1823
        %1859 = vst.msk [vmem:[%s1843 + $0x78] sm:$0xff] %vm1433, %v1825
        %1860 = vrot.lane.b32.xlu0 %v1355, 64
        %v1861 = vpop.permute.xlu0 %1860
        %1862 = vrot.lane.b32.xlu0 %v1360, 64
        %v1863 = vpop.permute.xlu0 %1862
        %1864 = vrot.lane.b32.xlu0 %v1365, 64
        %v1865 = vpop.permute.xlu0 %1864
        %1866 = vrot.lane.b32.xlu0 %v1370, 64
        %v1867 = vpop.permute.xlu0 %1866
        %1868 = vrot.lane.b32.xlu0 %v1375, 64
        %v1869 = vpop.permute.xlu0 %1868
        %1870 = vrot.lane.b32.xlu0 %v1380, 64
        %v1871 = vpop.permute.xlu0 %1870
        %1872 = vrot.lane.b32.xlu0 %v1385, 64
        %v1873 = vpop.permute.xlu0 %1872
        %1874 = vrot.lane.b32.xlu0 %v1390, 64
        %v1875 = vpop.permute.xlu0 %1874
        %1876 = vrot.lane.b32.xlu0 %v1395, 64
        %v1877 = vpop.permute.xlu0 %1876
        %1878 = vrot.lane.b32.xlu0 %v1400, 64
        %v1879 = vpop.permute.xlu0 %1878
        %1880 = vrot.lane.b32.xlu0 %v1405, 64
        %v1881 = vpop.permute.xlu0 %1880
        %1882 = vrot.lane.b32.xlu0 %v1410, 64
        %v1883 = vpop.permute.xlu0 %1882
        %1884 = vrot.lane.b32.xlu0 %v1415, 64
        %v1885 = vpop.permute.xlu0 %1884
        %1886 = vrot.lane.b32.xlu0 %v1420, 64
        %v1887 = vpop.permute.xlu0 %1886
        %1888 = vrot.lane.b32.xlu0 %v1425, 64
        %v1889 = vpop.permute.xlu0 %1888
        %1890 = vrot.lane.b32.xlu0 %v1430, 64
        %v1891 = vpop.permute.xlu0 %1890
        %s1908 = scalar_lea.vmem [#allocation4], %s1842
        %1909 = vst.msk [vmem:[%s1908] sm:$0xff] %vm1433, %v1861
        %1910 = vst.msk [vmem:[%s1908 + $0x8] sm:$0xff] %vm1433, %v1863
        %1911 = vst.msk [vmem:[%s1908 + $0x10] sm:$0xff] %vm1433, %v1865
        %1912 = vst.msk [vmem:[%s1908 + $0x18] sm:$0xff] %vm1433, %v1867
        %1913 = vst.msk [vmem:[%s1908 + $0x20] sm:$0xff] %vm1433, %v1869
        %1914 = vst.msk [vmem:[%s1908 + $0x28] sm:$0xff] %vm1433, %v1871
        %1915 = vst.msk [vmem:[%s1908 + $0x30] sm:$0xff] %vm1433, %v1873
        %1916 = vst.msk [vmem:[%s1908 + $0x38] sm:$0xff] %vm1433, %v1875
        %1917 = vst.msk [vmem:[%s1908 + $0x40] sm:$0xff] %vm1433, %v1877
        %1918 = vst.msk [vmem:[%s1908 + $0x48] sm:$0xff] %vm1433, %v1879
        %1919 = vst.msk [vmem:[%s1908 + $0x50] sm:$0xff] %vm1433, %v1881
        %1920 = vst.msk [vmem:[%s1908 + $0x58] sm:$0xff] %vm1433, %v1883
        %1921 = vst.msk [vmem:[%s1908 + $0x60] sm:$0xff] %vm1433, %v1885
        %1922 = vst.msk [vmem:[%s1908 + $0x68] sm:$0xff] %vm1433, %v1887
        %1923 = vst.msk [vmem:[%s1908 + $0x70] sm:$0xff] %vm1433, %v1889
        %1924 = vst.msk [vmem:[%s1908 + $0x78] sm:$0xff] %vm1433, %v1891
        %1925 = vrot.lane.b32.xlu0 %v1081, 32
        %v1926 = vpop.permute.xlu0 %1925
        %1927 = vrot.lane.b32.xlu0 %v1082, 32
        %v1928 = vpop.permute.xlu0 %1927
        %1929 = vrot.lane.b32.xlu0 %v1083, 32
        %v1930 = vpop.permute.xlu0 %1929
        %1931 = vrot.lane.b32.xlu0 %v1084, 32
        %v1932 = vpop.permute.xlu0 %1931
        %1933 = vrot.lane.b32.xlu0 %v1085, 32
        %v1934 = vpop.permute.xlu0 %1933
        %1935 = vrot.lane.b32.xlu0 %v1086, 32
        %v1936 = vpop.permute.xlu0 %1935
        %1937 = vrot.lane.b32.xlu0 %v1087, 32
        %v1938 = vpop.permute.xlu0 %1937
        %1939 = vrot.lane.b32.xlu0 %v1088, 32
        %v1940 = vpop.permute.xlu0 %1939
        %1941 = vrot.lane.b32.xlu0 %v1089, 32
        %v1942 = vpop.permute.xlu0 %1941
        %1943 = vrot.lane.b32.xlu0 %v1090, 32
        %v1944 = vpop.permute.xlu0 %1943
        %1945 = vrot.lane.b32.xlu0 %v1091, 32
        %v1946 = vpop.permute.xlu0 %1945
        %1947 = vrot.lane.b32.xlu0 %v1092, 32
        %v1948 = vpop.permute.xlu0 %1947
        %1949 = vrot.lane.b32.xlu0 %v1093, 32
        %v1950 = vpop.permute.xlu0 %1949
        %1951 = vrot.lane.b32.xlu0 %v1094, 32
        %v1952 = vpop.permute.xlu0 %1951
        %1953 = vrot.lane.b32.xlu0 %v1095, 32
        %v1954 = vpop.permute.xlu0 %1953
        %1955 = vrot.lane.b32.xlu0 %v1096, 32
        %v1956 = vpop.permute.xlu0 %1955
        %s1973 = scalar_lea.vmem [#allocation2], 384
        %1974 = vst.msk [vmem:[%s1973] sm:$0xff] %vm1433, %v1926
        %1975 = vst.msk [vmem:[%s1973 + $0x8] sm:$0xff] %vm1433, %v1928
        %1976 = vst.msk [vmem:[%s1973 + $0x10] sm:$0xff] %vm1433, %v1930
        %1977 = vst.msk [vmem:[%s1973 + $0x18] sm:$0xff] %vm1433, %v1932
        %1978 = vst.msk [vmem:[%s1973 + $0x20] sm:$0xff] %vm1433, %v1934
        %1979 = vst.msk [vmem:[%s1973 + $0x28] sm:$0xff] %vm1433, %v1936
        %1980 = vst.msk [vmem:[%s1973 + $0x30] sm:$0xff] %vm1433, %v1938
        %1981 = vst.msk [vmem:[%s1973 + $0x38] sm:$0xff] %vm1433, %v1940
        %1982 = vst.msk [vmem:[%s1973 + $0x40] sm:$0xff] %vm1433, %v1942
        %1983 = vst.msk [vmem:[%s1973 + $0x48] sm:$0xff] %vm1433, %v1944
        %1984 = vst.msk [vmem:[%s1973 + $0x50] sm:$0xff] %vm1433, %v1946
        %1985 = vst.msk [vmem:[%s1973 + $0x58] sm:$0xff] %vm1433, %v1948
        %1986 = vst.msk [vmem:[%s1973 + $0x60] sm:$0xff] %vm1433, %v1950
        %1987 = vst.msk [vmem:[%s1973 + $0x68] sm:$0xff] %vm1433, %v1952
        %1988 = vst.msk [vmem:[%s1973 + $0x70] sm:$0xff] %vm1433, %v1954
        %1989 = vst.msk [vmem:[%s1973 + $0x78] sm:$0xff] %vm1433, %v1956
        %1990 = vrot.lane.b32.xlu0 %v1187, 32
        %v1991 = vpop.permute.xlu0 %1990
        %1992 = vrot.lane.b32.xlu0 %v1192, 32
        %v1993 = vpop.permute.xlu0 %1992
        %1994 = vrot.lane.b32.xlu0 %v1197, 32
        %v1995 = vpop.permute.xlu0 %1994
        %1996 = vrot.lane.b32.xlu0 %v1202, 32
        %v1997 = vpop.permute.xlu0 %1996
        %1998 = vrot.lane.b32.xlu0 %v1207, 32
        %v1999 = vpop.permute.xlu0 %1998
        %2000 = vrot.lane.b32.xlu0 %v1212, 32
        %v2001 = vpop.permute.xlu0 %2000
        %2002 = vrot.lane.b32.xlu0 %v1217, 32
        %v2003 = vpop.permute.xlu0 %2002
        %2004 = vrot.lane.b32.xlu0 %v1222, 32
        %v2005 = vpop.permute.xlu0 %2004
        %2006 = vrot.lane.b32.xlu0 %v1227, 32
        %v2007 = vpop.permute.xlu0 %2006
        %2008 = vrot.lane.b32.xlu0 %v1232, 32
        %v2009 = vpop.permute.xlu0 %2008
        %2010 = vrot.lane.b32.xlu0 %v1237, 32
        %v2011 = vpop.permute.xlu0 %2010
        %2012 = vrot.lane.b32.xlu0 %v1242, 32
        %v2013 = vpop.permute.xlu0 %2012
        %2014 = vrot.lane.b32.xlu0 %v1247, 32
        %v2015 = vpop.permute.xlu0 %2014
        %2016 = vrot.lane.b32.xlu0 %v1252, 32
        %v2017 = vpop.permute.xlu0 %2016
        %2018 = vrot.lane.b32.xlu0 %v1257, 32
        %v2019 = vpop.permute.xlu0 %2018
        %2020 = vrot.lane.b32.xlu0 %v1262, 32
        %v2021 = vpop.permute.xlu0 %2020
        %s2038 = sadd.s32 384, %s1450
        %s2039 = scalar_lea.vmem [#allocation3], %s2038
        %2040 = vst.msk [vmem:[%s2039] sm:$0xff] %vm1433, %v1991
        %2041 = vst.msk [vmem:[%s2039 + $0x8] sm:$0xff] %vm1433, %v1993
        %2042 = vst.msk [vmem:[%s2039 + $0x10] sm:$0xff] %vm1433, %v1995
        %2043 = vst.msk [vmem:[%s2039 + $0x18] sm:$0xff] %vm1433, %v1997
        %2044 = vst.msk [vmem:[%s2039 + $0x20] sm:$0xff] %vm1433, %v1999
        %2045 = vst.msk [vmem:[%s2039 + $0x28] sm:$0xff] %vm1433, %v2001
        %2046 = vst.msk [vmem:[%s2039 + $0x30] sm:$0xff] %vm1433, %v2003
        %2047 = vst.msk [vmem:[%s2039 + $0x38] sm:$0xff] %vm1433, %v2005
        %2048 = vst.msk [vmem:[%s2039 + $0x40] sm:$0xff] %vm1433, %v2007
        %2049 = vst.msk [vmem:[%s2039 + $0x48] sm:$0xff] %vm1433, %v2009
        %2050 = vst.msk [vmem:[%s2039 + $0x50] sm:$0xff] %vm1433, %v2011
        %2051 = vst.msk [vmem:[%s2039 + $0x58] sm:$0xff] %vm1433, %v2013
        %2052 = vst.msk [vmem:[%s2039 + $0x60] sm:$0xff] %vm1433, %v2015
        %2053 = vst.msk [vmem:[%s2039 + $0x68] sm:$0xff] %vm1433, %v2017
        %2054 = vst.msk [vmem:[%s2039 + $0x70] sm:$0xff] %vm1433, %v2019
        %2055 = vst.msk [vmem:[%s2039 + $0x78] sm:$0xff] %vm1433, %v2021
        %2056 = vrot.lane.b32.xlu0 %v1355, 32
        %v2057 = vpop.permute.xlu0 %2056
        %2058 = vrot.lane.b32.xlu0 %v1360, 32
        %v2059 = vpop.permute.xlu0 %2058
        %2060 = vrot.lane.b32.xlu0 %v1365, 32
        %v2061 = vpop.permute.xlu0 %2060
        %2062 = vrot.lane.b32.xlu0 %v1370, 32
        %v2063 = vpop.permute.xlu0 %2062
        %2064 = vrot.lane.b32.xlu0 %v1375, 32
        %v2065 = vpop.permute.xlu0 %2064
        %2066 = vrot.lane.b32.xlu0 %v1380, 32
        %v2067 = vpop.permute.xlu0 %2066
        %2068 = vrot.lane.b32.xlu0 %v1385, 32
        %v2069 = vpop.permute.xlu0 %2068
        %2070 = vrot.lane.b32.xlu0 %v1390, 32
        %v2071 = vpop.permute.xlu0 %2070
        %2072 = vrot.lane.b32.xlu0 %v1395, 32
        %v2073 = vpop.permute.xlu0 %2072
        %2074 = vrot.lane.b32.xlu0 %v1400, 32
        %v2075 = vpop.permute.xlu0 %2074
        %2076 = vrot.lane.b32.xlu0 %v1405, 32
        %v2077 = vpop.permute.xlu0 %2076
        %2078 = vrot.lane.b32.xlu0 %v1410, 32
        %v2079 = vpop.permute.xlu0 %2078
        %2080 = vrot.lane.b32.xlu0 %v1415, 32
        %v2081 = vpop.permute.xlu0 %2080
        %2082 = vrot.lane.b32.xlu0 %v1420, 32
        %v2083 = vpop.permute.xlu0 %2082
        %2084 = vrot.lane.b32.xlu0 %v1425, 32
        %v2085 = vpop.permute.xlu0 %2084
        %2086 = vrot.lane.b32.xlu0 %v1430, 32
        %v2087 = vpop.permute.xlu0 %2086
        %s2104 = scalar_lea.vmem [#allocation4], %s2038
        %2105 = vst.msk [vmem:[%s2104] sm:$0xff] %vm1433, %v2057
        %2106 = vst.msk [vmem:[%s2104 + $0x8] sm:$0xff] %vm1433, %v2059
        %2107 = vst.msk [vmem:[%s2104 + $0x10] sm:$0xff] %vm1433, %v2061
        %2108 = vst.msk [vmem:[%s2104 + $0x18] sm:$0xff] %vm1433, %v2063
        %2109 = vst.msk [vmem:[%s2104 + $0x20] sm:$0xff] %vm1433, %v2065
        %2110 = vst.msk [vmem:[%s2104 + $0x28] sm:$0xff] %vm1433, %v2067
        %2111 = vst.msk [vmem:[%s2104 + $0x30] sm:$0xff] %vm1433, %v2069
        %2112 = vst.msk [vmem:[%s2104 + $0x38] sm:$0xff] %vm1433, %v2071
        %2113 = vst.msk [vmem:[%s2104 + $0x40] sm:$0xff] %vm1433, %v2073
        %2114 = vst.msk [vmem:[%s2104 + $0x48] sm:$0xff] %vm1433, %v2075
        %2115 = vst.msk [vmem:[%s2104 + $0x50] sm:$0xff] %vm1433, %v2077
        %2116 = vst.msk [vmem:[%s2104 + $0x58] sm:$0xff] %vm1433, %v2079
        %2117 = vst.msk [vmem:[%s2104 + $0x60] sm:$0xff] %vm1433, %v2081
        %2118 = vst.msk [vmem:[%s2104 + $0x68] sm:$0xff] %vm1433, %v2083
        %2119 = vst.msk [vmem:[%s2104 + $0x70] sm:$0xff] %vm1433, %v2085
        %2120 = vst.msk [vmem:[%s2104 + $0x78] sm:$0xff] %vm1433, %v2087
        %vm2121 = vcmask 7168
        %2122 = vst.msk [vmem:[#allocation6] sm:$0xff] %vm2121, -1e+30
        %2123 = vst.msk [vmem:[#allocation6 + $0x8] sm:$0xff] %vm2121, -1e+30
        %2124 = vst.msk [vmem:[#allocation6 + $0x10] sm:$0xff] %vm2121, -1e+30
        %2125 = vst.msk [vmem:[#allocation6 + $0x18] sm:$0xff] %vm2121, -1e+30
        %2126 = vst.msk [vmem:[#allocation6 + $0x20] sm:$0xff] %vm2121, -1e+30
        %2127 = vst.msk [vmem:[#allocation6 + $0x28] sm:$0xff] %vm2121, -1e+30
        %2128 = vst.msk [vmem:[#allocation6 + $0x30] sm:$0xff] %vm2121, -1e+30
        %2129 = vst.msk [vmem:[#allocation6 + $0x38] sm:$0xff] %vm2121, -1e+30
        %2130 = vst.msk [vmem:[#allocation6 + $0x40] sm:$0xff] %vm2121, -1e+30
        %2131 = vst.msk [vmem:[#allocation6 + $0x48] sm:$0xff] %vm2121, -1e+30
        %2132 = vst.msk [vmem:[#allocation6 + $0x50] sm:$0xff] %vm2121, -1e+30
        %2133 = vst.msk [vmem:[#allocation6 + $0x58] sm:$0xff] %vm2121, -1e+30
        %2134 = vst.msk [vmem:[#allocation6 + $0x60] sm:$0xff] %vm2121, -1e+30
        %2135 = vst.msk [vmem:[#allocation6 + $0x68] sm:$0xff] %vm2121, -1e+30
        %2136 = vst.msk [vmem:[#allocation6 + $0x70] sm:$0xff] %vm2121, -1e+30
        %2137 = vst.msk [vmem:[#allocation6 + $0x78] sm:$0xff] %vm2121, -1e+30
        %2138 = vst.msk [vmem:[#allocation6 + $0x80] sm:$0xff] %vm2121, -1e+30
        %2139 = vst.msk [vmem:[#allocation6 + $0x88] sm:$0xff] %vm2121, -1e+30
        %2140 = vst.msk [vmem:[#allocation6 + $0x90] sm:$0xff] %vm2121, -1e+30
        %2141 = vst.msk [vmem:[#allocation6 + $0x98] sm:$0xff] %vm2121, -1e+30
        %2142 = vst.msk [vmem:[#allocation6 + $0xa0] sm:$0xff] %vm2121, -1e+30
        %2143 = vst.msk [vmem:[#allocation6 + $0xa8] sm:$0xff] %vm2121, -1e+30
        %2144 = vst.msk [vmem:[#allocation6 + $0xb0] sm:$0xff] %vm2121, -1e+30
        %2145 = vst.msk [vmem:[#allocation6 + $0xb8] sm:$0xff] %vm2121, -1e+30
        %2146 = vst.msk [vmem:[#allocation6 + $0xc0] sm:$0xff] %vm2121, -1e+30
        %2147 = vst.msk [vmem:[#allocation6 + $0xc8] sm:$0xff] %vm2121, -1e+30
        %2148 = vst.msk [vmem:[#allocation6 + $0xd0] sm:$0xff] %vm2121, -1e+30
        %2149 = vst.msk [vmem:[#allocation6 + $0xd8] sm:$0xff] %vm2121, -1e+30
        %2150 = vst.msk [vmem:[#allocation6 + $0xe0] sm:$0xff] %vm2121, -1e+30
        %2151 = vst.msk [vmem:[#allocation6 + $0xe8] sm:$0xff] %vm2121, -1e+30
        %2152 = vst.msk [vmem:[#allocation6 + $0xf0] sm:$0xff] %vm2121, -1e+30
        %2153 = vst.msk [vmem:[#allocation6 + $0xf8] sm:$0xff] %vm2121, -1e+30
        %2154 = vst.msk [vmem:[#allocation6 + $0x100] sm:$0xff] %vm2121, -1e+30
        %2155 = vst.msk [vmem:[#allocation6 + $0x108] sm:$0xff] %vm2121, -1e+30
        %2156 = vst.msk [vmem:[#allocation6 + $0x110] sm:$0xff] %vm2121, -1e+30
        %2157 = vst.msk [vmem:[#allocation6 + $0x118] sm:$0xff] %vm2121, -1e+30
        %2158 = vst.msk [vmem:[#allocation6 + $0x120] sm:$0xff] %vm2121, -1e+30
        %2159 = vst.msk [vmem:[#allocation6 + $0x128] sm:$0xff] %vm2121, -1e+30
        %2160 = vst.msk [vmem:[#allocation6 + $0x130] sm:$0xff] %vm2121, -1e+30
        %2161 = vst.msk [vmem:[#allocation6 + $0x138] sm:$0xff] %vm2121, -1e+30
        %2162 = vst.msk [vmem:[#allocation6 + $0x140] sm:$0xff] %vm2121, -1e+30
        %2163 = vst.msk [vmem:[#allocation6 + $0x148] sm:$0xff] %vm2121, -1e+30
        %2164 = vst.msk [vmem:[#allocation6 + $0x150] sm:$0xff] %vm2121, -1e+30
        %2165 = vst.msk [vmem:[#allocation6 + $0x158] sm:$0xff] %vm2121, -1e+30
        %2166 = vst.msk [vmem:[#allocation6 + $0x160] sm:$0xff] %vm2121, -1e+30
        %2167 = vst.msk [vmem:[#allocation6 + $0x168] sm:$0xff] %vm2121, -1e+30
        %2168 = vst.msk [vmem:[#allocation6 + $0x170] sm:$0xff] %vm2121, -1e+30
        %2169 = vst.msk [vmem:[#allocation6 + $0x178] sm:$0xff] %vm2121, -1e+30
        %2170 = vst.msk [vmem:[#allocation6 + $0x180] sm:$0xff] %vm2121, -1e+30
        %2171 = vst.msk [vmem:[#allocation6 + $0x188] sm:$0xff] %vm2121, -1e+30
        %2172 = vst.msk [vmem:[#allocation6 + $0x190] sm:$0xff] %vm2121, -1e+30
        %2173 = vst.msk [vmem:[#allocation6 + $0x198] sm:$0xff] %vm2121, -1e+30
        %2174 = vst.msk [vmem:[#allocation6 + $0x1a0] sm:$0xff] %vm2121, -1e+30
        %2175 = vst.msk [vmem:[#allocation6 + $0x1a8] sm:$0xff] %vm2121, -1e+30
        %2176 = vst.msk [vmem:[#allocation6 + $0x1b0] sm:$0xff] %vm2121, -1e+30
        %2177 = vst.msk [vmem:[#allocation6 + $0x1b8] sm:$0xff] %vm2121, -1e+30
        %2178 = vst.msk [vmem:[#allocation6 + $0x1c0] sm:$0xff] %vm2121, -1e+30
        %2179 = vst.msk [vmem:[#allocation6 + $0x1c8] sm:$0xff] %vm2121, -1e+30
        %2180 = vst.msk [vmem:[#allocation6 + $0x1d0] sm:$0xff] %vm2121, -1e+30
        %2181 = vst.msk [vmem:[#allocation6 + $0x1d8] sm:$0xff] %vm2121, -1e+30
        %2182 = vst.msk [vmem:[#allocation6 + $0x1e0] sm:$0xff] %vm2121, -1e+30
        %2183 = vst.msk [vmem:[#allocation6 + $0x1e8] sm:$0xff] %vm2121, -1e+30
        %2184 = vst.msk [vmem:[#allocation6 + $0x1f0] sm:$0xff] %vm2121, -1e+30
        %2185 = vst.msk [vmem:[#allocation6 + $0x1f8] sm:$0xff] %vm2121, -1e+30
        %2186 = vst.msk [vmem:[#allocation7] sm:$0xff] %vm2121, 0.0
        %2187 = vst.msk [vmem:[#allocation7 + $0x8] sm:$0xff] %vm2121, 0.0
        %2188 = vst.msk [vmem:[#allocation7 + $0x10] sm:$0xff] %vm2121, 0.0
        %2189 = vst.msk [vmem:[#allocation7 + $0x18] sm:$0xff] %vm2121, 0.0
        %2190 = vst.msk [vmem:[#allocation7 + $0x20] sm:$0xff] %vm2121, 0.0
        %2191 = vst.msk [vmem:[#allocation7 + $0x28] sm:$0xff] %vm2121, 0.0
        %2192 = vst.msk [vmem:[#allocation7 + $0x30] sm:$0xff] %vm2121, 0.0
        %2193 = vst.msk [vmem:[#allocation7 + $0x38] sm:$0xff] %vm2121, 0.0
        %2194 = vst.msk [vmem:[#allocation7 + $0x40] sm:$0xff] %vm2121, 0.0
        %2195 = vst.msk [vmem:[#allocation7 + $0x48] sm:$0xff] %vm2121, 0.0
        %2196 = vst.msk [vmem:[#allocation7 + $0x50] sm:$0xff] %vm2121, 0.0
        %2197 = vst.msk [vmem:[#allocation7 + $0x58] sm:$0xff] %vm2121, 0.0
        %2198 = vst.msk [vmem:[#allocation7 + $0x60] sm:$0xff] %vm2121, 0.0
        %2199 = vst.msk [vmem:[#allocation7 + $0x68] sm:$0xff] %vm2121, 0.0
        %2200 = vst.msk [vmem:[#allocation7 + $0x70] sm:$0xff] %vm2121, 0.0
        %2201 = vst.msk [vmem:[#allocation7 + $0x78] sm:$0xff] %vm2121, 0.0
        %2202 = vst.msk [vmem:[#allocation7 + $0x80] sm:$0xff] %vm2121, 0.0
        %2203 = vst.msk [vmem:[#allocation7 + $0x88] sm:$0xff] %vm2121, 0.0
        %2204 = vst.msk [vmem:[#allocation7 + $0x90] sm:$0xff] %vm2121, 0.0
        %2205 = vst.msk [vmem:[#allocation7 + $0x98] sm:$0xff] %vm2121, 0.0
        %2206 = vst.msk [vmem:[#allocation7 + $0xa0] sm:$0xff] %vm2121, 0.0
        %2207 = vst.msk [vmem:[#allocation7 + $0xa8] sm:$0xff] %vm2121, 0.0
        %2208 = vst.msk [vmem:[#allocation7 + $0xb0] sm:$0xff] %vm2121, 0.0
        %2209 = vst.msk [vmem:[#allocation7 + $0xb8] sm:$0xff] %vm2121, 0.0
        %2210 = vst.msk [vmem:[#allocation7 + $0xc0] sm:$0xff] %vm2121, 0.0
        %2211 = vst.msk [vmem:[#allocation7 + $0xc8] sm:$0xff] %vm2121, 0.0
        %2212 = vst.msk [vmem:[#allocation7 + $0xd0] sm:$0xff] %vm2121, 0.0
        %2213 = vst.msk [vmem:[#allocation7 + $0xd8] sm:$0xff] %vm2121, 0.0
        %2214 = vst.msk [vmem:[#allocation7 + $0xe0] sm:$0xff] %vm2121, 0.0
        %2215 = vst.msk [vmem:[#allocation7 + $0xe8] sm:$0xff] %vm2121, 0.0
        %2216 = vst.msk [vmem:[#allocation7 + $0xf0] sm:$0xff] %vm2121, 0.0
        %2217 = vst.msk [vmem:[#allocation7 + $0xf8] sm:$0xff] %vm2121, 0.0
        %2218 = vst.msk [vmem:[#allocation7 + $0x100] sm:$0xff] %vm2121, 0.0
        %2219 = vst.msk [vmem:[#allocation7 + $0x108] sm:$0xff] %vm2121, 0.0
        %2220 = vst.msk [vmem:[#allocation7 + $0x110] sm:$0xff] %vm2121, 0.0
        %2221 = vst.msk [vmem:[#allocation7 + $0x118] sm:$0xff] %vm2121, 0.0
        %2222 = vst.msk [vmem:[#allocation7 + $0x120] sm:$0xff] %vm2121, 0.0
        %2223 = vst.msk [vmem:[#allocation7 + $0x128] sm:$0xff] %vm2121, 0.0
        %2224 = vst.msk [vmem:[#allocation7 + $0x130] sm:$0xff] %vm2121, 0.0
        %2225 = vst.msk [vmem:[#allocation7 + $0x138] sm:$0xff] %vm2121, 0.0
        %2226 = vst.msk [vmem:[#allocation7 + $0x140] sm:$0xff] %vm2121, 0.0
        %2227 = vst.msk [vmem:[#allocation7 + $0x148] sm:$0xff] %vm2121, 0.0
        %2228 = vst.msk [vmem:[#allocation7 + $0x150] sm:$0xff] %vm2121, 0.0
        %2229 = vst.msk [vmem:[#allocation7 + $0x158] sm:$0xff] %vm2121, 0.0
        %2230 = vst.msk [vmem:[#allocation7 + $0x160] sm:$0xff] %vm2121, 0.0
        %2231 = vst.msk [vmem:[#allocation7 + $0x168] sm:$0xff] %vm2121, 0.0
        %2232 = vst.msk [vmem:[#allocation7 + $0x170] sm:$0xff] %vm2121, 0.0
        %2233 = vst.msk [vmem:[#allocation7 + $0x178] sm:$0xff] %vm2121, 0.0
        %2234 = vst.msk [vmem:[#allocation7 + $0x180] sm:$0xff] %vm2121, 0.0
        %2235 = vst.msk [vmem:[#allocation7 + $0x188] sm:$0xff] %vm2121, 0.0
        %2236 = vst.msk [vmem:[#allocation7 + $0x190] sm:$0xff] %vm2121, 0.0
        %2237 = vst.msk [vmem:[#allocation7 + $0x198] sm:$0xff] %vm2121, 0.0
        %2238 = vst.msk [vmem:[#allocation7 + $0x1a0] sm:$0xff] %vm2121, 0.0
        %2239 = vst.msk [vmem:[#allocation7 + $0x1a8] sm:$0xff] %vm2121, 0.0
        %2240 = vst.msk [vmem:[#allocation7 + $0x1b0] sm:$0xff] %vm2121, 0.0
        %2241 = vst.msk [vmem:[#allocation7 + $0x1b8] sm:$0xff] %vm2121, 0.0
        %2242 = vst.msk [vmem:[#allocation7 + $0x1c0] sm:$0xff] %vm2121, 0.0
        %2243 = vst.msk [vmem:[#allocation7 + $0x1c8] sm:$0xff] %vm2121, 0.0
        %2244 = vst.msk [vmem:[#allocation7 + $0x1d0] sm:$0xff] %vm2121, 0.0
        %2245 = vst.msk [vmem:[#allocation7 + $0x1d8] sm:$0xff] %vm2121, 0.0
        %2246 = vst.msk [vmem:[#allocation7 + $0x1e0] sm:$0xff] %vm2121, 0.0
        %2247 = vst.msk [vmem:[#allocation7 + $0x1e8] sm:$0xff] %vm2121, 0.0
        %2248 = vst.msk [vmem:[#allocation7 + $0x1f0] sm:$0xff] %vm2121, 0.0
        %2249 = vst.msk [vmem:[#allocation7 + $0x1f8] sm:$0xff] %vm2121, 0.0
        %2250 = vst.msk [vmem:[#allocation8] sm:$0xff] %vm1433, 0.0
        %2251 = vst.msk [vmem:[#allocation8 + $0x8] sm:$0xff] %vm1433, 0.0
        %2252 = vst.msk [vmem:[#allocation8 + $0x10] sm:$0xff] %vm1433, 0.0
        %2253 = vst.msk [vmem:[#allocation8 + $0x18] sm:$0xff] %vm1433, 0.0
        %2254 = vst.msk [vmem:[#allocation8 + $0x20] sm:$0xff] %vm1433, 0.0
        %2255 = vst.msk [vmem:[#allocation8 + $0x28] sm:$0xff] %vm1433, 0.0
        %2256 = vst.msk [vmem:[#allocation8 + $0x30] sm:$0xff] %vm1433, 0.0
        %2257 = vst.msk [vmem:[#allocation8 + $0x38] sm:$0xff] %vm1433, 0.0
        %2258 = vst.msk [vmem:[#allocation8 + $0x40] sm:$0xff] %vm1433, 0.0
        %2259 = vst.msk [vmem:[#allocation8 + $0x48] sm:$0xff] %vm1433, 0.0
        %2260 = vst.msk [vmem:[#allocation8 + $0x50] sm:$0xff] %vm1433, 0.0
        %2261 = vst.msk [vmem:[#allocation8 + $0x58] sm:$0xff] %vm1433, 0.0
        %2262 = vst.msk [vmem:[#allocation8 + $0x60] sm:$0xff] %vm1433, 0.0
        %2263 = vst.msk [vmem:[#allocation8 + $0x68] sm:$0xff] %vm1433, 0.0
        %2264 = vst.msk [vmem:[#allocation8 + $0x70] sm:$0xff] %vm1433, 0.0
        %2265 = vst.msk [vmem:[#allocation8 + $0x78] sm:$0xff] %vm1433, 0.0
        %2266 = vst.msk [vmem:[#allocation8 + $0x80] sm:$0xff] %vm1433, 0.0
        %2267 = vst.msk [vmem:[#allocation8 + $0x88] sm:$0xff] %vm1433, 0.0
        %2268 = vst.msk [vmem:[#allocation8 + $0x90] sm:$0xff] %vm1433, 0.0
        %2269 = vst.msk [vmem:[#allocation8 + $0x98] sm:$0xff] %vm1433, 0.0
        %2270 = vst.msk [vmem:[#allocation8 + $0xa0] sm:$0xff] %vm1433, 0.0
        %2271 = vst.msk [vmem:[#allocation8 + $0xa8] sm:$0xff] %vm1433, 0.0
        %2272 = vst.msk [vmem:[#allocation8 + $0xb0] sm:$0xff] %vm1433, 0.0
        %2273 = vst.msk [vmem:[#allocation8 + $0xb8] sm:$0xff] %vm1433, 0.0
        %2274 = vst.msk [vmem:[#allocation8 + $0xc0] sm:$0xff] %vm1433, 0.0
        %2275 = vst.msk [vmem:[#allocation8 + $0xc8] sm:$0xff] %vm1433, 0.0
        %2276 = vst.msk [vmem:[#allocation8 + $0xd0] sm:$0xff] %vm1433, 0.0
        %2277 = vst.msk [vmem:[#allocation8 + $0xd8] sm:$0xff] %vm1433, 0.0
        %2278 = vst.msk [vmem:[#allocation8 + $0xe0] sm:$0xff] %vm1433, 0.0
        %2279 = vst.msk [vmem:[#allocation8 + $0xe8] sm:$0xff] %vm1433, 0.0
        %2280 = vst.msk [vmem:[#allocation8 + $0xf0] sm:$0xff] %vm1433, 0.0
        %2281 = vst.msk [vmem:[#allocation8 + $0xf8] sm:$0xff] %vm1433, 0.0
        %2282 = vst.msk [vmem:[#allocation8 + $0x100] sm:$0xff] %vm1433, 0.0
        %2283 = vst.msk [vmem:[#allocation8 + $0x108] sm:$0xff] %vm1433, 0.0
        %2284 = vst.msk [vmem:[#allocation8 + $0x110] sm:$0xff] %vm1433, 0.0
        %2285 = vst.msk [vmem:[#allocation8 + $0x118] sm:$0xff] %vm1433, 0.0
        %2286 = vst.msk [vmem:[#allocation8 + $0x120] sm:$0xff] %vm1433, 0.0
        %2287 = vst.msk [vmem:[#allocation8 + $0x128] sm:$0xff] %vm1433, 0.0
        %2288 = vst.msk [vmem:[#allocation8 + $0x130] sm:$0xff] %vm1433, 0.0
        %2289 = vst.msk [vmem:[#allocation8 + $0x138] sm:$0xff] %vm1433, 0.0
        %2290 = vst.msk [vmem:[#allocation8 + $0x140] sm:$0xff] %vm1433, 0.0
        %2291 = vst.msk [vmem:[#allocation8 + $0x148] sm:$0xff] %vm1433, 0.0
        %2292 = vst.msk [vmem:[#allocation8 + $0x150] sm:$0xff] %vm1433, 0.0
        %2293 = vst.msk [vmem:[#allocation8 + $0x158] sm:$0xff] %vm1433, 0.0
        %2294 = vst.msk [vmem:[#allocation8 + $0x160] sm:$0xff] %vm1433, 0.0
        %2295 = vst.msk [vmem:[#allocation8 + $0x168] sm:$0xff] %vm1433, 0.0
        %2296 = vst.msk [vmem:[#allocation8 + $0x170] sm:$0xff] %vm1433, 0.0
        %2297 = vst.msk [vmem:[#allocation8 + $0x178] sm:$0xff] %vm1433, 0.0
        %2298 = vst.msk [vmem:[#allocation8 + $0x180] sm:$0xff] %vm1433, 0.0
        %2299 = vst.msk [vmem:[#allocation8 + $0x188] sm:$0xff] %vm1433, 0.0
        %2300 = vst.msk [vmem:[#allocation8 + $0x190] sm:$0xff] %vm1433, 0.0
        %2301 = vst.msk [vmem:[#allocation8 + $0x198] sm:$0xff] %vm1433, 0.0
        %2302 = vst.msk [vmem:[#allocation8 + $0x1a0] sm:$0xff] %vm1433, 0.0
        %2303 = vst.msk [vmem:[#allocation8 + $0x1a8] sm:$0xff] %vm1433, 0.0
        %2304 = vst.msk [vmem:[#allocation8 + $0x1b0] sm:$0xff] %vm1433, 0.0
        %2305 = vst.msk [vmem:[#allocation8 + $0x1b8] sm:$0xff] %vm1433, 0.0
        %2306 = vst.msk [vmem:[#allocation8 + $0x1c0] sm:$0xff] %vm1433, 0.0
        %2307 = vst.msk [vmem:[#allocation8 + $0x1c8] sm:$0xff] %vm1433, 0.0
        %2308 = vst.msk [vmem:[#allocation8 + $0x1d0] sm:$0xff] %vm1433, 0.0
        %2309 = vst.msk [vmem:[#allocation8 + $0x1d8] sm:$0xff] %vm1433, 0.0
        %2310 = vst.msk [vmem:[#allocation8 + $0x1e0] sm:$0xff] %vm1433, 0.0
        %2311 = vst.msk [vmem:[#allocation8 + $0x1e8] sm:$0xff] %vm1433, 0.0
        %2312 = vst.msk [vmem:[#allocation8 + $0x1f0] sm:$0xff] %vm1433, 0.0
        %2313 = vst.msk [vmem:[#allocation8 + $0x1f8] sm:$0xff] %vm1433, 0.0
        %v2314 = vlaneseq
        %v2315 = vshrl.u32 %v2314, 7
        %v2316 = vadd.s32 %v2315, 8
        %v2317 = vadd.s32 %v2315, 16
        %v2318 = vadd.s32 %v2315, 24
        %v2319 = vadd.s32 %v2315, 32
        %v2320 = vadd.s32 %v2315, 40
        %v2321 = vadd.s32 %v2315, 48
        %v2322 = vadd.s32 %v2315, 56
        %v2323 = vadd.s32 %v2315, 64
        %v2324 = vadd.s32 %v2315, 72
        %v2325 = vadd.s32 %v2315, 80
        %v2326 = vadd.s32 %v2315, 88
        %v2327 = vadd.s32 %v2315, 96
        %v2328 = vadd.s32 %v2315, 104
        %v2329 = vadd.s32 %v2315, 112
        %v2330 = vadd.s32 %v2315, 120
        %v2331 = vlaneseq
        %v2332 = vand.u32 %v2331, 127
        %vm2333 = vcmp.ge.s32.totalorder %v2315, %v2332
        %vm2334 = vcmp.ge.s32.totalorder %v2316, %v2332
        %vm2335 = vcmp.ge.s32.totalorder %v2317, %v2332
        %vm2336 = vcmp.ge.s32.totalorder %v2318, %v2332
        %vm2337 = vcmp.ge.s32.totalorder %v2319, %v2332
        %vm2338 = vcmp.ge.s32.totalorder %v2320, %v2332
        %vm2339 = vcmp.ge.s32.totalorder %v2321, %v2332
        %vm2340 = vcmp.ge.s32.totalorder %v2322, %v2332
        %vm2341 = vcmp.ge.s32.totalorder %v2323, %v2332
        %vm2342 = vcmp.ge.s32.totalorder %v2324, %v2332
        %vm2343 = vcmp.ge.s32.totalorder %v2325, %v2332
        %vm2344 = vcmp.ge.s32.totalorder %v2326, %v2332
        %vm2345 = vcmp.ge.s32.totalorder %v2327, %v2332
        %vm2346 = vcmp.ge.s32.totalorder %v2328, %v2332
        %vm2347 = vcmp.ge.s32.totalorder %v2329, %v2332
        %vm2348 = vcmp.ge.s32.totalorder %v2330, %v2332
        %s2349 = sadd.s32 %s42, 1
        // While loop
        $region117: #{tpu_custom_call.1} parent=87 // loop_pre_header
          _
        $region118: #{tpu_custom_call.1} parent=87 // loop_header
          %s2351 = sphi 0, %s2353
          %p2352 = scmp.ge.s32.totalorder %s2351, %s2349
        $region119: #{tpu_custom_call.1} parent=87 // loop_header_branch
          %2355 = sbr.rel (%p2352) target = $region123
        $region120: #{tpu_custom_call.1} parent=87 // loop_body
          %v2356 = vld [vmem:[#allocation2] sm:$0xff]
          %v2357 = vld [vmem:[#allocation2 + $0x8] sm:$0xff]
          %v2358 = vld [vmem:[#allocation2 + $0x10] sm:$0xff]
          %v2359 = vld [vmem:[#allocation2 + $0x18] sm:$0xff]
          %v2360 = vld [vmem:[#allocation2 + $0x20] sm:$0xff]
          %v2361 = vld [vmem:[#allocation2 + $0x28] sm:$0xff]
          %v2362 = vld [vmem:[#allocation2 + $0x30] sm:$0xff]
          %v2363 = vld [vmem:[#allocation2 + $0x38] sm:$0xff]
          %v2364 = vld [vmem:[#allocation2 + $0x40] sm:$0xff]
          %v2365 = vld [vmem:[#allocation2 + $0x48] sm:$0xff]
          %v2366 = vld [vmem:[#allocation2 + $0x50] sm:$0xff]
          %v2367 = vld [vmem:[#allocation2 + $0x58] sm:$0xff]
          %v2368 = vld [vmem:[#allocation2 + $0x60] sm:$0xff]
          %v2369 = vld [vmem:[#allocation2 + $0x68] sm:$0xff]
          %v2370 = vld [vmem:[#allocation2 + $0x70] sm:$0xff]
          %v2371 = vld [vmem:[#allocation2 + $0x78] sm:$0xff]
          %v2372 = vld [vmem:[#allocation2 + $0x80] sm:$0xff]
          %v2373 = vld [vmem:[#allocation2 + $0x88] sm:$0xff]
          %v2374 = vld [vmem:[#allocation2 + $0x90] sm:$0xff]
          %v2375 = vld [vmem:[#allocation2 + $0x98] sm:$0xff]
          %v2376 = vld [vmem:[#allocation2 + $0xa0] sm:$0xff]
          %v2377 = vld [vmem:[#allocation2 + $0xa8] sm:$0xff]
          %v2378 = vld [vmem:[#allocation2 + $0xb0] sm:$0xff]
          %v2379 = vld [vmem:[#allocation2 + $0xb8] sm:$0xff]
          %v2380 = vld [vmem:[#allocation2 + $0xc0] sm:$0xff]
          %v2381 = vld [vmem:[#allocation2 + $0xc8] sm:$0xff]
          %v2382 = vld [vmem:[#allocation2 + $0xd0] sm:$0xff]
          %v2383 = vld [vmem:[#allocation2 + $0xd8] sm:$0xff]
          %v2384 = vld [vmem:[#allocation2 + $0xe0] sm:$0xff]
          %v2385 = vld [vmem:[#allocation2 + $0xe8] sm:$0xff]
          %v2386 = vld [vmem:[#allocation2 + $0xf0] sm:$0xff]
          %v2387 = vld [vmem:[#allocation2 + $0xf8] sm:$0xff]
          %v2388 = vld [vmem:[#allocation2 + $0x100] sm:$0xff]
          %v2389 = vld [vmem:[#allocation2 + $0x108] sm:$0xff]
          %v2390 = vld [vmem:[#allocation2 + $0x110] sm:$0xff]
          %v2391 = vld [vmem:[#allocation2 + $0x118] sm:$0xff]
          %v2392 = vld [vmem:[#allocation2 + $0x120] sm:$0xff]
          %v2393 = vld [vmem:[#allocation2 + $0x128] sm:$0xff]
          %v2394 = vld [vmem:[#allocation2 + $0x130] sm:$0xff]
          %v2395 = vld [vmem:[#allocation2 + $0x138] sm:$0xff]
          %v2396 = vld [vmem:[#allocation2 + $0x140] sm:$0xff]
          %v2397 = vld [vmem:[#allocation2 + $0x148] sm:$0xff]
          %v2398 = vld [vmem:[#allocation2 + $0x150] sm:$0xff]
          %v2399 = vld [vmem:[#allocation2 + $0x158] sm:$0xff]
          %v2400 = vld [vmem:[#allocation2 + $0x160] sm:$0xff]
          %v2401 = vld [vmem:[#allocation2 + $0x168] sm:$0xff]
          %v2402 = vld [vmem:[#allocation2 + $0x170] sm:$0xff]
          %v2403 = vld [vmem:[#allocation2 + $0x178] sm:$0xff]
          %v2404 = vld [vmem:[#allocation2 + $0x180] sm:$0xff]
          %v2405 = vld [vmem:[#allocation2 + $0x188] sm:$0xff]
          %v2406 = vld [vmem:[#allocation2 + $0x190] sm:$0xff]
          %v2407 = vld [vmem:[#allocation2 + $0x198] sm:$0xff]
          %v2408 = vld [vmem:[#allocation2 + $0x1a0] sm:$0xff]
          %v2409 = vld [vmem:[#allocation2 + $0x1a8] sm:$0xff]
          %v2410 = vld [vmem:[#allocation2 + $0x1b0] sm:$0xff]
          %v2411 = vld [vmem:[#allocation2 + $0x1b8] sm:$0xff]
          %v2412 = vld [vmem:[#allocation2 + $0x1c0] sm:$0xff]
          %v2413 = vld [vmem:[#allocation2 + $0x1c8] sm:$0xff]
          %v2414 = vld [vmem:[#allocation2 + $0x1d0] sm:$0xff]
          %v2415 = vld [vmem:[#allocation2 + $0x1d8] sm:$0xff]
          %v2416 = vld [vmem:[#allocation2 + $0x1e0] sm:$0xff]
          %v2417 = vld [vmem:[#allocation2 + $0x1e8] sm:$0xff]
          %v2418 = vld [vmem:[#allocation2 + $0x1f0] sm:$0xff]
          %v2419 = vld [vmem:[#allocation2 + $0x1f8] sm:$0xff]
          %s2420 = smul.u32 %s2351, 512
          %s2421 = scalar_lea.vmem [#allocation3], %s2420
          %v2422 = vld [vmem:[%s2421] sm:$0xff]
          %v2423 = vld [vmem:[%s2421 + $0x8] sm:$0xff]
          %v2424 = vld [vmem:[%s2421 + $0x10] sm:$0xff]
          %v2425 = vld [vmem:[%s2421 + $0x18] sm:$0xff]
          %v2426 = vld [vmem:[%s2421 + $0x20] sm:$0xff]
          %v2427 = vld [vmem:[%s2421 + $0x28] sm:$0xff]
          %v2428 = vld [vmem:[%s2421 + $0x30] sm:$0xff]
          %v2429 = vld [vmem:[%s2421 + $0x38] sm:$0xff]
          %v2430 = vld [vmem:[%s2421 + $0x40] sm:$0xff]
          %v2431 = vld [vmem:[%s2421 + $0x48] sm:$0xff]
          %v2432 = vld [vmem:[%s2421 + $0x50] sm:$0xff]
          %v2433 = vld [vmem:[%s2421 + $0x58] sm:$0xff]
          %v2434 = vld [vmem:[%s2421 + $0x60] sm:$0xff]
          %v2435 = vld [vmem:[%s2421 + $0x68] sm:$0xff]
          %v2436 = vld [vmem:[%s2421 + $0x70] sm:$0xff]
          %v2437 = vld [vmem:[%s2421 + $0x78] sm:$0xff]
          %v2438 = vld [vmem:[%s2421 + $0x80] sm:$0xff]
          %v2439 = vld [vmem:[%s2421 + $0x88] sm:$0xff]
          %v2440 = vld [vmem:[%s2421 + $0x90] sm:$0xff]
          %v2441 = vld [vmem:[%s2421 + $0x98] sm:$0xff]
          %v2442 = vld [vmem:[%s2421 + $0xa0] sm:$0xff]
          %v2443 = vld [vmem:[%s2421 + $0xa8] sm:$0xff]
          %v2444 = vld [vmem:[%s2421 + $0xb0] sm:$0xff]
          %v2445 = vld [vmem:[%s2421 + $0xb8] sm:$0xff]
          %v2446 = vld [vmem:[%s2421 + $0xc0] sm:$0xff]
          %v2447 = vld [vmem:[%s2421 + $0xc8] sm:$0xff]
          %v2448 = vld [vmem:[%s2421 + $0xd0] sm:$0xff]
          %v2449 = vld [vmem:[%s2421 + $0xd8] sm:$0xff]
          %v2450 = vld [vmem:[%s2421 + $0xe0] sm:$0xff]
          %v2451 = vld [vmem:[%s2421 + $0xe8] sm:$0xff]
          %v2452 = vld [vmem:[%s2421 + $0xf0] sm:$0xff]
          %v2453 = vld [vmem:[%s2421 + $0xf8] sm:$0xff]
          %v2454 = vld [vmem:[%s2421 + $0x100] sm:$0xff]
          %v2455 = vld [vmem:[%s2421 + $0x108] sm:$0xff]
          %v2456 = vld [vmem:[%s2421 + $0x110] sm:$0xff]
          %v2457 = vld [vmem:[%s2421 + $0x118] sm:$0xff]
          %v2458 = vld [vmem:[%s2421 + $0x120] sm:$0xff]
          %v2459 = vld [vmem:[%s2421 + $0x128] sm:$0xff]
          %v2460 = vld [vmem:[%s2421 + $0x130] sm:$0xff]
          %v2461 = vld [vmem:[%s2421 + $0x138] sm:$0xff]
          %v2462 = vld [vmem:[%s2421 + $0x140] sm:$0xff]
          %v2463 = vld [vmem:[%s2421 + $0x148] sm:$0xff]
          %v2464 = vld [vmem:[%s2421 + $0x150] sm:$0xff]
          %v2465 = vld [vmem:[%s2421 + $0x158] sm:$0xff]
          %v2466 = vld [vmem:[%s2421 + $0x160] sm:$0xff]
          %v2467 = vld [vmem:[%s2421 + $0x168] sm:$0xff]
          %v2468 = vld [vmem:[%s2421 + $0x170] sm:$0xff]
          %v2469 = vld [vmem:[%s2421 + $0x178] sm:$0xff]
          %v2470 = vld [vmem:[%s2421 + $0x180] sm:$0xff]
          %v2471 = vld [vmem:[%s2421 + $0x188] sm:$0xff]
          %v2472 = vld [vmem:[%s2421 + $0x190] sm:$0xff]
          %v2473 = vld [vmem:[%s2421 + $0x198] sm:$0xff]
          %v2474 = vld [vmem:[%s2421 + $0x1a0] sm:$0xff]
          %v2475 = vld [vmem:[%s2421 + $0x1a8] sm:$0xff]
          %v2476 = vld [vmem:[%s2421 + $0x1b0] sm:$0xff]
          %v2477 = vld [vmem:[%s2421 + $0x1b8] sm:$0xff]
          %v2478 = vld [vmem:[%s2421 + $0x1c0] sm:$0xff]
          %v2479 = vld [vmem:[%s2421 + $0x1c8] sm:$0xff]
          %v2480 = vld [vmem:[%s2421 + $0x1d0] sm:$0xff]
          %v2481 = vld [vmem:[%s2421 + $0x1d8] sm:$0xff]
          %v2482 = vld [vmem:[%s2421 + $0x1e0] sm:$0xff]
          %v2483 = vld [vmem:[%s2421 + $0x1e8] sm:$0xff]
          %v2484 = vld [vmem:[%s2421 + $0x1f0] sm:$0xff]
          %v2485 = vld [vmem:[%s2421 + $0x1f8] sm:$0xff]
          %s2486 = scalar_lea.vmem [#allocation4], %s2420
          %v2487 = vld [vmem:[%s2486] sm:$0xff]
          %v2488 = vld [vmem:[%s2486 + $0x8] sm:$0xff]
          %v2489 = vld [vmem:[%s2486 + $0x10] sm:$0xff]
          %v2490 = vld [vmem:[%s2486 + $0x18] sm:$0xff]
          %v2491 = vld [vmem:[%s2486 + $0x20] sm:$0xff]
          %v2492 = vld [vmem:[%s2486 + $0x28] sm:$0xff]
          %v2493 = vld [vmem:[%s2486 + $0x30] sm:$0xff]
          %v2494 = vld [vmem:[%s2486 + $0x38] sm:$0xff]
          %v2495 = vld [vmem:[%s2486 + $0x40] sm:$0xff]
          %v2496 = vld [vmem:[%s2486 + $0x48] sm:$0xff]
          %v2497 = vld [vmem:[%s2486 + $0x50] sm:$0xff]
          %v2498 = vld [vmem:[%s2486 + $0x58] sm:$0xff]
          %v2499 = vld [vmem:[%s2486 + $0x60] sm:$0xff]
          %v2500 = vld [vmem:[%s2486 + $0x68] sm:$0xff]
          %v2501 = vld [vmem:[%s2486 + $0x70] sm:$0xff]
          %v2502 = vld [vmem:[%s2486 + $0x78] sm:$0xff]
          %v2503 = vld [vmem:[%s2486 + $0x80] sm:$0xff]
          %v2504 = vld [vmem:[%s2486 + $0x88] sm:$0xff]
          %v2505 = vld [vmem:[%s2486 + $0x90] sm:$0xff]
          %v2506 = vld [vmem:[%s2486 + $0x98] sm:$0xff]
          %v2507 = vld [vmem:[%s2486 + $0xa0] sm:$0xff]
          %v2508 = vld [vmem:[%s2486 + $0xa8] sm:$0xff]
          %v2509 = vld [vmem:[%s2486 + $0xb0] sm:$0xff]
          %v2510 = vld [vmem:[%s2486 + $0xb8] sm:$0xff]
          %v2511 = vld [vmem:[%s2486 + $0xc0] sm:$0xff]
          %v2512 = vld [vmem:[%s2486 + $0xc8] sm:$0xff]
          %v2513 = vld [vmem:[%s2486 + $0xd0] sm:$0xff]
          %v2514 = vld [vmem:[%s2486 + $0xd8] sm:$0xff]
          %v2515 = vld [vmem:[%s2486 + $0xe0] sm:$0xff]
          %v2516 = vld [vmem:[%s2486 + $0xe8] sm:$0xff]
          %v2517 = vld [vmem:[%s2486 + $0xf0] sm:$0xff]
          %v2518 = vld [vmem:[%s2486 + $0xf8] sm:$0xff]
          %v2519 = vld [vmem:[%s2486 + $0x100] sm:$0xff]
          %v2520 = vld [vmem:[%s2486 + $0x108] sm:$0xff]
          %v2521 = vld [vmem:[%s2486 + $0x110] sm:$0xff]
          %v2522 = vld [vmem:[%s2486 + $0x118] sm:$0xff]
          %v2523 = vld [vmem:[%s2486 + $0x120] sm:$0xff]
          %v2524 = vld [vmem:[%s2486 + $0x128] sm:$0xff]
          %v2525 = vld [vmem:[%s2486 + $0x130] sm:$0xff]
          %v2526 = vld [vmem:[%s2486 + $0x138] sm:$0xff]
          %v2527 = vld [vmem:[%s2486 + $0x140] sm:$0xff]
          %v2528 = vld [vmem:[%s2486 + $0x148] sm:$0xff]
          %v2529 = vld [vmem:[%s2486 + $0x150] sm:$0xff]
          %v2530 = vld [vmem:[%s2486 + $0x158] sm:$0xff]
          %v2531 = vld [vmem:[%s2486 + $0x160] sm:$0xff]
          %v2532 = vld [vmem:[%s2486 + $0x168] sm:$0xff]
          %v2533 = vld [vmem:[%s2486 + $0x170] sm:$0xff]
          %v2534 = vld [vmem:[%s2486 + $0x178] sm:$0xff]
          %v2535 = vld [vmem:[%s2486 + $0x180] sm:$0xff]
          %v2536 = vld [vmem:[%s2486 + $0x188] sm:$0xff]
          %v2537 = vld [vmem:[%s2486 + $0x190] sm:$0xff]
          %v2538 = vld [vmem:[%s2486 + $0x198] sm:$0xff]
          %v2539 = vld [vmem:[%s2486 + $0x1a0] sm:$0xff]
          %v2540 = vld [vmem:[%s2486 + $0x1a8] sm:$0xff]
          %v2541 = vld [vmem:[%s2486 + $0x1b0] sm:$0xff]
          %v2542 = vld [vmem:[%s2486 + $0x1b8] sm:$0xff]
          %v2543 = vld [vmem:[%s2486 + $0x1c0] sm:$0xff]
          %v2544 = vld [vmem:[%s2486 + $0x1c8] sm:$0xff]
          %v2545 = vld [vmem:[%s2486 + $0x1d0] sm:$0xff]
          %v2546 = vld [vmem:[%s2486 + $0x1d8] sm:$0xff]
          %v2547 = vld [vmem:[%s2486 + $0x1e0] sm:$0xff]
          %v2548 = vld [vmem:[%s2486 + $0x1e8] sm:$0xff]
          %v2549 = vld [vmem:[%s2486 + $0x1f0] sm:$0xff]
          %v2550 = vld [vmem:[%s2486 + $0x1f8] sm:$0xff]
          %v2552 = vsel %vm1433, %v2356, 0
          %v2555 = vsel %vm1433, %v2357, 0
          %v2558 = vsel %vm1433, %v2358, 0
          %v2561 = vsel %vm1433, %v2359, 0
          %v2564 = vsel %vm1433, %v2360, 0
          %v2567 = vsel %vm1433, %v2361, 0
          %v2570 = vsel %vm1433, %v2362, 0
          %v2573 = vsel %vm1433, %v2363, 0
          %v2576 = vsel %vm1433, %v2364, 0
          %v2579 = vsel %vm1433, %v2365, 0
          %v2582 = vsel %vm1433, %v2366, 0
          %v2585 = vsel %vm1433, %v2367, 0
          %v2588 = vsel %vm1433, %v2368, 0
          %v2591 = vsel %vm1433, %v2369, 0
          %v2594 = vsel %vm1433, %v2370, 0
          %v2597 = vsel %vm1433, %v2371, 0
          %v2600 = vsel %vm1433, %v2422, 0
          %v2603 = vsel %vm1433, %v2423, 0
          %v2606 = vsel %vm1433, %v2424, 0
          %v2609 = vsel %vm1433, %v2425, 0
          %v2612 = vsel %vm1433, %v2426, 0
          %v2615 = vsel %vm1433, %v2427, 0
          %v2618 = vsel %vm1433, %v2428, 0
          %v2621 = vsel %vm1433, %v2429, 0
          %v2624 = vsel %vm1433, %v2430, 0
          %v2627 = vsel %vm1433, %v2431, 0
          %v2630 = vsel %vm1433, %v2432, 0
          %v2633 = vsel %vm1433, %v2433, 0
          %v2636 = vsel %vm1433, %v2434, 0
          %v2639 = vsel %vm1433, %v2435, 0
          %v2642 = vsel %vm1433, %v2436, 0
          %v2645 = vsel %vm1433, %v2437, 0
          %2647 = vmatprep.subr.mxu0 0.0
          %2648 = vmatpush1.xpose.msra.mxu0 %v2645
          %2649 = vmatprep.subr.mxu0 0.0
          %2650 = vmatpush1.xpose.msra.mxu0 %v2642
          %2651 = vmatprep.subr.mxu0 0.0
          %2652 = vmatpush1.xpose.msra.mxu0 %v2639
          %2653 = vmatprep.subr.mxu0 0.0
          %2654 = vmatpush1.xpose.msra.mxu0 %v2636
          %2655 = vmatprep.subr.mxu0 0.0
          %2656 = vmatpush1.xpose.msra.mxu0 %v2633
          %2657 = vmatprep.subr.mxu0 0.0
          %2658 = vmatpush1.xpose.msra.mxu0 %v2630
          %2659 = vmatprep.subr.mxu0 0.0
          %2660 = vmatpush1.xpose.msra.mxu0 %v2627
          %2661 = vmatprep.subr.mxu0 0.0
          %2662 = vmatpush1.xpose.msra.mxu0 %v2624
          %2663 = vmatprep.subr.mxu0 0.0
          %2664 = vmatpush1.xpose.msra.mxu0 %v2621
          %2665 = vmatprep.subr.mxu0 0.0
          %2666 = vmatpush1.xpose.msra.mxu0 %v2618
          %2667 = vmatprep.subr.mxu0 0.0
          %2668 = vmatpush1.xpose.msra.mxu0 %v2615
          %2669 = vmatprep.subr.mxu0 0.0
          %2670 = vmatpush1.xpose.msra.mxu0 %v2612
          %2671 = vmatprep.subr.mxu0 0.0
          %2672 = vmatpush1.xpose.msra.mxu0 %v2609
          %2673 = vmatprep.subr.mxu0 0.0
          %2674 = vmatpush1.xpose.msra.mxu0 %v2606
          %2675 = vmatprep.subr.mxu0 0.0
          %2676 = vmatpush1.xpose.msra.mxu0 %v2603
          %2677 = vmatprep.subr.mxu0 0.0
          %2678 = vmatpush1.xpose.msra.mxu0 %v2600
          %2679 = vmatprep.subr.mxu0 0.0
          %2680 = vmatpush2.xpose.msra.mxu0 0.0
          %2681 = vmatprep.subr.mxu0 0.0
          %2682 = vmatpush2.xpose.msra.mxu0 0.0
          %2683 = vmatprep.subr.mxu0 0.0
          %2684 = vmatpush2.xpose.msra.mxu0 0.0
          %2685 = vmatprep.subr.mxu0 0.0
          %2686 = vmatpush2.xpose.msra.mxu0 0.0
          %2687 = vmatprep.subr.mxu0 0.0
          %2688 = vmatpush2.xpose.msra.mxu0 0.0
          %2689 = vmatprep.subr.mxu0 0.0
          %2690 = vmatpush2.xpose.msra.mxu0 0.0
          %2691 = vmatprep.subr.mxu0 0.0
          %2692 = vmatpush2.xpose.msra.mxu0 0.0
          %2693 = vmatprep.subr.mxu0 0.0
          %2694 = vmatpush2.xpose.msra.mxu0 0.0
          %2695 = vmatprep.subr.mxu0 0.0
          %2696 = vmatpush2.xpose.msra.mxu0 0.0
          %2697 = vmatprep.subr.mxu0 0.0
          %2698 = vmatpush2.xpose.msra.mxu0 0.0
          %2699 = vmatprep.subr.mxu0 0.0
          %2700 = vmatpush2.xpose.msra.mxu0 0.0
          %2701 = vmatprep.subr.mxu0 0.0
          %2702 = vmatpush2.xpose.msra.mxu0 0.0
          %2703 = vmatprep.subr.mxu0 0.0
          %2704 = vmatpush2.xpose.msra.mxu0 0.0
          %2705 = vmatprep.subr.mxu0 0.0
          %2706 = vmatpush2.xpose.msra.mxu0 0.0
          %2707 = vmatprep.subr.mxu0 0.0
          %2708 = vmatpush2.xpose.msra.mxu0 0.0
          %2709 = vmatprep.subr.mxu0 0.0
          %2710 = vmatpush2.xpose.msra.mxu0 0.0
          %2711 = vmatprep.mubr.f32.mxu0 0.0
          %2712 = vmatmul.mubr.f32.gmra.mxu0 %v2552
          %v2713 = vpop.f32.mrf.mxu0
          %v2714 = vadd.f32 0.0, %v2713
          %v2715 = vpop.f32.mrf.mxu0
          %2716 = vmatprep.mubr.f32.mxu0 0.0
          %2717 = vmatmul.mubr.f32.gmra.mxu0 %v2555
          %v2718 = vpop.f32.mrf.mxu0
          %v2719 = vadd.f32 0.0, %v2718
          %v2720 = vpop.f32.mrf.mxu0
          %2721 = vmatprep.mubr.f32.mxu0 0.0
          %2722 = vmatmul.mubr.f32.gmra.mxu0 %v2558
          %v2723 = vpop.f32.mrf.mxu0
          %v2724 = vadd.f32 0.0, %v2723
          %v2725 = vpop.f32.mrf.mxu0
          %2726 = vmatprep.mubr.f32.mxu0 0.0
          %2727 = vmatmul.mubr.f32.gmra.mxu0 %v2561
          %v2728 = vpop.f32.mrf.mxu0
          %v2729 = vadd.f32 0.0, %v2728
          %v2730 = vpop.f32.mrf.mxu0
          %2731 = vmatprep.mubr.f32.mxu0 0.0
          %2732 = vmatmul.mubr.f32.gmra.mxu0 %v2564
          %v2733 = vpop.f32.mrf.mxu0
          %v2734 = vadd.f32 0.0, %v2733
          %v2735 = vpop.f32.mrf.mxu0
          %2736 = vmatprep.mubr.f32.mxu0 0.0
          %2737 = vmatmul.mubr.f32.gmra.mxu0 %v2567
          %v2738 = vpop.f32.mrf.mxu0
          %v2739 = vadd.f32 0.0, %v2738
          %v2740 = vpop.f32.mrf.mxu0
          %2741 = vmatprep.mubr.f32.mxu0 0.0
          %2742 = vmatmul.mubr.f32.gmra.mxu0 %v2570
          %v2743 = vpop.f32.mrf.mxu0
          %v2744 = vadd.f32 0.0, %v2743
          %v2745 = vpop.f32.mrf.mxu0
          %2746 = vmatprep.mubr.f32.mxu0 0.0
          %2747 = vmatmul.mubr.f32.gmra.mxu0 %v2573
          %v2748 = vpop.f32.mrf.mxu0
          %v2749 = vadd.f32 0.0, %v2748
          %v2750 = vpop.f32.mrf.mxu0
          %2751 = vmatprep.mubr.f32.mxu0 0.0
          %2752 = vmatmul.mubr.f32.gmra.mxu0 %v2576
          %v2753 = vpop.f32.mrf.mxu0
          %v2754 = vadd.f32 0.0, %v2753
          %v2755 = vpop.f32.mrf.mxu0
          %2756 = vmatprep.mubr.f32.mxu0 0.0
          %2757 = vmatmul.mubr.f32.gmra.mxu0 %v2579
          %v2758 = vpop.f32.mrf.mxu0
          %v2759 = vadd.f32 0.0, %v2758
          %v2760 = vpop.f32.mrf.mxu0
          %2761 = vmatprep.mubr.f32.mxu0 0.0
          %2762 = vmatmul.mubr.f32.gmra.mxu0 %v2582
          %v2763 = vpop.f32.mrf.mxu0
          %v2764 = vadd.f32 0.0, %v2763
          %v2765 = vpop.f32.mrf.mxu0
          %2766 = vmatprep.mubr.f32.mxu0 0.0
          %2767 = vmatmul.mubr.f32.gmra.mxu0 %v2585
          %v2768 = vpop.f32.mrf.mxu0
          %v2769 = vadd.f32 0.0, %v2768
          %v2770 = vpop.f32.mrf.mxu0
          %2771 = vmatprep.mubr.f32.mxu0 0.0
          %2772 = vmatmul.mubr.f32.gmra.mxu0 %v2588
          %v2773 = vpop.f32.mrf.mxu0
          %v2774 = vadd.f32 0.0, %v2773
          %v2775 = vpop.f32.mrf.mxu0
          %2776 = vmatprep.mubr.f32.mxu0 0.0
          %2777 = vmatmul.mubr.f32.gmra.mxu0 %v2591
          %v2778 = vpop.f32.mrf.mxu0
          %v2779 = vadd.f32 0.0, %v2778
          %v2780 = vpop.f32.mrf.mxu0
          %2781 = vmatprep.mubr.f32.mxu0 0.0
          %2782 = vmatmul.mubr.f32.gmra.mxu0 %v2594
          %v2783 = vpop.f32.mrf.mxu0
          %v2784 = vadd.f32 0.0, %v2783
          %v2785 = vpop.f32.mrf.mxu0
          %2786 = vmatprep.mubr.f32.mxu0 0.0
          %2787 = vmatmul.mubr.f32.gmra.mxu0 %v2597
          %v2788 = vpop.f32.mrf.mxu0
          %v2789 = vadd.f32 0.0, %v2788
          %v2790 = vpop.f32.mrf.mxu0
          %2791 = vdwg.mxu0
          %v2793 = vsel %vm1433, %v2372, 0
          %v2796 = vsel %vm1433, %v2373, 0
          %v2799 = vsel %vm1433, %v2374, 0
          %v2802 = vsel %vm1433, %v2375, 0
          %v2805 = vsel %vm1433, %v2376, 0
          %v2808 = vsel %vm1433, %v2377, 0
          %v2811 = vsel %vm1433, %v2378, 0
          %v2814 = vsel %vm1433, %v2379, 0
          %v2817 = vsel %vm1433, %v2380, 0
          %v2820 = vsel %vm1433, %v2381, 0
          %v2823 = vsel %vm1433, %v2382, 0
          %v2826 = vsel %vm1433, %v2383, 0
          %v2829 = vsel %vm1433, %v2384, 0
          %v2832 = vsel %vm1433, %v2385, 0
          %v2835 = vsel %vm1433, %v2386, 0
          %v2838 = vsel %vm1433, %v2387, 0
          %v2841 = vsel %vm1433, %v2438, 0
          %v2844 = vsel %vm1433, %v2439, 0
          %v2847 = vsel %vm1433, %v2440, 0
          %v2850 = vsel %vm1433, %v2441, 0
          %v2853 = vsel %vm1433, %v2442, 0
          %v2856 = vsel %vm1433, %v2443, 0
          %v2859 = vsel %vm1433, %v2444, 0
          %v2862 = vsel %vm1433, %v2445, 0
          %v2865 = vsel %vm1433, %v2446, 0
          %v2868 = vsel %vm1433, %v2447, 0
          %v2871 = vsel %vm1433, %v2448, 0
          %v2874 = vsel %vm1433, %v2449, 0
          %v2877 = vsel %vm1433, %v2450, 0
          %v2880 = vsel %vm1433, %v2451, 0
          %v2883 = vsel %vm1433, %v2452, 0
          %v2886 = vsel %vm1433, %v2453, 0
          %2888 = vmatprep.subr.mxu0 0.0
          %2889 = vmatpush1.xpose.msra.mxu0 %v2886
          %2890 = vmatprep.subr.mxu0 0.0
          %2891 = vmatpush1.xpose.msra.mxu0 %v2883
          %2892 = vmatprep.subr.mxu0 0.0
          %2893 = vmatpush1.xpose.msra.mxu0 %v2880
          %2894 = vmatprep.subr.mxu0 0.0
          %2895 = vmatpush1.xpose.msra.mxu0 %v2877
          %2896 = vmatprep.subr.mxu0 0.0
          %2897 = vmatpush1.xpose.msra.mxu0 %v2874
          %2898 = vmatprep.subr.mxu0 0.0
          %2899 = vmatpush1.xpose.msra.mxu0 %v2871
          %2900 = vmatprep.subr.mxu0 0.0
          %2901 = vmatpush1.xpose.msra.mxu0 %v2868
          %2902 = vmatprep.subr.mxu0 0.0
          %2903 = vmatpush1.xpose.msra.mxu0 %v2865
          %2904 = vmatprep.subr.mxu0 0.0
          %2905 = vmatpush1.xpose.msra.mxu0 %v2862
          %2906 = vmatprep.subr.mxu0 0.0
          %2907 = vmatpush1.xpose.msra.mxu0 %v2859
          %2908 = vmatprep.subr.mxu0 0.0
          %2909 = vmatpush1.xpose.msra.mxu0 %v2856
          %2910 = vmatprep.subr.mxu0 0.0
          %2911 = vmatpush1.xpose.msra.mxu0 %v2853
          %2912 = vmatprep.subr.mxu0 0.0
          %2913 = vmatpush1.xpose.msra.mxu0 %v2850
          %2914 = vmatprep.subr.mxu0 0.0
          %2915 = vmatpush1.xpose.msra.mxu0 %v2847
          %2916 = vmatprep.subr.mxu0 0.0
          %2917 = vmatpush1.xpose.msra.mxu0 %v2844
          %2918 = vmatprep.subr.mxu0 0.0
          %2919 = vmatpush1.xpose.msra.mxu0 %v2841
          %2920 = vmatprep.subr.mxu0 0.0
          %2921 = vmatpush2.xpose.msra.mxu0 0.0
          %2922 = vmatprep.subr.mxu0 0.0
          %2923 = vmatpush2.xpose.msra.mxu0 0.0
          %2924 = vmatprep.subr.mxu0 0.0
          %2925 = vmatpush2.xpose.msra.mxu0 0.0
          %2926 = vmatprep.subr.mxu0 0.0
          %2927 = vmatpush2.xpose.msra.mxu0 0.0
          %2928 = vmatprep.subr.mxu0 0.0
          %2929 = vmatpush2.xpose.msra.mxu0 0.0
          %2930 = vmatprep.subr.mxu0 0.0
          %2931 = vmatpush2.xpose.msra.mxu0 0.0
          %2932 = vmatprep.subr.mxu0 0.0
          %2933 = vmatpush2.xpose.msra.mxu0 0.0
          %2934 = vmatprep.subr.mxu0 0.0
          %2935 = vmatpush2.xpose.msra.mxu0 0.0
          %2936 = vmatprep.subr.mxu0 0.0
          %2937 = vmatpush2.xpose.msra.mxu0 0.0
          %2938 = vmatprep.subr.mxu0 0.0
          %2939 = vmatpush2.xpose.msra.mxu0 0.0
          %2940 = vmatprep.subr.mxu0 0.0
          %2941 = vmatpush2.xpose.msra.mxu0 0.0
          %2942 = vmatprep.subr.mxu0 0.0
          %2943 = vmatpush2.xpose.msra.mxu0 0.0
          %2944 = vmatprep.subr.mxu0 0.0
          %2945 = vmatpush2.xpose.msra.mxu0 0.0
          %2946 = vmatprep.subr.mxu0 0.0
          %2947 = vmatpush2.xpose.msra.mxu0 0.0
          %2948 = vmatprep.subr.mxu0 0.0
          %2949 = vmatpush2.xpose.msra.mxu0 0.0
          %2950 = vmatprep.subr.mxu0 0.0
          %2951 = vmatpush2.xpose.msra.mxu0 0.0
          %2952 = vmatprep.mubr.f32.mxu0 0.0
          %2953 = vmatmul.mubr.f32.gmra.mxu0 %v2793
          %v2954 = vpop.f32.mrf.mxu0
          %v2955 = vadd.f32 0.0, %v2954
          %v2956 = vpop.f32.mrf.mxu0
          %2957 = vmatprep.mubr.f32.mxu0 0.0
          %2958 = vmatmul.mubr.f32.gmra.mxu0 %v2796
          %v2959 = vpop.f32.mrf.mxu0
          %v2960 = vadd.f32 0.0, %v2959
          %v2961 = vpop.f32.mrf.mxu0
          %2962 = vmatprep.mubr.f32.mxu0 0.0
          %2963 = vmatmul.mubr.f32.gmra.mxu0 %v2799
          %v2964 = vpop.f32.mrf.mxu0
          %v2965 = vadd.f32 0.0, %v2964
          %v2966 = vpop.f32.mrf.mxu0
          %2967 = vmatprep.mubr.f32.mxu0 0.0
          %2968 = vmatmul.mubr.f32.gmra.mxu0 %v2802
          %v2969 = vpop.f32.mrf.mxu0
          %v2970 = vadd.f32 0.0, %v2969
          %v2971 = vpop.f32.mrf.mxu0
          %2972 = vmatprep.mubr.f32.mxu0 0.0
          %2973 = vmatmul.mubr.f32.gmra.mxu0 %v2805
          %v2974 = vpop.f32.mrf.mxu0
          %v2975 = vadd.f32 0.0, %v2974
          %v2976 = vpop.f32.mrf.mxu0
          %2977 = vmatprep.mubr.f32.mxu0 0.0
          %2978 = vmatmul.mubr.f32.gmra.mxu0 %v2808
          %v2979 = vpop.f32.mrf.mxu0
          %v2980 = vadd.f32 0.0, %v2979
          %v2981 = vpop.f32.mrf.mxu0
          %2982 = vmatprep.mubr.f32.mxu0 0.0
          %2983 = vmatmul.mubr.f32.gmra.mxu0 %v2811
          %v2984 = vpop.f32.mrf.mxu0
          %v2985 = vadd.f32 0.0, %v2984
          %v2986 = vpop.f32.mrf.mxu0
          %2987 = vmatprep.mubr.f32.mxu0 0.0
          %2988 = vmatmul.mubr.f32.gmra.mxu0 %v2814
          %v2989 = vpop.f32.mrf.mxu0
          %v2990 = vadd.f32 0.0, %v2989
          %v2991 = vpop.f32.mrf.mxu0
          %2992 = vmatprep.mubr.f32.mxu0 0.0
          %2993 = vmatmul.mubr.f32.gmra.mxu0 %v2817
          %v2994 = vpop.f32.mrf.mxu0
          %v2995 = vadd.f32 0.0, %v2994
          %v2996 = vpop.f32.mrf.mxu0
          %2997 = vmatprep.mubr.f32.mxu0 0.0
          %2998 = vmatmul.mubr.f32.gmra.mxu0 %v2820
          %v2999 = vpop.f32.mrf.mxu0
          %v3000 = vadd.f32 0.0, %v2999
          %v3001 = vpop.f32.mrf.mxu0
          %3002 = vmatprep.mubr.f32.mxu0 0.0
          %3003 = vmatmul.mubr.f32.gmra.mxu0 %v2823
          %v3004 = vpop.f32.mrf.mxu0
          %v3005 = vadd.f32 0.0, %v3004
          %v3006 = vpop.f32.mrf.mxu0
          %3007 = vmatprep.mubr.f32.mxu0 0.0
          %3008 = vmatmul.mubr.f32.gmra.mxu0 %v2826
          %v3009 = vpop.f32.mrf.mxu0
          %v3010 = vadd.f32 0.0, %v3009
          %v3011 = vpop.f32.mrf.mxu0
          %3012 = vmatprep.mubr.f32.mxu0 0.0
          %3013 = vmatmul.mubr.f32.gmra.mxu0 %v2829
          %v3014 = vpop.f32.mrf.mxu0
          %v3015 = vadd.f32 0.0, %v3014
          %v3016 = vpop.f32.mrf.mxu0
          %3017 = vmatprep.mubr.f32.mxu0 0.0
          %3018 = vmatmul.mubr.f32.gmra.mxu0 %v2832
          %v3019 = vpop.f32.mrf.mxu0
          %v3020 = vadd.f32 0.0, %v3019
          %v3021 = vpop.f32.mrf.mxu0
          %3022 = vmatprep.mubr.f32.mxu0 0.0
          %3023 = vmatmul.mubr.f32.gmra.mxu0 %v2835
          %v3024 = vpop.f32.mrf.mxu0
          %v3025 = vadd.f32 0.0, %v3024
          %v3026 = vpop.f32.mrf.mxu0
          %3027 = vmatprep.mubr.f32.mxu0 0.0
          %3028 = vmatmul.mubr.f32.gmra.mxu0 %v2838
          %v3029 = vpop.f32.mrf.mxu0
          %v3030 = vadd.f32 0.0, %v3029
          %v3031 = vpop.f32.mrf.mxu0
          %3032 = vdwg.mxu0
          %v3034 = vsel %vm1433, %v2388, 0
          %v3037 = vsel %vm1433, %v2389, 0
          %v3040 = vsel %vm1433, %v2390, 0
          %v3043 = vsel %vm1433, %v2391, 0
          %v3046 = vsel %vm1433, %v2392, 0
          %v3049 = vsel %vm1433, %v2393, 0
          %v3052 = vsel %vm1433, %v2394, 0
          %v3055 = vsel %vm1433, %v2395, 0
          %v3058 = vsel %vm1433, %v2396, 0
          %v3061 = vsel %vm1433, %v2397, 0
          %v3064 = vsel %vm1433, %v2398, 0
          %v3067 = vsel %vm1433, %v2399, 0
          %v3070 = vsel %vm1433, %v2400, 0
          %v3073 = vsel %vm1433, %v2401, 0
          %v3076 = vsel %vm1433, %v2402, 0
          %v3079 = vsel %vm1433, %v2403, 0
          %v3082 = vsel %vm1433, %v2454, 0
          %v3085 = vsel %vm1433, %v2455, 0
          %v3088 = vsel %vm1433, %v2456, 0
          %v3091 = vsel %vm1433, %v2457, 0
          %v3094 = vsel %vm1433, %v2458, 0
          %v3097 = vsel %vm1433, %v2459, 0
          %v3100 = vsel %vm1433, %v2460, 0
          %v3103 = vsel %vm1433, %v2461, 0
          %v3106 = vsel %vm1433, %v2462, 0
          %v3109 = vsel %vm1433, %v2463, 0
          %v3112 = vsel %vm1433, %v2464, 0
          %v3115 = vsel %vm1433, %v2465, 0
          %v3118 = vsel %vm1433, %v2466, 0
          %v3121 = vsel %vm1433, %v2467, 0
          %v3124 = vsel %vm1433, %v2468, 0
          %v3127 = vsel %vm1433, %v2469, 0
          %3129 = vmatprep.subr.mxu0 0.0
          %3130 = vmatpush1.xpose.msra.mxu0 %v3127
          %3131 = vmatprep.subr.mxu0 0.0
          %3132 = vmatpush1.xpose.msra.mxu0 %v3124
          %3133 = vmatprep.subr.mxu0 0.0
          %3134 = vmatpush1.xpose.msra.mxu0 %v3121
          %3135 = vmatprep.subr.mxu0 0.0
          %3136 = vmatpush1.xpose.msra.mxu0 %v3118
          %3137 = vmatprep.subr.mxu0 0.0
          %3138 = vmatpush1.xpose.msra.mxu0 %v3115
          %3139 = vmatprep.subr.mxu0 0.0
          %3140 = vmatpush1.xpose.msra.mxu0 %v3112
          %3141 = vmatprep.subr.mxu0 0.0
          %3142 = vmatpush1.xpose.msra.mxu0 %v3109
          %3143 = vmatprep.subr.mxu0 0.0
          %3144 = vmatpush1.xpose.msra.mxu0 %v3106
          %3145 = vmatprep.subr.mxu0 0.0
          %3146 = vmatpush1.xpose.msra.mxu0 %v3103
          %3147 = vmatprep.subr.mxu0 0.0
          %3148 = vmatpush1.xpose.msra.mxu0 %v3100
          %3149 = vmatprep.subr.mxu0 0.0
          %3150 = vmatpush1.xpose.msra.mxu0 %v3097
          %3151 = vmatprep.subr.mxu0 0.0
          %3152 = vmatpush1.xpose.msra.mxu0 %v3094
          %3153 = vmatprep.subr.mxu0 0.0
          %3154 = vmatpush1.xpose.msra.mxu0 %v3091
          %3155 = vmatprep.subr.mxu0 0.0
          %3156 = vmatpush1.xpose.msra.mxu0 %v3088
          %3157 = vmatprep.subr.mxu0 0.0
          %3158 = vmatpush1.xpose.msra.mxu0 %v3085
          %3159 = vmatprep.subr.mxu0 0.0
          %3160 = vmatpush1.xpose.msra.mxu0 %v3082
          %3161 = vmatprep.subr.mxu0 0.0
          %3162 = vmatpush2.xpose.msra.mxu0 0.0
          %3163 = vmatprep.subr.mxu0 0.0
          %3164 = vmatpush2.xpose.msra.mxu0 0.0
          %3165 = vmatprep.subr.mxu0 0.0
          %3166 = vmatpush2.xpose.msra.mxu0 0.0
          %3167 = vmatprep.subr.mxu0 0.0
          %3168 = vmatpush2.xpose.msra.mxu0 0.0
          %3169 = vmatprep.subr.mxu0 0.0
          %3170 = vmatpush2.xpose.msra.mxu0 0.0
          %3171 = vmatprep.subr.mxu0 0.0
          %3172 = vmatpush2.xpose.msra.mxu0 0.0
          %3173 = vmatprep.subr.mxu0 0.0
          %3174 = vmatpush2.xpose.msra.mxu0 0.0
          %3175 = vmatprep.subr.mxu0 0.0
          %3176 = vmatpush2.xpose.msra.mxu0 0.0
          %3177 = vmatprep.subr.mxu0 0.0
          %3178 = vmatpush2.xpose.msra.mxu0 0.0
          %3179 = vmatprep.subr.mxu0 0.0
          %3180 = vmatpush2.xpose.msra.mxu0 0.0
          %3181 = vmatprep.subr.mxu0 0.0
          %3182 = vmatpush2.xpose.msra.mxu0 0.0
          %3183 = vmatprep.subr.mxu0 0.0
          %3184 = vmatpush2.xpose.msra.mxu0 0.0
          %3185 = vmatprep.subr.mxu0 0.0
          %3186 = vmatpush2.xpose.msra.mxu0 0.0
          %3187 = vmatprep.subr.mxu0 0.0
          %3188 = vmatpush2.xpose.msra.mxu0 0.0
          %3189 = vmatprep.subr.mxu0 0.0
          %3190 = vmatpush2.xpose.msra.mxu0 0.0
          %3191 = vmatprep.subr.mxu0 0.0
          %3192 = vmatpush2.xpose.msra.mxu0 0.0
          %3193 = vmatprep.mubr.f32.mxu0 0.0
          %3194 = vmatmul.mubr.f32.gmra.mxu0 %v3034
          %v3195 = vpop.f32.mrf.mxu0
          %v3196 = vadd.f32 0.0, %v3195
          %v3197 = vpop.f32.mrf.mxu0
          %3198 = vmatprep.mubr.f32.mxu0 0.0
          %3199 = vmatmul.mubr.f32.gmra.mxu0 %v3037
          %v3200 = vpop.f32.mrf.mxu0
          %v3201 = vadd.f32 0.0, %v3200
          %v3202 = vpop.f32.mrf.mxu0
          %3203 = vmatprep.mubr.f32.mxu0 0.0
          %3204 = vmatmul.mubr.f32.gmra.mxu0 %v3040
          %v3205 = vpop.f32.mrf.mxu0
          %v3206 = vadd.f32 0.0, %v3205
          %v3207 = vpop.f32.mrf.mxu0
          %3208 = vmatprep.mubr.f32.mxu0 0.0
          %3209 = vmatmul.mubr.f32.gmra.mxu0 %v3043
          %v3210 = vpop.f32.mrf.mxu0
          %v3211 = vadd.f32 0.0, %v3210
          %v3212 = vpop.f32.mrf.mxu0
          %3213 = vmatprep.mubr.f32.mxu0 0.0
          %3214 = vmatmul.mubr.f32.gmra.mxu0 %v3046
          %v3215 = vpop.f32.mrf.mxu0
          %v3216 = vadd.f32 0.0, %v3215
          %v3217 = vpop.f32.mrf.mxu0
          %3218 = vmatprep.mubr.f32.mxu0 0.0
          %3219 = vmatmul.mubr.f32.gmra.mxu0 %v3049
          %v3220 = vpop.f32.mrf.mxu0
          %v3221 = vadd.f32 0.0, %v3220
          %v3222 = vpop.f32.mrf.mxu0
          %3223 = vmatprep.mubr.f32.mxu0 0.0
          %3224 = vmatmul.mubr.f32.gmra.mxu0 %v3052
          %v3225 = vpop.f32.mrf.mxu0
          %v3226 = vadd.f32 0.0, %v3225
          %v3227 = vpop.f32.mrf.mxu0
          %3228 = vmatprep.mubr.f32.mxu0 0.0
          %3229 = vmatmul.mubr.f32.gmra.mxu0 %v3055
          %v3230 = vpop.f32.mrf.mxu0
          %v3231 = vadd.f32 0.0, %v3230
          %v3232 = vpop.f32.mrf.mxu0
          %3233 = vmatprep.mubr.f32.mxu0 0.0
          %3234 = vmatmul.mubr.f32.gmra.mxu0 %v3058
          %v3235 = vpop.f32.mrf.mxu0
          %v3236 = vadd.f32 0.0, %v3235
          %v3237 = vpop.f32.mrf.mxu0
          %3238 = vmatprep.mubr.f32.mxu0 0.0
          %3239 = vmatmul.mubr.f32.gmra.mxu0 %v3061
          %v3240 = vpop.f32.mrf.mxu0
          %v3241 = vadd.f32 0.0, %v3240
          %v3242 = vpop.f32.mrf.mxu0
          %3243 = vmatprep.mubr.f32.mxu0 0.0
          %3244 = vmatmul.mubr.f32.gmra.mxu0 %v3064
          %v3245 = vpop.f32.mrf.mxu0
          %v3246 = vadd.f32 0.0, %v3245
          %v3247 = vpop.f32.mrf.mxu0
          %3248 = vmatprep.mubr.f32.mxu0 0.0
          %3249 = vmatmul.mubr.f32.gmra.mxu0 %v3067
          %v3250 = vpop.f32.mrf.mxu0
          %v3251 = vadd.f32 0.0, %v3250
          %v3252 = vpop.f32.mrf.mxu0
          %3253 = vmatprep.mubr.f32.mxu0 0.0
          %3254 = vmatmul.mubr.f32.gmra.mxu0 %v3070
          %v3255 = vpop.f32.mrf.mxu0
          %v3256 = vadd.f32 0.0, %v3255
          %v3257 = vpop.f32.mrf.mxu0
          %3258 = vmatprep.mubr.f32.mxu0 0.0
          %3259 = vmatmul.mubr.f32.gmra.mxu0 %v3073
          %v3260 = vpop.f32.mrf.mxu0
          %v3261 = vadd.f32 0.0, %v3260
          %v3262 = vpop.f32.mrf.mxu0
          %3263 = vmatprep.mubr.f32.mxu0 0.0
          %3264 = vmatmul.mubr.f32.gmra.mxu0 %v3076
          %v3265 = vpop.f32.mrf.mxu0
          %v3266 = vadd.f32 0.0, %v3265
          %v3267 = vpop.f32.mrf.mxu0
          %3268 = vmatprep.mubr.f32.mxu0 0.0
          %3269 = vmatmul.mubr.f32.gmra.mxu0 %v3079
          %v3270 = vpop.f32.mrf.mxu0
          %v3271 = vadd.f32 0.0, %v3270
          %v3272 = vpop.f32.mrf.mxu0
          %3273 = vdwg.mxu0
          %v3275 = vsel %vm1433, %v2404, 0
          %v3278 = vsel %vm1433, %v2405, 0
          %v3281 = vsel %vm1433, %v2406, 0
          %v3284 = vsel %vm1433, %v2407, 0
          %v3287 = vsel %vm1433, %v2408, 0
          %v3290 = vsel %vm1433, %v2409, 0
          %v3293 = vsel %vm1433, %v2410, 0
          %v3296 = vsel %vm1433, %v2411, 0
          %v3299 = vsel %vm1433, %v2412, 0
          %v3302 = vsel %vm1433, %v2413, 0
          %v3305 = vsel %vm1433, %v2414, 0
          %v3308 = vsel %vm1433, %v2415, 0
          %v3311 = vsel %vm1433, %v2416, 0
          %v3314 = vsel %vm1433, %v2417, 0
          %v3317 = vsel %vm1433, %v2418, 0
          %v3320 = vsel %vm1433, %v2419, 0
          %v3323 = vsel %vm1433, %v2470, 0
          %v3326 = vsel %vm1433, %v2471, 0
          %v3329 = vsel %vm1433, %v2472, 0
          %v3332 = vsel %vm1433, %v2473, 0
          %v3335 = vsel %vm1433, %v2474, 0
          %v3338 = vsel %vm1433, %v2475, 0
          %v3341 = vsel %vm1433, %v2476, 0
          %v3344 = vsel %vm1433, %v2477, 0
          %v3347 = vsel %vm1433, %v2478, 0
          %v3350 = vsel %vm1433, %v2479, 0
          %v3353 = vsel %vm1433, %v2480, 0
          %v3356 = vsel %vm1433, %v2481, 0
          %v3359 = vsel %vm1433, %v2482, 0
          %v3362 = vsel %vm1433, %v2483, 0
          %v3365 = vsel %vm1433, %v2484, 0
          %v3368 = vsel %vm1433, %v2485, 0
          %3370 = vmatprep.subr.mxu0 0.0
          %3371 = vmatpush1.xpose.msra.mxu0 %v3368
          %3372 = vmatprep.subr.mxu0 0.0
          %3373 = vmatpush1.xpose.msra.mxu0 %v3365
          %3374 = vmatprep.subr.mxu0 0.0
          %3375 = vmatpush1.xpose.msra.mxu0 %v3362
          %3376 = vmatprep.subr.mxu0 0.0
          %3377 = vmatpush1.xpose.msra.mxu0 %v3359
          %3378 = vmatprep.subr.mxu0 0.0
          %3379 = vmatpush1.xpose.msra.mxu0 %v3356
          %3380 = vmatprep.subr.mxu0 0.0
          %3381 = vmatpush1.xpose.msra.mxu0 %v3353
          %3382 = vmatprep.subr.mxu0 0.0
          %3383 = vmatpush1.xpose.msra.mxu0 %v3350
          %3384 = vmatprep.subr.mxu0 0.0
          %3385 = vmatpush1.xpose.msra.mxu0 %v3347
          %3386 = vmatprep.subr.mxu0 0.0
          %3387 = vmatpush1.xpose.msra.mxu0 %v3344
          %3388 = vmatprep.subr.mxu0 0.0
          %3389 = vmatpush1.xpose.msra.mxu0 %v3341
          %3390 = vmatprep.subr.mxu0 0.0
          %3391 = vmatpush1.xpose.msra.mxu0 %v3338
          %3392 = vmatprep.subr.mxu0 0.0
          %3393 = vmatpush1.xpose.msra.mxu0 %v3335
          %3394 = vmatprep.subr.mxu0 0.0
          %3395 = vmatpush1.xpose.msra.mxu0 %v3332
          %3396 = vmatprep.subr.mxu0 0.0
          %3397 = vmatpush1.xpose.msra.mxu0 %v3329
          %3398 = vmatprep.subr.mxu0 0.0
          %3399 = vmatpush1.xpose.msra.mxu0 %v3326
          %3400 = vmatprep.subr.mxu0 0.0
          %3401 = vmatpush1.xpose.msra.mxu0 %v3323
          %3402 = vmatprep.subr.mxu0 0.0
          %3403 = vmatpush2.xpose.msra.mxu0 0.0
          %3404 = vmatprep.subr.mxu0 0.0
          %3405 = vmatpush2.xpose.msra.mxu0 0.0
          %3406 = vmatprep.subr.mxu0 0.0
          %3407 = vmatpush2.xpose.msra.mxu0 0.0
          %3408 = vmatprep.subr.mxu0 0.0
          %3409 = vmatpush2.xpose.msra.mxu0 0.0
          %3410 = vmatprep.subr.mxu0 0.0
          %3411 = vmatpush2.xpose.msra.mxu0 0.0
          %3412 = vmatprep.subr.mxu0 0.0
          %3413 = vmatpush2.xpose.msra.mxu0 0.0
          %3414 = vmatprep.subr.mxu0 0.0
          %3415 = vmatpush2.xpose.msra.mxu0 0.0
          %3416 = vmatprep.subr.mxu0 0.0
          %3417 = vmatpush2.xpose.msra.mxu0 0.0
          %3418 = vmatprep.subr.mxu0 0.0
          %3419 = vmatpush2.xpose.msra.mxu0 0.0
          %3420 = vmatprep.subr.mxu0 0.0
          %3421 = vmatpush2.xpose.msra.mxu0 0.0
          %3422 = vmatprep.subr.mxu0 0.0
          %3423 = vmatpush2.xpose.msra.mxu0 0.0
          %3424 = vmatprep.subr.mxu0 0.0
          %3425 = vmatpush2.xpose.msra.mxu0 0.0
          %3426 = vmatprep.subr.mxu0 0.0
          %3427 = vmatpush2.xpose.msra.mxu0 0.0
          %3428 = vmatprep.subr.mxu0 0.0
          %3429 = vmatpush2.xpose.msra.mxu0 0.0
          %3430 = vmatprep.subr.mxu0 0.0
          %3431 = vmatpush2.xpose.msra.mxu0 0.0
          %3432 = vmatprep.subr.mxu0 0.0
          %3433 = vmatpush2.xpose.msra.mxu0 0.0
          %3434 = vmatprep.mubr.f32.mxu0 0.0
          %3435 = vmatmul.mubr.f32.gmra.mxu0 %v3275
          %v3436 = vpop.f32.mrf.mxu0
          %v3437 = vadd.f32 0.0, %v3436
          %v3438 = vpop.f32.mrf.mxu0
          %3439 = vmatprep.mubr.f32.mxu0 0.0
          %3440 = vmatmul.mubr.f32.gmra.mxu0 %v3278
          %v3441 = vpop.f32.mrf.mxu0
          %v3442 = vadd.f32 0.0, %v3441
          %v3443 = vpop.f32.mrf.mxu0
          %3444 = vmatprep.mubr.f32.mxu0 0.0
          %3445 = vmatmul.mubr.f32.gmra.mxu0 %v3281
          %v3446 = vpop.f32.mrf.mxu0
          %v3447 = vadd.f32 0.0, %v3446
          %v3448 = vpop.f32.mrf.mxu0
          %3449 = vmatprep.mubr.f32.mxu0 0.0
          %3450 = vmatmul.mubr.f32.gmra.mxu0 %v3284
          %v3451 = vpop.f32.mrf.mxu0
          %v3452 = vadd.f32 0.0, %v3451
          %v3453 = vpop.f32.mrf.mxu0
          %3454 = vmatprep.mubr.f32.mxu0 0.0
          %3455 = vmatmul.mubr.f32.gmra.mxu0 %v3287
          %v3456 = vpop.f32.mrf.mxu0
          %v3457 = vadd.f32 0.0, %v3456
          %v3458 = vpop.f32.mrf.mxu0
          %3459 = vmatprep.mubr.f32.mxu0 0.0
          %3460 = vmatmul.mubr.f32.gmra.mxu0 %v3290
          %v3461 = vpop.f32.mrf.mxu0
          %v3462 = vadd.f32 0.0, %v3461
          %v3463 = vpop.f32.mrf.mxu0
          %3464 = vmatprep.mubr.f32.mxu0 0.0
          %3465 = vmatmul.mubr.f32.gmra.mxu0 %v3293
          %v3466 = vpop.f32.mrf.mxu0
          %v3467 = vadd.f32 0.0, %v3466
          %v3468 = vpop.f32.mrf.mxu0
          %3469 = vmatprep.mubr.f32.mxu0 0.0
          %3470 = vmatmul.mubr.f32.gmra.mxu0 %v3296
          %v3471 = vpop.f32.mrf.mxu0
          %v3472 = vadd.f32 0.0, %v3471
          %v3473 = vpop.f32.mrf.mxu0
          %3474 = vmatprep.mubr.f32.mxu0 0.0
          %3475 = vmatmul.mubr.f32.gmra.mxu0 %v3299
          %v3476 = vpop.f32.mrf.mxu0
          %v3477 = vadd.f32 0.0, %v3476
          %v3478 = vpop.f32.mrf.mxu0
          %3479 = vmatprep.mubr.f32.mxu0 0.0
          %3480 = vmatmul.mubr.f32.gmra.mxu0 %v3302
          %v3481 = vpop.f32.mrf.mxu0
          %v3482 = vadd.f32 0.0, %v3481
          %v3483 = vpop.f32.mrf.mxu0
          %3484 = vmatprep.mubr.f32.mxu0 0.0
          %3485 = vmatmul.mubr.f32.gmra.mxu0 %v3305
          %v3486 = vpop.f32.mrf.mxu0
          %v3487 = vadd.f32 0.0, %v3486
          %v3488 = vpop.f32.mrf.mxu0
          %3489 = vmatprep.mubr.f32.mxu0 0.0
          %3490 = vmatmul.mubr.f32.gmra.mxu0 %v3308
          %v3491 = vpop.f32.mrf.mxu0
          %v3492 = vadd.f32 0.0, %v3491
          %v3493 = vpop.f32.mrf.mxu0
          %3494 = vmatprep.mubr.f32.mxu0 0.0
          %3495 = vmatmul.mubr.f32.gmra.mxu0 %v3311
          %v3496 = vpop.f32.mrf.mxu0
          %v3497 = vadd.f32 0.0, %v3496
          %v3498 = vpop.f32.mrf.mxu0
          %3499 = vmatprep.mubr.f32.mxu0 0.0
          %3500 = vmatmul.mubr.f32.gmra.mxu0 %v3314
          %v3501 = vpop.f32.mrf.mxu0
          %v3502 = vadd.f32 0.0, %v3501
          %v3503 = vpop.f32.mrf.mxu0
          %3504 = vmatprep.mubr.f32.mxu0 0.0
          %3505 = vmatmul.mubr.f32.gmra.mxu0 %v3317
          %v3506 = vpop.f32.mrf.mxu0
          %v3507 = vadd.f32 0.0, %v3506
          %v3508 = vpop.f32.mrf.mxu0
          %3509 = vmatprep.mubr.f32.mxu0 0.0
          %3510 = vmatmul.mubr.f32.gmra.mxu0 %v3320
          %v3511 = vpop.f32.mrf.mxu0
          %v3512 = vadd.f32 0.0, %v3511
          %v3513 = vpop.f32.mrf.mxu0
          %3514 = vdwg.mxu0
          %p3515 = scmp.lt.s32.totalorder %s2351, %s42
          %s3516 = scalar_select %p3515, 1, 0
          %v3517 = vstv %s3516
          %vm3518 = vcmp.eq.s32.totalorder %v3517, 1
          %vm3519 = vmor %vm3518, %vm2333
          %vm3520 = vmor %vm3518, %vm2334
          %vm3521 = vmor %vm3518, %vm2335
          %vm3522 = vmor %vm3518, %vm2336
          %vm3523 = vmor %vm3518, %vm2337
          %vm3524 = vmor %vm3518, %vm2338
          %vm3525 = vmor %vm3518, %vm2339
          %vm3526 = vmor %vm3518, %vm2340
          %vm3527 = vmor %vm3518, %vm2341
          %vm3528 = vmor %vm3518, %vm2342
          %vm3529 = vmor %vm3518, %vm2343
          %vm3530 = vmor %vm3518, %vm2344
          %vm3531 = vmor %vm3518, %vm2345
          %vm3532 = vmor %vm3518, %vm2346
          %vm3533 = vmor %vm3518, %vm2347
          %vm3534 = vmor %vm3518, %vm2348
          %v3535 = vsel %vm3519, 1, 0
          %v3536 = vsel %vm3520, 1, 0
          %v3537 = vsel %vm3521, 1, 0
          %v3538 = vsel %vm3522, 1, 0
          %v3539 = vsel %vm3523, 1, 0
          %v3540 = vsel %vm3524, 1, 0
          %v3541 = vsel %vm3525, 1, 0
          %v3542 = vsel %vm3526, 1, 0
          %v3543 = vsel %vm3527, 1, 0
          %v3544 = vsel %vm3528, 1, 0
          %v3545 = vsel %vm3529, 1, 0
          %v3546 = vsel %vm3530, 1, 0
          %v3547 = vsel %vm3531, 1, 0
          %v3548 = vsel %vm3532, 1, 0
          %v3549 = vsel %vm3533, 1, 0
          %v3550 = vsel %vm3534, 1, 0
          %vm3551 = vcmp.eq.s32.totalorder %v3535, 1
          %vm3552 = vcmp.eq.s32.totalorder %v3536, 1
          %vm3553 = vcmp.eq.s32.totalorder %v3537, 1
          %vm3554 = vcmp.eq.s32.totalorder %v3538, 1
          %vm3555 = vcmp.eq.s32.totalorder %v3539, 1
          %vm3556 = vcmp.eq.s32.totalorder %v3540, 1
          %vm3557 = vcmp.eq.s32.totalorder %v3541, 1
          %vm3558 = vcmp.eq.s32.totalorder %v3542, 1
          %vm3559 = vcmp.eq.s32.totalorder %v3543, 1
          %vm3560 = vcmp.eq.s32.totalorder %v3544, 1
          %vm3561 = vcmp.eq.s32.totalorder %v3545, 1
          %vm3562 = vcmp.eq.s32.totalorder %v3546, 1
          %vm3563 = vcmp.eq.s32.totalorder %v3547, 1
          %vm3564 = vcmp.eq.s32.totalorder %v3548, 1
          %vm3565 = vcmp.eq.s32.totalorder %v3549, 1
          %vm3566 = vcmp.eq.s32.totalorder %v3550, 1
          %v3567 = vsel %vm3551, %v2714, -1e+30
          %v3568 = vsel %vm3552, %v2719, -1e+30
          %v3569 = vsel %vm3553, %v2724, -1e+30
          %v3570 = vsel %vm3554, %v2729, -1e+30
          %v3571 = vsel %vm3555, %v2734, -1e+30
          %v3572 = vsel %vm3556, %v2739, -1e+30
          %v3573 = vsel %vm3557, %v2744, -1e+30
          %v3574 = vsel %vm3558, %v2749, -1e+30
          %v3575 = vsel %vm3559, %v2754, -1e+30
          %v3576 = vsel %vm3560, %v2759, -1e+30
          %v3577 = vsel %vm3561, %v2764, -1e+30
          %v3578 = vsel %vm3562, %v2769, -1e+30
          %v3579 = vsel %vm3563, %v2774, -1e+30
          %v3580 = vsel %vm3564, %v2779, -1e+30
          %v3581 = vsel %vm3565, %v2784, -1e+30
          %v3582 = vsel %vm3566, %v2789, -1e+30
          %v3583 = vsel %vm3551, %v2955, -1e+30
          %v3584 = vsel %vm3552, %v2960, -1e+30
          %v3585 = vsel %vm3553, %v2965, -1e+30
          %v3586 = vsel %vm3554, %v2970, -1e+30
          %v3587 = vsel %vm3555, %v2975, -1e+30
          %v3588 = vsel %vm3556, %v2980, -1e+30
          %v3589 = vsel %vm3557, %v2985, -1e+30
          %v3590 = vsel %vm3558, %v2990, -1e+30
          %v3591 = vsel %vm3559, %v2995, -1e+30
          %v3592 = vsel %vm3560, %v3000, -1e+30
          %v3593 = vsel %vm3561, %v3005, -1e+30
          %v3594 = vsel %vm3562, %v3010, -1e+30
          %v3595 = vsel %vm3563, %v3015, -1e+30
          %v3596 = vsel %vm3564, %v3020, -1e+30
          %v3597 = vsel %vm3565, %v3025, -1e+30
          %v3598 = vsel %vm3566, %v3030, -1e+30
          %v3599 = vsel %vm3551, %v3196, -1e+30
          %v3600 = vsel %vm3552, %v3201, -1e+30
          %v3601 = vsel %vm3553, %v3206, -1e+30
          %v3602 = vsel %vm3554, %v3211, -1e+30
          %v3603 = vsel %vm3555, %v3216, -1e+30
          %v3604 = vsel %vm3556, %v3221, -1e+30
          %v3605 = vsel %vm3557, %v3226, -1e+30
          %v3606 = vsel %vm3558, %v3231, -1e+30
          %v3607 = vsel %vm3559, %v3236, -1e+30
          %v3608 = vsel %vm3560, %v3241, -1e+30
          %v3609 = vsel %vm3561, %v3246, -1e+30
          %v3610 = vsel %vm3562, %v3251, -1e+30
          %v3611 = vsel %vm3563, %v3256, -1e+30
          %v3612 = vsel %vm3564, %v3261, -1e+30
          %v3613 = vsel %vm3565, %v3266, -1e+30
          %v3614 = vsel %vm3566, %v3271, -1e+30
          %v3615 = vsel %vm3551, %v3437, -1e+30
          %v3616 = vsel %vm3552, %v3442, -1e+30
          %v3617 = vsel %vm3553, %v3447, -1e+30
          %v3618 = vsel %vm3554, %v3452, -1e+30
          %v3619 = vsel %vm3555, %v3457, -1e+30
          %v3620 = vsel %vm3556, %v3462, -1e+30
          %v3621 = vsel %vm3557, %v3467, -1e+30
          %v3622 = vsel %vm3558, %v3472, -1e+30
          %v3623 = vsel %vm3559, %v3477, -1e+30
          %v3624 = vsel %vm3560, %v3482, -1e+30
          %v3625 = vsel %vm3561, %v3487, -1e+30
          %v3626 = vsel %vm3562, %v3492, -1e+30
          %v3627 = vsel %vm3563, %v3497, -1e+30
          %v3628 = vsel %vm3564, %v3502, -1e+30
          %v3629 = vsel %vm3565, %v3507, -1e+30
          %v3630 = vsel %vm3566, %v3512, -1e+30
          %v3631 = vld [vmem:[#allocation6] sm:$0xff]
          %v3632 = vld [vmem:[#allocation6 + $0x8] sm:$0xff]
          %v3633 = vld [vmem:[#allocation6 + $0x10] sm:$0xff]
          %v3634 = vld [vmem:[#allocation6 + $0x18] sm:$0xff]
          %v3635 = vld [vmem:[#allocation6 + $0x20] sm:$0xff]
          %v3636 = vld [vmem:[#allocation6 + $0x28] sm:$0xff]
          %v3637 = vld [vmem:[#allocation6 + $0x30] sm:$0xff]
          %v3638 = vld [vmem:[#allocation6 + $0x38] sm:$0xff]
          %v3639 = vld [vmem:[#allocation6 + $0x40] sm:$0xff]
          %v3640 = vld [vmem:[#allocation6 + $0x48] sm:$0xff]
          %v3641 = vld [vmem:[#allocation6 + $0x50] sm:$0xff]
          %v3642 = vld [vmem:[#allocation6 + $0x58] sm:$0xff]
          %v3643 = vld [vmem:[#allocation6 + $0x60] sm:$0xff]
          %v3644 = vld [vmem:[#allocation6 + $0x68] sm:$0xff]
          %v3645 = vld [vmem:[#allocation6 + $0x70] sm:$0xff]
          %v3646 = vld [vmem:[#allocation6 + $0x78] sm:$0xff]
          %v3647 = vld [vmem:[#allocation6 + $0x80] sm:$0xff]
          %v3648 = vld [vmem:[#allocation6 + $0x88] sm:$0xff]
          %v3649 = vld [vmem:[#allocation6 + $0x90] sm:$0xff]
          %v3650 = vld [vmem:[#allocation6 + $0x98] sm:$0xff]
          %v3651 = vld [vmem:[#allocation6 + $0xa0] sm:$0xff]
          %v3652 = vld [vmem:[#allocation6 + $0xa8] sm:$0xff]
          %v3653 = vld [vmem:[#allocation6 + $0xb0] sm:$0xff]
          %v3654 = vld [vmem:[#allocation6 + $0xb8] sm:$0xff]
          %v3655 = vld [vmem:[#allocation6 + $0xc0] sm:$0xff]
          %v3656 = vld [vmem:[#allocation6 + $0xc8] sm:$0xff]
          %v3657 = vld [vmem:[#allocation6 + $0xd0] sm:$0xff]
          %v3658 = vld [vmem:[#allocation6 + $0xd8] sm:$0xff]
          %v3659 = vld [vmem:[#allocation6 + $0xe0] sm:$0xff]
          %v3660 = vld [vmem:[#allocation6 + $0xe8] sm:$0xff]
          %v3661 = vld [vmem:[#allocation6 + $0xf0] sm:$0xff]
          %v3662 = vld [vmem:[#allocation6 + $0xf8] sm:$0xff]
          %v3663 = vld [vmem:[#allocation6 + $0x100] sm:$0xff]
          %v3664 = vld [vmem:[#allocation6 + $0x108] sm:$0xff]
          %v3665 = vld [vmem:[#allocation6 + $0x110] sm:$0xff]
          %v3666 = vld [vmem:[#allocation6 + $0x118] sm:$0xff]
          %v3667 = vld [vmem:[#allocation6 + $0x120] sm:$0xff]
          %v3668 = vld [vmem:[#allocation6 + $0x128] sm:$0xff]
          %v3669 = vld [vmem:[#allocation6 + $0x130] sm:$0xff]
          %v3670 = vld [vmem:[#allocation6 + $0x138] sm:$0xff]
          %v3671 = vld [vmem:[#allocation6 + $0x140] sm:$0xff]
          %v3672 = vld [vmem:[#allocation6 + $0x148] sm:$0xff]
          %v3673 = vld [vmem:[#allocation6 + $0x150] sm:$0xff]
          %v3674 = vld [vmem:[#allocation6 + $0x158] sm:$0xff]
          %v3675 = vld [vmem:[#allocation6 + $0x160] sm:$0xff]
          %v3676 = vld [vmem:[#allocation6 + $0x168] sm:$0xff]
          %v3677 = vld [vmem:[#allocation6 + $0x170] sm:$0xff]
          %v3678 = vld [vmem:[#allocation6 + $0x178] sm:$0xff]
          %v3679 = vld [vmem:[#allocation6 + $0x180] sm:$0xff]
          %v3680 = vld [vmem:[#allocation6 + $0x188] sm:$0xff]
          %v3681 = vld [vmem:[#allocation6 + $0x190] sm:$0xff]
          %v3682 = vld [vmem:[#allocation6 + $0x198] sm:$0xff]
          %v3683 = vld [vmem:[#allocation6 + $0x1a0] sm:$0xff]
          %v3684 = vld [vmem:[#allocation6 + $0x1a8] sm:$0xff]
          %v3685 = vld [vmem:[#allocation6 + $0x1b0] sm:$0xff]
          %v3686 = vld [vmem:[#allocation6 + $0x1b8] sm:$0xff]
          %v3687 = vld [vmem:[#allocation6 + $0x1c0] sm:$0xff]
          %v3688 = vld [vmem:[#allocation6 + $0x1c8] sm:$0xff]
          %v3689 = vld [vmem:[#allocation6 + $0x1d0] sm:$0xff]
          %v3690 = vld [vmem:[#allocation6 + $0x1d8] sm:$0xff]
          %v3691 = vld [vmem:[#allocation6 + $0x1e0] sm:$0xff]
          %v3692 = vld [vmem:[#allocation6 + $0x1e8] sm:$0xff]
          %v3693 = vld [vmem:[#allocation6 + $0x1f0] sm:$0xff]
          %v3694 = vld [vmem:[#allocation6 + $0x1f8] sm:$0xff]
          %3695 = vmax.xlane.f32.xlu0 %v3567
          %v3696 = vpop.xlane.xlu0 %3695
          %3697 = vmax.xlane.f32.xlu0 %v3568
          %v3698 = vpop.xlane.xlu0 %3697
          %3699 = vmax.xlane.f32.xlu0 %v3569
          %v3700 = vpop.xlane.xlu0 %3699
          %3701 = vmax.xlane.f32.xlu0 %v3570
          %v3702 = vpop.xlane.xlu0 %3701
          %3703 = vmax.xlane.f32.xlu0 %v3571
          %v3704 = vpop.xlane.xlu0 %3703
          %3705 = vmax.xlane.f32.xlu0 %v3572
          %v3706 = vpop.xlane.xlu0 %3705
          %3707 = vmax.xlane.f32.xlu0 %v3573
          %v3708 = vpop.xlane.xlu0 %3707
          %3709 = vmax.xlane.f32.xlu0 %v3574
          %v3710 = vpop.xlane.xlu0 %3709
          %3711 = vmax.xlane.f32.xlu0 %v3575
          %v3712 = vpop.xlane.xlu0 %3711
          %3713 = vmax.xlane.f32.xlu0 %v3576
          %v3714 = vpop.xlane.xlu0 %3713
          %3715 = vmax.xlane.f32.xlu0 %v3577
          %v3716 = vpop.xlane.xlu0 %3715
          %3717 = vmax.xlane.f32.xlu0 %v3578
          %v3718 = vpop.xlane.xlu0 %3717
          %3719 = vmax.xlane.f32.xlu0 %v3579
          %v3720 = vpop.xlane.xlu0 %3719
          %3721 = vmax.xlane.f32.xlu0 %v3580
          %v3722 = vpop.xlane.xlu0 %3721
          %3723 = vmax.xlane.f32.xlu0 %v3581
          %v3724 = vpop.xlane.xlu0 %3723
          %3725 = vmax.xlane.f32.xlu0 %v3582
          %v3726 = vpop.xlane.xlu0 %3725
          %3727 = vmax.xlane.f32.xlu0 %v3583
          %v3728 = vpop.xlane.xlu0 %3727
          %3729 = vmax.xlane.f32.xlu0 %v3584
          %v3730 = vpop.xlane.xlu0 %3729
          %3731 = vmax.xlane.f32.xlu0 %v3585
          %v3732 = vpop.xlane.xlu0 %3731
          %3733 = vmax.xlane.f32.xlu0 %v3586
          %v3734 = vpop.xlane.xlu0 %3733
          %3735 = vmax.xlane.f32.xlu0 %v3587
          %v3736 = vpop.xlane.xlu0 %3735
          %3737 = vmax.xlane.f32.xlu0 %v3588
          %v3738 = vpop.xlane.xlu0 %3737
          %3739 = vmax.xlane.f32.xlu0 %v3589
          %v3740 = vpop.xlane.xlu0 %3739
          %3741 = vmax.xlane.f32.xlu0 %v3590
          %v3742 = vpop.xlane.xlu0 %3741
          %3743 = vmax.xlane.f32.xlu0 %v3591
          %v3744 = vpop.xlane.xlu0 %3743
          %3745 = vmax.xlane.f32.xlu0 %v3592
          %v3746 = vpop.xlane.xlu0 %3745
          %3747 = vmax.xlane.f32.xlu0 %v3593
          %v3748 = vpop.xlane.xlu0 %3747
          %3749 = vmax.xlane.f32.xlu0 %v3594
          %v3750 = vpop.xlane.xlu0 %3749
          %3751 = vmax.xlane.f32.xlu0 %v3595
          %v3752 = vpop.xlane.xlu0 %3751
          %3753 = vmax.xlane.f32.xlu0 %v3596
          %v3754 = vpop.xlane.xlu0 %3753
          %3755 = vmax.xlane.f32.xlu0 %v3597
          %v3756 = vpop.xlane.xlu0 %3755
          %3757 = vmax.xlane.f32.xlu0 %v3598
          %v3758 = vpop.xlane.xlu0 %3757
          %3759 = vmax.xlane.f32.xlu0 %v3599
          %v3760 = vpop.xlane.xlu0 %3759
          %3761 = vmax.xlane.f32.xlu0 %v3600
          %v3762 = vpop.xlane.xlu0 %3761
          %3763 = vmax.xlane.f32.xlu0 %v3601
          %v3764 = vpop.xlane.xlu0 %3763
          %3765 = vmax.xlane.f32.xlu0 %v3602
          %v3766 = vpop.xlane.xlu0 %3765
          %3767 = vmax.xlane.f32.xlu0 %v3603
          %v3768 = vpop.xlane.xlu0 %3767
          %3769 = vmax.xlane.f32.xlu0 %v3604
          %v3770 = vpop.xlane.xlu0 %3769
          %3771 = vmax.xlane.f32.xlu0 %v3605
          %v3772 = vpop.xlane.xlu0 %3771
          %3773 = vmax.xlane.f32.xlu0 %v3606
          %v3774 = vpop.xlane.xlu0 %3773
          %3775 = vmax.xlane.f32.xlu0 %v3607
          %v3776 = vpop.xlane.xlu0 %3775
          %3777 = vmax.xlane.f32.xlu0 %v3608
          %v3778 = vpop.xlane.xlu0 %3777
          %3779 = vmax.xlane.f32.xlu0 %v3609
          %v3780 = vpop.xlane.xlu0 %3779
          %3781 = vmax.xlane.f32.xlu0 %v3610
          %v3782 = vpop.xlane.xlu0 %3781
          %3783 = vmax.xlane.f32.xlu0 %v3611
          %v3784 = vpop.xlane.xlu0 %3783
          %3785 = vmax.xlane.f32.xlu0 %v3612
          %v3786 = vpop.xlane.xlu0 %3785
          %3787 = vmax.xlane.f32.xlu0 %v3613
          %v3788 = vpop.xlane.xlu0 %3787
          %3789 = vmax.xlane.f32.xlu0 %v3614
          %v3790 = vpop.xlane.xlu0 %3789
          %3791 = vmax.xlane.f32.xlu0 %v3615
          %v3792 = vpop.xlane.xlu0 %3791
          %3793 = vmax.xlane.f32.xlu0 %v3616
          %v3794 = vpop.xlane.xlu0 %3793
          %3795 = vmax.xlane.f32.xlu0 %v3617
          %v3796 = vpop.xlane.xlu0 %3795
          %3797 = vmax.xlane.f32.xlu0 %v3618
          %v3798 = vpop.xlane.xlu0 %3797
          %3799 = vmax.xlane.f32.xlu0 %v3619
          %v3800 = vpop.xlane.xlu0 %3799
          %3801 = vmax.xlane.f32.xlu0 %v3620
          %v3802 = vpop.xlane.xlu0 %3801
          %3803 = vmax.xlane.f32.xlu0 %v3621
          %v3804 = vpop.xlane.xlu0 %3803
          %3805 = vmax.xlane.f32.xlu0 %v3622
          %v3806 = vpop.xlane.xlu0 %3805
          %3807 = vmax.xlane.f32.xlu0 %v3623
          %v3808 = vpop.xlane.xlu0 %3807
          %3809 = vmax.xlane.f32.xlu0 %v3624
          %v3810 = vpop.xlane.xlu0 %3809
          %3811 = vmax.xlane.f32.xlu0 %v3625
          %v3812 = vpop.xlane.xlu0 %3811
          %3813 = vmax.xlane.f32.xlu0 %v3626
          %v3814 = vpop.xlane.xlu0 %3813
          %3815 = vmax.xlane.f32.xlu0 %v3627
          %v3816 = vpop.xlane.xlu0 %3815
          %3817 = vmax.xlane.f32.xlu0 %v3628
          %v3818 = vpop.xlane.xlu0 %3817
          %3819 = vmax.xlane.f32.xlu0 %v3629
          %v3820 = vpop.xlane.xlu0 %3819
          %3821 = vmax.xlane.f32.xlu0 %v3630
          %v3822 = vpop.xlane.xlu0 %3821
          %v3823 = vmax.f32 %v3631, %v3696
          %v3824 = vmax.f32 %v3632, %v3698
          %v3825 = vmax.f32 %v3633, %v3700
          %v3826 = vmax.f32 %v3634, %v3702
          %v3827 = vmax.f32 %v3635, %v3704
          %v3828 = vmax.f32 %v3636, %v3706
          %v3829 = vmax.f32 %v3637, %v3708
          %v3830 = vmax.f32 %v3638, %v3710
          %v3831 = vmax.f32 %v3639, %v3712
          %v3832 = vmax.f32 %v3640, %v3714
          %v3833 = vmax.f32 %v3641, %v3716
          %v3834 = vmax.f32 %v3642, %v3718
          %v3835 = vmax.f32 %v3643, %v3720
          %v3836 = vmax.f32 %v3644, %v3722
          %v3837 = vmax.f32 %v3645, %v3724
          %v3838 = vmax.f32 %v3646, %v3726
          %v3839 = vmax.f32 %v3647, %v3728
          %v3840 = vmax.f32 %v3648, %v3730
          %v3841 = vmax.f32 %v3649, %v3732
          %v3842 = vmax.f32 %v3650, %v3734
          %v3843 = vmax.f32 %v3651, %v3736
          %v3844 = vmax.f32 %v3652, %v3738
          %v3845 = vmax.f32 %v3653, %v3740
          %v3846 = vmax.f32 %v3654, %v3742
          %v3847 = vmax.f32 %v3655, %v3744
          %v3848 = vmax.f32 %v3656, %v3746
          %v3849 = vmax.f32 %v3657, %v3748
          %v3850 = vmax.f32 %v3658, %v3750
          %v3851 = vmax.f32 %v3659, %v3752
          %v3852 = vmax.f32 %v3660, %v3754
          %v3853 = vmax.f32 %v3661, %v3756
          %v3854 = vmax.f32 %v3662, %v3758
          %v3855 = vmax.f32 %v3663, %v3760
          %v3856 = vmax.f32 %v3664, %v3762
          %v3857 = vmax.f32 %v3665, %v3764
          %v3858 = vmax.f32 %v3666, %v3766
          %v3859 = vmax.f32 %v3667, %v3768
          %v3860 = vmax.f32 %v3668, %v3770
          %v3861 = vmax.f32 %v3669, %v3772
          %v3862 = vmax.f32 %v3670, %v3774
          %v3863 = vmax.f32 %v3671, %v3776
          %v3864 = vmax.f32 %v3672, %v3778
          %v3865 = vmax.f32 %v3673, %v3780
          %v3866 = vmax.f32 %v3674, %v3782
          %v3867 = vmax.f32 %v3675, %v3784
          %v3868 = vmax.f32 %v3676, %v3786
          %v3869 = vmax.f32 %v3677, %v3788
          %v3870 = vmax.f32 %v3678, %v3790
          %v3871 = vmax.f32 %v3679, %v3792
          %v3872 = vmax.f32 %v3680, %v3794
          %v3873 = vmax.f32 %v3681, %v3796
          %v3874 = vmax.f32 %v3682, %v3798
          %v3875 = vmax.f32 %v3683, %v3800
          %v3876 = vmax.f32 %v3684, %v3802
          %v3877 = vmax.f32 %v3685, %v3804
          %v3878 = vmax.f32 %v3686, %v3806
          %v3879 = vmax.f32 %v3687, %v3808
          %v3880 = vmax.f32 %v3688, %v3810
          %v3881 = vmax.f32 %v3689, %v3812
          %v3882 = vmax.f32 %v3690, %v3814
          %v3883 = vmax.f32 %v3691, %v3816
          %v3884 = vmax.f32 %v3692, %v3818
          %v3885 = vmax.f32 %v3693, %v3820
          %v3886 = vmax.f32 %v3694, %v3822
          %v3887 = vsub.f32 %v3631, %v3823
          %v3888 = vsub.f32 %v3632, %v3824
          %v3889 = vsub.f32 %v3633, %v3825
          %v3890 = vsub.f32 %v3634, %v3826
          %v3891 = vsub.f32 %v3635, %v3827
          %v3892 = vsub.f32 %v3636, %v3828
          %v3893 = vsub.f32 %v3637, %v3829
          %v3894 = vsub.f32 %v3638, %v3830
          %v3895 = vsub.f32 %v3639, %v3831
          %v3896 = vsub.f32 %v3640, %v3832
          %v3897 = vsub.f32 %v3641, %v3833
          %v3898 = vsub.f32 %v3642, %v3834
          %v3899 = vsub.f32 %v3643, %v3835
          %v3900 = vsub.f32 %v3644, %v3836
          %v3901 = vsub.f32 %v3645, %v3837
          %v3902 = vsub.f32 %v3646, %v3838
          %v3903 = vsub.f32 %v3647, %v3839
          %v3904 = vsub.f32 %v3648, %v3840
          %v3905 = vsub.f32 %v3649, %v3841
          %v3906 = vsub.f32 %v3650, %v3842
          %v3907 = vsub.f32 %v3651, %v3843
          %v3908 = vsub.f32 %v3652, %v3844
          %v3909 = vsub.f32 %v3653, %v3845
          %v3910 = vsub.f32 %v3654, %v3846
          %v3911 = vsub.f32 %v3655, %v3847
          %v3912 = vsub.f32 %v3656, %v3848
          %v3913 = vsub.f32 %v3657, %v3849
          %v3914 = vsub.f32 %v3658, %v3850
          %v3915 = vsub.f32 %v3659, %v3851
          %v3916 = vsub.f32 %v3660, %v3852
          %v3917 = vsub.f32 %v3661, %v3853
          %v3918 = vsub.f32 %v3662, %v3854
          %v3919 = vsub.f32 %v3663, %v3855
          %v3920 = vsub.f32 %v3664, %v3856
          %v3921 = vsub.f32 %v3665, %v3857
          %v3922 = vsub.f32 %v3666, %v3858
          %v3923 = vsub.f32 %v3667, %v3859
          %v3924 = vsub.f32 %v3668, %v3860
          %v3925 = vsub.f32 %v3669, %v3861
          %v3926 = vsub.f32 %v3670, %v3862
          %v3927 = vsub.f32 %v3671, %v3863
          %v3928 = vsub.f32 %v3672, %v3864
          %v3929 = vsub.f32 %v3673, %v3865
          %v3930 = vsub.f32 %v3674, %v3866
          %v3931 = vsub.f32 %v3675, %v3867
          %v3932 = vsub.f32 %v3676, %v3868
          %v3933 = vsub.f32 %v3677, %v3869
          %v3934 = vsub.f32 %v3678, %v3870
          %v3935 = vsub.f32 %v3679, %v3871
          %v3936 = vsub.f32 %v3680, %v3872
          %v3937 = vsub.f32 %v3681, %v3873
          %v3938 = vsub.f32 %v3682, %v3874
          %v3939 = vsub.f32 %v3683, %v3875
          %v3940 = vsub.f32 %v3684, %v3876
          %v3941 = vsub.f32 %v3685, %v3877
          %v3942 = vsub.f32 %v3686, %v3878
          %v3943 = vsub.f32 %v3687, %v3879
          %v3944 = vsub.f32 %v3688, %v3880
          %v3945 = vsub.f32 %v3689, %v3881
          %v3946 = vsub.f32 %v3690, %v3882
          %v3947 = vsub.f32 %v3691, %v3883
          %v3948 = vsub.f32 %v3692, %v3884
          %v3949 = vsub.f32 %v3693, %v3885
          %v3950 = vsub.f32 %v3694, %v3886
          %v3951 = vmul.f32 %v3887, 1.442695
          %v3952 = vpow.pop %v3951
          %v3953 = vmul.f32 %v3888, 1.442695
          %v3954 = vpow.pop %v3953
          %v3955 = vmul.f32 %v3889, 1.442695
          %v3956 = vpow.pop %v3955
          %v3957 = vmul.f32 %v3890, 1.442695
          %v3958 = vpow.pop %v3957
          %v3959 = vmul.f32 %v3891, 1.442695
          %v3960 = vpow.pop %v3959
          %v3961 = vmul.f32 %v3892, 1.442695
          %v3962 = vpow.pop %v3961
          %v3963 = vmul.f32 %v3893, 1.442695
          %v3964 = vpow.pop %v3963
          %v3965 = vmul.f32 %v3894, 1.442695
          %v3966 = vpow.pop %v3965
          %v3967 = vmul.f32 %v3895, 1.442695
          %v3968 = vpow.pop %v3967
          %v3969 = vmul.f32 %v3896, 1.442695
          %v3970 = vpow.pop %v3969
          %v3971 = vmul.f32 %v3897, 1.442695
          %v3972 = vpow.pop %v3971
          %v3973 = vmul.f32 %v3898, 1.442695
          %v3974 = vpow.pop %v3973
          %v3975 = vmul.f32 %v3899, 1.442695
          %v3976 = vpow.pop %v3975
          %v3977 = vmul.f32 %v3900, 1.442695
          %v3978 = vpow.pop %v3977
          %v3979 = vmul.f32 %v3901, 1.442695
          %v3980 = vpow.pop %v3979
          %v3981 = vmul.f32 %v3902, 1.442695
          %v3982 = vpow.pop %v3981
          %v3983 = vmul.f32 %v3903, 1.442695
          %v3984 = vpow.pop %v3983
          %v3985 = vmul.f32 %v3904, 1.442695
          %v3986 = vpow.pop %v3985
          %v3987 = vmul.f32 %v3905, 1.442695
          %v3988 = vpow.pop %v3987
          %v3989 = vmul.f32 %v3906, 1.442695
          %v3990 = vpow.pop %v3989
          %v3991 = vmul.f32 %v3907, 1.442695
          %v3992 = vpow.pop %v3991
          %v3993 = vmul.f32 %v3908, 1.442695
          %v3994 = vpow.pop %v3993
          %v3995 = vmul.f32 %v3909, 1.442695
          %v3996 = vpow.pop %v3995
          %v3997 = vmul.f32 %v3910, 1.442695
          %v3998 = vpow.pop %v3997
          %v3999 = vmul.f32 %v3911, 1.442695
          %v4000 = vpow.pop %v3999
          %v4001 = vmul.f32 %v3912, 1.442695
          %v4002 = vpow.pop %v4001
          %v4003 = vmul.f32 %v3913, 1.442695
          %v4004 = vpow.pop %v4003
          %v4005 = vmul.f32 %v3914, 1.442695
          %v4006 = vpow.pop %v4005
          %v4007 = vmul.f32 %v3915, 1.442695
          %v4008 = vpow.pop %v4007
          %v4009 = vmul.f32 %v3916, 1.442695
          %v4010 = vpow.pop %v4009
          %v4011 = vmul.f32 %v3917, 1.442695
          %v4012 = vpow.pop %v4011
          %v4013 = vmul.f32 %v3918, 1.442695
          %v4014 = vpow.pop %v4013
          %v4015 = vmul.f32 %v3919, 1.442695
          %v4016 = vpow.pop %v4015
          %v4017 = vmul.f32 %v3920, 1.442695
          %v4018 = vpow.pop %v4017
          %v4019 = vmul.f32 %v3921, 1.442695
          %v4020 = vpow.pop %v4019
          %v4021 = vmul.f32 %v3922, 1.442695
          %v4022 = vpow.pop %v4021
          %v4023 = vmul.f32 %v3923, 1.442695
          %v4024 = vpow.pop %v4023
          %v4025 = vmul.f32 %v3924, 1.442695
          %v4026 = vpow.pop %v4025
          %v4027 = vmul.f32 %v3925, 1.442695
          %v4028 = vpow.pop %v4027
          %v4029 = vmul.f32 %v3926, 1.442695
          %v4030 = vpow.pop %v4029
          %v4031 = vmul.f32 %v3927, 1.442695
          %v4032 = vpow.pop %v4031
          %v4033 = vmul.f32 %v3928, 1.442695
          %v4034 = vpow.pop %v4033
          %v4035 = vmul.f32 %v3929, 1.442695
          %v4036 = vpow.pop %v4035
          %v4037 = vmul.f32 %v3930, 1.442695
          %v4038 = vpow.pop %v4037
          %v4039 = vmul.f32 %v3931, 1.442695
          %v4040 = vpow.pop %v4039
          %v4041 = vmul.f32 %v3932, 1.442695
          %v4042 = vpow.pop %v4041
          %v4043 = vmul.f32 %v3933, 1.442695
          %v4044 = vpow.pop %v4043
          %v4045 = vmul.f32 %v3934, 1.442695
          %v4046 = vpow.pop %v4045
          %v4047 = vmul.f32 %v3935, 1.442695
          %v4048 = vpow.pop %v4047
          %v4049 = vmul.f32 %v3936, 1.442695
          %v4050 = vpow.pop %v4049
          %v4051 = vmul.f32 %v3937, 1.442695
          %v4052 = vpow.pop %v4051
          %v4053 = vmul.f32 %v3938, 1.442695
          %v4054 = vpow.pop %v4053
          %v4055 = vmul.f32 %v3939, 1.442695
          %v4056 = vpow.pop %v4055
          %v4057 = vmul.f32 %v3940, 1.442695
          %v4058 = vpow.pop %v4057
          %v4059 = vmul.f32 %v3941, 1.442695
          %v4060 = vpow.pop %v4059
          %v4061 = vmul.f32 %v3942, 1.442695
          %v4062 = vpow.pop %v4061
          %v4063 = vmul.f32 %v3943, 1.442695
          %v4064 = vpow.pop %v4063
          %v4065 = vmul.f32 %v3944, 1.442695
          %v4066 = vpow.pop %v4065
          %v4067 = vmul.f32 %v3945, 1.442695
          %v4068 = vpow.pop %v4067
          %v4069 = vmul.f32 %v3946, 1.442695
          %v4070 = vpow.pop %v4069
          %v4071 = vmul.f32 %v3947, 1.442695
          %v4072 = vpow.pop %v4071
          %v4073 = vmul.f32 %v3948, 1.442695
          %v4074 = vpow.pop %v4073
          %v4075 = vmul.f32 %v3949, 1.442695
          %v4076 = vpow.pop %v4075
          %v4077 = vmul.f32 %v3950, 1.442695
          %v4078 = vpow.pop %v4077
          %4080 = vset.pattern.permute.xlu0 0
          %4081 = vperm.xlu0 %4080, %v3823
          %v4082 = vpop.permute.xlu0 %4081
          %4085 = vset.pattern.permute.xlu0 0
          %4086 = vperm.xlu0 %4085, %v3824
          %v4087 = vpop.permute.xlu0 %4086
          %4090 = vset.pattern.permute.xlu0 0
          %4091 = vperm.xlu0 %4090, %v3825
          %v4092 = vpop.permute.xlu0 %4091
          %4095 = vset.pattern.permute.xlu0 0
          %4096 = vperm.xlu0 %4095, %v3826
          %v4097 = vpop.permute.xlu0 %4096
          %4100 = vset.pattern.permute.xlu0 0
          %4101 = vperm.xlu0 %4100, %v3827
          %v4102 = vpop.permute.xlu0 %4101
          %4105 = vset.pattern.permute.xlu0 0
          %4106 = vperm.xlu0 %4105, %v3828
          %v4107 = vpop.permute.xlu0 %4106
          %4110 = vset.pattern.permute.xlu0 0
          %4111 = vperm.xlu0 %4110, %v3829
          %v4112 = vpop.permute.xlu0 %4111
          %4115 = vset.pattern.permute.xlu0 0
          %4116 = vperm.xlu0 %4115, %v3830
          %v4117 = vpop.permute.xlu0 %4116
          %4120 = vset.pattern.permute.xlu0 0
          %4121 = vperm.xlu0 %4120, %v3831
          %v4122 = vpop.permute.xlu0 %4121
          %4125 = vset.pattern.permute.xlu0 0
          %4126 = vperm.xlu0 %4125, %v3832
          %v4127 = vpop.permute.xlu0 %4126
          %4130 = vset.pattern.permute.xlu0 0
          %4131 = vperm.xlu0 %4130, %v3833
          %v4132 = vpop.permute.xlu0 %4131
          %4135 = vset.pattern.permute.xlu0 0
          %4136 = vperm.xlu0 %4135, %v3834
          %v4137 = vpop.permute.xlu0 %4136
          %4140 = vset.pattern.permute.xlu0 0
          %4141 = vperm.xlu0 %4140, %v3835
          %v4142 = vpop.permute.xlu0 %4141
          %4145 = vset.pattern.permute.xlu0 0
          %4146 = vperm.xlu0 %4145, %v3836
          %v4147 = vpop.permute.xlu0 %4146
          %4150 = vset.pattern.permute.xlu0 0
          %4151 = vperm.xlu0 %4150, %v3837
          %v4152 = vpop.permute.xlu0 %4151
          %4155 = vset.pattern.permute.xlu0 0
          %4156 = vperm.xlu0 %4155, %v3838
          %v4157 = vpop.permute.xlu0 %4156
          %4160 = vset.pattern.permute.xlu0 0
          %4161 = vperm.xlu0 %4160, %v3839
          %v4162 = vpop.permute.xlu0 %4161
          %4165 = vset.pattern.permute.xlu0 0
          %4166 = vperm.xlu0 %4165, %v3840
          %v4167 = vpop.permute.xlu0 %4166
          %4170 = vset.pattern.permute.xlu0 0
          %4171 = vperm.xlu0 %4170, %v3841
          %v4172 = vpop.permute.xlu0 %4171
          %4175 = vset.pattern.permute.xlu0 0
          %4176 = vperm.xlu0 %4175, %v3842
          %v4177 = vpop.permute.xlu0 %4176
          %4180 = vset.pattern.permute.xlu0 0
          %4181 = vperm.xlu0 %4180, %v3843
          %v4182 = vpop.permute.xlu0 %4181
          %4185 = vset.pattern.permute.xlu0 0
          %4186 = vperm.xlu0 %4185, %v3844
          %v4187 = vpop.permute.xlu0 %4186
          %4190 = vset.pattern.permute.xlu0 0
          %4191 = vperm.xlu0 %4190, %v3845
          %v4192 = vpop.permute.xlu0 %4191
          %4195 = vset.pattern.permute.xlu0 0
          %4196 = vperm.xlu0 %4195, %v3846
          %v4197 = vpop.permute.xlu0 %4196
          %4200 = vset.pattern.permute.xlu0 0
          %4201 = vperm.xlu0 %4200, %v3847
          %v4202 = vpop.permute.xlu0 %4201
          %4205 = vset.pattern.permute.xlu0 0
          %4206 = vperm.xlu0 %4205, %v3848
          %v4207 = vpop.permute.xlu0 %4206
          %4210 = vset.pattern.permute.xlu0 0
          %4211 = vperm.xlu0 %4210, %v3849
          %v4212 = vpop.permute.xlu0 %4211
          %4215 = vset.pattern.permute.xlu0 0
          %4216 = vperm.xlu0 %4215, %v3850
          %v4217 = vpop.permute.xlu0 %4216
          %4220 = vset.pattern.permute.xlu0 0
          %4221 = vperm.xlu0 %4220, %v3851
          %v4222 = vpop.permute.xlu0 %4221
          %4225 = vset.pattern.permute.xlu0 0
          %4226 = vperm.xlu0 %4225, %v3852
          %v4227 = vpop.permute.xlu0 %4226
          %4230 = vset.pattern.permute.xlu0 0
          %4231 = vperm.xlu0 %4230, %v3853
          %v4232 = vpop.permute.xlu0 %4231
          %4235 = vset.pattern.permute.xlu0 0
          %4236 = vperm.xlu0 %4235, %v3854
          %v4237 = vpop.permute.xlu0 %4236
          %4240 = vset.pattern.permute.xlu0 0
          %4241 = vperm.xlu0 %4240, %v3855
          %v4242 = vpop.permute.xlu0 %4241
          %4245 = vset.pattern.permute.xlu0 0
          %4246 = vperm.xlu0 %4245, %v3856
          %v4247 = vpop.permute.xlu0 %4246
          %4250 = vset.pattern.permute.xlu0 0
          %4251 = vperm.xlu0 %4250, %v3857
          %v4252 = vpop.permute.xlu0 %4251
          %4255 = vset.pattern.permute.xlu0 0
          %4256 = vperm.xlu0 %4255, %v3858
          %v4257 = vpop.permute.xlu0 %4256
          %4260 = vset.pattern.permute.xlu0 0
          %4261 = vperm.xlu0 %4260, %v3859
          %v4262 = vpop.permute.xlu0 %4261
          %4265 = vset.pattern.permute.xlu0 0
          %4266 = vperm.xlu0 %4265, %v3860
          %v4267 = vpop.permute.xlu0 %4266
          %4270 = vset.pattern.permute.xlu0 0
          %4271 = vperm.xlu0 %4270, %v3861
          %v4272 = vpop.permute.xlu0 %4271
          %4275 = vset.pattern.permute.xlu0 0
          %4276 = vperm.xlu0 %4275, %v3862
          %v4277 = vpop.permute.xlu0 %4276
          %4280 = vset.pattern.permute.xlu0 0
          %4281 = vperm.xlu0 %4280, %v3863
          %v4282 = vpop.permute.xlu0 %4281
          %4285 = vset.pattern.permute.xlu0 0
          %4286 = vperm.xlu0 %4285, %v3864
          %v4287 = vpop.permute.xlu0 %4286
          %4290 = vset.pattern.permute.xlu0 0
          %4291 = vperm.xlu0 %4290, %v3865
          %v4292 = vpop.permute.xlu0 %4291
          %4295 = vset.pattern.permute.xlu0 0
          %4296 = vperm.xlu0 %4295, %v3866
          %v4297 = vpop.permute.xlu0 %4296
          %4300 = vset.pattern.permute.xlu0 0
          %4301 = vperm.xlu0 %4300, %v3867
          %v4302 = vpop.permute.xlu0 %4301
          %4305 = vset.pattern.permute.xlu0 0
          %4306 = vperm.xlu0 %4305, %v3868
          %v4307 = vpop.permute.xlu0 %4306
          %4310 = vset.pattern.permute.xlu0 0
          %4311 = vperm.xlu0 %4310, %v3869
          %v4312 = vpop.permute.xlu0 %4311
          %4315 = vset.pattern.permute.xlu0 0
          %4316 = vperm.xlu0 %4315, %v3870
          %v4317 = vpop.permute.xlu0 %4316
          %4320 = vset.pattern.permute.xlu0 0
          %4321 = vperm.xlu0 %4320, %v3871
          %v4322 = vpop.permute.xlu0 %4321
          %4325 = vset.pattern.permute.xlu0 0
          %4326 = vperm.xlu0 %4325, %v3872
          %v4327 = vpop.permute.xlu0 %4326
          %4330 = vset.pattern.permute.xlu0 0
          %4331 = vperm.xlu0 %4330, %v3873
          %v4332 = vpop.permute.xlu0 %4331
          %4335 = vset.pattern.permute.xlu0 0
          %4336 = vperm.xlu0 %4335, %v3874
          %v4337 = vpop.permute.xlu0 %4336
          %4340 = vset.pattern.permute.xlu0 0
          %4341 = vperm.xlu0 %4340, %v3875
          %v4342 = vpop.permute.xlu0 %4341
          %4345 = vset.pattern.permute.xlu0 0
          %4346 = vperm.xlu0 %4345, %v3876
          %v4347 = vpop.permute.xlu0 %4346
          %4350 = vset.pattern.permute.xlu0 0
          %4351 = vperm.xlu0 %4350, %v3877
          %v4352 = vpop.permute.xlu0 %4351
          %4355 = vset.pattern.permute.xlu0 0
          %4356 = vperm.xlu0 %4355, %v3878
          %v4357 = vpop.permute.xlu0 %4356
          %4360 = vset.pattern.permute.xlu0 0
          %4361 = vperm.xlu0 %4360, %v3879
          %v4362 = vpop.permute.xlu0 %4361
          %4365 = vset.pattern.permute.xlu0 0
          %4366 = vperm.xlu0 %4365, %v3880
          %v4367 = vpop.permute.xlu0 %4366
          %4370 = vset.pattern.permute.xlu0 0
          %4371 = vperm.xlu0 %4370, %v3881
          %v4372 = vpop.permute.xlu0 %4371
          %4375 = vset.pattern.permute.xlu0 0
          %4376 = vperm.xlu0 %4375, %v3882
          %v4377 = vpop.permute.xlu0 %4376
          %4380 = vset.pattern.permute.xlu0 0
          %4381 = vperm.xlu0 %4380, %v3883
          %v4382 = vpop.permute.xlu0 %4381
          %4385 = vset.pattern.permute.xlu0 0
          %4386 = vperm.xlu0 %4385, %v3884
          %v4387 = vpop.permute.xlu0 %4386
          %4390 = vset.pattern.permute.xlu0 0
          %4391 = vperm.xlu0 %4390, %v3885
          %v4392 = vpop.permute.xlu0 %4391
          %4395 = vset.pattern.permute.xlu0 0
          %4396 = vperm.xlu0 %4395, %v3886
          %v4397 = vpop.permute.xlu0 %4396
          %v4399 = vsub.f32 %v3567, %v4082
          %v4400 = vsub.f32 %v3568, %v4087
          %v4401 = vsub.f32 %v3569, %v4092
          %v4402 = vsub.f32 %v3570, %v4097
          %v4403 = vsub.f32 %v3571, %v4102
          %v4404 = vsub.f32 %v3572, %v4107
          %v4405 = vsub.f32 %v3573, %v4112
          %v4406 = vsub.f32 %v3574, %v4117
          %v4407 = vsub.f32 %v3575, %v4122
          %v4408 = vsub.f32 %v3576, %v4127
          %v4409 = vsub.f32 %v3577, %v4132
          %v4410 = vsub.f32 %v3578, %v4137
          %v4411 = vsub.f32 %v3579, %v4142
          %v4412 = vsub.f32 %v3580, %v4147
          %v4413 = vsub.f32 %v3581, %v4152
          %v4414 = vsub.f32 %v3582, %v4157
          %v4415 = vsub.f32 %v3583, %v4162
          %v4416 = vsub.f32 %v3584, %v4167
          %v4417 = vsub.f32 %v3585, %v4172
          %v4418 = vsub.f32 %v3586, %v4177
          %v4419 = vsub.f32 %v3587, %v4182
          %v4420 = vsub.f32 %v3588, %v4187
          %v4421 = vsub.f32 %v3589, %v4192
          %v4422 = vsub.f32 %v3590, %v4197
          %v4423 = vsub.f32 %v3591, %v4202
          %v4424 = vsub.f32 %v3592, %v4207
          %v4425 = vsub.f32 %v3593, %v4212
          %v4426 = vsub.f32 %v3594, %v4217
          %v4427 = vsub.f32 %v3595, %v4222
          %v4428 = vsub.f32 %v3596, %v4227
          %v4429 = vsub.f32 %v3597, %v4232
          %v4430 = vsub.f32 %v3598, %v4237
          %v4431 = vsub.f32 %v3599, %v4242
          %v4432 = vsub.f32 %v3600, %v4247
          %v4433 = vsub.f32 %v3601, %v4252
          %v4434 = vsub.f32 %v3602, %v4257
          %v4435 = vsub.f32 %v3603, %v4262
          %v4436 = vsub.f32 %v3604, %v4267
          %v4437 = vsub.f32 %v3605, %v4272
          %v4438 = vsub.f32 %v3606, %v4277
          %v4439 = vsub.f32 %v3607, %v4282
          %v4440 = vsub.f32 %v3608, %v4287
          %v4441 = vsub.f32 %v3609, %v4292
          %v4442 = vsub.f32 %v3610, %v4297
          %v4443 = vsub.f32 %v3611, %v4302
          %v4444 = vsub.f32 %v3612, %v4307
          %v4445 = vsub.f32 %v3613, %v4312
          %v4446 = vsub.f32 %v3614, %v4317
          %v4447 = vsub.f32 %v3615, %v4322
          %v4448 = vsub.f32 %v3616, %v4327
          %v4449 = vsub.f32 %v3617, %v4332
          %v4450 = vsub.f32 %v3618, %v4337
          %v4451 = vsub.f32 %v3619, %v4342
          %v4452 = vsub.f32 %v3620, %v4347
          %v4453 = vsub.f32 %v3621, %v4352
          %v4454 = vsub.f32 %v3622, %v4357
          %v4455 = vsub.f32 %v3623, %v4362
          %v4456 = vsub.f32 %v3624, %v4367
          %v4457 = vsub.f32 %v3625, %v4372
          %v4458 = vsub.f32 %v3626, %v4377
          %v4459 = vsub.f32 %v3627, %v4382
          %v4460 = vsub.f32 %v3628, %v4387
          %v4461 = vsub.f32 %v3629, %v4392
          %v4462 = vsub.f32 %v3630, %v4397
          %v4463 = vmul.f32 %v4399, 1.442695
          %v4464 = vpow.pop %v4463
          %v4465 = vmul.f32 %v4400, 1.442695
          %v4466 = vpow.pop %v4465
          %v4467 = vmul.f32 %v4401, 1.442695
          %v4468 = vpow.pop %v4467
          %v4469 = vmul.f32 %v4402, 1.442695
          %v4470 = vpow.pop %v4469
          %v4471 = vmul.f32 %v4403, 1.442695
          %v4472 = vpow.pop %v4471
          %v4473 = vmul.f32 %v4404, 1.442695
          %v4474 = vpow.pop %v4473
          %v4475 = vmul.f32 %v4405, 1.442695
          %v4476 = vpow.pop %v4475
          %v4477 = vmul.f32 %v4406, 1.442695
          %v4478 = vpow.pop %v4477
          %v4479 = vmul.f32 %v4407, 1.442695
          %v4480 = vpow.pop %v4479
          %v4481 = vmul.f32 %v4408, 1.442695
          %v4482 = vpow.pop %v4481
          %v4483 = vmul.f32 %v4409, 1.442695
          %v4484 = vpow.pop %v4483
          %v4485 = vmul.f32 %v4410, 1.442695
          %v4486 = vpow.pop %v4485
          %v4487 = vmul.f32 %v4411, 1.442695
          %v4488 = vpow.pop %v4487
          %v4489 = vmul.f32 %v4412, 1.442695
          %v4490 = vpow.pop %v4489
          %v4491 = vmul.f32 %v4413, 1.442695
          %v4492 = vpow.pop %v4491
          %v4493 = vmul.f32 %v4414, 1.442695
          %v4494 = vpow.pop %v4493
          %v4495 = vmul.f32 %v4415, 1.442695
          %v4496 = vpow.pop %v4495
          %v4497 = vmul.f32 %v4416, 1.442695
          %v4498 = vpow.pop %v4497
          %v4499 = vmul.f32 %v4417, 1.442695
          %v4500 = vpow.pop %v4499
          %v4501 = vmul.f32 %v4418, 1.442695
          %v4502 = vpow.pop %v4501
          %v4503 = vmul.f32 %v4419, 1.442695
          %v4504 = vpow.pop %v4503
          %v4505 = vmul.f32 %v4420, 1.442695
          %v4506 = vpow.pop %v4505
          %v4507 = vmul.f32 %v4421, 1.442695
          %v4508 = vpow.pop %v4507
          %v4509 = vmul.f32 %v4422, 1.442695
          %v4510 = vpow.pop %v4509
          %v4511 = vmul.f32 %v4423, 1.442695
          %v4512 = vpow.pop %v4511
          %v4513 = vmul.f32 %v4424, 1.442695
          %v4514 = vpow.pop %v4513
          %v4515 = vmul.f32 %v4425, 1.442695
          %v4516 = vpow.pop %v4515
          %v4517 = vmul.f32 %v4426, 1.442695
          %v4518 = vpow.pop %v4517
          %v4519 = vmul.f32 %v4427, 1.442695
          %v4520 = vpow.pop %v4519
          %v4521 = vmul.f32 %v4428, 1.442695
          %v4522 = vpow.pop %v4521
          %v4523 = vmul.f32 %v4429, 1.442695
          %v4524 = vpow.pop %v4523
          %v4525 = vmul.f32 %v4430, 1.442695
          %v4526 = vpow.pop %v4525
          %v4527 = vmul.f32 %v4431, 1.442695
          %v4528 = vpow.pop %v4527
          %v4529 = vmul.f32 %v4432, 1.442695
          %v4530 = vpow.pop %v4529
          %v4531 = vmul.f32 %v4433, 1.442695
          %v4532 = vpow.pop %v4531
          %v4533 = vmul.f32 %v4434, 1.442695
          %v4534 = vpow.pop %v4533
          %v4535 = vmul.f32 %v4435, 1.442695
          %v4536 = vpow.pop %v4535
          %v4537 = vmul.f32 %v4436, 1.442695
          %v4538 = vpow.pop %v4537
          %v4539 = vmul.f32 %v4437, 1.442695
          %v4540 = vpow.pop %v4539
          %v4541 = vmul.f32 %v4438, 1.442695
          %v4542 = vpow.pop %v4541
          %v4543 = vmul.f32 %v4439, 1.442695
          %v4544 = vpow.pop %v4543
          %v4545 = vmul.f32 %v4440, 1.442695
          %v4546 = vpow.pop %v4545
          %v4547 = vmul.f32 %v4441, 1.442695
          %v4548 = vpow.pop %v4547
          %v4549 = vmul.f32 %v4442, 1.442695
          %v4550 = vpow.pop %v4549
          %v4551 = vmul.f32 %v4443, 1.442695
          %v4552 = vpow.pop %v4551
          %v4553 = vmul.f32 %v4444, 1.442695
          %v4554 = vpow.pop %v4553
          %v4555 = vmul.f32 %v4445, 1.442695
          %v4556 = vpow.pop %v4555
          %v4557 = vmul.f32 %v4446, 1.442695
          %v4558 = vpow.pop %v4557
          %v4559 = vmul.f32 %v4447, 1.442695
          %v4560 = vpow.pop %v4559
          %v4561 = vmul.f32 %v4448, 1.442695
          %v4562 = vpow.pop %v4561
          %v4563 = vmul.f32 %v4449, 1.442695
          %v4564 = vpow.pop %v4563
          %v4565 = vmul.f32 %v4450, 1.442695
          %v4566 = vpow.pop %v4565
          %v4567 = vmul.f32 %v4451, 1.442695
          %v4568 = vpow.pop %v4567
          %v4569 = vmul.f32 %v4452, 1.442695
          %v4570 = vpow.pop %v4569
          %v4571 = vmul.f32 %v4453, 1.442695
          %v4572 = vpow.pop %v4571
          %v4573 = vmul.f32 %v4454, 1.442695
          %v4574 = vpow.pop %v4573
          %v4575 = vmul.f32 %v4455, 1.442695
          %v4576 = vpow.pop %v4575
          %v4577 = vmul.f32 %v4456, 1.442695
          %v4578 = vpow.pop %v4577
          %v4579 = vmul.f32 %v4457, 1.442695
          %v4580 = vpow.pop %v4579
          %v4581 = vmul.f32 %v4458, 1.442695
          %v4582 = vpow.pop %v4581
          %v4583 = vmul.f32 %v4459, 1.442695
          %v4584 = vpow.pop %v4583
          %v4585 = vmul.f32 %v4460, 1.442695
          %v4586 = vpow.pop %v4585
          %v4587 = vmul.f32 %v4461, 1.442695
          %v4588 = vpow.pop %v4587
          %v4589 = vmul.f32 %v4462, 1.442695
          %v4590 = vpow.pop %v4589
          %v4591 = vld [vmem:[#allocation7] sm:$0xff]
          %v4592 = vld [vmem:[#allocation7 + $0x8] sm:$0xff]
          %v4593 = vld [vmem:[#allocation7 + $0x10] sm:$0xff]
          %v4594 = vld [vmem:[#allocation7 + $0x18] sm:$0xff]
          %v4595 = vld [vmem:[#allocation7 + $0x20] sm:$0xff]
          %v4596 = vld [vmem:[#allocation7 + $0x28] sm:$0xff]
          %v4597 = vld [vmem:[#allocation7 + $0x30] sm:$0xff]
          %v4598 = vld [vmem:[#allocation7 + $0x38] sm:$0xff]
          %v4599 = vld [vmem:[#allocation7 + $0x40] sm:$0xff]
          %v4600 = vld [vmem:[#allocation7 + $0x48] sm:$0xff]
          %v4601 = vld [vmem:[#allocation7 + $0x50] sm:$0xff]
          %v4602 = vld [vmem:[#allocation7 + $0x58] sm:$0xff]
          %v4603 = vld [vmem:[#allocation7 + $0x60] sm:$0xff]
          %v4604 = vld [vmem:[#allocation7 + $0x68] sm:$0xff]
          %v4605 = vld [vmem:[#allocation7 + $0x70] sm:$0xff]
          %v4606 = vld [vmem:[#allocation7 + $0x78] sm:$0xff]
          %v4607 = vld [vmem:[#allocation7 + $0x80] sm:$0xff]
          %v4608 = vld [vmem:[#allocation7 + $0x88] sm:$0xff]
          %v4609 = vld [vmem:[#allocation7 + $0x90] sm:$0xff]
          %v4610 = vld [vmem:[#allocation7 + $0x98] sm:$0xff]
          %v4611 = vld [vmem:[#allocation7 + $0xa0] sm:$0xff]
          %v4612 = vld [vmem:[#allocation7 + $0xa8] sm:$0xff]
          %v4613 = vld [vmem:[#allocation7 + $0xb0] sm:$0xff]
          %v4614 = vld [vmem:[#allocation7 + $0xb8] sm:$0xff]
          %v4615 = vld [vmem:[#allocation7 + $0xc0] sm:$0xff]
          %v4616 = vld [vmem:[#allocation7 + $0xc8] sm:$0xff]
          %v4617 = vld [vmem:[#allocation7 + $0xd0] sm:$0xff]
          %v4618 = vld [vmem:[#allocation7 + $0xd8] sm:$0xff]
          %v4619 = vld [vmem:[#allocation7 + $0xe0] sm:$0xff]
          %v4620 = vld [vmem:[#allocation7 + $0xe8] sm:$0xff]
          %v4621 = vld [vmem:[#allocation7 + $0xf0] sm:$0xff]
          %v4622 = vld [vmem:[#allocation7 + $0xf8] sm:$0xff]
          %v4623 = vld [vmem:[#allocation7 + $0x100] sm:$0xff]
          %v4624 = vld [vmem:[#allocation7 + $0x108] sm:$0xff]
          %v4625 = vld [vmem:[#allocation7 + $0x110] sm:$0xff]
          %v4626 = vld [vmem:[#allocation7 + $0x118] sm:$0xff]
          %v4627 = vld [vmem:[#allocation7 + $0x120] sm:$0xff]
          %v4628 = vld [vmem:[#allocation7 + $0x128] sm:$0xff]
          %v4629 = vld [vmem:[#allocation7 + $0x130] sm:$0xff]
          %v4630 = vld [vmem:[#allocation7 + $0x138] sm:$0xff]
          %v4631 = vld [vmem:[#allocation7 + $0x140] sm:$0xff]
          %v4632 = vld [vmem:[#allocation7 + $0x148] sm:$0xff]
          %v4633 = vld [vmem:[#allocation7 + $0x150] sm:$0xff]
          %v4634 = vld [vmem:[#allocation7 + $0x158] sm:$0xff]
          %v4635 = vld [vmem:[#allocation7 + $0x160] sm:$0xff]
          %v4636 = vld [vmem:[#allocation7 + $0x168] sm:$0xff]
          %v4637 = vld [vmem:[#allocation7 + $0x170] sm:$0xff]
          %v4638 = vld [vmem:[#allocation7 + $0x178] sm:$0xff]
          %v4639 = vld [vmem:[#allocation7 + $0x180] sm:$0xff]
          %v4640 = vld [vmem:[#allocation7 + $0x188] sm:$0xff]
          %v4641 = vld [vmem:[#allocation7 + $0x190] sm:$0xff]
          %v4642 = vld [vmem:[#allocation7 + $0x198] sm:$0xff]
          %v4643 = vld [vmem:[#allocation7 + $0x1a0] sm:$0xff]
          %v4644 = vld [vmem:[#allocation7 + $0x1a8] sm:$0xff]
          %v4645 = vld [vmem:[#allocation7 + $0x1b0] sm:$0xff]
          %v4646 = vld [vmem:[#allocation7 + $0x1b8] sm:$0xff]
          %v4647 = vld [vmem:[#allocation7 + $0x1c0] sm:$0xff]
          %v4648 = vld [vmem:[#allocation7 + $0x1c8] sm:$0xff]
          %v4649 = vld [vmem:[#allocation7 + $0x1d0] sm:$0xff]
          %v4650 = vld [vmem:[#allocation7 + $0x1d8] sm:$0xff]
          %v4651 = vld [vmem:[#allocation7 + $0x1e0] sm:$0xff]
          %v4652 = vld [vmem:[#allocation7 + $0x1e8] sm:$0xff]
          %v4653 = vld [vmem:[#allocation7 + $0x1f0] sm:$0xff]
          %v4654 = vld [vmem:[#allocation7 + $0x1f8] sm:$0xff]
          %v4655 = vmul.f32 %v3952, %v4591
          %v4656 = vmul.f32 %v3954, %v4592
          %v4657 = vmul.f32 %v3956, %v4593
          %v4658 = vmul.f32 %v3958, %v4594
          %v4659 = vmul.f32 %v3960, %v4595
          %v4660 = vmul.f32 %v3962, %v4596
          %v4661 = vmul.f32 %v3964, %v4597
          %v4662 = vmul.f32 %v3966, %v4598
          %v4663 = vmul.f32 %v3968, %v4599
          %v4664 = vmul.f32 %v3970, %v4600
          %v4665 = vmul.f32 %v3972, %v4601
          %v4666 = vmul.f32 %v3974, %v4602
          %v4667 = vmul.f32 %v3976, %v4603
          %v4668 = vmul.f32 %v3978, %v4604
          %v4669 = vmul.f32 %v3980, %v4605
          %v4670 = vmul.f32 %v3982, %v4606
          %v4671 = vmul.f32 %v3984, %v4607
          %v4672 = vmul.f32 %v3986, %v4608
          %v4673 = vmul.f32 %v3988, %v4609
          %v4674 = vmul.f32 %v3990, %v4610
          %v4675 = vmul.f32 %v3992, %v4611
          %v4676 = vmul.f32 %v3994, %v4612
          %v4677 = vmul.f32 %v3996, %v4613
          %v4678 = vmul.f32 %v3998, %v4614
          %v4679 = vmul.f32 %v4000, %v4615
          %v4680 = vmul.f32 %v4002, %v4616
          %v4681 = vmul.f32 %v4004, %v4617
          %v4682 = vmul.f32 %v4006, %v4618
          %v4683 = vmul.f32 %v4008, %v4619
          %v4684 = vmul.f32 %v4010, %v4620
          %v4685 = vmul.f32 %v4012, %v4621
          %v4686 = vmul.f32 %v4014, %v4622
          %v4687 = vmul.f32 %v4016, %v4623
          %v4688 = vmul.f32 %v4018, %v4624
          %v4689 = vmul.f32 %v4020, %v4625
          %v4690 = vmul.f32 %v4022, %v4626
          %v4691 = vmul.f32 %v4024, %v4627
          %v4692 = vmul.f32 %v4026, %v4628
          %v4693 = vmul.f32 %v4028, %v4629
          %v4694 = vmul.f32 %v4030, %v4630
          %v4695 = vmul.f32 %v4032, %v4631
          %v4696 = vmul.f32 %v4034, %v4632
          %v4697 = vmul.f32 %v4036, %v4633
          %v4698 = vmul.f32 %v4038, %v4634
          %v4699 = vmul.f32 %v4040, %v4635
          %v4700 = vmul.f32 %v4042, %v4636
          %v4701 = vmul.f32 %v4044, %v4637
          %v4702 = vmul.f32 %v4046, %v4638
          %v4703 = vmul.f32 %v4048, %v4639
          %v4704 = vmul.f32 %v4050, %v4640
          %v4705 = vmul.f32 %v4052, %v4641
          %v4706 = vmul.f32 %v4054, %v4642
          %v4707 = vmul.f32 %v4056, %v4643
          %v4708 = vmul.f32 %v4058, %v4644
          %v4709 = vmul.f32 %v4060, %v4645
          %v4710 = vmul.f32 %v4062, %v4646
          %v4711 = vmul.f32 %v4064, %v4647
          %v4712 = vmul.f32 %v4066, %v4648
          %v4713 = vmul.f32 %v4068, %v4649
          %v4714 = vmul.f32 %v4070, %v4650
          %v4715 = vmul.f32 %v4072, %v4651
          %v4716 = vmul.f32 %v4074, %v4652
          %v4717 = vmul.f32 %v4076, %v4653
          %v4718 = vmul.f32 %v4078, %v4654
          %4719 = vadd.xlane.f32.xlu0 %v4464
          %v4720 = vpop.xlane.xlu0 %4719
          %4721 = vadd.xlane.f32.xlu0 %v4466
          %v4722 = vpop.xlane.xlu0 %4721
          %4723 = vadd.xlane.f32.xlu0 %v4468
          %v4724 = vpop.xlane.xlu0 %4723
          %4725 = vadd.xlane.f32.xlu0 %v4470
          %v4726 = vpop.xlane.xlu0 %4725
          %4727 = vadd.xlane.f32.xlu0 %v4472
          %v4728 = vpop.xlane.xlu0 %4727
          %4729 = vadd.xlane.f32.xlu0 %v4474
          %v4730 = vpop.xlane.xlu0 %4729
          %4731 = vadd.xlane.f32.xlu0 %v4476
          %v4732 = vpop.xlane.xlu0 %4731
          %4733 = vadd.xlane.f32.xlu0 %v4478
          %v4734 = vpop.xlane.xlu0 %4733
          %4735 = vadd.xlane.f32.xlu0 %v4480
          %v4736 = vpop.xlane.xlu0 %4735
          %4737 = vadd.xlane.f32.xlu0 %v4482
          %v4738 = vpop.xlane.xlu0 %4737
          %4739 = vadd.xlane.f32.xlu0 %v4484
          %v4740 = vpop.xlane.xlu0 %4739
          %4741 = vadd.xlane.f32.xlu0 %v4486
          %v4742 = vpop.xlane.xlu0 %4741
          %4743 = vadd.xlane.f32.xlu0 %v4488
          %v4744 = vpop.xlane.xlu0 %4743
          %4745 = vadd.xlane.f32.xlu0 %v4490
          %v4746 = vpop.xlane.xlu0 %4745
          %4747 = vadd.xlane.f32.xlu0 %v4492
          %v4748 = vpop.xlane.xlu0 %4747
          %4749 = vadd.xlane.f32.xlu0 %v4494
          %v4750 = vpop.xlane.xlu0 %4749
          %4751 = vadd.xlane.f32.xlu0 %v4496
          %v4752 = vpop.xlane.xlu0 %4751
          %4753 = vadd.xlane.f32.xlu0 %v4498
          %v4754 = vpop.xlane.xlu0 %4753
          %4755 = vadd.xlane.f32.xlu0 %v4500
          %v4756 = vpop.xlane.xlu0 %4755
          %4757 = vadd.xlane.f32.xlu0 %v4502
          %v4758 = vpop.xlane.xlu0 %4757
          %4759 = vadd.xlane.f32.xlu0 %v4504
          %v4760 = vpop.xlane.xlu0 %4759
          %4761 = vadd.xlane.f32.xlu0 %v4506
          %v4762 = vpop.xlane.xlu0 %4761
          %4763 = vadd.xlane.f32.xlu0 %v4508
          %v4764 = vpop.xlane.xlu0 %4763
          %4765 = vadd.xlane.f32.xlu0 %v4510
          %v4766 = vpop.xlane.xlu0 %4765
          %4767 = vadd.xlane.f32.xlu0 %v4512
          %v4768 = vpop.xlane.xlu0 %4767
          %4769 = vadd.xlane.f32.xlu0 %v4514
          %v4770 = vpop.xlane.xlu0 %4769
          %4771 = vadd.xlane.f32.xlu0 %v4516
          %v4772 = vpop.xlane.xlu0 %4771
          %4773 = vadd.xlane.f32.xlu0 %v4518
          %v4774 = vpop.xlane.xlu0 %4773
          %4775 = vadd.xlane.f32.xlu0 %v4520
          %v4776 = vpop.xlane.xlu0 %4775
          %4777 = vadd.xlane.f32.xlu0 %v4522
          %v4778 = vpop.xlane.xlu0 %4777
          %4779 = vadd.xlane.f32.xlu0 %v4524
          %v4780 = vpop.xlane.xlu0 %4779
          %4781 = vadd.xlane.f32.xlu0 %v4526
          %v4782 = vpop.xlane.xlu0 %4781
          %4783 = vadd.xlane.f32.xlu0 %v4528
          %v4784 = vpop.xlane.xlu0 %4783
          %4785 = vadd.xlane.f32.xlu0 %v4530
          %v4786 = vpop.xlane.xlu0 %4785
          %4787 = vadd.xlane.f32.xlu0 %v4532
          %v4788 = vpop.xlane.xlu0 %4787
          %4789 = vadd.xlane.f32.xlu0 %v4534
          %v4790 = vpop.xlane.xlu0 %4789
          %4791 = vadd.xlane.f32.xlu0 %v4536
          %v4792 = vpop.xlane.xlu0 %4791
          %4793 = vadd.xlane.f32.xlu0 %v4538
          %v4794 = vpop.xlane.xlu0 %4793
          %4795 = vadd.xlane.f32.xlu0 %v4540
          %v4796 = vpop.xlane.xlu0 %4795
          %4797 = vadd.xlane.f32.xlu0 %v4542
          %v4798 = vpop.xlane.xlu0 %4797
          %4799 = vadd.xlane.f32.xlu0 %v4544
          %v4800 = vpop.xlane.xlu0 %4799
          %4801 = vadd.xlane.f32.xlu0 %v4546
          %v4802 = vpop.xlane.xlu0 %4801
          %4803 = vadd.xlane.f32.xlu0 %v4548
          %v4804 = vpop.xlane.xlu0 %4803
          %4805 = vadd.xlane.f32.xlu0 %v4550
          %v4806 = vpop.xlane.xlu0 %4805
          %4807 = vadd.xlane.f32.xlu0 %v4552
          %v4808 = vpop.xlane.xlu0 %4807
          %4809 = vadd.xlane.f32.xlu0 %v4554
          %v4810 = vpop.xlane.xlu0 %4809
          %4811 = vadd.xlane.f32.xlu0 %v4556
          %v4812 = vpop.xlane.xlu0 %4811
          %4813 = vadd.xlane.f32.xlu0 %v4558
          %v4814 = vpop.xlane.xlu0 %4813
          %4815 = vadd.xlane.f32.xlu0 %v4560
          %v4816 = vpop.xlane.xlu0 %4815
          %4817 = vadd.xlane.f32.xlu0 %v4562
          %v4818 = vpop.xlane.xlu0 %4817
          %4819 = vadd.xlane.f32.xlu0 %v4564
          %v4820 = vpop.xlane.xlu0 %4819
          %4821 = vadd.xlane.f32.xlu0 %v4566
          %v4822 = vpop.xlane.xlu0 %4821
          %4823 = vadd.xlane.f32.xlu0 %v4568
          %v4824 = vpop.xlane.xlu0 %4823
          %4825 = vadd.xlane.f32.xlu0 %v4570
          %v4826 = vpop.xlane.xlu0 %4825
          %4827 = vadd.xlane.f32.xlu0 %v4572
          %v4828 = vpop.xlane.xlu0 %4827
          %4829 = vadd.xlane.f32.xlu0 %v4574
          %v4830 = vpop.xlane.xlu0 %4829
          %4831 = vadd.xlane.f32.xlu0 %v4576
          %v4832 = vpop.xlane.xlu0 %4831
          %4833 = vadd.xlane.f32.xlu0 %v4578
          %v4834 = vpop.xlane.xlu0 %4833
          %4835 = vadd.xlane.f32.xlu0 %v4580
          %v4836 = vpop.xlane.xlu0 %4835
          %4837 = vadd.xlane.f32.xlu0 %v4582
          %v4838 = vpop.xlane.xlu0 %4837
          %4839 = vadd.xlane.f32.xlu0 %v4584
          %v4840 = vpop.xlane.xlu0 %4839
          %4841 = vadd.xlane.f32.xlu0 %v4586
          %v4842 = vpop.xlane.xlu0 %4841
          %4843 = vadd.xlane.f32.xlu0 %v4588
          %v4844 = vpop.xlane.xlu0 %4843
          %4845 = vadd.xlane.f32.xlu0 %v4590
          %v4846 = vpop.xlane.xlu0 %4845
          %v4847 = vadd.f32 %v4655, %v4720
          %v4848 = vadd.f32 %v4656, %v4722
          %v4849 = vadd.f32 %v4657, %v4724
          %v4850 = vadd.f32 %v4658, %v4726
          %v4851 = vadd.f32 %v4659, %v4728
          %v4852 = vadd.f32 %v4660, %v4730
          %v4853 = vadd.f32 %v4661, %v4732
          %v4854 = vadd.f32 %v4662, %v4734
          %v4855 = vadd.f32 %v4663, %v4736
          %v4856 = vadd.f32 %v4664, %v4738
          %v4857 = vadd.f32 %v4665, %v4740
          %v4858 = vadd.f32 %v4666, %v4742
          %v4859 = vadd.f32 %v4667, %v4744
          %v4860 = vadd.f32 %v4668, %v4746
          %v4861 = vadd.f32 %v4669, %v4748
          %v4862 = vadd.f32 %v4670, %v4750
          %v4863 = vadd.f32 %v4671, %v4752
          %v4864 = vadd.f32 %v4672, %v4754
          %v4865 = vadd.f32 %v4673, %v4756
          %v4866 = vadd.f32 %v4674, %v4758
          %v4867 = vadd.f32 %v4675, %v4760
          %v4868 = vadd.f32 %v4676, %v4762
          %v4869 = vadd.f32 %v4677, %v4764
          %v4870 = vadd.f32 %v4678, %v4766
          %v4871 = vadd.f32 %v4679, %v4768
          %v4872 = vadd.f32 %v4680, %v4770
          %v4873 = vadd.f32 %v4681, %v4772
          %v4874 = vadd.f32 %v4682, %v4774
          %v4875 = vadd.f32 %v4683, %v4776
          %v4876 = vadd.f32 %v4684, %v4778
          %v4877 = vadd.f32 %v4685, %v4780
          %v4878 = vadd.f32 %v4686, %v4782
          %v4879 = vadd.f32 %v4687, %v4784
          %v4880 = vadd.f32 %v4688, %v4786
          %v4881 = vadd.f32 %v4689, %v4788
          %v4882 = vadd.f32 %v4690, %v4790
          %v4883 = vadd.f32 %v4691, %v4792
          %v4884 = vadd.f32 %v4692, %v4794
          %v4885 = vadd.f32 %v4693, %v4796
          %v4886 = vadd.f32 %v4694, %v4798
          %v4887 = vadd.f32 %v4695, %v4800
          %v4888 = vadd.f32 %v4696, %v4802
          %v4889 = vadd.f32 %v4697, %v4804
          %v4890 = vadd.f32 %v4698, %v4806
          %v4891 = vadd.f32 %v4699, %v4808
          %v4892 = vadd.f32 %v4700, %v4810
          %v4893 = vadd.f32 %v4701, %v4812
          %v4894 = vadd.f32 %v4702, %v4814
          %v4895 = vadd.f32 %v4703, %v4816
          %v4896 = vadd.f32 %v4704, %v4818
          %v4897 = vadd.f32 %v4705, %v4820
          %v4898 = vadd.f32 %v4706, %v4822
          %v4899 = vadd.f32 %v4707, %v4824
          %v4900 = vadd.f32 %v4708, %v4826
          %v4901 = vadd.f32 %v4709, %v4828
          %v4902 = vadd.f32 %v4710, %v4830
          %v4903 = vadd.f32 %v4711, %v4832
          %v4904 = vadd.f32 %v4712, %v4834
          %v4905 = vadd.f32 %v4713, %v4836
          %v4906 = vadd.f32 %v4714, %v4838
          %v4907 = vadd.f32 %v4715, %v4840
          %v4908 = vadd.f32 %v4716, %v4842
          %v4909 = vadd.f32 %v4717, %v4844
          %v4910 = vadd.f32 %v4718, %v4846
          %4911 = vst.msk [vmem:[#allocation7] sm:$0xff] %vm2121, %v4847
          %4912 = vst.msk [vmem:[#allocation7 + $0x8] sm:$0xff] %vm2121, %v4848
          %4913 = vst.msk [vmem:[#allocation7 + $0x10] sm:$0xff] %vm2121, %v4849
          %4914 = vst.msk [vmem:[#allocation7 + $0x18] sm:$0xff] %vm2121, %v4850
          %4915 = vst.msk [vmem:[#allocation7 + $0x20] sm:$0xff] %vm2121, %v4851
          %4916 = vst.msk [vmem:[#allocation7 + $0x28] sm:$0xff] %vm2121, %v4852
          %4917 = vst.msk [vmem:[#allocation7 + $0x30] sm:$0xff] %vm2121, %v4853
          %4918 = vst.msk [vmem:[#allocation7 + $0x38] sm:$0xff] %vm2121, %v4854
          %4919 = vst.msk [vmem:[#allocation7 + $0x40] sm:$0xff] %vm2121, %v4855
          %4920 = vst.msk [vmem:[#allocation7 + $0x48] sm:$0xff] %vm2121, %v4856
          %4921 = vst.msk [vmem:[#allocation7 + $0x50] sm:$0xff] %vm2121, %v4857
          %4922 = vst.msk [vmem:[#allocation7 + $0x58] sm:$0xff] %vm2121, %v4858
          %4923 = vst.msk [vmem:[#allocation7 + $0x60] sm:$0xff] %vm2121, %v4859
          %4924 = vst.msk [vmem:[#allocation7 + $0x68] sm:$0xff] %vm2121, %v4860
          %4925 = vst.msk [vmem:[#allocation7 + $0x70] sm:$0xff] %vm2121, %v4861
          %4926 = vst.msk [vmem:[#allocation7 + $0x78] sm:$0xff] %vm2121, %v4862
          %4927 = vst.msk [vmem:[#allocation7 + $0x80] sm:$0xff] %vm2121, %v4863
          %4928 = vst.msk [vmem:[#allocation7 + $0x88] sm:$0xff] %vm2121, %v4864
          %4929 = vst.msk [vmem:[#allocation7 + $0x90] sm:$0xff] %vm2121, %v4865
          %4930 = vst.msk [vmem:[#allocation7 + $0x98] sm:$0xff] %vm2121, %v4866
          %4931 = vst.msk [vmem:[#allocation7 + $0xa0] sm:$0xff] %vm2121, %v4867
          %4932 = vst.msk [vmem:[#allocation7 + $0xa8] sm:$0xff] %vm2121, %v4868
          %4933 = vst.msk [vmem:[#allocation7 + $0xb0] sm:$0xff] %vm2121, %v4869
          %4934 = vst.msk [vmem:[#allocation7 + $0xb8] sm:$0xff] %vm2121, %v4870
          %4935 = vst.msk [vmem:[#allocation7 + $0xc0] sm:$0xff] %vm2121, %v4871
          %4936 = vst.msk [vmem:[#allocation7 + $0xc8] sm:$0xff] %vm2121, %v4872
          %4937 = vst.msk [vmem:[#allocation7 + $0xd0] sm:$0xff] %vm2121, %v4873
          %4938 = vst.msk [vmem:[#allocation7 + $0xd8] sm:$0xff] %vm2121, %v4874
          %4939 = vst.msk [vmem:[#allocation7 + $0xe0] sm:$0xff] %vm2121, %v4875
          %4940 = vst.msk [vmem:[#allocation7 + $0xe8] sm:$0xff] %vm2121, %v4876
          %4941 = vst.msk [vmem:[#allocation7 + $0xf0] sm:$0xff] %vm2121, %v4877
          %4942 = vst.msk [vmem:[#allocation7 + $0xf8] sm:$0xff] %vm2121, %v4878
          %4943 = vst.msk [vmem:[#allocation7 + $0x100] sm:$0xff] %vm2121, %v4879
          %4944 = vst.msk [vmem:[#allocation7 + $0x108] sm:$0xff] %vm2121, %v4880
          %4945 = vst.msk [vmem:[#allocation7 + $0x110] sm:$0xff] %vm2121, %v4881
          %4946 = vst.msk [vmem:[#allocation7 + $0x118] sm:$0xff] %vm2121, %v4882
          %4947 = vst.msk [vmem:[#allocation7 + $0x120] sm:$0xff] %vm2121, %v4883
          %4948 = vst.msk [vmem:[#allocation7 + $0x128] sm:$0xff] %vm2121, %v4884
          %4949 = vst.msk [vmem:[#allocation7 + $0x130] sm:$0xff] %vm2121, %v4885
          %4950 = vst.msk [vmem:[#allocation7 + $0x138] sm:$0xff] %vm2121, %v4886
          %4951 = vst.msk [vmem:[#allocation7 + $0x140] sm:$0xff] %vm2121, %v4887
          %4952 = vst.msk [vmem:[#allocation7 + $0x148] sm:$0xff] %vm2121, %v4888
          %4953 = vst.msk [vmem:[#allocation7 + $0x150] sm:$0xff] %vm2121, %v4889
          %4954 = vst.msk [vmem:[#allocation7 + $0x158] sm:$0xff] %vm2121, %v4890
          %4955 = vst.msk [vmem:[#allocation7 + $0x160] sm:$0xff] %vm2121, %v4891
          %4956 = vst.msk [vmem:[#allocation7 + $0x168] sm:$0xff] %vm2121, %v4892
          %4957 = vst.msk [vmem:[#allocation7 + $0x170] sm:$0xff] %vm2121, %v4893
          %4958 = vst.msk [vmem:[#allocation7 + $0x178] sm:$0xff] %vm2121, %v4894
          %4959 = vst.msk [vmem:[#allocation7 + $0x180] sm:$0xff] %vm2121, %v4895
          %4960 = vst.msk [vmem:[#allocation7 + $0x188] sm:$0xff] %vm2121, %v4896
          %4961 = vst.msk [vmem:[#allocation7 + $0x190] sm:$0xff] %vm2121, %v4897
          %4962 = vst.msk [vmem:[#allocation7 + $0x198] sm:$0xff] %vm2121, %v4898
          %4963 = vst.msk [vmem:[#allocation7 + $0x1a0] sm:$0xff] %vm2121, %v4899
          %4964 = vst.msk [vmem:[#allocation7 + $0x1a8] sm:$0xff] %vm2121, %v4900
          %4965 = vst.msk [vmem:[#allocation7 + $0x1b0] sm:$0xff] %vm2121, %v4901
          %4966 = vst.msk [vmem:[#allocation7 + $0x1b8] sm:$0xff] %vm2121, %v4902
          %4967 = vst.msk [vmem:[#allocation7 + $0x1c0] sm:$0xff] %vm2121, %v4903
          %4968 = vst.msk [vmem:[#allocation7 + $0x1c8] sm:$0xff] %vm2121, %v4904
          %4969 = vst.msk [vmem:[#allocation7 + $0x1d0] sm:$0xff] %vm2121, %v4905
          %4970 = vst.msk [vmem:[#allocation7 + $0x1d8] sm:$0xff] %vm2121, %v4906
          %4971 = vst.msk [vmem:[#allocation7 + $0x1e0] sm:$0xff] %vm2121, %v4907
          %4972 = vst.msk [vmem:[#allocation7 + $0x1e8] sm:$0xff] %vm2121, %v4908
          %4973 = vst.msk [vmem:[#allocation7 + $0x1f0] sm:$0xff] %vm2121, %v4909
          %4974 = vst.msk [vmem:[#allocation7 + $0x1f8] sm:$0xff] %vm2121, %v4910
          %v4975 = vld [vmem:[#allocation8] sm:$0xff]
          %v4976 = vld [vmem:[#allocation8 + $0x8] sm:$0xff]
          %v4977 = vld [vmem:[#allocation8 + $0x10] sm:$0xff]
          %v4978 = vld [vmem:[#allocation8 + $0x18] sm:$0xff]
          %v4979 = vld [vmem:[#allocation8 + $0x20] sm:$0xff]
          %v4980 = vld [vmem:[#allocation8 + $0x28] sm:$0xff]
          %v4981 = vld [vmem:[#allocation8 + $0x30] sm:$0xff]
          %v4982 = vld [vmem:[#allocation8 + $0x38] sm:$0xff]
          %v4983 = vld [vmem:[#allocation8 + $0x40] sm:$0xff]
          %v4984 = vld [vmem:[#allocation8 + $0x48] sm:$0xff]
          %v4985 = vld [vmem:[#allocation8 + $0x50] sm:$0xff]
          %v4986 = vld [vmem:[#allocation8 + $0x58] sm:$0xff]
          %v4987 = vld [vmem:[#allocation8 + $0x60] sm:$0xff]
          %v4988 = vld [vmem:[#allocation8 + $0x68] sm:$0xff]
          %v4989 = vld [vmem:[#allocation8 + $0x70] sm:$0xff]
          %v4990 = vld [vmem:[#allocation8 + $0x78] sm:$0xff]
          %v4991 = vld [vmem:[#allocation8 + $0x80] sm:$0xff]
          %v4992 = vld [vmem:[#allocation8 + $0x88] sm:$0xff]
          %v4993 = vld [vmem:[#allocation8 + $0x90] sm:$0xff]
          %v4994 = vld [vmem:[#allocation8 + $0x98] sm:$0xff]
          %v4995 = vld [vmem:[#allocation8 + $0xa0] sm:$0xff]
          %v4996 = vld [vmem:[#allocation8 + $0xa8] sm:$0xff]
          %v4997 = vld [vmem:[#allocation8 + $0xb0] sm:$0xff]
          %v4998 = vld [vmem:[#allocation8 + $0xb8] sm:$0xff]
          %v4999 = vld [vmem:[#allocation8 + $0xc0] sm:$0xff]
          %v5000 = vld [vmem:[#allocation8 + $0xc8] sm:$0xff]
          %v5001 = vld [vmem:[#allocation8 + $0xd0] sm:$0xff]
          %v5002 = vld [vmem:[#allocation8 + $0xd8] sm:$0xff]
          %v5003 = vld [vmem:[#allocation8 + $0xe0] sm:$0xff]
          %v5004 = vld [vmem:[#allocation8 + $0xe8] sm:$0xff]
          %v5005 = vld [vmem:[#allocation8 + $0xf0] sm:$0xff]
          %v5006 = vld [vmem:[#allocation8 + $0xf8] sm:$0xff]
          %v5007 = vld [vmem:[#allocation8 + $0x100] sm:$0xff]
          %v5008 = vld [vmem:[#allocation8 + $0x108] sm:$0xff]
          %v5009 = vld [vmem:[#allocation8 + $0x110] sm:$0xff]
          %v5010 = vld [vmem:[#allocation8 + $0x118] sm:$0xff]
          %v5011 = vld [vmem:[#allocation8 + $0x120] sm:$0xff]
          %v5012 = vld [vmem:[#allocation8 + $0x128] sm:$0xff]
          %v5013 = vld [vmem:[#allocation8 + $0x130] sm:$0xff]
          %v5014 = vld [vmem:[#allocation8 + $0x138] sm:$0xff]
          %v5015 = vld [vmem:[#allocation8 + $0x140] sm:$0xff]
          %v5016 = vld [vmem:[#allocation8 + $0x148] sm:$0xff]
          %v5017 = vld [vmem:[#allocation8 + $0x150] sm:$0xff]
          %v5018 = vld [vmem:[#allocation8 + $0x158] sm:$0xff]
          %v5019 = vld [vmem:[#allocation8 + $0x160] sm:$0xff]
          %v5020 = vld [vmem:[#allocation8 + $0x168] sm:$0xff]
          %v5021 = vld [vmem:[#allocation8 + $0x170] sm:$0xff]
          %v5022 = vld [vmem:[#allocation8 + $0x178] sm:$0xff]
          %v5023 = vld [vmem:[#allocation8 + $0x180] sm:$0xff]
          %v5024 = vld [vmem:[#allocation8 + $0x188] sm:$0xff]
          %v5025 = vld [vmem:[#allocation8 + $0x190] sm:$0xff]
          %v5026 = vld [vmem:[#allocation8 + $0x198] sm:$0xff]
          %v5027 = vld [vmem:[#allocation8 + $0x1a0] sm:$0xff]
          %v5028 = vld [vmem:[#allocation8 + $0x1a8] sm:$0xff]
          %v5029 = vld [vmem:[#allocation8 + $0x1b0] sm:$0xff]
          %v5030 = vld [vmem:[#allocation8 + $0x1b8] sm:$0xff]
          %v5031 = vld [vmem:[#allocation8 + $0x1c0] sm:$0xff]
          %v5032 = vld [vmem:[#allocation8 + $0x1c8] sm:$0xff]
          %v5033 = vld [vmem:[#allocation8 + $0x1d0] sm:$0xff]
          %v5034 = vld [vmem:[#allocation8 + $0x1d8] sm:$0xff]
          %v5035 = vld [vmem:[#allocation8 + $0x1e0] sm:$0xff]
          %v5036 = vld [vmem:[#allocation8 + $0x1e8] sm:$0xff]
          %v5037 = vld [vmem:[#allocation8 + $0x1f0] sm:$0xff]
          %v5038 = vld [vmem:[#allocation8 + $0x1f8] sm:$0xff]
          %5040 = vset.pattern.permute.xlu0 0
          %5041 = vperm.xlu0 %5040, %v3952
          %v5042 = vpop.permute.xlu0 %5041
          %5045 = vset.pattern.permute.xlu0 0
          %5046 = vperm.xlu0 %5045, %v3954
          %v5047 = vpop.permute.xlu0 %5046
          %5050 = vset.pattern.permute.xlu0 0
          %5051 = vperm.xlu0 %5050, %v3956
          %v5052 = vpop.permute.xlu0 %5051
          %5055 = vset.pattern.permute.xlu0 0
          %5056 = vperm.xlu0 %5055, %v3958
          %v5057 = vpop.permute.xlu0 %5056
          %5060 = vset.pattern.permute.xlu0 0
          %5061 = vperm.xlu0 %5060, %v3960
          %v5062 = vpop.permute.xlu0 %5061
          %5065 = vset.pattern.permute.xlu0 0
          %5066 = vperm.xlu0 %5065, %v3962
          %v5067 = vpop.permute.xlu0 %5066
          %5070 = vset.pattern.permute.xlu0 0
          %5071 = vperm.xlu0 %5070, %v3964
          %v5072 = vpop.permute.xlu0 %5071
          %5075 = vset.pattern.permute.xlu0 0
          %5076 = vperm.xlu0 %5075, %v3966
          %v5077 = vpop.permute.xlu0 %5076
          %5080 = vset.pattern.permute.xlu0 0
          %5081 = vperm.xlu0 %5080, %v3968
          %v5082 = vpop.permute.xlu0 %5081
          %5085 = vset.pattern.permute.xlu0 0
          %5086 = vperm.xlu0 %5085, %v3970
          %v5087 = vpop.permute.xlu0 %5086
          %5090 = vset.pattern.permute.xlu0 0
          %5091 = vperm.xlu0 %5090, %v3972
          %v5092 = vpop.permute.xlu0 %5091
          %5095 = vset.pattern.permute.xlu0 0
          %5096 = vperm.xlu0 %5095, %v3974
          %v5097 = vpop.permute.xlu0 %5096
          %5100 = vset.pattern.permute.xlu0 0
          %5101 = vperm.xlu0 %5100, %v3976
          %v5102 = vpop.permute.xlu0 %5101
          %5105 = vset.pattern.permute.xlu0 0
          %5106 = vperm.xlu0 %5105, %v3978
          %v5107 = vpop.permute.xlu0 %5106
          %5110 = vset.pattern.permute.xlu0 0
          %5111 = vperm.xlu0 %5110, %v3980
          %v5112 = vpop.permute.xlu0 %5111
          %5115 = vset.pattern.permute.xlu0 0
          %5116 = vperm.xlu0 %5115, %v3982
          %v5117 = vpop.permute.xlu0 %5116
          %5120 = vset.pattern.permute.xlu0 0
          %5121 = vperm.xlu0 %5120, %v3984
          %v5122 = vpop.permute.xlu0 %5121
          %5125 = vset.pattern.permute.xlu0 0
          %5126 = vperm.xlu0 %5125, %v3986
          %v5127 = vpop.permute.xlu0 %5126
          %5130 = vset.pattern.permute.xlu0 0
          %5131 = vperm.xlu0 %5130, %v3988
          %v5132 = vpop.permute.xlu0 %5131
          %5135 = vset.pattern.permute.xlu0 0
          %5136 = vperm.xlu0 %5135, %v3990
          %v5137 = vpop.permute.xlu0 %5136
          %5140 = vset.pattern.permute.xlu0 0
          %5141 = vperm.xlu0 %5140, %v3992
          %v5142 = vpop.permute.xlu0 %5141
          %5145 = vset.pattern.permute.xlu0 0
          %5146 = vperm.xlu0 %5145, %v3994
          %v5147 = vpop.permute.xlu0 %5146
          %5150 = vset.pattern.permute.xlu0 0
          %5151 = vperm.xlu0 %5150, %v3996
          %v5152 = vpop.permute.xlu0 %5151
          %5155 = vset.pattern.permute.xlu0 0
          %5156 = vperm.xlu0 %5155, %v3998
          %v5157 = vpop.permute.xlu0 %5156
          %5160 = vset.pattern.permute.xlu0 0
          %5161 = vperm.xlu0 %5160, %v4000
          %v5162 = vpop.permute.xlu0 %5161
          %5165 = vset.pattern.permute.xlu0 0
          %5166 = vperm.xlu0 %5165, %v4002
          %v5167 = vpop.permute.xlu0 %5166
          %5170 = vset.pattern.permute.xlu0 0
          %5171 = vperm.xlu0 %5170, %v4004
          %v5172 = vpop.permute.xlu0 %5171
          %5175 = vset.pattern.permute.xlu0 0
          %5176 = vperm.xlu0 %5175, %v4006
          %v5177 = vpop.permute.xlu0 %5176
          %5180 = vset.pattern.permute.xlu0 0
          %5181 = vperm.xlu0 %5180, %v4008
          %v5182 = vpop.permute.xlu0 %5181
          %5185 = vset.pattern.permute.xlu0 0
          %5186 = vperm.xlu0 %5185, %v4010
          %v5187 = vpop.permute.xlu0 %5186
          %5190 = vset.pattern.permute.xlu0 0
          %5191 = vperm.xlu0 %5190, %v4012
          %v5192 = vpop.permute.xlu0 %5191
          %5195 = vset.pattern.permute.xlu0 0
          %5196 = vperm.xlu0 %5195, %v4014
          %v5197 = vpop.permute.xlu0 %5196
          %5200 = vset.pattern.permute.xlu0 0
          %5201 = vperm.xlu0 %5200, %v4016
          %v5202 = vpop.permute.xlu0 %5201
          %5205 = vset.pattern.permute.xlu0 0
          %5206 = vperm.xlu0 %5205, %v4018
          %v5207 = vpop.permute.xlu0 %5206
          %5210 = vset.pattern.permute.xlu0 0
          %5211 = vperm.xlu0 %5210, %v4020
          %v5212 = vpop.permute.xlu0 %5211
          %5215 = vset.pattern.permute.xlu0 0
          %5216 = vperm.xlu0 %5215, %v4022
          %v5217 = vpop.permute.xlu0 %5216
          %5220 = vset.pattern.permute.xlu0 0
          %5221 = vperm.xlu0 %5220, %v4024
          %v5222 = vpop.permute.xlu0 %5221
          %5225 = vset.pattern.permute.xlu0 0
          %5226 = vperm.xlu0 %5225, %v4026
          %v5227 = vpop.permute.xlu0 %5226
          %5230 = vset.pattern.permute.xlu0 0
          %5231 = vperm.xlu0 %5230, %v4028
          %v5232 = vpop.permute.xlu0 %5231
          %5235 = vset.pattern.permute.xlu0 0
          %5236 = vperm.xlu0 %5235, %v4030
          %v5237 = vpop.permute.xlu0 %5236
          %5240 = vset.pattern.permute.xlu0 0
          %5241 = vperm.xlu0 %5240, %v4032
          %v5242 = vpop.permute.xlu0 %5241
          %5245 = vset.pattern.permute.xlu0 0
          %5246 = vperm.xlu0 %5245, %v4034
          %v5247 = vpop.permute.xlu0 %5246
          %5250 = vset.pattern.permute.xlu0 0
          %5251 = vperm.xlu0 %5250, %v4036
          %v5252 = vpop.permute.xlu0 %5251
          %5255 = vset.pattern.permute.xlu0 0
          %5256 = vperm.xlu0 %5255, %v4038
          %v5257 = vpop.permute.xlu0 %5256
          %5260 = vset.pattern.permute.xlu0 0
          %5261 = vperm.xlu0 %5260, %v4040
          %v5262 = vpop.permute.xlu0 %5261
          %5265 = vset.pattern.permute.xlu0 0
          %5266 = vperm.xlu0 %5265, %v4042
          %v5267 = vpop.permute.xlu0 %5266
          %5270 = vset.pattern.permute.xlu0 0
          %5271 = vperm.xlu0 %5270, %v4044
          %v5272 = vpop.permute.xlu0 %5271
          %5275 = vset.pattern.permute.xlu0 0
          %5276 = vperm.xlu0 %5275, %v4046
          %v5277 = vpop.permute.xlu0 %5276
          %5280 = vset.pattern.permute.xlu0 0
          %5281 = vperm.xlu0 %5280, %v4048
          %v5282 = vpop.permute.xlu0 %5281
          %5285 = vset.pattern.permute.xlu0 0
          %5286 = vperm.xlu0 %5285, %v4050
          %v5287 = vpop.permute.xlu0 %5286
          %5290 = vset.pattern.permute.xlu0 0
          %5291 = vperm.xlu0 %5290, %v4052
          %v5292 = vpop.permute.xlu0 %5291
          %5295 = vset.pattern.permute.xlu0 0
          %5296 = vperm.xlu0 %5295, %v4054
          %v5297 = vpop.permute.xlu0 %5296
          %5300 = vset.pattern.permute.xlu0 0
          %5301 = vperm.xlu0 %5300, %v4056
          %v5302 = vpop.permute.xlu0 %5301
          %5305 = vset.pattern.permute.xlu0 0
          %5306 = vperm.xlu0 %5305, %v4058
          %v5307 = vpop.permute.xlu0 %5306
          %5310 = vset.pattern.permute.xlu0 0
          %5311 = vperm.xlu0 %5310, %v4060
          %v5312 = vpop.permute.xlu0 %5311
          %5315 = vset.pattern.permute.xlu0 0
          %5316 = vperm.xlu0 %5315, %v4062
          %v5317 = vpop.permute.xlu0 %5316
          %5320 = vset.pattern.permute.xlu0 0
          %5321 = vperm.xlu0 %5320, %v4064
          %v5322 = vpop.permute.xlu0 %5321
          %5325 = vset.pattern.permute.xlu0 0
          %5326 = vperm.xlu0 %5325, %v4066
          %v5327 = vpop.permute.xlu0 %5326
          %5330 = vset.pattern.permute.xlu0 0
          %5331 = vperm.xlu0 %5330, %v4068
          %v5332 = vpop.permute.xlu0 %5331
          %5335 = vset.pattern.permute.xlu0 0
          %5336 = vperm.xlu0 %5335, %v4070
          %v5337 = vpop.permute.xlu0 %5336
          %5340 = vset.pattern.permute.xlu0 0
          %5341 = vperm.xlu0 %5340, %v4072
          %v5342 = vpop.permute.xlu0 %5341
          %5345 = vset.pattern.permute.xlu0 0
          %5346 = vperm.xlu0 %5345, %v4074
          %v5347 = vpop.permute.xlu0 %5346
          %5350 = vset.pattern.permute.xlu0 0
          %5351 = vperm.xlu0 %5350, %v4076
          %v5352 = vpop.permute.xlu0 %5351
          %5355 = vset.pattern.permute.xlu0 0
          %5356 = vperm.xlu0 %5355, %v4078
          %v5357 = vpop.permute.xlu0 %5356
          %v5359 = vmul.f32 %v5042, %v4975
          %v5360 = vmul.f32 %v5047, %v4976
          %v5361 = vmul.f32 %v5052, %v4977
          %v5362 = vmul.f32 %v5057, %v4978
          %v5363 = vmul.f32 %v5062, %v4979
          %v5364 = vmul.f32 %v5067, %v4980
          %v5365 = vmul.f32 %v5072, %v4981
          %v5366 = vmul.f32 %v5077, %v4982
          %v5367 = vmul.f32 %v5082, %v4983
          %v5368 = vmul.f32 %v5087, %v4984
          %v5369 = vmul.f32 %v5092, %v4985
          %v5370 = vmul.f32 %v5097, %v4986
          %v5371 = vmul.f32 %v5102, %v4987
          %v5372 = vmul.f32 %v5107, %v4988
          %v5373 = vmul.f32 %v5112, %v4989
          %v5374 = vmul.f32 %v5117, %v4990
          %v5375 = vmul.f32 %v5122, %v4991
          %v5376 = vmul.f32 %v5127, %v4992
          %v5377 = vmul.f32 %v5132, %v4993
          %v5378 = vmul.f32 %v5137, %v4994
          %v5379 = vmul.f32 %v5142, %v4995
          %v5380 = vmul.f32 %v5147, %v4996
          %v5381 = vmul.f32 %v5152, %v4997
          %v5382 = vmul.f32 %v5157, %v4998
          %v5383 = vmul.f32 %v5162, %v4999
          %v5384 = vmul.f32 %v5167, %v5000
          %v5385 = vmul.f32 %v5172, %v5001
          %v5386 = vmul.f32 %v5177, %v5002
          %v5387 = vmul.f32 %v5182, %v5003
          %v5388 = vmul.f32 %v5187, %v5004
          %v5389 = vmul.f32 %v5192, %v5005
          %v5390 = vmul.f32 %v5197, %v5006
          %v5391 = vmul.f32 %v5202, %v5007
          %v5392 = vmul.f32 %v5207, %v5008
          %v5393 = vmul.f32 %v5212, %v5009
          %v5394 = vmul.f32 %v5217, %v5010
          %v5395 = vmul.f32 %v5222, %v5011
          %v5396 = vmul.f32 %v5227, %v5012
          %v5397 = vmul.f32 %v5232, %v5013
          %v5398 = vmul.f32 %v5237, %v5014
          %v5399 = vmul.f32 %v5242, %v5015
          %v5400 = vmul.f32 %v5247, %v5016
          %v5401 = vmul.f32 %v5252, %v5017
          %v5402 = vmul.f32 %v5257, %v5018
          %v5403 = vmul.f32 %v5262, %v5019
          %v5404 = vmul.f32 %v5267, %v5020
          %v5405 = vmul.f32 %v5272, %v5021
          %v5406 = vmul.f32 %v5277, %v5022
          %v5407 = vmul.f32 %v5282, %v5023
          %v5408 = vmul.f32 %v5287, %v5024
          %v5409 = vmul.f32 %v5292, %v5025
          %v5410 = vmul.f32 %v5297, %v5026
          %v5411 = vmul.f32 %v5302, %v5027
          %v5412 = vmul.f32 %v5307, %v5028
          %v5413 = vmul.f32 %v5312, %v5029
          %v5414 = vmul.f32 %v5317, %v5030
          %v5415 = vmul.f32 %v5322, %v5031
          %v5416 = vmul.f32 %v5327, %v5032
          %v5417 = vmul.f32 %v5332, %v5033
          %v5418 = vmul.f32 %v5337, %v5034
          %v5419 = vmul.f32 %v5342, %v5035
          %v5420 = vmul.f32 %v5347, %v5036
          %v5421 = vmul.f32 %v5352, %v5037
          %v5422 = vmul.f32 %v5357, %v5038
          %5423 = vmatprep.subr.mxu0 0.0
          %5424 = vmatpush1.msra.mxu0 %v2502
          %5425 = vmatprep.subr.mxu0 0.0
          %5426 = vmatpush1.msra.mxu0 %v2501
          %5427 = vmatprep.subr.mxu0 0.0
          %5428 = vmatpush1.msra.mxu0 %v2500
          %5429 = vmatprep.subr.mxu0 0.0
          %5430 = vmatpush1.msra.mxu0 %v2499
          %5431 = vmatprep.subr.mxu0 0.0
          %5432 = vmatpush1.msra.mxu0 %v2498
          %5433 = vmatprep.subr.mxu0 0.0
          %5434 = vmatpush1.msra.mxu0 %v2497
          %5435 = vmatprep.subr.mxu0 0.0
          %5436 = vmatpush1.msra.mxu0 %v2496
          %5437 = vmatprep.subr.mxu0 0.0
          %5438 = vmatpush1.msra.mxu0 %v2495
          %5439 = vmatprep.subr.mxu0 0.0
          %5440 = vmatpush1.msra.mxu0 %v2494
          %5441 = vmatprep.subr.mxu0 0.0
          %5442 = vmatpush1.msra.mxu0 %v2493
          %5443 = vmatprep.subr.mxu0 0.0
          %5444 = vmatpush1.msra.mxu0 %v2492
          %5445 = vmatprep.subr.mxu0 0.0
          %5446 = vmatpush1.msra.mxu0 %v2491
          %5447 = vmatprep.subr.mxu0 0.0
          %5448 = vmatpush1.msra.mxu0 %v2490
          %5449 = vmatprep.subr.mxu0 0.0
          %5450 = vmatpush1.msra.mxu0 %v2489
          %5451 = vmatprep.subr.mxu0 0.0
          %5452 = vmatpush1.msra.mxu0 %v2488
          %5453 = vmatprep.subr.mxu0 0.0
          %5454 = vmatpush1.msra.mxu0 %v2487
          %5455 = vmatprep.subr.mxu0 0.0
          %5456 = vmatpush2.msra.mxu0 0.0
          %5457 = vmatprep.subr.mxu0 0.0
          %5458 = vmatpush2.msra.mxu0 0.0
          %5459 = vmatprep.subr.mxu0 0.0
          %5460 = vmatpush2.msra.mxu0 0.0
          %5461 = vmatprep.subr.mxu0 0.0
          %5462 = vmatpush2.msra.mxu0 0.0
          %5463 = vmatprep.subr.mxu0 0.0
          %5464 = vmatpush2.msra.mxu0 0.0
          %5465 = vmatprep.subr.mxu0 0.0
          %5466 = vmatpush2.msra.mxu0 0.0
          %5467 = vmatprep.subr.mxu0 0.0
          %5468 = vmatpush2.msra.mxu0 0.0
          %5469 = vmatprep.subr.mxu0 0.0
          %5470 = vmatpush2.msra.mxu0 0.0
          %5471 = vmatprep.subr.mxu0 0.0
          %5472 = vmatpush2.msra.mxu0 0.0
          %5473 = vmatprep.subr.mxu0 0.0
          %5474 = vmatpush2.msra.mxu0 0.0
          %5475 = vmatprep.subr.mxu0 0.0
          %5476 = vmatpush2.msra.mxu0 0.0
          %5477 = vmatprep.subr.mxu0 0.0
          %5478 = vmatpush2.msra.mxu0 0.0
          %5479 = vmatprep.subr.mxu0 0.0
          %5480 = vmatpush2.msra.mxu0 0.0
          %5481 = vmatprep.subr.mxu0 0.0
          %5482 = vmatpush2.msra.mxu0 0.0
          %5483 = vmatprep.subr.mxu0 0.0
          %5484 = vmatpush2.msra.mxu0 0.0
          %5485 = vmatprep.subr.mxu0 0.0
          %5486 = vmatpush2.msra.mxu0 0.0
          %5487 = vmatprep.mubr.f32.mxu0 0.0
          %5488 = vmatmul.mubr.f32.gmra.mxu0 %v4464
          %v5489 = vpop.f32.mrf.mxu0
          %v5490 = vadd.f32 0.0, %v5489
          %v5491 = vpop.f32.mrf.mxu0
          %5492 = vmatprep.mubr.f32.mxu0 0.0
          %5493 = vmatmul.mubr.f32.gmra.mxu0 %v4466
          %v5494 = vpop.f32.mrf.mxu0
          %v5495 = vadd.f32 0.0, %v5494
          %v5496 = vpop.f32.mrf.mxu0
          %5497 = vmatprep.mubr.f32.mxu0 0.0
          %5498 = vmatmul.mubr.f32.gmra.mxu0 %v4468
          %v5499 = vpop.f32.mrf.mxu0
          %v5500 = vadd.f32 0.0, %v5499
          %v5501 = vpop.f32.mrf.mxu0
          %5502 = vmatprep.mubr.f32.mxu0 0.0
          %5503 = vmatmul.mubr.f32.gmra.mxu0 %v4470
          %v5504 = vpop.f32.mrf.mxu0
          %v5505 = vadd.f32 0.0, %v5504
          %v5506 = vpop.f32.mrf.mxu0
          %5507 = vmatprep.mubr.f32.mxu0 0.0
          %5508 = vmatmul.mubr.f32.gmra.mxu0 %v4472
          %v5509 = vpop.f32.mrf.mxu0
          %v5510 = vadd.f32 0.0, %v5509
          %v5511 = vpop.f32.mrf.mxu0
          %5512 = vmatprep.mubr.f32.mxu0 0.0
          %5513 = vmatmul.mubr.f32.gmra.mxu0 %v4474
          %v5514 = vpop.f32.mrf.mxu0
          %v5515 = vadd.f32 0.0, %v5514
          %v5516 = vpop.f32.mrf.mxu0
          %5517 = vmatprep.mubr.f32.mxu0 0.0
          %5518 = vmatmul.mubr.f32.gmra.mxu0 %v4476
          %v5519 = vpop.f32.mrf.mxu0
          %v5520 = vadd.f32 0.0, %v5519
          %v5521 = vpop.f32.mrf.mxu0
          %5522 = vmatprep.mubr.f32.mxu0 0.0
          %5523 = vmatmul.mubr.f32.gmra.mxu0 %v4478
          %v5524 = vpop.f32.mrf.mxu0
          %v5525 = vadd.f32 0.0, %v5524
          %v5526 = vpop.f32.mrf.mxu0
          %5527 = vmatprep.mubr.f32.mxu0 0.0
          %5528 = vmatmul.mubr.f32.gmra.mxu0 %v4480
          %v5529 = vpop.f32.mrf.mxu0
          %v5530 = vadd.f32 0.0, %v5529
          %v5531 = vpop.f32.mrf.mxu0
          %5532 = vmatprep.mubr.f32.mxu0 0.0
          %5533 = vmatmul.mubr.f32.gmra.mxu0 %v4482
          %v5534 = vpop.f32.mrf.mxu0
          %v5535 = vadd.f32 0.0, %v5534
          %v5536 = vpop.f32.mrf.mxu0
          %5537 = vmatprep.mubr.f32.mxu0 0.0
          %5538 = vmatmul.mubr.f32.gmra.mxu0 %v4484
          %v5539 = vpop.f32.mrf.mxu0
          %v5540 = vadd.f32 0.0, %v5539
          %v5541 = vpop.f32.mrf.mxu0
          %5542 = vmatprep.mubr.f32.mxu0 0.0
          %5543 = vmatmul.mubr.f32.gmra.mxu0 %v4486
          %v5544 = vpop.f32.mrf.mxu0
          %v5545 = vadd.f32 0.0, %v5544
          %v5546 = vpop.f32.mrf.mxu0
          %5547 = vmatprep.mubr.f32.mxu0 0.0
          %5548 = vmatmul.mubr.f32.gmra.mxu0 %v4488
          %v5549 = vpop.f32.mrf.mxu0
          %v5550 = vadd.f32 0.0, %v5549
          %v5551 = vpop.f32.mrf.mxu0
          %5552 = vmatprep.mubr.f32.mxu0 0.0
          %5553 = vmatmul.mubr.f32.gmra.mxu0 %v4490
          %v5554 = vpop.f32.mrf.mxu0
          %v5555 = vadd.f32 0.0, %v5554
          %v5556 = vpop.f32.mrf.mxu0
          %5557 = vmatprep.mubr.f32.mxu0 0.0
          %5558 = vmatmul.mubr.f32.gmra.mxu0 %v4492
          %v5559 = vpop.f32.mrf.mxu0
          %v5560 = vadd.f32 0.0, %v5559
          %v5561 = vpop.f32.mrf.mxu0
          %5562 = vmatprep.mubr.f32.mxu0 0.0
          %5563 = vmatmul.mubr.f32.gmra.mxu0 %v4494
          %v5564 = vpop.f32.mrf.mxu0
          %v5565 = vadd.f32 0.0, %v5564
          %v5566 = vpop.f32.mrf.mxu0
          %5567 = vdwg.mxu0
          %5568 = vmatprep.subr.mxu0 0.0
          %5569 = vmatpush1.msra.mxu0 %v2518
          %5570 = vmatprep.subr.mxu0 0.0
          %5571 = vmatpush1.msra.mxu0 %v2517
          %5572 = vmatprep.subr.mxu0 0.0
          %5573 = vmatpush1.msra.mxu0 %v2516
          %5574 = vmatprep.subr.mxu0 0.0
          %5575 = vmatpush1.msra.mxu0 %v2515
          %5576 = vmatprep.subr.mxu0 0.0
          %5577 = vmatpush1.msra.mxu0 %v2514
          %5578 = vmatprep.subr.mxu0 0.0
          %5579 = vmatpush1.msra.mxu0 %v2513
          %5580 = vmatprep.subr.mxu0 0.0
          %5581 = vmatpush1.msra.mxu0 %v2512
          %5582 = vmatprep.subr.mxu0 0.0
          %5583 = vmatpush1.msra.mxu0 %v2511
          %5584 = vmatprep.subr.mxu0 0.0
          %5585 = vmatpush1.msra.mxu0 %v2510
          %5586 = vmatprep.subr.mxu0 0.0
          %5587 = vmatpush1.msra.mxu0 %v2509
          %5588 = vmatprep.subr.mxu0 0.0
          %5589 = vmatpush1.msra.mxu0 %v2508
          %5590 = vmatprep.subr.mxu0 0.0
          %5591 = vmatpush1.msra.mxu0 %v2507
          %5592 = vmatprep.subr.mxu0 0.0
          %5593 = vmatpush1.msra.mxu0 %v2506
          %5594 = vmatprep.subr.mxu0 0.0
          %5595 = vmatpush1.msra.mxu0 %v2505
          %5596 = vmatprep.subr.mxu0 0.0
          %5597 = vmatpush1.msra.mxu0 %v2504
          %5598 = vmatprep.subr.mxu0 0.0
          %5599 = vmatpush1.msra.mxu0 %v2503
          %5600 = vmatprep.subr.mxu0 0.0
          %5601 = vmatpush2.msra.mxu0 0.0
          %5602 = vmatprep.subr.mxu0 0.0
          %5603 = vmatpush2.msra.mxu0 0.0
          %5604 = vmatprep.subr.mxu0 0.0
          %5605 = vmatpush2.msra.mxu0 0.0
          %5606 = vmatprep.subr.mxu0 0.0
          %5607 = vmatpush2.msra.mxu0 0.0
          %5608 = vmatprep.subr.mxu0 0.0
          %5609 = vmatpush2.msra.mxu0 0.0
          %5610 = vmatprep.subr.mxu0 0.0
          %5611 = vmatpush2.msra.mxu0 0.0
          %5612 = vmatprep.subr.mxu0 0.0
          %5613 = vmatpush2.msra.mxu0 0.0
          %5614 = vmatprep.subr.mxu0 0.0
          %5615 = vmatpush2.msra.mxu0 0.0
          %5616 = vmatprep.subr.mxu0 0.0
          %5617 = vmatpush2.msra.mxu0 0.0
          %5618 = vmatprep.subr.mxu0 0.0
          %5619 = vmatpush2.msra.mxu0 0.0
          %5620 = vmatprep.subr.mxu0 0.0
          %5621 = vmatpush2.msra.mxu0 0.0
          %5622 = vmatprep.subr.mxu0 0.0
          %5623 = vmatpush2.msra.mxu0 0.0
          %5624 = vmatprep.subr.mxu0 0.0
          %5625 = vmatpush2.msra.mxu0 0.0
          %5626 = vmatprep.subr.mxu0 0.0
          %5627 = vmatpush2.msra.mxu0 0.0
          %5628 = vmatprep.subr.mxu0 0.0
          %5629 = vmatpush2.msra.mxu0 0.0
          %5630 = vmatprep.subr.mxu0 0.0
          %5631 = vmatpush2.msra.mxu0 0.0
          %5632 = vmatprep.mubr.f32.mxu0 0.0
          %5633 = vmatmul.mubr.f32.gmra.mxu0 %v4496
          %v5634 = vpop.f32.mrf.mxu0
          %v5635 = vadd.f32 0.0, %v5634
          %v5636 = vpop.f32.mrf.mxu0
          %5637 = vmatprep.mubr.f32.mxu0 0.0
          %5638 = vmatmul.mubr.f32.gmra.mxu0 %v4498
          %v5639 = vpop.f32.mrf.mxu0
          %v5640 = vadd.f32 0.0, %v5639
          %v5641 = vpop.f32.mrf.mxu0
          %5642 = vmatprep.mubr.f32.mxu0 0.0
          %5643 = vmatmul.mubr.f32.gmra.mxu0 %v4500
          %v5644 = vpop.f32.mrf.mxu0
          %v5645 = vadd.f32 0.0, %v5644
          %v5646 = vpop.f32.mrf.mxu0
          %5647 = vmatprep.mubr.f32.mxu0 0.0
          %5648 = vmatmul.mubr.f32.gmra.mxu0 %v4502
          %v5649 = vpop.f32.mrf.mxu0
          %v5650 = vadd.f32 0.0, %v5649
          %v5651 = vpop.f32.mrf.mxu0
          %5652 = vmatprep.mubr.f32.mxu0 0.0
          %5653 = vmatmul.mubr.f32.gmra.mxu0 %v4504
          %v5654 = vpop.f32.mrf.mxu0
          %v5655 = vadd.f32 0.0, %v5654
          %v5656 = vpop.f32.mrf.mxu0
          %5657 = vmatprep.mubr.f32.mxu0 0.0
          %5658 = vmatmul.mubr.f32.gmra.mxu0 %v4506
          %v5659 = vpop.f32.mrf.mxu0
          %v5660 = vadd.f32 0.0, %v5659
          %v5661 = vpop.f32.mrf.mxu0
          %5662 = vmatprep.mubr.f32.mxu0 0.0
          %5663 = vmatmul.mubr.f32.gmra.mxu0 %v4508
          %v5664 = vpop.f32.mrf.mxu0
          %v5665 = vadd.f32 0.0, %v5664
          %v5666 = vpop.f32.mrf.mxu0
          %5667 = vmatprep.mubr.f32.mxu0 0.0
          %5668 = vmatmul.mubr.f32.gmra.mxu0 %v4510
          %v5669 = vpop.f32.mrf.mxu0
          %v5670 = vadd.f32 0.0, %v5669
          %v5671 = vpop.f32.mrf.mxu0
          %5672 = vmatprep.mubr.f32.mxu0 0.0
          %5673 = vmatmul.mubr.f32.gmra.mxu0 %v4512
          %v5674 = vpop.f32.mrf.mxu0
          %v5675 = vadd.f32 0.0, %v5674
          %v5676 = vpop.f32.mrf.mxu0
          %5677 = vmatprep.mubr.f32.mxu0 0.0
          %5678 = vmatmul.mubr.f32.gmra.mxu0 %v4514
          %v5679 = vpop.f32.mrf.mxu0
          %v5680 = vadd.f32 0.0, %v5679
          %v5681 = vpop.f32.mrf.mxu0
          %5682 = vmatprep.mubr.f32.mxu0 0.0
          %5683 = vmatmul.mubr.f32.gmra.mxu0 %v4516
          %v5684 = vpop.f32.mrf.mxu0
          %v5685 = vadd.f32 0.0, %v5684
          %v5686 = vpop.f32.mrf.mxu0
          %5687 = vmatprep.mubr.f32.mxu0 0.0
          %5688 = vmatmul.mubr.f32.gmra.mxu0 %v4518
          %v5689 = vpop.f32.mrf.mxu0
          %v5690 = vadd.f32 0.0, %v5689
          %v5691 = vpop.f32.mrf.mxu0
          %5692 = vmatprep.mubr.f32.mxu0 0.0
          %5693 = vmatmul.mubr.f32.gmra.mxu0 %v4520
          %v5694 = vpop.f32.mrf.mxu0
          %v5695 = vadd.f32 0.0, %v5694
          %v5696 = vpop.f32.mrf.mxu0
          %5697 = vmatprep.mubr.f32.mxu0 0.0
          %5698 = vmatmul.mubr.f32.gmra.mxu0 %v4522
          %v5699 = vpop.f32.mrf.mxu0
          %v5700 = vadd.f32 0.0, %v5699
          %v5701 = vpop.f32.mrf.mxu0
          %5702 = vmatprep.mubr.f32.mxu0 0.0
          %5703 = vmatmul.mubr.f32.gmra.mxu0 %v4524
          %v5704 = vpop.f32.mrf.mxu0
          %v5705 = vadd.f32 0.0, %v5704
          %v5706 = vpop.f32.mrf.mxu0
          %5707 = vmatprep.mubr.f32.mxu0 0.0
          %5708 = vmatmul.mubr.f32.gmra.mxu0 %v4526
          %v5709 = vpop.f32.mrf.mxu0
          %v5710 = vadd.f32 0.0, %v5709
          %v5711 = vpop.f32.mrf.mxu0
          %5712 = vdwg.mxu0
          %5713 = vmatprep.subr.mxu0 0.0
          %5714 = vmatpush1.msra.mxu0 %v2534
          %5715 = vmatprep.subr.mxu0 0.0
          %5716 = vmatpush1.msra.mxu0 %v2533
          %5717 = vmatprep.subr.mxu0 0.0
          %5718 = vmatpush1.msra.mxu0 %v2532
          %5719 = vmatprep.subr.mxu0 0.0
          %5720 = vmatpush1.msra.mxu0 %v2531
          %5721 = vmatprep.subr.mxu0 0.0
          %5722 = vmatpush1.msra.mxu0 %v2530
          %5723 = vmatprep.subr.mxu0 0.0
          %5724 = vmatpush1.msra.mxu0 %v2529
          %5725 = vmatprep.subr.mxu0 0.0
          %5726 = vmatpush1.msra.mxu0 %v2528
          %5727 = vmatprep.subr.mxu0 0.0
          %5728 = vmatpush1.msra.mxu0 %v2527
          %5729 = vmatprep.subr.mxu0 0.0
          %5730 = vmatpush1.msra.mxu0 %v2526
          %5731 = vmatprep.subr.mxu0 0.0
          %5732 = vmatpush1.msra.mxu0 %v2525
          %5733 = vmatprep.subr.mxu0 0.0
          %5734 = vmatpush1.msra.mxu0 %v2524
          %5735 = vmatprep.subr.mxu0 0.0
          %5736 = vmatpush1.msra.mxu0 %v2523
          %5737 = vmatprep.subr.mxu0 0.0
          %5738 = vmatpush1.msra.mxu0 %v2522
          %5739 = vmatprep.subr.mxu0 0.0
          %5740 = vmatpush1.msra.mxu0 %v2521
          %5741 = vmatprep.subr.mxu0 0.0
          %5742 = vmatpush1.msra.mxu0 %v2520
          %5743 = vmatprep.subr.mxu0 0.0
          %5744 = vmatpush1.msra.mxu0 %v2519
          %5745 = vmatprep.subr.mxu0 0.0
          %5746 = vmatpush2.msra.mxu0 0.0
          %5747 = vmatprep.subr.mxu0 0.0
          %5748 = vmatpush2.msra.mxu0 0.0
          %5749 = vmatprep.subr.mxu0 0.0
          %5750 = vmatpush2.msra.mxu0 0.0
          %5751 = vmatprep.subr.mxu0 0.0
          %5752 = vmatpush2.msra.mxu0 0.0
          %5753 = vmatprep.subr.mxu0 0.0
          %5754 = vmatpush2.msra.mxu0 0.0
          %5755 = vmatprep.subr.mxu0 0.0
          %5756 = vmatpush2.msra.mxu0 0.0
          %5757 = vmatprep.subr.mxu0 0.0
          %5758 = vmatpush2.msra.mxu0 0.0
          %5759 = vmatprep.subr.mxu0 0.0
          %5760 = vmatpush2.msra.mxu0 0.0
          %5761 = vmatprep.subr.mxu0 0.0
          %5762 = vmatpush2.msra.mxu0 0.0
          %5763 = vmatprep.subr.mxu0 0.0
          %5764 = vmatpush2.msra.mxu0 0.0
          %5765 = vmatprep.subr.mxu0 0.0
          %5766 = vmatpush2.msra.mxu0 0.0
          %5767 = vmatprep.subr.mxu0 0.0
          %5768 = vmatpush2.msra.mxu0 0.0
          %5769 = vmatprep.subr.mxu0 0.0
          %5770 = vmatpush2.msra.mxu0 0.0
          %5771 = vmatprep.subr.mxu0 0.0
          %5772 = vmatpush2.msra.mxu0 0.0
          %5773 = vmatprep.subr.mxu0 0.0
          %5774 = vmatpush2.msra.mxu0 0.0
          %5775 = vmatprep.subr.mxu0 0.0
          %5776 = vmatpush2.msra.mxu0 0.0
          %5777 = vmatprep.mubr.f32.mxu0 0.0
          %5778 = vmatmul.mubr.f32.gmra.mxu0 %v4528
          %v5779 = vpop.f32.mrf.mxu0
          %v5780 = vadd.f32 0.0, %v5779
          %v5781 = vpop.f32.mrf.mxu0
          %5782 = vmatprep.mubr.f32.mxu0 0.0
          %5783 = vmatmul.mubr.f32.gmra.mxu0 %v4530
          %v5784 = vpop.f32.mrf.mxu0
          %v5785 = vadd.f32 0.0, %v5784
          %v5786 = vpop.f32.mrf.mxu0
          %5787 = vmatprep.mubr.f32.mxu0 0.0
          %5788 = vmatmul.mubr.f32.gmra.mxu0 %v4532
          %v5789 = vpop.f32.mrf.mxu0
          %v5790 = vadd.f32 0.0, %v5789
          %v5791 = vpop.f32.mrf.mxu0
          %5792 = vmatprep.mubr.f32.mxu0 0.0
          %5793 = vmatmul.mubr.f32.gmra.mxu0 %v4534
          %v5794 = vpop.f32.mrf.mxu0
          %v5795 = vadd.f32 0.0, %v5794
          %v5796 = vpop.f32.mrf.mxu0
          %5797 = vmatprep.mubr.f32.mxu0 0.0
          %5798 = vmatmul.mubr.f32.gmra.mxu0 %v4536
          %v5799 = vpop.f32.mrf.mxu0
          %v5800 = vadd.f32 0.0, %v5799
          %v5801 = vpop.f32.mrf.mxu0
          %5802 = vmatprep.mubr.f32.mxu0 0.0
          %5803 = vmatmul.mubr.f32.gmra.mxu0 %v4538
          %v5804 = vpop.f32.mrf.mxu0
          %v5805 = vadd.f32 0.0, %v5804
          %v5806 = vpop.f32.mrf.mxu0
          %5807 = vmatprep.mubr.f32.mxu0 0.0
          %5808 = vmatmul.mubr.f32.gmra.mxu0 %v4540
          %v5809 = vpop.f32.mrf.mxu0
          %v5810 = vadd.f32 0.0, %v5809
          %v5811 = vpop.f32.mrf.mxu0
          %5812 = vmatprep.mubr.f32.mxu0 0.0
          %5813 = vmatmul.mubr.f32.gmra.mxu0 %v4542
          %v5814 = vpop.f32.mrf.mxu0
          %v5815 = vadd.f32 0.0, %v5814
          %v5816 = vpop.f32.mrf.mxu0
          %5817 = vmatprep.mubr.f32.mxu0 0.0
          %5818 = vmatmul.mubr.f32.gmra.mxu0 %v4544
          %v5819 = vpop.f32.mrf.mxu0
          %v5820 = vadd.f32 0.0, %v5819
          %v5821 = vpop.f32.mrf.mxu0
          %5822 = vmatprep.mubr.f32.mxu0 0.0
          %5823 = vmatmul.mubr.f32.gmra.mxu0 %v4546
          %v5824 = vpop.f32.mrf.mxu0
          %v5825 = vadd.f32 0.0, %v5824
          %v5826 = vpop.f32.mrf.mxu0
          %5827 = vmatprep.mubr.f32.mxu0 0.0
          %5828 = vmatmul.mubr.f32.gmra.mxu0 %v4548
          %v5829 = vpop.f32.mrf.mxu0
          %v5830 = vadd.f32 0.0, %v5829
          %v5831 = vpop.f32.mrf.mxu0
          %5832 = vmatprep.mubr.f32.mxu0 0.0
          %5833 = vmatmul.mubr.f32.gmra.mxu0 %v4550
          %v5834 = vpop.f32.mrf.mxu0
          %v5835 = vadd.f32 0.0, %v5834
          %v5836 = vpop.f32.mrf.mxu0
          %5837 = vmatprep.mubr.f32.mxu0 0.0
          %5838 = vmatmul.mubr.f32.gmra.mxu0 %v4552
          %v5839 = vpop.f32.mrf.mxu0
          %v5840 = vadd.f32 0.0, %v5839
          %v5841 = vpop.f32.mrf.mxu0
          %5842 = vmatprep.mubr.f32.mxu0 0.0
          %5843 = vmatmul.mubr.f32.gmra.mxu0 %v4554
          %v5844 = vpop.f32.mrf.mxu0
          %v5845 = vadd.f32 0.0, %v5844
          %v5846 = vpop.f32.mrf.mxu0
          %5847 = vmatprep.mubr.f32.mxu0 0.0
          %5848 = vmatmul.mubr.f32.gmra.mxu0 %v4556
          %v5849 = vpop.f32.mrf.mxu0
          %v5850 = vadd.f32 0.0, %v5849
          %v5851 = vpop.f32.mrf.mxu0
          %5852 = vmatprep.mubr.f32.mxu0 0.0
          %5853 = vmatmul.mubr.f32.gmra.mxu0 %v4558
          %v5854 = vpop.f32.mrf.mxu0
          %v5855 = vadd.f32 0.0, %v5854
          %v5856 = vpop.f32.mrf.mxu0
          %5857 = vdwg.mxu0
          %5858 = vmatprep.subr.mxu0 0.0
          %5859 = vmatpush1.msra.mxu0 %v2550
          %5860 = vmatprep.subr.mxu0 0.0
          %5861 = vmatpush1.msra.mxu0 %v2549
          %5862 = vmatprep.subr.mxu0 0.0
          %5863 = vmatpush1.msra.mxu0 %v2548
          %5864 = vmatprep.subr.mxu0 0.0
          %5865 = vmatpush1.msra.mxu0 %v2547
          %5866 = vmatprep.subr.mxu0 0.0
          %5867 = vmatpush1.msra.mxu0 %v2546
          %5868 = vmatprep.subr.mxu0 0.0
          %5869 = vmatpush1.msra.mxu0 %v2545
          %5870 = vmatprep.subr.mxu0 0.0
          %5871 = vmatpush1.msra.mxu0 %v2544
          %5872 = vmatprep.subr.mxu0 0.0
          %5873 = vmatpush1.msra.mxu0 %v2543
          %5874 = vmatprep.subr.mxu0 0.0
          %5875 = vmatpush1.msra.mxu0 %v2542
          %5876 = vmatprep.subr.mxu0 0.0
          %5877 = vmatpush1.msra.mxu0 %v2541
          %5878 = vmatprep.subr.mxu0 0.0
          %5879 = vmatpush1.msra.mxu0 %v2540
          %5880 = vmatprep.subr.mxu0 0.0
          %5881 = vmatpush1.msra.mxu0 %v2539
          %5882 = vmatprep.subr.mxu0 0.0
          %5883 = vmatpush1.msra.mxu0 %v2538
          %5884 = vmatprep.subr.mxu0 0.0
          %5885 = vmatpush1.msra.mxu0 %v2537
          %5886 = vmatprep.subr.mxu0 0.0
          %5887 = vmatpush1.msra.mxu0 %v2536
          %5888 = vmatprep.subr.mxu0 0.0
          %5889 = vmatpush1.msra.mxu0 %v2535
          %5890 = vmatprep.subr.mxu0 0.0
          %5891 = vmatpush2.msra.mxu0 0.0
          %5892 = vmatprep.subr.mxu0 0.0
          %5893 = vmatpush2.msra.mxu0 0.0
          %5894 = vmatprep.subr.mxu0 0.0
          %5895 = vmatpush2.msra.mxu0 0.0
          %5896 = vmatprep.subr.mxu0 0.0
          %5897 = vmatpush2.msra.mxu0 0.0
          %5898 = vmatprep.subr.mxu0 0.0
          %5899 = vmatpush2.msra.mxu0 0.0
          %5900 = vmatprep.subr.mxu0 0.0
          %5901 = vmatpush2.msra.mxu0 0.0
          %5902 = vmatprep.subr.mxu0 0.0
          %5903 = vmatpush2.msra.mxu0 0.0
          %5904 = vmatprep.subr.mxu0 0.0
          %5905 = vmatpush2.msra.mxu0 0.0
          %5906 = vmatprep.subr.mxu0 0.0
          %5907 = vmatpush2.msra.mxu0 0.0
          %5908 = vmatprep.subr.mxu0 0.0
          %5909 = vmatpush2.msra.mxu0 0.0
          %5910 = vmatprep.subr.mxu0 0.0
          %5911 = vmatpush2.msra.mxu0 0.0
          %5912 = vmatprep.subr.mxu0 0.0
          %5913 = vmatpush2.msra.mxu0 0.0
          %5914 = vmatprep.subr.mxu0 0.0
          %5915 = vmatpush2.msra.mxu0 0.0
          %5916 = vmatprep.subr.mxu0 0.0
          %5917 = vmatpush2.msra.mxu0 0.0
          %5918 = vmatprep.subr.mxu0 0.0
          %5919 = vmatpush2.msra.mxu0 0.0
          %5920 = vmatprep.subr.mxu0 0.0
          %5921 = vmatpush2.msra.mxu0 0.0
          %5922 = vmatprep.mubr.f32.mxu0 0.0
          %5923 = vmatmul.mubr.f32.gmra.mxu0 %v4560
          %v5924 = vpop.f32.mrf.mxu0
          %v5925 = vadd.f32 0.0, %v5924
          %v5926 = vpop.f32.mrf.mxu0
          %5927 = vmatprep.mubr.f32.mxu0 0.0
          %5928 = vmatmul.mubr.f32.gmra.mxu0 %v4562
          %v5929 = vpop.f32.mrf.mxu0
          %v5930 = vadd.f32 0.0, %v5929
          %v5931 = vpop.f32.mrf.mxu0
          %5932 = vmatprep.mubr.f32.mxu0 0.0
          %5933 = vmatmul.mubr.f32.gmra.mxu0 %v4564
          %v5934 = vpop.f32.mrf.mxu0
          %v5935 = vadd.f32 0.0, %v5934
          %v5936 = vpop.f32.mrf.mxu0
          %5937 = vmatprep.mubr.f32.mxu0 0.0
          %5938 = vmatmul.mubr.f32.gmra.mxu0 %v4566
          %v5939 = vpop.f32.mrf.mxu0
          %v5940 = vadd.f32 0.0, %v5939
          %v5941 = vpop.f32.mrf.mxu0
          %5942 = vmatprep.mubr.f32.mxu0 0.0
          %5943 = vmatmul.mubr.f32.gmra.mxu0 %v4568
          %v5944 = vpop.f32.mrf.mxu0
          %v5945 = vadd.f32 0.0, %v5944
          %v5946 = vpop.f32.mrf.mxu0
          %5947 = vmatprep.mubr.f32.mxu0 0.0
          %5948 = vmatmul.mubr.f32.gmra.mxu0 %v4570
          %v5949 = vpop.f32.mrf.mxu0
          %v5950 = vadd.f32 0.0, %v5949
          %v5951 = vpop.f32.mrf.mxu0
          %5952 = vmatprep.mubr.f32.mxu0 0.0
          %5953 = vmatmul.mubr.f32.gmra.mxu0 %v4572
          %v5954 = vpop.f32.mrf.mxu0
          %v5955 = vadd.f32 0.0, %v5954
          %v5956 = vpop.f32.mrf.mxu0
          %5957 = vmatprep.mubr.f32.mxu0 0.0
          %5958 = vmatmul.mubr.f32.gmra.mxu0 %v4574
          %v5959 = vpop.f32.mrf.mxu0
          %v5960 = vadd.f32 0.0, %v5959
          %v5961 = vpop.f32.mrf.mxu0
          %5962 = vmatprep.mubr.f32.mxu0 0.0
          %5963 = vmatmul.mubr.f32.gmra.mxu0 %v4576
          %v5964 = vpop.f32.mrf.mxu0
          %v5965 = vadd.f32 0.0, %v5964
          %v5966 = vpop.f32.mrf.mxu0
          %5967 = vmatprep.mubr.f32.mxu0 0.0
          %5968 = vmatmul.mubr.f32.gmra.mxu0 %v4578
          %v5969 = vpop.f32.mrf.mxu0
          %v5970 = vadd.f32 0.0, %v5969
          %v5971 = vpop.f32.mrf.mxu0
          %5972 = vmatprep.mubr.f32.mxu0 0.0
          %5973 = vmatmul.mubr.f32.gmra.mxu0 %v4580
          %v5974 = vpop.f32.mrf.mxu0
          %v5975 = vadd.f32 0.0, %v5974
          %v5976 = vpop.f32.mrf.mxu0
          %5977 = vmatprep.mubr.f32.mxu0 0.0
          %5978 = vmatmul.mubr.f32.gmra.mxu0 %v4582
          %v5979 = vpop.f32.mrf.mxu0
          %v5980 = vadd.f32 0.0, %v5979
          %v5981 = vpop.f32.mrf.mxu0
          %5982 = vmatprep.mubr.f32.mxu0 0.0
          %5983 = vmatmul.mubr.f32.gmra.mxu0 %v4584
          %v5984 = vpop.f32.mrf.mxu0
          %v5985 = vadd.f32 0.0, %v5984
          %v5986 = vpop.f32.mrf.mxu0
          %5987 = vmatprep.mubr.f32.mxu0 0.0
          %5988 = vmatmul.mubr.f32.gmra.mxu0 %v4586
          %v5989 = vpop.f32.mrf.mxu0
          %v5990 = vadd.f32 0.0, %v5989
          %v5991 = vpop.f32.mrf.mxu0
          %5992 = vmatprep.mubr.f32.mxu0 0.0
          %5993 = vmatmul.mubr.f32.gmra.mxu0 %v4588
          %v5994 = vpop.f32.mrf.mxu0
          %v5995 = vadd.f32 0.0, %v5994
          %v5996 = vpop.f32.mrf.mxu0
          %5997 = vmatprep.mubr.f32.mxu0 0.0
          %5998 = vmatmul.mubr.f32.gmra.mxu0 %v4590
          %v5999 = vpop.f32.mrf.mxu0
          %v6000 = vadd.f32 0.0, %v5999
          %v6001 = vpop.f32.mrf.mxu0
          %6002 = vdwg.mxu0
          %v6003 = vadd.f32 %v5359, %v5490
          %v6004 = vadd.f32 %v5360, %v5495
          %v6005 = vadd.f32 %v5361, %v5500
          %v6006 = vadd.f32 %v5362, %v5505
          %v6007 = vadd.f32 %v5363, %v5510
          %v6008 = vadd.f32 %v5364, %v5515
          %v6009 = vadd.f32 %v5365, %v5520
          %v6010 = vadd.f32 %v5366, %v5525
          %v6011 = vadd.f32 %v5367, %v5530
          %v6012 = vadd.f32 %v5368, %v5535
          %v6013 = vadd.f32 %v5369, %v5540
          %v6014 = vadd.f32 %v5370, %v5545
          %v6015 = vadd.f32 %v5371, %v5550
          %v6016 = vadd.f32 %v5372, %v5555
          %v6017 = vadd.f32 %v5373, %v5560
          %v6018 = vadd.f32 %v5374, %v5565
          %v6019 = vadd.f32 %v5375, %v5635
          %v6020 = vadd.f32 %v5376, %v5640
          %v6021 = vadd.f32 %v5377, %v5645
          %v6022 = vadd.f32 %v5378, %v5650
          %v6023 = vadd.f32 %v5379, %v5655
          %v6024 = vadd.f32 %v5380, %v5660
          %v6025 = vadd.f32 %v5381, %v5665
          %v6026 = vadd.f32 %v5382, %v5670
          %v6027 = vadd.f32 %v5383, %v5675
          %v6028 = vadd.f32 %v5384, %v5680
          %v6029 = vadd.f32 %v5385, %v5685
          %v6030 = vadd.f32 %v5386, %v5690
          %v6031 = vadd.f32 %v5387, %v5695
          %v6032 = vadd.f32 %v5388, %v5700
          %v6033 = vadd.f32 %v5389, %v5705
          %v6034 = vadd.f32 %v5390, %v5710
          %v6035 = vadd.f32 %v5391, %v5780
          %v6036 = vadd.f32 %v5392, %v5785
          %v6037 = vadd.f32 %v5393, %v5790
          %v6038 = vadd.f32 %v5394, %v5795
          %v6039 = vadd.f32 %v5395, %v5800
          %v6040 = vadd.f32 %v5396, %v5805
          %v6041 = vadd.f32 %v5397, %v5810
          %v6042 = vadd.f32 %v5398, %v5815
          %v6043 = vadd.f32 %v5399, %v5820
          %v6044 = vadd.f32 %v5400, %v5825
          %v6045 = vadd.f32 %v5401, %v5830
          %v6046 = vadd.f32 %v5402, %v5835
          %v6047 = vadd.f32 %v5403, %v5840
          %v6048 = vadd.f32 %v5404, %v5845
          %v6049 = vadd.f32 %v5405, %v5850
          %v6050 = vadd.f32 %v5406, %v5855
          %v6051 = vadd.f32 %v5407, %v5925
          %v6052 = vadd.f32 %v5408, %v5930
          %v6053 = vadd.f32 %v5409, %v5935
          %v6054 = vadd.f32 %v5410, %v5940
          %v6055 = vadd.f32 %v5411, %v5945
          %v6056 = vadd.f32 %v5412, %v5950
          %v6057 = vadd.f32 %v5413, %v5955
          %v6058 = vadd.f32 %v5414, %v5960
          %v6059 = vadd.f32 %v5415, %v5965
          %v6060 = vadd.f32 %v5416, %v5970
          %v6061 = vadd.f32 %v5417, %v5975
          %v6062 = vadd.f32 %v5418, %v5980
          %v6063 = vadd.f32 %v5419, %v5985
          %v6064 = vadd.f32 %v5420, %v5990
          %v6065 = vadd.f32 %v5421, %v5995
          %v6066 = vadd.f32 %v5422, %v6000
          %6067 = vst.msk [vmem:[#allocation8] sm:$0xff] %vm1433, %v6003
          %6068 = vst.msk [vmem:[#allocation8 + $0x8] sm:$0xff] %vm1433, %v6004
          %6069 = vst.msk [vmem:[#allocation8 + $0x10] sm:$0xff] %vm1433, %v6005
          %6070 = vst.msk [vmem:[#allocation8 + $0x18] sm:$0xff] %vm1433, %v6006
          %6071 = vst.msk [vmem:[#allocation8 + $0x20] sm:$0xff] %vm1433, %v6007
          %6072 = vst.msk [vmem:[#allocation8 + $0x28] sm:$0xff] %vm1433, %v6008
          %6073 = vst.msk [vmem:[#allocation8 + $0x30] sm:$0xff] %vm1433, %v6009
          %6074 = vst.msk [vmem:[#allocation8 + $0x38] sm:$0xff] %vm1433, %v6010
          %6075 = vst.msk [vmem:[#allocation8 + $0x40] sm:$0xff] %vm1433, %v6011
          %6076 = vst.msk [vmem:[#allocation8 + $0x48] sm:$0xff] %vm1433, %v6012
          %6077 = vst.msk [vmem:[#allocation8 + $0x50] sm:$0xff] %vm1433, %v6013
          %6078 = vst.msk [vmem:[#allocation8 + $0x58] sm:$0xff] %vm1433, %v6014
          %6079 = vst.msk [vmem:[#allocation8 + $0x60] sm:$0xff] %vm1433, %v6015
          %6080 = vst.msk [vmem:[#allocation8 + $0x68] sm:$0xff] %vm1433, %v6016
          %6081 = vst.msk [vmem:[#allocation8 + $0x70] sm:$0xff] %vm1433, %v6017
          %6082 = vst.msk [vmem:[#allocation8 + $0x78] sm:$0xff] %vm1433, %v6018
          %6083 = vst.msk [vmem:[#allocation8 + $0x80] sm:$0xff] %vm1433, %v6019
          %6084 = vst.msk [vmem:[#allocation8 + $0x88] sm:$0xff] %vm1433, %v6020
          %6085 = vst.msk [vmem:[#allocation8 + $0x90] sm:$0xff] %vm1433, %v6021
          %6086 = vst.msk [vmem:[#allocation8 + $0x98] sm:$0xff] %vm1433, %v6022
          %6087 = vst.msk [vmem:[#allocation8 + $0xa0] sm:$0xff] %vm1433, %v6023
          %6088 = vst.msk [vmem:[#allocation8 + $0xa8] sm:$0xff] %vm1433, %v6024
          %6089 = vst.msk [vmem:[#allocation8 + $0xb0] sm:$0xff] %vm1433, %v6025
          %6090 = vst.msk [vmem:[#allocation8 + $0xb8] sm:$0xff] %vm1433, %v6026
          %6091 = vst.msk [vmem:[#allocation8 + $0xc0] sm:$0xff] %vm1433, %v6027
          %6092 = vst.msk [vmem:[#allocation8 + $0xc8] sm:$0xff] %vm1433, %v6028
          %6093 = vst.msk [vmem:[#allocation8 + $0xd0] sm:$0xff] %vm1433, %v6029
          %6094 = vst.msk [vmem:[#allocation8 + $0xd8] sm:$0xff] %vm1433, %v6030
          %6095 = vst.msk [vmem:[#allocation8 + $0xe0] sm:$0xff] %vm1433, %v6031
          %6096 = vst.msk [vmem:[#allocation8 + $0xe8] sm:$0xff] %vm1433, %v6032
          %6097 = vst.msk [vmem:[#allocation8 + $0xf0] sm:$0xff] %vm1433, %v6033
          %6098 = vst.msk [vmem:[#allocation8 + $0xf8] sm:$0xff] %vm1433, %v6034
          %6099 = vst.msk [vmem:[#allocation8 + $0x100] sm:$0xff] %vm1433, %v6035
          %6100 = vst.msk [vmem:[#allocation8 + $0x108] sm:$0xff] %vm1433, %v6036
          %6101 = vst.msk [vmem:[#allocation8 + $0x110] sm:$0xff] %vm1433, %v6037
          %6102 = vst.msk [vmem:[#allocation8 + $0x118] sm:$0xff] %vm1433, %v6038
          %6103 = vst.msk [vmem:[#allocation8 + $0x120] sm:$0xff] %vm1433, %v6039
          %6104 = vst.msk [vmem:[#allocation8 + $0x128] sm:$0xff] %vm1433, %v6040
          %6105 = vst.msk [vmem:[#allocation8 + $0x130] sm:$0xff] %vm1433, %v6041
          %6106 = vst.msk [vmem:[#allocation8 + $0x138] sm:$0xff] %vm1433, %v6042
          %6107 = vst.msk [vmem:[#allocation8 + $0x140] sm:$0xff] %vm1433, %v6043
          %6108 = vst.msk [vmem:[#allocation8 + $0x148] sm:$0xff] %vm1433, %v6044
          %6109 = vst.msk [vmem:[#allocation8 + $0x150] sm:$0xff] %vm1433, %v6045
          %6110 = vst.msk [vmem:[#allocation8 + $0x158] sm:$0xff] %vm1433, %v6046
          %6111 = vst.msk [vmem:[#allocation8 + $0x160] sm:$0xff] %vm1433, %v6047
          %6112 = vst.msk [vmem:[#allocation8 + $0x168] sm:$0xff] %vm1433, %v6048
          %6113 = vst.msk [vmem:[#allocation8 + $0x170] sm:$0xff] %vm1433, %v6049
          %6114 = vst.msk [vmem:[#allocation8 + $0x178] sm:$0xff] %vm1433, %v6050
          %6115 = vst.msk [vmem:[#allocation8 + $0x180] sm:$0xff] %vm1433, %v6051
          %6116 = vst.msk [vmem:[#allocation8 + $0x188] sm:$0xff] %vm1433, %v6052
          %6117 = vst.msk [vmem:[#allocation8 + $0x190] sm:$0xff] %vm1433, %v6053
          %6118 = vst.msk [vmem:[#allocation8 + $0x198] sm:$0xff] %vm1433, %v6054
          %6119 = vst.msk [vmem:[#allocation8 + $0x1a0] sm:$0xff] %vm1433, %v6055
          %6120 = vst.msk [vmem:[#allocation8 + $0x1a8] sm:$0xff] %vm1433, %v6056
          %6121 = vst.msk [vmem:[#allocation8 + $0x1b0] sm:$0xff] %vm1433, %v6057
          %6122 = vst.msk [vmem:[#allocation8 + $0x1b8] sm:$0xff] %vm1433, %v6058
          %6123 = vst.msk [vmem:[#allocation8 + $0x1c0] sm:$0xff] %vm1433, %v6059
          %6124 = vst.msk [vmem:[#allocation8 + $0x1c8] sm:$0xff] %vm1433, %v6060
          %6125 = vst.msk [vmem:[#allocation8 + $0x1d0] sm:$0xff] %vm1433, %v6061
          %6126 = vst.msk [vmem:[#allocation8 + $0x1d8] sm:$0xff] %vm1433, %v6062
          %6127 = vst.msk [vmem:[#allocation8 + $0x1e0] sm:$0xff] %vm1433, %v6063
          %6128 = vst.msk [vmem:[#allocation8 + $0x1e8] sm:$0xff] %vm1433, %v6064
          %6129 = vst.msk [vmem:[#allocation8 + $0x1f0] sm:$0xff] %vm1433, %v6065
          %6130 = vst.msk [vmem:[#allocation8 + $0x1f8] sm:$0xff] %vm1433, %v6066
          %6131 = vst.msk [vmem:[#allocation6] sm:$0xff] %vm2121, %v3823
          %6132 = vst.msk [vmem:[#allocation6 + $0x8] sm:$0xff] %vm2121, %v3824
          %6133 = vst.msk [vmem:[#allocation6 + $0x10] sm:$0xff] %vm2121, %v3825
          %6134 = vst.msk [vmem:[#allocation6 + $0x18] sm:$0xff] %vm2121, %v3826
          %6135 = vst.msk [vmem:[#allocation6 + $0x20] sm:$0xff] %vm2121, %v3827
          %6136 = vst.msk [vmem:[#allocation6 + $0x28] sm:$0xff] %vm2121, %v3828
          %6137 = vst.msk [vmem:[#allocation6 + $0x30] sm:$0xff] %vm2121, %v3829
          %6138 = vst.msk [vmem:[#allocation6 + $0x38] sm:$0xff] %vm2121, %v3830
          %6139 = vst.msk [vmem:[#allocation6 + $0x40] sm:$0xff] %vm2121, %v3831
          %6140 = vst.msk [vmem:[#allocation6 + $0x48] sm:$0xff] %vm2121, %v3832
          %6141 = vst.msk [vmem:[#allocation6 + $0x50] sm:$0xff] %vm2121, %v3833
          %6142 = vst.msk [vmem:[#allocation6 + $0x58] sm:$0xff] %vm2121, %v3834
          %6143 = vst.msk [vmem:[#allocation6 + $0x60] sm:$0xff] %vm2121, %v3835
          %6144 = vst.msk [vmem:[#allocation6 + $0x68] sm:$0xff] %vm2121, %v3836
          %6145 = vst.msk [vmem:[#allocation6 + $0x70] sm:$0xff] %vm2121, %v3837
          %6146 = vst.msk [vmem:[#allocation6 + $0x78] sm:$0xff] %vm2121, %v3838
          %6147 = vst.msk [vmem:[#allocation6 + $0x80] sm:$0xff] %vm2121, %v3839
          %6148 = vst.msk [vmem:[#allocation6 + $0x88] sm:$0xff] %vm2121, %v3840
          %6149 = vst.msk [vmem:[#allocation6 + $0x90] sm:$0xff] %vm2121, %v3841
          %6150 = vst.msk [vmem:[#allocation6 + $0x98] sm:$0xff] %vm2121, %v3842
          %6151 = vst.msk [vmem:[#allocation6 + $0xa0] sm:$0xff] %vm2121, %v3843
          %6152 = vst.msk [vmem:[#allocation6 + $0xa8] sm:$0xff] %vm2121, %v3844
          %6153 = vst.msk [vmem:[#allocation6 + $0xb0] sm:$0xff] %vm2121, %v3845
          %6154 = vst.msk [vmem:[#allocation6 + $0xb8] sm:$0xff] %vm2121, %v3846
          %6155 = vst.msk [vmem:[#allocation6 + $0xc0] sm:$0xff] %vm2121, %v3847
          %6156 = vst.msk [vmem:[#allocation6 + $0xc8] sm:$0xff] %vm2121, %v3848
          %6157 = vst.msk [vmem:[#allocation6 + $0xd0] sm:$0xff] %vm2121, %v3849
          %6158 = vst.msk [vmem:[#allocation6 + $0xd8] sm:$0xff] %vm2121, %v3850
          %6159 = vst.msk [vmem:[#allocation6 + $0xe0] sm:$0xff] %vm2121, %v3851
          %6160 = vst.msk [vmem:[#allocation6 + $0xe8] sm:$0xff] %vm2121, %v3852
          %6161 = vst.msk [vmem:[#allocation6 + $0xf0] sm:$0xff] %vm2121, %v3853
          %6162 = vst.msk [vmem:[#allocation6 + $0xf8] sm:$0xff] %vm2121, %v3854
          %6163 = vst.msk [vmem:[#allocation6 + $0x100] sm:$0xff] %vm2121, %v3855
          %6164 = vst.msk [vmem:[#allocation6 + $0x108] sm:$0xff] %vm2121, %v3856
          %6165 = vst.msk [vmem:[#allocation6 + $0x110] sm:$0xff] %vm2121, %v3857
          %6166 = vst.msk [vmem:[#allocation6 + $0x118] sm:$0xff] %vm2121, %v3858
          %6167 = vst.msk [vmem:[#allocation6 + $0x120] sm:$0xff] %vm2121, %v3859
          %6168 = vst.msk [vmem:[#allocation6 + $0x128] sm:$0xff] %vm2121, %v3860
          %6169 = vst.msk [vmem:[#allocation6 + $0x130] sm:$0xff] %vm2121, %v3861
          %6170 = vst.msk [vmem:[#allocation6 + $0x138] sm:$0xff] %vm2121, %v3862
          %6171 = vst.msk [vmem:[#allocation6 + $0x140] sm:$0xff] %vm2121, %v3863
          %6172 = vst.msk [vmem:[#allocation6 + $0x148] sm:$0xff] %vm2121, %v3864
          %6173 = vst.msk [vmem:[#allocation6 + $0x150] sm:$0xff] %vm2121, %v3865
          %6174 = vst.msk [vmem:[#allocation6 + $0x158] sm:$0xff] %vm2121, %v3866
          %6175 = vst.msk [vmem:[#allocation6 + $0x160] sm:$0xff] %vm2121, %v3867
          %6176 = vst.msk [vmem:[#allocation6 + $0x168] sm:$0xff] %vm2121, %v3868
          %6177 = vst.msk [vmem:[#allocation6 + $0x170] sm:$0xff] %vm2121, %v3869
          %6178 = vst.msk [vmem:[#allocation6 + $0x178] sm:$0xff] %vm2121, %v3870
          %6179 = vst.msk [vmem:[#allocation6 + $0x180] sm:$0xff] %vm2121, %v3871
          %6180 = vst.msk [vmem:[#allocation6 + $0x188] sm:$0xff] %vm2121, %v3872
          %6181 = vst.msk [vmem:[#allocation6 + $0x190] sm:$0xff] %vm2121, %v3873
          %6182 = vst.msk [vmem:[#allocation6 + $0x198] sm:$0xff] %vm2121, %v3874
          %6183 = vst.msk [vmem:[#allocation6 + $0x1a0] sm:$0xff] %vm2121, %v3875
          %6184 = vst.msk [vmem:[#allocation6 + $0x1a8] sm:$0xff] %vm2121, %v3876
          %6185 = vst.msk [vmem:[#allocation6 + $0x1b0] sm:$0xff] %vm2121, %v3877
          %6186 = vst.msk [vmem:[#allocation6 + $0x1b8] sm:$0xff] %vm2121, %v3878
          %6187 = vst.msk [vmem:[#allocation6 + $0x1c0] sm:$0xff] %vm2121, %v3879
          %6188 = vst.msk [vmem:[#allocation6 + $0x1c8] sm:$0xff] %vm2121, %v3880
          %6189 = vst.msk [vmem:[#allocation6 + $0x1d0] sm:$0xff] %vm2121, %v3881
          %6190 = vst.msk [vmem:[#allocation6 + $0x1d8] sm:$0xff] %vm2121, %v3882
          %6191 = vst.msk [vmem:[#allocation6 + $0x1e0] sm:$0xff] %vm2121, %v3883
          %6192 = vst.msk [vmem:[#allocation6 + $0x1e8] sm:$0xff] %vm2121, %v3884
          %6193 = vst.msk [vmem:[#allocation6 + $0x1f0] sm:$0xff] %vm2121, %v3885
          %6194 = vst.msk [vmem:[#allocation6 + $0x1f8] sm:$0xff] %vm2121, %v3886
        $region121: #{tpu_custom_call.1} parent=87 // loop_footer
          %s2353 = sadd.s32 %s2351, 1
        $region122: #{tpu_custom_call.1} parent=87 // loop_footer_branch
          %2350 = sbr.rel target = $region118
        $region123: #{tpu_custom_call.1} parent=87 // loop_exit
          _
        %v6195 = vld [vmem:[#allocation8] sm:$0xff]
        %v6196 = vld [vmem:[#allocation8 + $0x8] sm:$0xff]
        %v6197 = vld [vmem:[#allocation8 + $0x10] sm:$0xff]
        %v6198 = vld [vmem:[#allocation8 + $0x18] sm:$0xff]
        %v6199 = vld [vmem:[#allocation8 + $0x20] sm:$0xff]
        %v6200 = vld [vmem:[#allocation8 + $0x28] sm:$0xff]
        %v6201 = vld [vmem:[#allocation8 + $0x30] sm:$0xff]
        %v6202 = vld [vmem:[#allocation8 + $0x38] sm:$0xff]
        %v6203 = vld [vmem:[#allocation8 + $0x40] sm:$0xff]
        %v6204 = vld [vmem:[#allocation8 + $0x48] sm:$0xff]
        %v6205 = vld [vmem:[#allocation8 + $0x50] sm:$0xff]
        %v6206 = vld [vmem:[#allocation8 + $0x58] sm:$0xff]
        %v6207 = vld [vmem:[#allocation8 + $0x60] sm:$0xff]
        %v6208 = vld [vmem:[#allocation8 + $0x68] sm:$0xff]
        %v6209 = vld [vmem:[#allocation8 + $0x70] sm:$0xff]
        %v6210 = vld [vmem:[#allocation8 + $0x78] sm:$0xff]
        %v6211 = vld [vmem:[#allocation8 + $0x80] sm:$0xff]
        %v6212 = vld [vmem:[#allocation8 + $0x88] sm:$0xff]
        %v6213 = vld [vmem:[#allocation8 + $0x90] sm:$0xff]
        %v6214 = vld [vmem:[#allocation8 + $0x98] sm:$0xff]
        %v6215 = vld [vmem:[#allocation8 + $0xa0] sm:$0xff]
        %v6216 = vld [vmem:[#allocation8 + $0xa8] sm:$0xff]
        %v6217 = vld [vmem:[#allocation8 + $0xb0] sm:$0xff]
        %v6218 = vld [vmem:[#allocation8 + $0xb8] sm:$0xff]
        %v6219 = vld [vmem:[#allocation8 + $0xc0] sm:$0xff]
        %v6220 = vld [vmem:[#allocation8 + $0xc8] sm:$0xff]
        %v6221 = vld [vmem:[#allocation8 + $0xd0] sm:$0xff]
        %v6222 = vld [vmem:[#allocation8 + $0xd8] sm:$0xff]
        %v6223 = vld [vmem:[#allocation8 + $0xe0] sm:$0xff]
        %v6224 = vld [vmem:[#allocation8 + $0xe8] sm:$0xff]
        %v6225 = vld [vmem:[#allocation8 + $0xf0] sm:$0xff]
        %v6226 = vld [vmem:[#allocation8 + $0xf8] sm:$0xff]
        %v6227 = vld [vmem:[#allocation8 + $0x100] sm:$0xff]
        %v6228 = vld [vmem:[#allocation8 + $0x108] sm:$0xff]
        %v6229 = vld [vmem:[#allocation8 + $0x110] sm:$0xff]
        %v6230 = vld [vmem:[#allocation8 + $0x118] sm:$0xff]
        %v6231 = vld [vmem:[#allocation8 + $0x120] sm:$0xff]
        %v6232 = vld [vmem:[#allocation8 + $0x128] sm:$0xff]
        %v6233 = vld [vmem:[#allocation8 + $0x130] sm:$0xff]
        %v6234 = vld [vmem:[#allocation8 + $0x138] sm:$0xff]
        %v6235 = vld [vmem:[#allocation8 + $0x140] sm:$0xff]
        %v6236 = vld [vmem:[#allocation8 + $0x148] sm:$0xff]
        %v6237 = vld [vmem:[#allocation8 + $0x150] sm:$0xff]
        %v6238 = vld [vmem:[#allocation8 + $0x158] sm:$0xff]
        %v6239 = vld [vmem:[#allocation8 + $0x160] sm:$0xff]
        %v6240 = vld [vmem:[#allocation8 + $0x168] sm:$0xff]
        %v6241 = vld [vmem:[#allocation8 + $0x170] sm:$0xff]
        %v6242 = vld [vmem:[#allocation8 + $0x178] sm:$0xff]
        %v6243 = vld [vmem:[#allocation8 + $0x180] sm:$0xff]
        %v6244 = vld [vmem:[#allocation8 + $0x188] sm:$0xff]
        %v6245 = vld [vmem:[#allocation8 + $0x190] sm:$0xff]
        %v6246 = vld [vmem:[#allocation8 + $0x198] sm:$0xff]
        %v6247 = vld [vmem:[#allocation8 + $0x1a0] sm:$0xff]
        %v6248 = vld [vmem:[#allocation8 + $0x1a8] sm:$0xff]
        %v6249 = vld [vmem:[#allocation8 + $0x1b0] sm:$0xff]
        %v6250 = vld [vmem:[#allocation8 + $0x1b8] sm:$0xff]
        %v6251 = vld [vmem:[#allocation8 + $0x1c0] sm:$0xff]
        %v6252 = vld [vmem:[#allocation8 + $0x1c8] sm:$0xff]
        %v6253 = vld [vmem:[#allocation8 + $0x1d0] sm:$0xff]
        %v6254 = vld [vmem:[#allocation8 + $0x1d8] sm:$0xff]
        %v6255 = vld [vmem:[#allocation8 + $0x1e0] sm:$0xff]
        %v6256 = vld [vmem:[#allocation8 + $0x1e8] sm:$0xff]
        %v6257 = vld [vmem:[#allocation8 + $0x1f0] sm:$0xff]
        %v6258 = vld [vmem:[#allocation8 + $0x1f8] sm:$0xff]
        %v6259 = vld [vmem:[#allocation7] sm:$0xff]
        %v6260 = vld [vmem:[#allocation7 + $0x8] sm:$0xff]
        %v6261 = vld [vmem:[#allocation7 + $0x10] sm:$0xff]
        %v6262 = vld [vmem:[#allocation7 + $0x18] sm:$0xff]
        %v6263 = vld [vmem:[#allocation7 + $0x20] sm:$0xff]
        %v6264 = vld [vmem:[#allocation7 + $0x28] sm:$0xff]
        %v6265 = vld [vmem:[#allocation7 + $0x30] sm:$0xff]
        %v6266 = vld [vmem:[#allocation7 + $0x38] sm:$0xff]
        %v6267 = vld [vmem:[#allocation7 + $0x40] sm:$0xff]
        %v6268 = vld [vmem:[#allocation7 + $0x48] sm:$0xff]
        %v6269 = vld [vmem:[#allocation7 + $0x50] sm:$0xff]
        %v6270 = vld [vmem:[#allocation7 + $0x58] sm:$0xff]
        %v6271 = vld [vmem:[#allocation7 + $0x60] sm:$0xff]
        %v6272 = vld [vmem:[#allocation7 + $0x68] sm:$0xff]
        %v6273 = vld [vmem:[#allocation7 + $0x70] sm:$0xff]
        %v6274 = vld [vmem:[#allocation7 + $0x78] sm:$0xff]
        %v6275 = vld [vmem:[#allocation7 + $0x80] sm:$0xff]
        %v6276 = vld [vmem:[#allocation7 + $0x88] sm:$0xff]
        %v6277 = vld [vmem:[#allocation7 + $0x90] sm:$0xff]
        %v6278 = vld [vmem:[#allocation7 + $0x98] sm:$0xff]
        %v6279 = vld [vmem:[#allocation7 + $0xa0] sm:$0xff]
        %v6280 = vld [vmem:[#allocation7 + $0xa8] sm:$0xff]
        %v6281 = vld [vmem:[#allocation7 + $0xb0] sm:$0xff]
        %v6282 = vld [vmem:[#allocation7 + $0xb8] sm:$0xff]
        %v6283 = vld [vmem:[#allocation7 + $0xc0] sm:$0xff]
        %v6284 = vld [vmem:[#allocation7 + $0xc8] sm:$0xff]
        %v6285 = vld [vmem:[#allocation7 + $0xd0] sm:$0xff]
        %v6286 = vld [vmem:[#allocation7 + $0xd8] sm:$0xff]
        %v6287 = vld [vmem:[#allocation7 + $0xe0] sm:$0xff]
        %v6288 = vld [vmem:[#allocation7 + $0xe8] sm:$0xff]
        %v6289 = vld [vmem:[#allocation7 + $0xf0] sm:$0xff]
        %v6290 = vld [vmem:[#allocation7 + $0xf8] sm:$0xff]
        %v6291 = vld [vmem:[#allocation7 + $0x100] sm:$0xff]
        %v6292 = vld [vmem:[#allocation7 + $0x108] sm:$0xff]
        %v6293 = vld [vmem:[#allocation7 + $0x110] sm:$0xff]
        %v6294 = vld [vmem:[#allocation7 + $0x118] sm:$0xff]
        %v6295 = vld [vmem:[#allocation7 + $0x120] sm:$0xff]
        %v6296 = vld [vmem:[#allocation7 + $0x128] sm:$0xff]
        %v6297 = vld [vmem:[#allocation7 + $0x130] sm:$0xff]
        %v6298 = vld [vmem:[#allocation7 + $0x138] sm:$0xff]
        %v6299 = vld [vmem:[#allocation7 + $0x140] sm:$0xff]
        %v6300 = vld [vmem:[#allocation7 + $0x148] sm:$0xff]
        %v6301 = vld [vmem:[#allocation7 + $0x150] sm:$0xff]
        %v6302 = vld [vmem:[#allocation7 + $0x158] sm:$0xff]
        %v6303 = vld [vmem:[#allocation7 + $0x160] sm:$0xff]
        %v6304 = vld [vmem:[#allocation7 + $0x168] sm:$0xff]
        %v6305 = vld [vmem:[#allocation7 + $0x170] sm:$0xff]
        %v6306 = vld [vmem:[#allocation7 + $0x178] sm:$0xff]
        %v6307 = vld [vmem:[#allocation7 + $0x180] sm:$0xff]
        %v6308 = vld [vmem:[#allocation7 + $0x188] sm:$0xff]
        %v6309 = vld [vmem:[#allocation7 + $0x190] sm:$0xff]
        %v6310 = vld [vmem:[#allocation7 + $0x198] sm:$0xff]
        %v6311 = vld [vmem:[#allocation7 + $0x1a0] sm:$0xff]
        %v6312 = vld [vmem:[#allocation7 + $0x1a8] sm:$0xff]
        %v6313 = vld [vmem:[#allocation7 + $0x1b0] sm:$0xff]
        %v6314 = vld [vmem:[#allocation7 + $0x1b8] sm:$0xff]
        %v6315 = vld [vmem:[#allocation7 + $0x1c0] sm:$0xff]
        %v6316 = vld [vmem:[#allocation7 + $0x1c8] sm:$0xff]
        %v6317 = vld [vmem:[#allocation7 + $0x1d0] sm:$0xff]
        %v6318 = vld [vmem:[#allocation7 + $0x1d8] sm:$0xff]
        %v6319 = vld [vmem:[#allocation7 + $0x1e0] sm:$0xff]
        %v6320 = vld [vmem:[#allocation7 + $0x1e8] sm:$0xff]
        %v6321 = vld [vmem:[#allocation7 + $0x1f0] sm:$0xff]
        %v6322 = vld [vmem:[#allocation7 + $0x1f8] sm:$0xff]
        %v6323 = vrcp.pop %v6259
        %v6324 = vrcp.pop %v6260
        %v6325 = vrcp.pop %v6261
        %v6326 = vrcp.pop %v6262
        %v6327 = vrcp.pop %v6263
        %v6328 = vrcp.pop %v6264
        %v6329 = vrcp.pop %v6265
        %v6330 = vrcp.pop %v6266
        %v6331 = vrcp.pop %v6267
        %v6332 = vrcp.pop %v6268
        %v6333 = vrcp.pop %v6269
        %v6334 = vrcp.pop %v6270
        %v6335 = vrcp.pop %v6271
        %v6336 = vrcp.pop %v6272
        %v6337 = vrcp.pop %v6273
        %v6338 = vrcp.pop %v6274
        %v6339 = vrcp.pop %v6275
        %v6340 = vrcp.pop %v6276
        %v6341 = vrcp.pop %v6277
        %v6342 = vrcp.pop %v6278
        %v6343 = vrcp.pop %v6279
        %v6344 = vrcp.pop %v6280
        %v6345 = vrcp.pop %v6281
        %v6346 = vrcp.pop %v6282
        %v6347 = vrcp.pop %v6283
        %v6348 = vrcp.pop %v6284
        %v6349 = vrcp.pop %v6285
        %v6350 = vrcp.pop %v6286
        %v6351 = vrcp.pop %v6287
        %v6352 = vrcp.pop %v6288
        %v6353 = vrcp.pop %v6289
        %v6354 = vrcp.pop %v6290
        %v6355 = vrcp.pop %v6291
        %v6356 = vrcp.pop %v6292
        %v6357 = vrcp.pop %v6293
        %v6358 = vrcp.pop %v6294
        %v6359 = vrcp.pop %v6295
        %v6360 = vrcp.pop %v6296
        %v6361 = vrcp.pop %v6297
        %v6362 = vrcp.pop %v6298
        %v6363 = vrcp.pop %v6299
        %v6364 = vrcp.pop %v6300
        %v6365 = vrcp.pop %v6301
        %v6366 = vrcp.pop %v6302
        %v6367 = vrcp.pop %v6303
        %v6368 = vrcp.pop %v6304
        %v6369 = vrcp.pop %v6305
        %v6370 = vrcp.pop %v6306
        %v6371 = vrcp.pop %v6307
        %v6372 = vrcp.pop %v6308
        %v6373 = vrcp.pop %v6309
        %v6374 = vrcp.pop %v6310
        %v6375 = vrcp.pop %v6311
        %v6376 = vrcp.pop %v6312
        %v6377 = vrcp.pop %v6313
        %v6378 = vrcp.pop %v6314
        %v6379 = vrcp.pop %v6315
        %v6380 = vrcp.pop %v6316
        %v6381 = vrcp.pop %v6317
        %v6382 = vrcp.pop %v6318
        %v6383 = vrcp.pop %v6319
        %v6384 = vrcp.pop %v6320
        %v6385 = vrcp.pop %v6321
        %v6386 = vrcp.pop %v6322
        %6388 = vset.pattern.permute.xlu0 0
        %6389 = vperm.xlu0 %6388, %v6323
        %v6390 = vpop.permute.xlu0 %6389
        %6393 = vset.pattern.permute.xlu0 0
        %6394 = vperm.xlu0 %6393, %v6324
        %v6395 = vpop.permute.xlu0 %6394
        %6398 = vset.pattern.permute.xlu0 0
        %6399 = vperm.xlu0 %6398, %v6325
        %v6400 = vpop.permute.xlu0 %6399
        %6403 = vset.pattern.permute.xlu0 0
        %6404 = vperm.xlu0 %6403, %v6326
        %v6405 = vpop.permute.xlu0 %6404
        %6408 = vset.pattern.permute.xlu0 0
        %6409 = vperm.xlu0 %6408, %v6327
        %v6410 = vpop.permute.xlu0 %6409
        %6413 = vset.pattern.permute.xlu0 0
        %6414 = vperm.xlu0 %6413, %v6328
        %v6415 = vpop.permute.xlu0 %6414
        %6418 = vset.pattern.permute.xlu0 0
        %6419 = vperm.xlu0 %6418, %v6329
        %v6420 = vpop.permute.xlu0 %6419
        %6423 = vset.pattern.permute.xlu0 0
        %6424 = vperm.xlu0 %6423, %v6330
        %v6425 = vpop.permute.xlu0 %6424
        %6428 = vset.pattern.permute.xlu0 0
        %6429 = vperm.xlu0 %6428, %v6331
        %v6430 = vpop.permute.xlu0 %6429
        %6433 = vset.pattern.permute.xlu0 0
        %6434 = vperm.xlu0 %6433, %v6332
        %v6435 = vpop.permute.xlu0 %6434
        %6438 = vset.pattern.permute.xlu0 0
        %6439 = vperm.xlu0 %6438, %v6333
        %v6440 = vpop.permute.xlu0 %6439
        %6443 = vset.pattern.permute.xlu0 0
        %6444 = vperm.xlu0 %6443, %v6334
        %v6445 = vpop.permute.xlu0 %6444
        %6448 = vset.pattern.permute.xlu0 0
        %6449 = vperm.xlu0 %6448, %v6335
        %v6450 = vpop.permute.xlu0 %6449
        %6453 = vset.pattern.permute.xlu0 0
        %6454 = vperm.xlu0 %6453, %v6336
        %v6455 = vpop.permute.xlu0 %6454
        %6458 = vset.pattern.permute.xlu0 0
        %6459 = vperm.xlu0 %6458, %v6337
        %v6460 = vpop.permute.xlu0 %6459
        %6463 = vset.pattern.permute.xlu0 0
        %6464 = vperm.xlu0 %6463, %v6338
        %v6465 = vpop.permute.xlu0 %6464
        %6468 = vset.pattern.permute.xlu0 0
        %6469 = vperm.xlu0 %6468, %v6339
        %v6470 = vpop.permute.xlu0 %6469
        %6473 = vset.pattern.permute.xlu0 0
        %6474 = vperm.xlu0 %6473, %v6340
        %v6475 = vpop.permute.xlu0 %6474
        %6478 = vset.pattern.permute.xlu0 0
        %6479 = vperm.xlu0 %6478, %v6341
        %v6480 = vpop.permute.xlu0 %6479
        %6483 = vset.pattern.permute.xlu0 0
        %6484 = vperm.xlu0 %6483, %v6342
        %v6485 = vpop.permute.xlu0 %6484
        %6488 = vset.pattern.permute.xlu0 0
        %6489 = vperm.xlu0 %6488, %v6343
        %v6490 = vpop.permute.xlu0 %6489
        %6493 = vset.pattern.permute.xlu0 0
        %6494 = vperm.xlu0 %6493, %v6344
        %v6495 = vpop.permute.xlu0 %6494
        %6498 = vset.pattern.permute.xlu0 0
        %6499 = vperm.xlu0 %6498, %v6345
        %v6500 = vpop.permute.xlu0 %6499
        %6503 = vset.pattern.permute.xlu0 0
        %6504 = vperm.xlu0 %6503, %v6346
        %v6505 = vpop.permute.xlu0 %6504
        %6508 = vset.pattern.permute.xlu0 0
        %6509 = vperm.xlu0 %6508, %v6347
        %v6510 = vpop.permute.xlu0 %6509
        %6513 = vset.pattern.permute.xlu0 0
        %6514 = vperm.xlu0 %6513, %v6348
        %v6515 = vpop.permute.xlu0 %6514
        %6518 = vset.pattern.permute.xlu0 0
        %6519 = vperm.xlu0 %6518, %v6349
        %v6520 = vpop.permute.xlu0 %6519
        %6523 = vset.pattern.permute.xlu0 0
        %6524 = vperm.xlu0 %6523, %v6350
        %v6525 = vpop.permute.xlu0 %6524
        %6528 = vset.pattern.permute.xlu0 0
        %6529 = vperm.xlu0 %6528, %v6351
        %v6530 = vpop.permute.xlu0 %6529
        %6533 = vset.pattern.permute.xlu0 0
        %6534 = vperm.xlu0 %6533, %v6352
        %v6535 = vpop.permute.xlu0 %6534
        %6538 = vset.pattern.permute.xlu0 0
        %6539 = vperm.xlu0 %6538, %v6353
        %v6540 = vpop.permute.xlu0 %6539
        %6543 = vset.pattern.permute.xlu0 0
        %6544 = vperm.xlu0 %6543, %v6354
        %v6545 = vpop.permute.xlu0 %6544
        %6548 = vset.pattern.permute.xlu0 0
        %6549 = vperm.xlu0 %6548, %v6355
        %v6550 = vpop.permute.xlu0 %6549
        %6553 = vset.pattern.permute.xlu0 0
        %6554 = vperm.xlu0 %6553, %v6356
        %v6555 = vpop.permute.xlu0 %6554
        %6558 = vset.pattern.permute.xlu0 0
        %6559 = vperm.xlu0 %6558, %v6357
        %v6560 = vpop.permute.xlu0 %6559
        %6563 = vset.pattern.permute.xlu0 0
        %6564 = vperm.xlu0 %6563, %v6358
        %v6565 = vpop.permute.xlu0 %6564
        %6568 = vset.pattern.permute.xlu0 0
        %6569 = vperm.xlu0 %6568, %v6359
        %v6570 = vpop.permute.xlu0 %6569
        %6573 = vset.pattern.permute.xlu0 0
        %6574 = vperm.xlu0 %6573, %v6360
        %v6575 = vpop.permute.xlu0 %6574
        %6578 = vset.pattern.permute.xlu0 0
        %6579 = vperm.xlu0 %6578, %v6361
        %v6580 = vpop.permute.xlu0 %6579
        %6583 = vset.pattern.permute.xlu0 0
        %6584 = vperm.xlu0 %6583, %v6362
        %v6585 = vpop.permute.xlu0 %6584
        %6588 = vset.pattern.permute.xlu0 0
        %6589 = vperm.xlu0 %6588, %v6363
        %v6590 = vpop.permute.xlu0 %6589
        %6593 = vset.pattern.permute.xlu0 0
        %6594 = vperm.xlu0 %6593, %v6364
        %v6595 = vpop.permute.xlu0 %6594
        %6598 = vset.pattern.permute.xlu0 0
        %6599 = vperm.xlu0 %6598, %v6365
        %v6600 = vpop.permute.xlu0 %6599
        %6603 = vset.pattern.permute.xlu0 0
        %6604 = vperm.xlu0 %6603, %v6366
        %v6605 = vpop.permute.xlu0 %6604
        %6608 = vset.pattern.permute.xlu0 0
        %6609 = vperm.xlu0 %6608, %v6367
        %v6610 = vpop.permute.xlu0 %6609
        %6613 = vset.pattern.permute.xlu0 0
        %6614 = vperm.xlu0 %6613, %v6368
        %v6615 = vpop.permute.xlu0 %6614
        %6618 = vset.pattern.permute.xlu0 0
        %6619 = vperm.xlu0 %6618, %v6369
        %v6620 = vpop.permute.xlu0 %6619
        %6623 = vset.pattern.permute.xlu0 0
        %6624 = vperm.xlu0 %6623, %v6370
        %v6625 = vpop.permute.xlu0 %6624
        %6628 = vset.pattern.permute.xlu0 0
        %6629 = vperm.xlu0 %6628, %v6371
        %v6630 = vpop.permute.xlu0 %6629
        %6633 = vset.pattern.permute.xlu0 0
        %6634 = vperm.xlu0 %6633, %v6372
        %v6635 = vpop.permute.xlu0 %6634
        %6638 = vset.pattern.permute.xlu0 0
        %6639 = vperm.xlu0 %6638, %v6373
        %v6640 = vpop.permute.xlu0 %6639
        %6643 = vset.pattern.permute.xlu0 0
        %6644 = vperm.xlu0 %6643, %v6374
        %v6645 = vpop.permute.xlu0 %6644
        %6648 = vset.pattern.permute.xlu0 0
        %6649 = vperm.xlu0 %6648, %v6375
        %v6650 = vpop.permute.xlu0 %6649
        %6653 = vset.pattern.permute.xlu0 0
        %6654 = vperm.xlu0 %6653, %v6376
        %v6655 = vpop.permute.xlu0 %6654
        %6658 = vset.pattern.permute.xlu0 0
        %6659 = vperm.xlu0 %6658, %v6377
        %v6660 = vpop.permute.xlu0 %6659
        %6663 = vset.pattern.permute.xlu0 0
        %6664 = vperm.xlu0 %6663, %v6378
        %v6665 = vpop.permute.xlu0 %6664
        %6668 = vset.pattern.permute.xlu0 0
        %6669 = vperm.xlu0 %6668, %v6379
        %v6670 = vpop.permute.xlu0 %6669
        %6673 = vset.pattern.permute.xlu0 0
        %6674 = vperm.xlu0 %6673, %v6380
        %v6675 = vpop.permute.xlu0 %6674
        %6678 = vset.pattern.permute.xlu0 0
        %6679 = vperm.xlu0 %6678, %v6381
        %v6680 = vpop.permute.xlu0 %6679
        %6683 = vset.pattern.permute.xlu0 0
        %6684 = vperm.xlu0 %6683, %v6382
        %v6685 = vpop.permute.xlu0 %6684
        %6688 = vset.pattern.permute.xlu0 0
        %6689 = vperm.xlu0 %6688, %v6383
        %v6690 = vpop.permute.xlu0 %6689
        %6693 = vset.pattern.permute.xlu0 0
        %6694 = vperm.xlu0 %6693, %v6384
        %v6695 = vpop.permute.xlu0 %6694
        %6698 = vset.pattern.permute.xlu0 0
        %6699 = vperm.xlu0 %6698, %v6385
        %v6700 = vpop.permute.xlu0 %6699
        %6703 = vset.pattern.permute.xlu0 0
        %6704 = vperm.xlu0 %6703, %v6386
        %v6705 = vpop.permute.xlu0 %6704
        %v6707 = vmul.f32 %v6195, %v6390
        %v6708 = vmul.f32 %v6196, %v6395
        %v6709 = vmul.f32 %v6197, %v6400
        %v6710 = vmul.f32 %v6198, %v6405
        %v6711 = vmul.f32 %v6199, %v6410
        %v6712 = vmul.f32 %v6200, %v6415
        %v6713 = vmul.f32 %v6201, %v6420
        %v6714 = vmul.f32 %v6202, %v6425
        %v6715 = vmul.f32 %v6203, %v6430
        %v6716 = vmul.f32 %v6204, %v6435
        %v6717 = vmul.f32 %v6205, %v6440
        %v6718 = vmul.f32 %v6206, %v6445
        %v6719 = vmul.f32 %v6207, %v6450
        %v6720 = vmul.f32 %v6208, %v6455
        %v6721 = vmul.f32 %v6209, %v6460
        %v6722 = vmul.f32 %v6210, %v6465
        %v6723 = vmul.f32 %v6211, %v6470
        %v6724 = vmul.f32 %v6212, %v6475
        %v6725 = vmul.f32 %v6213, %v6480
        %v6726 = vmul.f32 %v6214, %v6485
        %v6727 = vmul.f32 %v6215, %v6490
        %v6728 = vmul.f32 %v6216, %v6495
        %v6729 = vmul.f32 %v6217, %v6500
        %v6730 = vmul.f32 %v6218, %v6505
        %v6731 = vmul.f32 %v6219, %v6510
        %v6732 = vmul.f32 %v6220, %v6515
        %v6733 = vmul.f32 %v6221, %v6520
        %v6734 = vmul.f32 %v6222, %v6525
        %v6735 = vmul.f32 %v6223, %v6530
        %v6736 = vmul.f32 %v6224, %v6535
        %v6737 = vmul.f32 %v6225, %v6540
        %v6738 = vmul.f32 %v6226, %v6545
        %v6739 = vmul.f32 %v6227, %v6550
        %v6740 = vmul.f32 %v6228, %v6555
        %v6741 = vmul.f32 %v6229, %v6560
        %v6742 = vmul.f32 %v6230, %v6565
        %v6743 = vmul.f32 %v6231, %v6570
        %v6744 = vmul.f32 %v6232, %v6575
        %v6745 = vmul.f32 %v6233, %v6580
        %v6746 = vmul.f32 %v6234, %v6585
        %v6747 = vmul.f32 %v6235, %v6590
        %v6748 = vmul.f32 %v6236, %v6595
        %v6749 = vmul.f32 %v6237, %v6600
        %v6750 = vmul.f32 %v6238, %v6605
        %v6751 = vmul.f32 %v6239, %v6610
        %v6752 = vmul.f32 %v6240, %v6615
        %v6753 = vmul.f32 %v6241, %v6620
        %v6754 = vmul.f32 %v6242, %v6625
        %v6755 = vmul.f32 %v6243, %v6630
        %v6756 = vmul.f32 %v6244, %v6635
        %v6757 = vmul.f32 %v6245, %v6640
        %v6758 = vmul.f32 %v6246, %v6645
        %v6759 = vmul.f32 %v6247, %v6650
        %v6760 = vmul.f32 %v6248, %v6655
        %v6761 = vmul.f32 %v6249, %v6660
        %v6762 = vmul.f32 %v6250, %v6665
        %v6763 = vmul.f32 %v6251, %v6670
        %v6764 = vmul.f32 %v6252, %v6675
        %v6765 = vmul.f32 %v6253, %v6680
        %v6766 = vmul.f32 %v6254, %v6685
        %v6767 = vmul.f32 %v6255, %v6690
        %v6768 = vmul.f32 %v6256, %v6695
        %v6769 = vmul.f32 %v6257, %v6700
        %v6770 = vmul.f32 %v6258, %v6705
        %6771 = vst.msk [vmem:[#allocation5] sm:$0xff] %vm1433, %v6707
        %6772 = vst.msk [vmem:[#allocation5 + $0x8] sm:$0xff] %vm1433, %v6708
        %6773 = vst.msk [vmem:[#allocation5 + $0x10] sm:$0xff] %vm1433, %v6709
        %6774 = vst.msk [vmem:[#allocation5 + $0x18] sm:$0xff] %vm1433, %v6710
        %6775 = vst.msk [vmem:[#allocation5 + $0x20] sm:$0xff] %vm1433, %v6711
        %6776 = vst.msk [vmem:[#allocation5 + $0x28] sm:$0xff] %vm1433, %v6712
        %6777 = vst.msk [vmem:[#allocation5 + $0x30] sm:$0xff] %vm1433, %v6713
        %6778 = vst.msk [vmem:[#allocation5 + $0x38] sm:$0xff] %vm1433, %v6714
        %6779 = vst.msk [vmem:[#allocation5 + $0x40] sm:$0xff] %vm1433, %v6715
        %6780 = vst.msk [vmem:[#allocation5 + $0x48] sm:$0xff] %vm1433, %v6716
        %6781 = vst.msk [vmem:[#allocation5 + $0x50] sm:$0xff] %vm1433, %v6717
        %6782 = vst.msk [vmem:[#allocation5 + $0x58] sm:$0xff] %vm1433, %v6718
        %6783 = vst.msk [vmem:[#allocation5 + $0x60] sm:$0xff] %vm1433, %v6719
        %6784 = vst.msk [vmem:[#allocation5 + $0x68] sm:$0xff] %vm1433, %v6720
        %6785 = vst.msk [vmem:[#allocation5 + $0x70] sm:$0xff] %vm1433, %v6721
        %6786 = vst.msk [vmem:[#allocation5 + $0x78] sm:$0xff] %vm1433, %v6722
        %6803 = vrot.lane.b32.xlu0 %v6723, 32
        %v6804 = vpop.permute.xlu0 %6803
        %6805 = vrot.lane.b32.xlu0 %v6724, 32
        %v6806 = vpop.permute.xlu0 %6805
        %6807 = vrot.lane.b32.xlu0 %v6725, 32
        %v6808 = vpop.permute.xlu0 %6807
        %6809 = vrot.lane.b32.xlu0 %v6726, 32
        %v6810 = vpop.permute.xlu0 %6809
        %6811 = vrot.lane.b32.xlu0 %v6727, 32
        %v6812 = vpop.permute.xlu0 %6811
        %6813 = vrot.lane.b32.xlu0 %v6728, 32
        %v6814 = vpop.permute.xlu0 %6813
        %6815 = vrot.lane.b32.xlu0 %v6729, 32
        %v6816 = vpop.permute.xlu0 %6815
        %6817 = vrot.lane.b32.xlu0 %v6730, 32
        %v6818 = vpop.permute.xlu0 %6817
        %6819 = vrot.lane.b32.xlu0 %v6731, 32
        %v6820 = vpop.permute.xlu0 %6819
        %6821 = vrot.lane.b32.xlu0 %v6732, 32
        %v6822 = vpop.permute.xlu0 %6821
        %6823 = vrot.lane.b32.xlu0 %v6733, 32
        %v6824 = vpop.permute.xlu0 %6823
        %6825 = vrot.lane.b32.xlu0 %v6734, 32
        %v6826 = vpop.permute.xlu0 %6825
        %6827 = vrot.lane.b32.xlu0 %v6735, 32
        %v6828 = vpop.permute.xlu0 %6827
        %6829 = vrot.lane.b32.xlu0 %v6736, 32
        %v6830 = vpop.permute.xlu0 %6829
        %6831 = vrot.lane.b32.xlu0 %v6737, 32
        %v6832 = vpop.permute.xlu0 %6831
        %6833 = vrot.lane.b32.xlu0 %v6738, 32
        %v6834 = vpop.permute.xlu0 %6833
        %vm6851 = vcmask 523520
        %6852 = vst.msk [vmem:[#allocation5] sm:$0xff] %vm6851, %v6804
        %6853 = vst.msk [vmem:[#allocation5 + $0x8] sm:$0xff] %vm6851, %v6806
        %6854 = vst.msk [vmem:[#allocation5 + $0x10] sm:$0xff] %vm6851, %v6808
        %6855 = vst.msk [vmem:[#allocation5 + $0x18] sm:$0xff] %vm6851, %v6810
        %6856 = vst.msk [vmem:[#allocation5 + $0x20] sm:$0xff] %vm6851, %v6812
        %6857 = vst.msk [vmem:[#allocation5 + $0x28] sm:$0xff] %vm6851, %v6814
        %6858 = vst.msk [vmem:[#allocation5 + $0x30] sm:$0xff] %vm6851, %v6816
        %6859 = vst.msk [vmem:[#allocation5 + $0x38] sm:$0xff] %vm6851, %v6818
        %6860 = vst.msk [vmem:[#allocation5 + $0x40] sm:$0xff] %vm6851, %v6820
        %6861 = vst.msk [vmem:[#allocation5 + $0x48] sm:$0xff] %vm6851, %v6822
        %6862 = vst.msk [vmem:[#allocation5 + $0x50] sm:$0xff] %vm6851, %v6824
        %6863 = vst.msk [vmem:[#allocation5 + $0x58] sm:$0xff] %vm6851, %v6826
        %6864 = vst.msk [vmem:[#allocation5 + $0x60] sm:$0xff] %vm6851, %v6828
        %6865 = vst.msk [vmem:[#allocation5 + $0x68] sm:$0xff] %vm6851, %v6830
        %6866 = vst.msk [vmem:[#allocation5 + $0x70] sm:$0xff] %vm6851, %v6832
        %6867 = vst.msk [vmem:[#allocation5 + $0x78] sm:$0xff] %vm6851, %v6834
        %6884 = vrot.lane.b32.xlu0 %v6739, 64
        %v6885 = vpop.permute.xlu0 %6884
        %6886 = vrot.lane.b32.xlu0 %v6740, 64
        %v6887 = vpop.permute.xlu0 %6886
        %6888 = vrot.lane.b32.xlu0 %v6741, 64
        %v6889 = vpop.permute.xlu0 %6888
        %6890 = vrot.lane.b32.xlu0 %v6742, 64
        %v6891 = vpop.permute.xlu0 %6890
        %6892 = vrot.lane.b32.xlu0 %v6743, 64
        %v6893 = vpop.permute.xlu0 %6892
        %6894 = vrot.lane.b32.xlu0 %v6744, 64
        %v6895 = vpop.permute.xlu0 %6894
        %6896 = vrot.lane.b32.xlu0 %v6745, 64
        %v6897 = vpop.permute.xlu0 %6896
        %6898 = vrot.lane.b32.xlu0 %v6746, 64
        %v6899 = vpop.permute.xlu0 %6898
        %6900 = vrot.lane.b32.xlu0 %v6747, 64
        %v6901 = vpop.permute.xlu0 %6900
        %6902 = vrot.lane.b32.xlu0 %v6748, 64
        %v6903 = vpop.permute.xlu0 %6902
        %6904 = vrot.lane.b32.xlu0 %v6749, 64
        %v6905 = vpop.permute.xlu0 %6904
        %6906 = vrot.lane.b32.xlu0 %v6750, 64
        %v6907 = vpop.permute.xlu0 %6906
        %6908 = vrot.lane.b32.xlu0 %v6751, 64
        %v6909 = vpop.permute.xlu0 %6908
        %6910 = vrot.lane.b32.xlu0 %v6752, 64
        %v6911 = vpop.permute.xlu0 %6910
        %6912 = vrot.lane.b32.xlu0 %v6753, 64
        %v6913 = vpop.permute.xlu0 %6912
        %6914 = vrot.lane.b32.xlu0 %v6754, 64
        %v6915 = vpop.permute.xlu0 %6914
        %vm6932 = vcmask 785920
        %6933 = vst.msk [vmem:[#allocation5] sm:$0xff] %vm6932, %v6885
        %6934 = vst.msk [vmem:[#allocation5 + $0x8] sm:$0xff] %vm6932, %v6887
        %6935 = vst.msk [vmem:[#allocation5 + $0x10] sm:$0xff] %vm6932, %v6889
        %6936 = vst.msk [vmem:[#allocation5 + $0x18] sm:$0xff] %vm6932, %v6891
        %6937 = vst.msk [vmem:[#allocation5 + $0x20] sm:$0xff] %vm6932, %v6893
        %6938 = vst.msk [vmem:[#allocation5 + $0x28] sm:$0xff] %vm6932, %v6895
        %6939 = vst.msk [vmem:[#allocation5 + $0x30] sm:$0xff] %vm6932, %v6897
        %6940 = vst.msk [vmem:[#allocation5 + $0x38] sm:$0xff] %vm6932, %v6899
        %6941 = vst.msk [vmem:[#allocation5 + $0x40] sm:$0xff] %vm6932, %v6901
        %6942 = vst.msk [vmem:[#allocation5 + $0x48] sm:$0xff] %vm6932, %v6903
        %6943 = vst.msk [vmem:[#allocation5 + $0x50] sm:$0xff] %vm6932, %v6905
        %6944 = vst.msk [vmem:[#allocation5 + $0x58] sm:$0xff] %vm6932, %v6907
        %6945 = vst.msk [vmem:[#allocation5 + $0x60] sm:$0xff] %vm6932, %v6909
        %6946 = vst.msk [vmem:[#allocation5 + $0x68] sm:$0xff] %vm6932, %v6911
        %6947 = vst.msk [vmem:[#allocation5 + $0x70] sm:$0xff] %vm6932, %v6913
        %6948 = vst.msk [vmem:[#allocation5 + $0x78] sm:$0xff] %vm6932, %v6915
        %6965 = vrot.lane.b32.xlu0 %v6755, 96
        %v6966 = vpop.permute.xlu0 %6965
        %6967 = vrot.lane.b32.xlu0 %v6756, 96
        %v6968 = vpop.permute.xlu0 %6967
        %6969 = vrot.lane.b32.xlu0 %v6757, 96
        %v6970 = vpop.permute.xlu0 %6969
        %6971 = vrot.lane.b32.xlu0 %v6758, 96
        %v6972 = vpop.permute.xlu0 %6971
        %6973 = vrot.lane.b32.xlu0 %v6759, 96
        %v6974 = vpop.permute.xlu0 %6973
        %6975 = vrot.lane.b32.xlu0 %v6760, 96
        %v6976 = vpop.permute.xlu0 %6975
        %6977 = vrot.lane.b32.xlu0 %v6761, 96
        %v6978 = vpop.permute.xlu0 %6977
        %6979 = vrot.lane.b32.xlu0 %v6762, 96
        %v6980 = vpop.permute.xlu0 %6979
        %6981 = vrot.lane.b32.xlu0 %v6763, 96
        %v6982 = vpop.permute.xlu0 %6981
        %6983 = vrot.lane.b32.xlu0 %v6764, 96
        %v6984 = vpop.permute.xlu0 %6983
        %6985 = vrot.lane.b32.xlu0 %v6765, 96
        %v6986 = vpop.permute.xlu0 %6985
        %6987 = vrot.lane.b32.xlu0 %v6766, 96
        %v6988 = vpop.permute.xlu0 %6987
        %6989 = vrot.lane.b32.xlu0 %v6767, 96
        %v6990 = vpop.permute.xlu0 %6989
        %6991 = vrot.lane.b32.xlu0 %v6768, 96
        %v6992 = vpop.permute.xlu0 %6991
        %6993 = vrot.lane.b32.xlu0 %v6769, 96
        %v6994 = vpop.permute.xlu0 %6993
        %6995 = vrot.lane.b32.xlu0 %v6770, 96
        %v6996 = vpop.permute.xlu0 %6995
        %vm7013 = vcmask 1048320
        %7014 = vst.msk [vmem:[#allocation5] sm:$0xff] %vm7013, %v6966
        %7015 = vst.msk [vmem:[#allocation5 + $0x8] sm:$0xff] %vm7013, %v6968
        %7016 = vst.msk [vmem:[#allocation5 + $0x10] sm:$0xff] %vm7013, %v6970
        %7017 = vst.msk [vmem:[#allocation5 + $0x18] sm:$0xff] %vm7013, %v6972
        %7018 = vst.msk [vmem:[#allocation5 + $0x20] sm:$0xff] %vm7013, %v6974
        %7019 = vst.msk [vmem:[#allocation5 + $0x28] sm:$0xff] %vm7013, %v6976
        %7020 = vst.msk [vmem:[#allocation5 + $0x30] sm:$0xff] %vm7013, %v6978
        %7021 = vst.msk [vmem:[#allocation5 + $0x38] sm:$0xff] %vm7013, %v6980
        %7022 = vst.msk [vmem:[#allocation5 + $0x40] sm:$0xff] %vm7013, %v6982
        %7023 = vst.msk [vmem:[#allocation5 + $0x48] sm:$0xff] %vm7013, %v6984
        %7024 = vst.msk [vmem:[#allocation5 + $0x50] sm:$0xff] %vm7013, %v6986
        %7025 = vst.msk [vmem:[#allocation5 + $0x58] sm:$0xff] %vm7013, %v6988
        %7026 = vst.msk [vmem:[#allocation5 + $0x60] sm:$0xff] %vm7013, %v6990
        %7027 = vst.msk [vmem:[#allocation5 + $0x68] sm:$0xff] %vm7013, %v6992
        %7028 = vst.msk [vmem:[#allocation5 + $0x70] sm:$0xff] %vm7013, %v6994
        %7029 = vst.msk [vmem:[#allocation5 + $0x78] sm:$0xff] %vm7013, %v6996
        %v7030 = vld [vmem:[#allocation5] sm:$0xff]
        %v7031 = vld [vmem:[#allocation5 + $0x8] sm:$0xff]
        %v7032 = vld [vmem:[#allocation5 + $0x10] sm:$0xff]
        %v7033 = vld [vmem:[#allocation5 + $0x18] sm:$0xff]
        %v7034 = vld [vmem:[#allocation5 + $0x20] sm:$0xff]
        %v7035 = vld [vmem:[#allocation5 + $0x28] sm:$0xff]
        %v7036 = vld [vmem:[#allocation5 + $0x30] sm:$0xff]
        %v7037 = vld [vmem:[#allocation5 + $0x38] sm:$0xff]
        %v7038 = vld [vmem:[#allocation5 + $0x40] sm:$0xff]
        %v7039 = vld [vmem:[#allocation5 + $0x48] sm:$0xff]
        %v7040 = vld [vmem:[#allocation5 + $0x50] sm:$0xff]
        %v7041 = vld [vmem:[#allocation5 + $0x58] sm:$0xff]
        %v7042 = vld [vmem:[#allocation5 + $0x60] sm:$0xff]
        %v7043 = vld [vmem:[#allocation5 + $0x68] sm:$0xff]
        %v7044 = vld [vmem:[#allocation5 + $0x70] sm:$0xff]
        %v7045 = vld [vmem:[#allocation5 + $0x78] sm:$0xff]
        %v7046 = vld [vmem:[#allocation17] sm:$0xff]
        %v7047 = vld [vmem:[#allocation17 + $0x8] sm:$0xff]
        %v7048 = vld [vmem:[#allocation17 + $0x10] sm:$0xff]
        %v7049 = vld [vmem:[#allocation17 + $0x18] sm:$0xff]
        %v7050 = vld [vmem:[#allocation17 + $0x20] sm:$0xff]
        %v7051 = vld [vmem:[#allocation17 + $0x28] sm:$0xff]
        %v7052 = vld [vmem:[#allocation17 + $0x30] sm:$0xff]
        %v7053 = vld [vmem:[#allocation17 + $0x38] sm:$0xff]
        %v7054 = vld [vmem:[#allocation17 + $0x40] sm:$0xff]
        %v7055 = vld [vmem:[#allocation17 + $0x48] sm:$0xff]
        %v7056 = vld [vmem:[#allocation17 + $0x50] sm:$0xff]
        %v7057 = vld [vmem:[#allocation17 + $0x58] sm:$0xff]
        %v7058 = vld [vmem:[#allocation17 + $0x60] sm:$0xff]
        %v7059 = vld [vmem:[#allocation17 + $0x68] sm:$0xff]
        %v7060 = vld [vmem:[#allocation17 + $0x70] sm:$0xff]
        %v7061 = vld [vmem:[#allocation17 + $0x78] sm:$0xff]
        %v7062 = vld [vmem:[%s10] sm:$0x1]
        %v7064 = vlaneseq
        %v7065 = vshrl.u32 %v7064, 7
        %v7066 = vsub.s32 0, %v7065
        %v7067 = vrot.slane %v7062, %v7066
        %7069 = vmatprep.subr.mxu0 0.0
        %7070 = vmatpush1.msra.mxu0 %v7061
        %7071 = vmatprep.subr.mxu0 0.0
        %7072 = vmatpush1.msra.mxu0 %v7060
        %7073 = vmatprep.subr.mxu0 0.0
        %7074 = vmatpush1.msra.mxu0 %v7059
        %7075 = vmatprep.subr.mxu0 0.0
        %7076 = vmatpush1.msra.mxu0 %v7058
        %7077 = vmatprep.subr.mxu0 0.0
        %7078 = vmatpush1.msra.mxu0 %v7057
        %7079 = vmatprep.subr.mxu0 0.0
        %7080 = vmatpush1.msra.mxu0 %v7056
        %7081 = vmatprep.subr.mxu0 0.0
        %7082 = vmatpush1.msra.mxu0 %v7055
        %7083 = vmatprep.subr.mxu0 0.0
        %7084 = vmatpush1.msra.mxu0 %v7054
        %7085 = vmatprep.subr.mxu0 0.0
        %7086 = vmatpush1.msra.mxu0 %v7053
        %7087 = vmatprep.subr.mxu0 0.0
        %7088 = vmatpush1.msra.mxu0 %v7052
        %7089 = vmatprep.subr.mxu0 0.0
        %7090 = vmatpush1.msra.mxu0 %v7051
        %7091 = vmatprep.subr.mxu0 0.0
        %7092 = vmatpush1.msra.mxu0 %v7050
        %7093 = vmatprep.subr.mxu0 0.0
        %7094 = vmatpush1.msra.mxu0 %v7049
        %7095 = vmatprep.subr.mxu0 0.0
        %7096 = vmatpush1.msra.mxu0 %v7048
        %7097 = vmatprep.subr.mxu0 0.0
        %7098 = vmatpush1.msra.mxu0 %v7047
        %7099 = vmatprep.subr.mxu0 0.0
        %7100 = vmatpush1.msra.mxu0 %v7046
        %7101 = vmatprep.subr.mxu0 0.0
        %7102 = vmatpush2.msra.mxu0 0.0
        %7103 = vmatprep.subr.mxu0 0.0
        %7104 = vmatpush2.msra.mxu0 0.0
        %7105 = vmatprep.subr.mxu0 0.0
        %7106 = vmatpush2.msra.mxu0 0.0
        %7107 = vmatprep.subr.mxu0 0.0
        %7108 = vmatpush2.msra.mxu0 0.0
        %7109 = vmatprep.subr.mxu0 0.0
        %7110 = vmatpush2.msra.mxu0 0.0
        %7111 = vmatprep.subr.mxu0 0.0
        %7112 = vmatpush2.msra.mxu0 0.0
        %7113 = vmatprep.subr.mxu0 0.0
        %7114 = vmatpush2.msra.mxu0 0.0
        %7115 = vmatprep.subr.mxu0 0.0
        %7116 = vmatpush2.msra.mxu0 0.0
        %7117 = vmatprep.subr.mxu0 0.0
        %7118 = vmatpush2.msra.mxu0 0.0
        %7119 = vmatprep.subr.mxu0 0.0
        %7120 = vmatpush2.msra.mxu0 0.0
        %7121 = vmatprep.subr.mxu0 0.0
        %7122 = vmatpush2.msra.mxu0 0.0
        %7123 = vmatprep.subr.mxu0 0.0
        %7124 = vmatpush2.msra.mxu0 0.0
        %7125 = vmatprep.subr.mxu0 0.0
        %7126 = vmatpush2.msra.mxu0 0.0
        %7127 = vmatprep.subr.mxu0 0.0
        %7128 = vmatpush2.msra.mxu0 0.0
        %7129 = vmatprep.subr.mxu0 0.0
        %7130 = vmatpush2.msra.mxu0 0.0
        %7131 = vmatprep.subr.mxu0 0.0
        %7132 = vmatpush2.msra.mxu0 0.0
        %7133 = vmatprep.mubr.f32.mxu0 0.0
        %7134 = vmatmul.mubr.f32.gmra.mxu0 %v7030
        %v7135 = vpop.f32.mrf.mxu0
        %v7136 = vadd.f32 %v7067, %v7135
        %v7137 = vpop.f32.mrf.mxu0
        %7138 = vmatprep.mubr.f32.mxu0 0.0
        %7139 = vmatmul.mubr.f32.gmra.mxu0 %v7031
        %v7140 = vpop.f32.mrf.mxu0
        %v7141 = vadd.f32 %v7067, %v7140
        %v7142 = vpop.f32.mrf.mxu0
        %7143 = vmatprep.mubr.f32.mxu0 0.0
        %7144 = vmatmul.mubr.f32.gmra.mxu0 %v7032
        %v7145 = vpop.f32.mrf.mxu0
        %v7146 = vadd.f32 %v7067, %v7145
        %v7147 = vpop.f32.mrf.mxu0
        %7148 = vmatprep.mubr.f32.mxu0 0.0
        %7149 = vmatmul.mubr.f32.gmra.mxu0 %v7033
        %v7150 = vpop.f32.mrf.mxu0
        %v7151 = vadd.f32 %v7067, %v7150
        %v7152 = vpop.f32.mrf.mxu0
        %7153 = vmatprep.mubr.f32.mxu0 0.0
        %7154 = vmatmul.mubr.f32.gmra.mxu0 %v7034
        %v7155 = vpop.f32.mrf.mxu0
        %v7156 = vadd.f32 %v7067, %v7155
        %v7157 = vpop.f32.mrf.mxu0
        %7158 = vmatprep.mubr.f32.mxu0 0.0
        %7159 = vmatmul.mubr.f32.gmra.mxu0 %v7035
        %v7160 = vpop.f32.mrf.mxu0
        %v7161 = vadd.f32 %v7067, %v7160
        %v7162 = vpop.f32.mrf.mxu0
        %7163 = vmatprep.mubr.f32.mxu0 0.0
        %7164 = vmatmul.mubr.f32.gmra.mxu0 %v7036
        %v7165 = vpop.f32.mrf.mxu0
        %v7166 = vadd.f32 %v7067, %v7165
        %v7167 = vpop.f32.mrf.mxu0
        %7168 = vmatprep.mubr.f32.mxu0 0.0
        %7169 = vmatmul.mubr.f32.gmra.mxu0 %v7037
        %v7170 = vpop.f32.mrf.mxu0
        %v7171 = vadd.f32 %v7067, %v7170
        %v7172 = vpop.f32.mrf.mxu0
        %7173 = vmatprep.mubr.f32.mxu0 0.0
        %7174 = vmatmul.mubr.f32.gmra.mxu0 %v7038
        %v7175 = vpop.f32.mrf.mxu0
        %v7176 = vadd.f32 %v7067, %v7175
        %v7177 = vpop.f32.mrf.mxu0
        %7178 = vmatprep.mubr.f32.mxu0 0.0
        %7179 = vmatmul.mubr.f32.gmra.mxu0 %v7039
        %v7180 = vpop.f32.mrf.mxu0
        %v7181 = vadd.f32 %v7067, %v7180
        %v7182 = vpop.f32.mrf.mxu0
        %7183 = vmatprep.mubr.f32.mxu0 0.0
        %7184 = vmatmul.mubr.f32.gmra.mxu0 %v7040
        %v7185 = vpop.f32.mrf.mxu0
        %v7186 = vadd.f32 %v7067, %v7185
        %v7187 = vpop.f32.mrf.mxu0
        %7188 = vmatprep.mubr.f32.mxu0 0.0
        %7189 = vmatmul.mubr.f32.gmra.mxu0 %v7041
        %v7190 = vpop.f32.mrf.mxu0
        %v7191 = vadd.f32 %v7067, %v7190
        %v7192 = vpop.f32.mrf.mxu0
        %7193 = vmatprep.mubr.f32.mxu0 0.0
        %7194 = vmatmul.mubr.f32.gmra.mxu0 %v7042
        %v7195 = vpop.f32.mrf.mxu0
        %v7196 = vadd.f32 %v7067, %v7195
        %v7197 = vpop.f32.mrf.mxu0
        %7198 = vmatprep.mubr.f32.mxu0 0.0
        %7199 = vmatmul.mubr.f32.gmra.mxu0 %v7043
        %v7200 = vpop.f32.mrf.mxu0
        %v7201 = vadd.f32 %v7067, %v7200
        %v7202 = vpop.f32.mrf.mxu0
        %7203 = vmatprep.mubr.f32.mxu0 0.0
        %7204 = vmatmul.mubr.f32.gmra.mxu0 %v7044
        %v7205 = vpop.f32.mrf.mxu0
        %v7206 = vadd.f32 %v7067, %v7205
        %v7207 = vpop.f32.mrf.mxu0
        %7208 = vmatprep.mubr.f32.mxu0 0.0
        %7209 = vmatmul.mubr.f32.gmra.mxu0 %v7045
        %v7210 = vpop.f32.mrf.mxu0
        %v7211 = vadd.f32 %v7067, %v7210
        %v7212 = vpop.f32.mrf.mxu0
        %7213 = vdwg.mxu0
        %v7214 = vadd.f32 %v674, %v7136
        %v7215 = vadd.f32 %v675, %v7141
        %v7216 = vadd.f32 %v676, %v7146
        %v7217 = vadd.f32 %v677, %v7151
        %v7218 = vadd.f32 %v678, %v7156
        %v7219 = vadd.f32 %v679, %v7161
        %v7220 = vadd.f32 %v680, %v7166
        %v7221 = vadd.f32 %v681, %v7171
        %v7222 = vadd.f32 %v682, %v7176
        %v7223 = vadd.f32 %v683, %v7181
        %v7224 = vadd.f32 %v684, %v7186
        %v7225 = vadd.f32 %v685, %v7191
        %v7226 = vadd.f32 %v686, %v7196
        %v7227 = vadd.f32 %v687, %v7201
        %v7228 = vadd.f32 %v688, %v7206
        %v7229 = vadd.f32 %v689, %v7211
        %v7230 = vld [vmem:[%s11] sm:$0x1]
        %v7231 = vld [vmem:[%s12] sm:$0x1]
        %7232 = vadd.xlane.f32.xlu0 %v7214
        %v7233 = vpop.xlane.xlu0 %7232
        %7234 = vadd.xlane.f32.xlu0 %v7215
        %v7235 = vpop.xlane.xlu0 %7234
        %7236 = vadd.xlane.f32.xlu0 %v7216
        %v7237 = vpop.xlane.xlu0 %7236
        %7238 = vadd.xlane.f32.xlu0 %v7217
        %v7239 = vpop.xlane.xlu0 %7238
        %7240 = vadd.xlane.f32.xlu0 %v7218
        %v7241 = vpop.xlane.xlu0 %7240
        %7242 = vadd.xlane.f32.xlu0 %v7219
        %v7243 = vpop.xlane.xlu0 %7242
        %7244 = vadd.xlane.f32.xlu0 %v7220
        %v7245 = vpop.xlane.xlu0 %7244
        %7246 = vadd.xlane.f32.xlu0 %v7221
        %v7247 = vpop.xlane.xlu0 %7246
        %7248 = vadd.xlane.f32.xlu0 %v7222
        %v7249 = vpop.xlane.xlu0 %7248
        %7250 = vadd.xlane.f32.xlu0 %v7223
        %v7251 = vpop.xlane.xlu0 %7250
        %7252 = vadd.xlane.f32.xlu0 %v7224
        %v7253 = vpop.xlane.xlu0 %7252
        %7254 = vadd.xlane.f32.xlu0 %v7225
        %v7255 = vpop.xlane.xlu0 %7254
        %7256 = vadd.xlane.f32.xlu0 %v7226
        %v7257 = vpop.xlane.xlu0 %7256
        %7258 = vadd.xlane.f32.xlu0 %v7227
        %v7259 = vpop.xlane.xlu0 %7258
        %7260 = vadd.xlane.f32.xlu0 %v7228
        %v7261 = vpop.xlane.xlu0 %7260
        %7262 = vadd.xlane.f32.xlu0 %v7229
        %v7263 = vpop.xlane.xlu0 %7262
        %v7264 = vmul.f32 %v7233, %v724
        %v7265 = vmul.f32 %v7235, %v724
        %v7266 = vmul.f32 %v7237, %v724
        %v7267 = vmul.f32 %v7239, %v724
        %v7268 = vmul.f32 %v7241, %v724
        %v7269 = vmul.f32 %v7243, %v724
        %v7270 = vmul.f32 %v7245, %v724
        %v7271 = vmul.f32 %v7247, %v724
        %v7272 = vmul.f32 %v7249, %v724
        %v7273 = vmul.f32 %v7251, %v724
        %v7274 = vmul.f32 %v7253, %v724
        %v7275 = vmul.f32 %v7255, %v724
        %v7276 = vmul.f32 %v7257, %v724
        %v7277 = vmul.f32 %v7259, %v724
        %v7278 = vmul.f32 %v7261, %v724
        %v7279 = vmul.f32 %v7263, %v724
        %v7280 = vsub.f32 %v7214, %v7264
        %v7281 = vsub.f32 %v7215, %v7265
        %v7282 = vsub.f32 %v7216, %v7266
        %v7283 = vsub.f32 %v7217, %v7267
        %v7284 = vsub.f32 %v7218, %v7268
        %v7285 = vsub.f32 %v7219, %v7269
        %v7286 = vsub.f32 %v7220, %v7270
        %v7287 = vsub.f32 %v7221, %v7271
        %v7288 = vsub.f32 %v7222, %v7272
        %v7289 = vsub.f32 %v7223, %v7273
        %v7290 = vsub.f32 %v7224, %v7274
        %v7291 = vsub.f32 %v7225, %v7275
        %v7292 = vsub.f32 %v7226, %v7276
        %v7293 = vsub.f32 %v7227, %v7277
        %v7294 = vsub.f32 %v7228, %v7278
        %v7295 = vsub.f32 %v7229, %v7279
        %v7296 = vmul.f32 %v7280, %v7280
        %v7297 = vmul.f32 %v7281, %v7281
        %v7298 = vmul.f32 %v7282, %v7282
        %v7299 = vmul.f32 %v7283, %v7283
        %v7300 = vmul.f32 %v7284, %v7284
        %v7301 = vmul.f32 %v7285, %v7285
        %v7302 = vmul.f32 %v7286, %v7286
        %v7303 = vmul.f32 %v7287, %v7287
        %v7304 = vmul.f32 %v7288, %v7288
        %v7305 = vmul.f32 %v7289, %v7289
        %v7306 = vmul.f32 %v7290, %v7290
        %v7307 = vmul.f32 %v7291, %v7291
        %v7308 = vmul.f32 %v7292, %v7292
        %v7309 = vmul.f32 %v7293, %v7293
        %v7310 = vmul.f32 %v7294, %v7294
        %v7311 = vmul.f32 %v7295, %v7295
        %7312 = vadd.xlane.f32.xlu0 %v7296
        %v7313 = vpop.xlane.xlu0 %7312
        %7314 = vadd.xlane.f32.xlu0 %v7297
        %v7315 = vpop.xlane.xlu0 %7314
        %7316 = vadd.xlane.f32.xlu0 %v7298
        %v7317 = vpop.xlane.xlu0 %7316
        %7318 = vadd.xlane.f32.xlu0 %v7299
        %v7319 = vpop.xlane.xlu0 %7318
        %7320 = vadd.xlane.f32.xlu0 %v7300
        %v7321 = vpop.xlane.xlu0 %7320
        %7322 = vadd.xlane.f32.xlu0 %v7301
        %v7323 = vpop.xlane.xlu0 %7322
        %7324 = vadd.xlane.f32.xlu0 %v7302
        %v7325 = vpop.xlane.xlu0 %7324
        %7326 = vadd.xlane.f32.xlu0 %v7303
        %v7327 = vpop.xlane.xlu0 %7326
        %7328 = vadd.xlane.f32.xlu0 %v7304
        %v7329 = vpop.xlane.xlu0 %7328
        %7330 = vadd.xlane.f32.xlu0 %v7305
        %v7331 = vpop.xlane.xlu0 %7330
        %7332 = vadd.xlane.f32.xlu0 %v7306
        %v7333 = vpop.xlane.xlu0 %7332
        %7334 = vadd.xlane.f32.xlu0 %v7307
        %v7335 = vpop.xlane.xlu0 %7334
        %7336 = vadd.xlane.f32.xlu0 %v7308
        %v7337 = vpop.xlane.xlu0 %7336
        %7338 = vadd.xlane.f32.xlu0 %v7309
        %v7339 = vpop.xlane.xlu0 %7338
        %7340 = vadd.xlane.f32.xlu0 %v7310
        %v7341 = vpop.xlane.xlu0 %7340
        %7342 = vadd.xlane.f32.xlu0 %v7311
        %v7343 = vpop.xlane.xlu0 %7342
        %v7344 = vmul.f32 %v7313, %v724
        %v7345 = vmul.f32 %v7315, %v724
        %v7346 = vmul.f32 %v7317, %v724
        %v7347 = vmul.f32 %v7319, %v724
        %v7348 = vmul.f32 %v7321, %v724
        %v7349 = vmul.f32 %v7323, %v724
        %v7350 = vmul.f32 %v7325, %v724
        %v7351 = vmul.f32 %v7327, %v724
        %v7352 = vmul.f32 %v7329, %v724
        %v7353 = vmul.f32 %v7331, %v724
        %v7354 = vmul.f32 %v7333, %v724
        %v7355 = vmul.f32 %v7335, %v724
        %v7356 = vmul.f32 %v7337, %v724
        %v7357 = vmul.f32 %v7339, %v724
        %v7358 = vmul.f32 %v7341, %v724
        %v7359 = vmul.f32 %v7343, %v724
        %v7360 = vadd.f32 %v7344, 1e-05
        %v7361 = vadd.f32 %v7345, 1e-05
        %v7362 = vadd.f32 %v7346, 1e-05
        %v7363 = vadd.f32 %v7347, 1e-05
        %v7364 = vadd.f32 %v7348, 1e-05
        %v7365 = vadd.f32 %v7349, 1e-05
        %v7366 = vadd.f32 %v7350, 1e-05
        %v7367 = vadd.f32 %v7351, 1e-05
        %v7368 = vadd.f32 %v7352, 1e-05
        %v7369 = vadd.f32 %v7353, 1e-05
        %v7370 = vadd.f32 %v7354, 1e-05
        %v7371 = vadd.f32 %v7355, 1e-05
        %v7372 = vadd.f32 %v7356, 1e-05
        %v7373 = vadd.f32 %v7357, 1e-05
        %v7374 = vadd.f32 %v7358, 1e-05
        %v7375 = vadd.f32 %v7359, 1e-05
        %v7376 = vrsqrt.pop %v7360
        %v7377 = vrsqrt.pop %v7361
        %v7378 = vrsqrt.pop %v7362
        %v7379 = vrsqrt.pop %v7363
        %v7380 = vrsqrt.pop %v7364
        %v7381 = vrsqrt.pop %v7365
        %v7382 = vrsqrt.pop %v7366
        %v7383 = vrsqrt.pop %v7367
        %v7384 = vrsqrt.pop %v7368
        %v7385 = vrsqrt.pop %v7369
        %v7386 = vrsqrt.pop %v7370
        %v7387 = vrsqrt.pop %v7371
        %v7388 = vrsqrt.pop %v7372
        %v7389 = vrsqrt.pop %v7373
        %v7390 = vrsqrt.pop %v7374
        %v7391 = vrsqrt.pop %v7375
        %v7392 = vmul.f32 %v7280, %v7376
        %v7393 = vmul.f32 %v7281, %v7377
        %v7394 = vmul.f32 %v7282, %v7378
        %v7395 = vmul.f32 %v7283, %v7379
        %v7396 = vmul.f32 %v7284, %v7380
        %v7397 = vmul.f32 %v7285, %v7381
        %v7398 = vmul.f32 %v7286, %v7382
        %v7399 = vmul.f32 %v7287, %v7383
        %v7400 = vmul.f32 %v7288, %v7384
        %v7401 = vmul.f32 %v7289, %v7385
        %v7402 = vmul.f32 %v7290, %v7386
        %v7403 = vmul.f32 %v7291, %v7387
        %v7404 = vmul.f32 %v7292, %v7388
        %v7405 = vmul.f32 %v7293, %v7389
        %v7406 = vmul.f32 %v7294, %v7390
        %v7407 = vmul.f32 %v7295, %v7391
        %v7409 = vlaneseq
        %v7410 = vshrl.u32 %v7409, 7
        %v7411 = vsub.s32 0, %v7410
        %v7412 = vrot.slane %v7230, %v7411
        %v7414 = vmul.f32 %v7392, %v7412
        %v7415 = vmul.f32 %v7393, %v7412
        %v7416 = vmul.f32 %v7394, %v7412
        %v7417 = vmul.f32 %v7395, %v7412
        %v7418 = vmul.f32 %v7396, %v7412
        %v7419 = vmul.f32 %v7397, %v7412
        %v7420 = vmul.f32 %v7398, %v7412
        %v7421 = vmul.f32 %v7399, %v7412
        %v7422 = vmul.f32 %v7400, %v7412
        %v7423 = vmul.f32 %v7401, %v7412
        %v7424 = vmul.f32 %v7402, %v7412
        %v7425 = vmul.f32 %v7403, %v7412
        %v7426 = vmul.f32 %v7404, %v7412
        %v7427 = vmul.f32 %v7405, %v7412
        %v7428 = vmul.f32 %v7406, %v7412
        %v7429 = vmul.f32 %v7407, %v7412
        %v7431 = vlaneseq
        %v7432 = vshrl.u32 %v7431, 7
        %v7433 = vsub.s32 0, %v7432
        %v7434 = vrot.slane %v7231, %v7433
        %v7436 = vadd.f32 %v7414, %v7434
        %v7437 = vadd.f32 %v7415, %v7434
        %v7438 = vadd.f32 %v7416, %v7434
        %v7439 = vadd.f32 %v7417, %v7434
        %v7440 = vadd.f32 %v7418, %v7434
        %v7441 = vadd.f32 %v7419, %v7434
        %v7442 = vadd.f32 %v7420, %v7434
        %v7443 = vadd.f32 %v7421, %v7434
        %v7444 = vadd.f32 %v7422, %v7434
        %v7445 = vadd.f32 %v7423, %v7434
        %v7446 = vadd.f32 %v7424, %v7434
        %v7447 = vadd.f32 %v7425, %v7434
        %v7448 = vadd.f32 %v7426, %v7434
        %v7449 = vadd.f32 %v7427, %v7434
        %v7450 = vadd.f32 %v7428, %v7434
        %v7451 = vadd.f32 %v7429, %v7434
        %v7452 = vld [vmem:[#allocation18] sm:$0xff]
        %v7453 = vld [vmem:[#allocation18 + $0x8] sm:$0xff]
        %v7454 = vld [vmem:[#allocation18 + $0x10] sm:$0xff]
        %v7455 = vld [vmem:[#allocation18 + $0x18] sm:$0xff]
        %v7456 = vld [vmem:[#allocation18 + $0x20] sm:$0xff]
        %v7457 = vld [vmem:[#allocation18 + $0x28] sm:$0xff]
        %v7458 = vld [vmem:[#allocation18 + $0x30] sm:$0xff]
        %v7459 = vld [vmem:[#allocation18 + $0x38] sm:$0xff]
        %v7460 = vld [vmem:[#allocation18 + $0x40] sm:$0xff]
        %v7461 = vld [vmem:[#allocation18 + $0x48] sm:$0xff]
        %v7462 = vld [vmem:[#allocation18 + $0x50] sm:$0xff]
        %v7463 = vld [vmem:[#allocation18 + $0x58] sm:$0xff]
        %v7464 = vld [vmem:[#allocation18 + $0x60] sm:$0xff]
        %v7465 = vld [vmem:[#allocation18 + $0x68] sm:$0xff]
        %v7466 = vld [vmem:[#allocation18 + $0x70] sm:$0xff]
        %v7467 = vld [vmem:[#allocation18 + $0x78] sm:$0xff]
        %v7468 = vld [vmem:[#allocation18 + $0x80] sm:$0xff]
        %v7469 = vld [vmem:[#allocation18 + $0x88] sm:$0xff]
        %v7470 = vld [vmem:[#allocation18 + $0x90] sm:$0xff]
        %v7471 = vld [vmem:[#allocation18 + $0x98] sm:$0xff]
        %v7472 = vld [vmem:[#allocation18 + $0xa0] sm:$0xff]
        %v7473 = vld [vmem:[#allocation18 + $0xa8] sm:$0xff]
        %v7474 = vld [vmem:[#allocation18 + $0xb0] sm:$0xff]
        %v7475 = vld [vmem:[#allocation18 + $0xb8] sm:$0xff]
        %v7476 = vld [vmem:[#allocation18 + $0xc0] sm:$0xff]
        %v7477 = vld [vmem:[#allocation18 + $0xc8] sm:$0xff]
        %v7478 = vld [vmem:[#allocation18 + $0xd0] sm:$0xff]
        %v7479 = vld [vmem:[#allocation18 + $0xd8] sm:$0xff]
        %v7480 = vld [vmem:[#allocation18 + $0xe0] sm:$0xff]
        %v7481 = vld [vmem:[#allocation18 + $0xe8] sm:$0xff]
        %v7482 = vld [vmem:[#allocation18 + $0xf0] sm:$0xff]
        %v7483 = vld [vmem:[#allocation18 + $0xf8] sm:$0xff]
        %v7484 = vld [vmem:[#allocation18 + $0x100] sm:$0xff]
        %v7485 = vld [vmem:[#allocation18 + $0x108] sm:$0xff]
        %v7486 = vld [vmem:[#allocation18 + $0x110] sm:$0xff]
        %v7487 = vld [vmem:[#allocation18 + $0x118] sm:$0xff]
        %v7488 = vld [vmem:[#allocation18 + $0x120] sm:$0xff]
        %v7489 = vld [vmem:[#allocation18 + $0x128] sm:$0xff]
        %v7490 = vld [vmem:[#allocation18 + $0x130] sm:$0xff]
        %v7491 = vld [vmem:[#allocation18 + $0x138] sm:$0xff]
        %v7492 = vld [vmem:[#allocation18 + $0x140] sm:$0xff]
        %v7493 = vld [vmem:[#allocation18 + $0x148] sm:$0xff]
        %v7494 = vld [vmem:[#allocation18 + $0x150] sm:$0xff]
        %v7495 = vld [vmem:[#allocation18 + $0x158] sm:$0xff]
        %v7496 = vld [vmem:[#allocation18 + $0x160] sm:$0xff]
        %v7497 = vld [vmem:[#allocation18 + $0x168] sm:$0xff]
        %v7498 = vld [vmem:[#allocation18 + $0x170] sm:$0xff]
        %v7499 = vld [vmem:[#allocation18 + $0x178] sm:$0xff]
        %v7500 = vld [vmem:[#allocation18 + $0x180] sm:$0xff]
        %v7501 = vld [vmem:[#allocation18 + $0x188] sm:$0xff]
        %v7502 = vld [vmem:[#allocation18 + $0x190] sm:$0xff]
        %v7503 = vld [vmem:[#allocation18 + $0x198] sm:$0xff]
        %v7504 = vld [vmem:[#allocation18 + $0x1a0] sm:$0xff]
        %v7505 = vld [vmem:[#allocation18 + $0x1a8] sm:$0xff]
        %v7506 = vld [vmem:[#allocation18 + $0x1b0] sm:$0xff]
        %v7507 = vld [vmem:[#allocation18 + $0x1b8] sm:$0xff]
        %v7508 = vld [vmem:[#allocation18 + $0x1c0] sm:$0xff]
        %v7509 = vld [vmem:[#allocation18 + $0x1c8] sm:$0xff]
        %v7510 = vld [vmem:[#allocation18 + $0x1d0] sm:$0xff]
        %v7511 = vld [vmem:[#allocation18 + $0x1d8] sm:$0xff]
        %v7512 = vld [vmem:[#allocation18 + $0x1e0] sm:$0xff]
        %v7513 = vld [vmem:[#allocation18 + $0x1e8] sm:$0xff]
        %v7514 = vld [vmem:[#allocation18 + $0x1f0] sm:$0xff]
        %v7515 = vld [vmem:[#allocation18 + $0x1f8] sm:$0xff]
        %v7516 = vld [vmem:[%s14] sm:$0xf]
        %v7518 = vlaneseq
        %v7519 = vshrl.u32 %v7518, 7
        %v7520 = vsub.s32 0, %v7519
        %v7521 = vrot.slane %v7516, %v7520
        %v7522 = vlaneseq
        %v7523 = vshrl.u32 %v7522, 7
        %v7524 = vsub.s32 1, %v7523
        %v7525 = vrot.slane %v7516, %v7524
        %v7526 = vlaneseq
        %v7527 = vshrl.u32 %v7526, 7
        %v7528 = vsub.s32 2, %v7527
        %v7529 = vrot.slane %v7516, %v7528
        %v7530 = vlaneseq
        %v7531 = vshrl.u32 %v7530, 7
        %v7532 = vsub.s32 3, %v7531
        %v7533 = vrot.slane %v7516, %v7532
        %7538 = vmatprep.subr.mxu0 %v7513
        %7539 = vmatpush1.msra.mxu0 %v7512
        %7540 = vmatprep.subr.mxu0 %v7509
        %7541 = vmatpush1.msra.mxu0 %v7508
        %7542 = vmatprep.subr.mxu0 %v7505
        %7543 = vmatpush1.msra.mxu0 %v7504
        %7544 = vmatprep.subr.mxu0 %v7501
        %7545 = vmatpush1.msra.mxu0 %v7500
        %7546 = vmatprep.subr.mxu0 %v7497
        %7547 = vmatpush1.msra.mxu0 %v7496
        %7548 = vmatprep.subr.mxu0 %v7493
        %7549 = vmatpush1.msra.mxu0 %v7492
        %7550 = vmatprep.subr.mxu0 %v7489
        %7551 = vmatpush1.msra.mxu0 %v7488
        %7552 = vmatprep.subr.mxu0 %v7485
        %7553 = vmatpush1.msra.mxu0 %v7484
        %7554 = vmatprep.subr.mxu0 %v7481
        %7555 = vmatpush1.msra.mxu0 %v7480
        %7556 = vmatprep.subr.mxu0 %v7477
        %7557 = vmatpush1.msra.mxu0 %v7476
        %7558 = vmatprep.subr.mxu0 %v7473
        %7559 = vmatpush1.msra.mxu0 %v7472
        %7560 = vmatprep.subr.mxu0 %v7469
        %7561 = vmatpush1.msra.mxu0 %v7468
        %7562 = vmatprep.subr.mxu0 %v7465
        %7563 = vmatpush1.msra.mxu0 %v7464
        %7564 = vmatprep.subr.mxu0 %v7461
        %7565 = vmatpush1.msra.mxu0 %v7460
        %7566 = vmatprep.subr.mxu0 %v7457
        %7567 = vmatpush1.msra.mxu0 %v7456
        %7568 = vmatprep.subr.mxu0 %v7453
        %7569 = vmatpush1.msra.mxu0 %v7452
        %7570 = vmatprep.subr.mxu0 0.0
        %7571 = vmatpush2.msra.mxu0 0.0
        %7572 = vmatprep.subr.mxu0 0.0
        %7573 = vmatpush2.msra.mxu0 0.0
        %7574 = vmatprep.subr.mxu0 0.0
        %7575 = vmatpush2.msra.mxu0 0.0
        %7576 = vmatprep.subr.mxu0 0.0
        %7577 = vmatpush2.msra.mxu0 0.0
        %7578 = vmatprep.subr.mxu0 0.0
        %7579 = vmatpush2.msra.mxu0 0.0
        %7580 = vmatprep.subr.mxu0 0.0
        %7581 = vmatpush2.msra.mxu0 0.0
        %7582 = vmatprep.subr.mxu0 0.0
        %7583 = vmatpush2.msra.mxu0 0.0
        %7584 = vmatprep.subr.mxu0 0.0
        %7585 = vmatpush2.msra.mxu0 0.0
        %7586 = vmatprep.subr.mxu0 0.0
        %7587 = vmatpush2.msra.mxu0 0.0
        %7588 = vmatprep.subr.mxu0 0.0
        %7589 = vmatpush2.msra.mxu0 0.0
        %7590 = vmatprep.subr.mxu0 0.0
        %7591 = vmatpush2.msra.mxu0 0.0
        %7592 = vmatprep.subr.mxu0 0.0
        %7593 = vmatpush2.msra.mxu0 0.0
        %7594 = vmatprep.subr.mxu0 0.0
        %7595 = vmatpush2.msra.mxu0 0.0
        %7596 = vmatprep.subr.mxu0 0.0
        %7597 = vmatpush2.msra.mxu0 0.0
        %7598 = vmatprep.subr.mxu0 0.0
        %7599 = vmatpush2.msra.mxu0 0.0
        %7600 = vmatprep.subr.mxu0 0.0
        %7601 = vmatpush2.msra.mxu0 0.0
        %7602 = vmatprep.mubr.f32.mxu0 0.0
        %7603 = vmatmul.mubr.f32.gmra.mxu0 %v7436
        %v7604 = vpop.f32.mrf.mxu0
        %v7605 = vadd.f32 %v7521, %v7604
        %v7606 = vpop.f32.mrf.mxu0
        %v7607 = vadd.f32 %v7525, %v7606
        %7608 = vmatprep.mubr.f32.mxu0 0.0
        %7609 = vmatmul.mubr.f32.gmra.mxu0 %v7437
        %v7610 = vpop.f32.mrf.mxu0
        %v7611 = vadd.f32 %v7521, %v7610
        %v7612 = vpop.f32.mrf.mxu0
        %v7613 = vadd.f32 %v7525, %v7612
        %7614 = vmatprep.mubr.f32.mxu0 0.0
        %7615 = vmatmul.mubr.f32.gmra.mxu0 %v7438
        %v7616 = vpop.f32.mrf.mxu0
        %v7617 = vadd.f32 %v7521, %v7616
        %v7618 = vpop.f32.mrf.mxu0
        %v7619 = vadd.f32 %v7525, %v7618
        %7620 = vmatprep.mubr.f32.mxu0 0.0
        %7621 = vmatmul.mubr.f32.gmra.mxu0 %v7439
        %v7622 = vpop.f32.mrf.mxu0
        %v7623 = vadd.f32 %v7521, %v7622
        %v7624 = vpop.f32.mrf.mxu0
        %v7625 = vadd.f32 %v7525, %v7624
        %7626 = vmatprep.mubr.f32.mxu0 0.0
        %7627 = vmatmul.mubr.f32.gmra.mxu0 %v7440
        %v7628 = vpop.f32.mrf.mxu0
        %v7629 = vadd.f32 %v7521, %v7628
        %v7630 = vpop.f32.mrf.mxu0
        %v7631 = vadd.f32 %v7525, %v7630
        %7632 = vmatprep.mubr.f32.mxu0 0.0
        %7633 = vmatmul.mubr.f32.gmra.mxu0 %v7441
        %v7634 = vpop.f32.mrf.mxu0
        %v7635 = vadd.f32 %v7521, %v7634
        %v7636 = vpop.f32.mrf.mxu0
        %v7637 = vadd.f32 %v7525, %v7636
        %7638 = vmatprep.mubr.f32.mxu0 0.0
        %7639 = vmatmul.mubr.f32.gmra.mxu0 %v7442
        %v7640 = vpop.f32.mrf.mxu0
        %v7641 = vadd.f32 %v7521, %v7640
        %v7642 = vpop.f32.mrf.mxu0
        %v7643 = vadd.f32 %v7525, %v7642
        %7644 = vmatprep.mubr.f32.mxu0 0.0
        %7645 = vmatmul.mubr.f32.gmra.mxu0 %v7443
        %v7646 = vpop.f32.mrf.mxu0
        %v7647 = vadd.f32 %v7521, %v7646
        %v7648 = vpop.f32.mrf.mxu0
        %v7649 = vadd.f32 %v7525, %v7648
        %7650 = vmatprep.mubr.f32.mxu0 0.0
        %7651 = vmatmul.mubr.f32.gmra.mxu0 %v7444
        %v7652 = vpop.f32.mrf.mxu0
        %v7653 = vadd.f32 %v7521, %v7652
        %v7654 = vpop.f32.mrf.mxu0
        %v7655 = vadd.f32 %v7525, %v7654
        %7656 = vmatprep.mubr.f32.mxu0 0.0
        %7657 = vmatmul.mubr.f32.gmra.mxu0 %v7445
        %v7658 = vpop.f32.mrf.mxu0
        %v7659 = vadd.f32 %v7521, %v7658
        %v7660 = vpop.f32.mrf.mxu0
        %v7661 = vadd.f32 %v7525, %v7660
        %7662 = vmatprep.mubr.f32.mxu0 0.0
        %7663 = vmatmul.mubr.f32.gmra.mxu0 %v7446
        %v7664 = vpop.f32.mrf.mxu0
        %v7665 = vadd.f32 %v7521, %v7664
        %v7666 = vpop.f32.mrf.mxu0
        %v7667 = vadd.f32 %v7525, %v7666
        %7668 = vmatprep.mubr.f32.mxu0 0.0
        %7669 = vmatmul.mubr.f32.gmra.mxu0 %v7447
        %v7670 = vpop.f32.mrf.mxu0
        %v7671 = vadd.f32 %v7521, %v7670
        %v7672 = vpop.f32.mrf.mxu0
        %v7673 = vadd.f32 %v7525, %v7672
        %7674 = vmatprep.mubr.f32.mxu0 0.0
        %7675 = vmatmul.mubr.f32.gmra.mxu0 %v7448
        %v7676 = vpop.f32.mrf.mxu0
        %v7677 = vadd.f32 %v7521, %v7676
        %v7678 = vpop.f32.mrf.mxu0
        %v7679 = vadd.f32 %v7525, %v7678
        %7680 = vmatprep.mubr.f32.mxu0 0.0
        %7681 = vmatmul.mubr.f32.gmra.mxu0 %v7449
        %v7682 = vpop.f32.mrf.mxu0
        %v7683 = vadd.f32 %v7521, %v7682
        %v7684 = vpop.f32.mrf.mxu0
        %v7685 = vadd.f32 %v7525, %v7684
        %7686 = vmatprep.mubr.f32.mxu0 0.0
        %7687 = vmatmul.mubr.f32.gmra.mxu0 %v7450
        %v7688 = vpop.f32.mrf.mxu0
        %v7689 = vadd.f32 %v7521, %v7688
        %v7690 = vpop.f32.mrf.mxu0
        %v7691 = vadd.f32 %v7525, %v7690
        %7692 = vmatprep.mubr.f32.mxu0 0.0
        %7693 = vmatmul.mubr.f32.gmra.mxu0 %v7451
        %v7694 = vpop.f32.mrf.mxu0
        %v7695 = vadd.f32 %v7521, %v7694
        %v7696 = vpop.f32.mrf.mxu0
        %v7697 = vadd.f32 %v7525, %v7696
        %7698 = vdwg.mxu0
        %7699 = vmatprep.subr.mxu0 %v7515
        %7700 = vmatpush1.msra.mxu0 %v7514
        %7701 = vmatprep.subr.mxu0 %v7511
        %7702 = vmatpush1.msra.mxu0 %v7510
        %7703 = vmatprep.subr.mxu0 %v7507
        %7704 = vmatpush1.msra.mxu0 %v7506
        %7705 = vmatprep.subr.mxu0 %v7503
        %7706 = vmatpush1.msra.mxu0 %v7502
        %7707 = vmatprep.subr.mxu0 %v7499
        %7708 = vmatpush1.msra.mxu0 %v7498
        %7709 = vmatprep.subr.mxu0 %v7495
        %7710 = vmatpush1.msra.mxu0 %v7494
        %7711 = vmatprep.subr.mxu0 %v7491
        %7712 = vmatpush1.msra.mxu0 %v7490
        %7713 = vmatprep.subr.mxu0 %v7487
        %7714 = vmatpush1.msra.mxu0 %v7486
        %7715 = vmatprep.subr.mxu0 %v7483
        %7716 = vmatpush1.msra.mxu0 %v7482
        %7717 = vmatprep.subr.mxu0 %v7479
        %7718 = vmatpush1.msra.mxu0 %v7478
        %7719 = vmatprep.subr.mxu0 %v7475
        %7720 = vmatpush1.msra.mxu0 %v7474
        %7721 = vmatprep.subr.mxu0 %v7471
        %7722 = vmatpush1.msra.mxu0 %v7470
        %7723 = vmatprep.subr.mxu0 %v7467
        %7724 = vmatpush1.msra.mxu0 %v7466
        %7725 = vmatprep.subr.mxu0 %v7463
        %7726 = vmatpush1.msra.mxu0 %v7462
        %7727 = vmatprep.subr.mxu0 %v7459
        %7728 = vmatpush1.msra.mxu0 %v7458
        %7729 = vmatprep.subr.mxu0 %v7455
        %7730 = vmatpush1.msra.mxu0 %v7454
        %7731 = vmatprep.subr.mxu0 0.0
        %7732 = vmatpush2.msra.mxu0 0.0
        %7733 = vmatprep.subr.mxu0 0.0
        %7734 = vmatpush2.msra.mxu0 0.0
        %7735 = vmatprep.subr.mxu0 0.0
        %7736 = vmatpush2.msra.mxu0 0.0
        %7737 = vmatprep.subr.mxu0 0.0
        %7738 = vmatpush2.msra.mxu0 0.0
        %7739 = vmatprep.subr.mxu0 0.0
        %7740 = vmatpush2.msra.mxu0 0.0
        %7741 = vmatprep.subr.mxu0 0.0
        %7742 = vmatpush2.msra.mxu0 0.0
        %7743 = vmatprep.subr.mxu0 0.0
        %7744 = vmatpush2.msra.mxu0 0.0
        %7745 = vmatprep.subr.mxu0 0.0
        %7746 = vmatpush2.msra.mxu0 0.0
        %7747 = vmatprep.subr.mxu0 0.0
        %7748 = vmatpush2.msra.mxu0 0.0
        %7749 = vmatprep.subr.mxu0 0.0
        %7750 = vmatpush2.msra.mxu0 0.0
        %7751 = vmatprep.subr.mxu0 0.0
        %7752 = vmatpush2.msra.mxu0 0.0
        %7753 = vmatprep.subr.mxu0 0.0
        %7754 = vmatpush2.msra.mxu0 0.0
        %7755 = vmatprep.subr.mxu0 0.0
        %7756 = vmatpush2.msra.mxu0 0.0
        %7757 = vmatprep.subr.mxu0 0.0
        %7758 = vmatpush2.msra.mxu0 0.0
        %7759 = vmatprep.subr.mxu0 0.0
        %7760 = vmatpush2.msra.mxu0 0.0
        %7761 = vmatprep.subr.mxu0 0.0
        %7762 = vmatpush2.msra.mxu0 0.0
        %7763 = vmatprep.mubr.f32.mxu0 0.0
        %7764 = vmatmul.mubr.f32.gmra.mxu0 %v7436
        %v7765 = vpop.f32.mrf.mxu0
        %v7766 = vadd.f32 %v7529, %v7765
        %v7767 = vpop.f32.mrf.mxu0
        %v7768 = vadd.f32 %v7533, %v7767
        %7769 = vmatprep.mubr.f32.mxu0 0.0
        %7770 = vmatmul.mubr.f32.gmra.mxu0 %v7437
        %v7771 = vpop.f32.mrf.mxu0
        %v7772 = vadd.f32 %v7529, %v7771
        %v7773 = vpop.f32.mrf.mxu0
        %v7774 = vadd.f32 %v7533, %v7773
        %7775 = vmatprep.mubr.f32.mxu0 0.0
        %7776 = vmatmul.mubr.f32.gmra.mxu0 %v7438
        %v7777 = vpop.f32.mrf.mxu0
        %v7778 = vadd.f32 %v7529, %v7777
        %v7779 = vpop.f32.mrf.mxu0
        %v7780 = vadd.f32 %v7533, %v7779
        %7781 = vmatprep.mubr.f32.mxu0 0.0
        %7782 = vmatmul.mubr.f32.gmra.mxu0 %v7439
        %v7783 = vpop.f32.mrf.mxu0
        %v7784 = vadd.f32 %v7529, %v7783
        %v7785 = vpop.f32.mrf.mxu0
        %v7786 = vadd.f32 %v7533, %v7785
        %7787 = vmatprep.mubr.f32.mxu0 0.0
        %7788 = vmatmul.mubr.f32.gmra.mxu0 %v7440
        %v7789 = vpop.f32.mrf.mxu0
        %v7790 = vadd.f32 %v7529, %v7789
        %v7791 = vpop.f32.mrf.mxu0
        %v7792 = vadd.f32 %v7533, %v7791
        %7793 = vmatprep.mubr.f32.mxu0 0.0
        %7794 = vmatmul.mubr.f32.gmra.mxu0 %v7441
        %v7795 = vpop.f32.mrf.mxu0
        %v7796 = vadd.f32 %v7529, %v7795
        %v7797 = vpop.f32.mrf.mxu0
        %v7798 = vadd.f32 %v7533, %v7797
        %7799 = vmatprep.mubr.f32.mxu0 0.0
        %7800 = vmatmul.mubr.f32.gmra.mxu0 %v7442
        %v7801 = vpop.f32.mrf.mxu0
        %v7802 = vadd.f32 %v7529, %v7801
        %v7803 = vpop.f32.mrf.mxu0
        %v7804 = vadd.f32 %v7533, %v7803
        %7805 = vmatprep.mubr.f32.mxu0 0.0
        %7806 = vmatmul.mubr.f32.gmra.mxu0 %v7443
        %v7807 = vpop.f32.mrf.mxu0
        %v7808 = vadd.f32 %v7529, %v7807
        %v7809 = vpop.f32.mrf.mxu0
        %v7810 = vadd.f32 %v7533, %v7809
        %7811 = vmatprep.mubr.f32.mxu0 0.0
        %7812 = vmatmul.mubr.f32.gmra.mxu0 %v7444
        %v7813 = vpop.f32.mrf.mxu0
        %v7814 = vadd.f32 %v7529, %v7813
        %v7815 = vpop.f32.mrf.mxu0
        %v7816 = vadd.f32 %v7533, %v7815
        %7817 = vmatprep.mubr.f32.mxu0 0.0
        %7818 = vmatmul.mubr.f32.gmra.mxu0 %v7445
        %v7819 = vpop.f32.mrf.mxu0
        %v7820 = vadd.f32 %v7529, %v7819
        %v7821 = vpop.f32.mrf.mxu0
        %v7822 = vadd.f32 %v7533, %v7821
        %7823 = vmatprep.mubr.f32.mxu0 0.0
        %7824 = vmatmul.mubr.f32.gmra.mxu0 %v7446
        %v7825 = vpop.f32.mrf.mxu0
        %v7826 = vadd.f32 %v7529, %v7825
        %v7827 = vpop.f32.mrf.mxu0
        %v7828 = vadd.f32 %v7533, %v7827
        %7829 = vmatprep.mubr.f32.mxu0 0.0
        %7830 = vmatmul.mubr.f32.gmra.mxu0 %v7447
        %v7831 = vpop.f32.mrf.mxu0
        %v7832 = vadd.f32 %v7529, %v7831
        %v7833 = vpop.f32.mrf.mxu0
        %v7834 = vadd.f32 %v7533, %v7833
        %7835 = vmatprep.mubr.f32.mxu0 0.0
        %7836 = vmatmul.mubr.f32.gmra.mxu0 %v7448
        %v7837 = vpop.f32.mrf.mxu0
        %v7838 = vadd.f32 %v7529, %v7837
        %v7839 = vpop.f32.mrf.mxu0
        %v7840 = vadd.f32 %v7533, %v7839
        %7841 = vmatprep.mubr.f32.mxu0 0.0
        %7842 = vmatmul.mubr.f32.gmra.mxu0 %v7449
        %v7843 = vpop.f32.mrf.mxu0
        %v7844 = vadd.f32 %v7529, %v7843
        %v7845 = vpop.f32.mrf.mxu0
        %v7846 = vadd.f32 %v7533, %v7845
        %7847 = vmatprep.mubr.f32.mxu0 0.0
        %7848 = vmatmul.mubr.f32.gmra.mxu0 %v7450
        %v7849 = vpop.f32.mrf.mxu0
        %v7850 = vadd.f32 %v7529, %v7849
        %v7851 = vpop.f32.mrf.mxu0
        %v7852 = vadd.f32 %v7533, %v7851
        %7853 = vmatprep.mubr.f32.mxu0 0.0
        %7854 = vmatmul.mubr.f32.gmra.mxu0 %v7451
        %v7855 = vpop.f32.mrf.mxu0
        %v7856 = vadd.f32 %v7529, %v7855
        %v7857 = vpop.f32.mrf.mxu0
        %v7858 = vadd.f32 %v7533, %v7857
        %7859 = vdwg.mxu0
        %v7860 = vmul.f32 %v7605, 0.5
        %v7861 = vmul.f32 %v7607, 0.5
        %v7862 = vmul.f32 %v7766, 0.5
        %v7863 = vmul.f32 %v7768, 0.5
        %v7864 = vmul.f32 %v7611, 0.5
        %v7865 = vmul.f32 %v7613, 0.5
        %v7866 = vmul.f32 %v7772, 0.5
        %v7867 = vmul.f32 %v7774, 0.5
        %v7868 = vmul.f32 %v7617, 0.5
        %v7869 = vmul.f32 %v7619, 0.5
        %v7870 = vmul.f32 %v7778, 0.5
        %v7871 = vmul.f32 %v7780, 0.5
        %v7872 = vmul.f32 %v7623, 0.5
        %v7873 = vmul.f32 %v7625, 0.5
        %v7874 = vmul.f32 %v7784, 0.5
        %v7875 = vmul.f32 %v7786, 0.5
        %v7876 = vmul.f32 %v7629, 0.5
        %v7877 = vmul.f32 %v7631, 0.5
        %v7878 = vmul.f32 %v7790, 0.5
        %v7879 = vmul.f32 %v7792, 0.5
        %v7880 = vmul.f32 %v7635, 0.5
        %v7881 = vmul.f32 %v7637, 0.5
        %v7882 = vmul.f32 %v7796, 0.5
        %v7883 = vmul.f32 %v7798, 0.5
        %v7884 = vmul.f32 %v7641, 0.5
        %v7885 = vmul.f32 %v7643, 0.5
        %v7886 = vmul.f32 %v7802, 0.5
        %v7887 = vmul.f32 %v7804, 0.5
        %v7888 = vmul.f32 %v7647, 0.5
        %v7889 = vmul.f32 %v7649, 0.5
        %v7890 = vmul.f32 %v7808, 0.5
        %v7891 = vmul.f32 %v7810, 0.5
        %v7892 = vmul.f32 %v7653, 0.5
        %v7893 = vmul.f32 %v7655, 0.5
        %v7894 = vmul.f32 %v7814, 0.5
        %v7895 = vmul.f32 %v7816, 0.5
        %v7896 = vmul.f32 %v7659, 0.5
        %v7897 = vmul.f32 %v7661, 0.5
        %v7898 = vmul.f32 %v7820, 0.5
        %v7899 = vmul.f32 %v7822, 0.5
        %v7900 = vmul.f32 %v7665, 0.5
        %v7901 = vmul.f32 %v7667, 0.5
        %v7902 = vmul.f32 %v7826, 0.5
        %v7903 = vmul.f32 %v7828, 0.5
        %v7904 = vmul.f32 %v7671, 0.5
        %v7905 = vmul.f32 %v7673, 0.5
        %v7906 = vmul.f32 %v7832, 0.5
        %v7907 = vmul.f32 %v7834, 0.5
        %v7908 = vmul.f32 %v7677, 0.5
        %v7909 = vmul.f32 %v7679, 0.5
        %v7910 = vmul.f32 %v7838, 0.5
        %v7911 = vmul.f32 %v7840, 0.5
        %v7912 = vmul.f32 %v7683, 0.5
        %v7913 = vmul.f32 %v7685, 0.5
        %v7914 = vmul.f32 %v7844, 0.5
        %v7915 = vmul.f32 %v7846, 0.5
        %v7916 = vmul.f32 %v7689, 0.5
        %v7917 = vmul.f32 %v7691, 0.5
        %v7918 = vmul.f32 %v7850, 0.5
        %v7919 = vmul.f32 %v7852, 0.5
        %v7920 = vmul.f32 %v7695, 0.5
        %v7921 = vmul.f32 %v7697, 0.5
        %v7922 = vmul.f32 %v7856, 0.5
        %v7923 = vmul.f32 %v7858, 0.5
        %v7924 = vmul.f32 %v7605, 0.044715
        %v7925 = vmul.f32 %v7607, 0.044715
        %v7926 = vmul.f32 %v7766, 0.044715
        %v7927 = vmul.f32 %v7768, 0.044715
        %v7928 = vmul.f32 %v7611, 0.044715
        %v7929 = vmul.f32 %v7613, 0.044715
        %v7930 = vmul.f32 %v7772, 0.044715
        %v7931 = vmul.f32 %v7774, 0.044715
        %v7932 = vmul.f32 %v7617, 0.044715
        %v7933 = vmul.f32 %v7619, 0.044715
        %v7934 = vmul.f32 %v7778, 0.044715
        %v7935 = vmul.f32 %v7780, 0.044715
        %v7936 = vmul.f32 %v7623, 0.044715
        %v7937 = vmul.f32 %v7625, 0.044715
        %v7938 = vmul.f32 %v7784, 0.044715
        %v7939 = vmul.f32 %v7786, 0.044715
        %v7940 = vmul.f32 %v7629, 0.044715
        %v7941 = vmul.f32 %v7631, 0.044715
        %v7942 = vmul.f32 %v7790, 0.044715
        %v7943 = vmul.f32 %v7792, 0.044715
        %v7944 = vmul.f32 %v7635, 0.044715
        %v7945 = vmul.f32 %v7637, 0.044715
        %v7946 = vmul.f32 %v7796, 0.044715
        %v7947 = vmul.f32 %v7798, 0.044715
        %v7948 = vmul.f32 %v7641, 0.044715
        %v7949 = vmul.f32 %v7643, 0.044715
        %v7950 = vmul.f32 %v7802, 0.044715
        %v7951 = vmul.f32 %v7804, 0.044715
        %v7952 = vmul.f32 %v7647, 0.044715
        %v7953 = vmul.f32 %v7649, 0.044715
        %v7954 = vmul.f32 %v7808, 0.044715
        %v7955 = vmul.f32 %v7810, 0.044715
        %v7956 = vmul.f32 %v7653, 0.044715
        %v7957 = vmul.f32 %v7655, 0.044715
        %v7958 = vmul.f32 %v7814, 0.044715
        %v7959 = vmul.f32 %v7816, 0.044715
        %v7960 = vmul.f32 %v7659, 0.044715
        %v7961 = vmul.f32 %v7661, 0.044715
        %v7962 = vmul.f32 %v7820, 0.044715
        %v7963 = vmul.f32 %v7822, 0.044715
        %v7964 = vmul.f32 %v7665, 0.044715
        %v7965 = vmul.f32 %v7667, 0.044715
        %v7966 = vmul.f32 %v7826, 0.044715
        %v7967 = vmul.f32 %v7828, 0.044715
        %v7968 = vmul.f32 %v7671, 0.044715
        %v7969 = vmul.f32 %v7673, 0.044715
        %v7970 = vmul.f32 %v7832, 0.044715
        %v7971 = vmul.f32 %v7834, 0.044715
        %v7972 = vmul.f32 %v7677, 0.044715
        %v7973 = vmul.f32 %v7679, 0.044715
        %v7974 = vmul.f32 %v7838, 0.044715
        %v7975 = vmul.f32 %v7840, 0.044715
        %v7976 = vmul.f32 %v7683, 0.044715
        %v7977 = vmul.f32 %v7685, 0.044715
        %v7978 = vmul.f32 %v7844, 0.044715
        %v7979 = vmul.f32 %v7846, 0.044715
        %v7980 = vmul.f32 %v7689, 0.044715
        %v7981 = vmul.f32 %v7691, 0.044715
        %v7982 = vmul.f32 %v7850, 0.044715
        %v7983 = vmul.f32 %v7852, 0.044715
        %v7984 = vmul.f32 %v7695, 0.044715
        %v7985 = vmul.f32 %v7697, 0.044715
        %v7986 = vmul.f32 %v7856, 0.044715
        %v7987 = vmul.f32 %v7858, 0.044715
        %v7988 = vmul.f32 %v7924, %v7605
        %v7989 = vmul.f32 %v7925, %v7607
        %v7990 = vmul.f32 %v7926, %v7766
        %v7991 = vmul.f32 %v7927, %v7768
        %v7992 = vmul.f32 %v7928, %v7611
        %v7993 = vmul.f32 %v7929, %v7613
        %v7994 = vmul.f32 %v7930, %v7772
        %v7995 = vmul.f32 %v7931, %v7774
        %v7996 = vmul.f32 %v7932, %v7617
        %v7997 = vmul.f32 %v7933, %v7619
        %v7998 = vmul.f32 %v7934, %v7778
        %v7999 = vmul.f32 %v7935, %v7780
        %v8000 = vmul.f32 %v7936, %v7623
        %v8001 = vmul.f32 %v7937, %v7625
        %v8002 = vmul.f32 %v7938, %v7784
        %v8003 = vmul.f32 %v7939, %v7786
        %v8004 = vmul.f32 %v7940, %v7629
        %v8005 = vmul.f32 %v7941, %v7631
        %v8006 = vmul.f32 %v7942, %v7790
        %v8007 = vmul.f32 %v7943, %v7792
        %v8008 = vmul.f32 %v7944, %v7635
        %v8009 = vmul.f32 %v7945, %v7637
        %v8010 = vmul.f32 %v7946, %v7796
        %v8011 = vmul.f32 %v7947, %v7798
        %v8012 = vmul.f32 %v7948, %v7641
        %v8013 = vmul.f32 %v7949, %v7643
        %v8014 = vmul.f32 %v7950, %v7802
        %v8015 = vmul.f32 %v7951, %v7804
        %v8016 = vmul.f32 %v7952, %v7647
        %v8017 = vmul.f32 %v7953, %v7649
        %v8018 = vmul.f32 %v7954, %v7808
        %v8019 = vmul.f32 %v7955, %v7810
        %v8020 = vmul.f32 %v7956, %v7653
        %v8021 = vmul.f32 %v7957, %v7655
        %v8022 = vmul.f32 %v7958, %v7814
        %v8023 = vmul.f32 %v7959, %v7816
        %v8024 = vmul.f32 %v7960, %v7659
        %v8025 = vmul.f32 %v7961, %v7661
        %v8026 = vmul.f32 %v7962, %v7820
        %v8027 = vmul.f32 %v7963, %v7822
        %v8028 = vmul.f32 %v7964, %v7665
        %v8029 = vmul.f32 %v7965, %v7667
        %v8030 = vmul.f32 %v7966, %v7826
        %v8031 = vmul.f32 %v7967, %v7828
        %v8032 = vmul.f32 %v7968, %v7671
        %v8033 = vmul.f32 %v7969, %v7673
        %v8034 = vmul.f32 %v7970, %v7832
        %v8035 = vmul.f32 %v7971, %v7834
        %v8036 = vmul.f32 %v7972, %v7677
        %v8037 = vmul.f32 %v7973, %v7679
        %v8038 = vmul.f32 %v7974, %v7838
        %v8039 = vmul.f32 %v7975, %v7840
        %v8040 = vmul.f32 %v7976, %v7683
        %v8041 = vmul.f32 %v7977, %v7685
        %v8042 = vmul.f32 %v7978, %v7844
        %v8043 = vmul.f32 %v7979, %v7846
        %v8044 = vmul.f32 %v7980, %v7689
        %v8045 = vmul.f32 %v7981, %v7691
        %v8046 = vmul.f32 %v7982, %v7850
        %v8047 = vmul.f32 %v7983, %v7852
        %v8048 = vmul.f32 %v7984, %v7695
        %v8049 = vmul.f32 %v7985, %v7697
        %v8050 = vmul.f32 %v7986, %v7856
        %v8051 = vmul.f32 %v7987, %v7858
        %v8052 = vmul.f32 %v7988, %v7605
        %v8053 = vmul.f32 %v7989, %v7607
        %v8054 = vmul.f32 %v7990, %v7766
        %v8055 = vmul.f32 %v7991, %v7768
        %v8056 = vmul.f32 %v7992, %v7611
        %v8057 = vmul.f32 %v7993, %v7613
        %v8058 = vmul.f32 %v7994, %v7772
        %v8059 = vmul.f32 %v7995, %v7774
        %v8060 = vmul.f32 %v7996, %v7617
        %v8061 = vmul.f32 %v7997, %v7619
        %v8062 = vmul.f32 %v7998, %v7778
        %v8063 = vmul.f32 %v7999, %v7780
        %v8064 = vmul.f32 %v8000, %v7623
        %v8065 = vmul.f32 %v8001, %v7625
        %v8066 = vmul.f32 %v8002, %v7784
        %v8067 = vmul.f32 %v8003, %v7786
        %v8068 = vmul.f32 %v8004, %v7629
        %v8069 = vmul.f32 %v8005, %v7631
        %v8070 = vmul.f32 %v8006, %v7790
        %v8071 = vmul.f32 %v8007, %v7792
        %v8072 = vmul.f32 %v8008, %v7635
        %v8073 = vmul.f32 %v8009, %v7637
        %v8074 = vmul.f32 %v8010, %v7796
        %v8075 = vmul.f32 %v8011, %v7798
        %v8076 = vmul.f32 %v8012, %v7641
        %v8077 = vmul.f32 %v8013, %v7643
        %v8078 = vmul.f32 %v8014, %v7802
        %v8079 = vmul.f32 %v8015, %v7804
        %v8080 = vmul.f32 %v8016, %v7647
        %v8081 = vmul.f32 %v8017, %v7649
        %v8082 = vmul.f32 %v8018, %v7808
        %v8083 = vmul.f32 %v8019, %v7810
        %v8084 = vmul.f32 %v8020, %v7653
        %v8085 = vmul.f32 %v8021, %v7655
        %v8086 = vmul.f32 %v8022, %v7814
        %v8087 = vmul.f32 %v8023, %v7816
        %v8088 = vmul.f32 %v8024, %v7659
        %v8089 = vmul.f32 %v8025, %v7661
        %v8090 = vmul.f32 %v8026, %v7820
        %v8091 = vmul.f32 %v8027, %v7822
        %v8092 = vmul.f32 %v8028, %v7665
        %v8093 = vmul.f32 %v8029, %v7667
        %v8094 = vmul.f32 %v8030, %v7826
        %v8095 = vmul.f32 %v8031, %v7828
        %v8096 = vmul.f32 %v8032, %v7671
        %v8097 = vmul.f32 %v8033, %v7673
        %v8098 = vmul.f32 %v8034, %v7832
        %v8099 = vmul.f32 %v8035, %v7834
        %v8100 = vmul.f32 %v8036, %v7677
        %v8101 = vmul.f32 %v8037, %v7679
        %v8102 = vmul.f32 %v8038, %v7838
        %v8103 = vmul.f32 %v8039, %v7840
        %v8104 = vmul.f32 %v8040, %v7683
        %v8105 = vmul.f32 %v8041, %v7685
        %v8106 = vmul.f32 %v8042, %v7844
        %v8107 = vmul.f32 %v8043, %v7846
        %v8108 = vmul.f32 %v8044, %v7689
        %v8109 = vmul.f32 %v8045, %v7691
        %v8110 = vmul.f32 %v8046, %v7850
        %v8111 = vmul.f32 %v8047, %v7852
        %v8112 = vmul.f32 %v8048, %v7695
        %v8113 = vmul.f32 %v8049, %v7697
        %v8114 = vmul.f32 %v8050, %v7856
        %v8115 = vmul.f32 %v8051, %v7858
        %v8116 = vadd.f32 %v7605, %v8052
        %v8117 = vadd.f32 %v7607, %v8053
        %v8118 = vadd.f32 %v7766, %v8054
        %v8119 = vadd.f32 %v7768, %v8055
        %v8120 = vadd.f32 %v7611, %v8056
        %v8121 = vadd.f32 %v7613, %v8057
        %v8122 = vadd.f32 %v7772, %v8058
        %v8123 = vadd.f32 %v7774, %v8059
        %v8124 = vadd.f32 %v7617, %v8060
        %v8125 = vadd.f32 %v7619, %v8061
        %v8126 = vadd.f32 %v7778, %v8062
        %v8127 = vadd.f32 %v7780, %v8063
        %v8128 = vadd.f32 %v7623, %v8064
        %v8129 = vadd.f32 %v7625, %v8065
        %v8130 = vadd.f32 %v7784, %v8066
        %v8131 = vadd.f32 %v7786, %v8067
        %v8132 = vadd.f32 %v7629, %v8068
        %v8133 = vadd.f32 %v7631, %v8069
        %v8134 = vadd.f32 %v7790, %v8070
        %v8135 = vadd.f32 %v7792, %v8071
        %v8136 = vadd.f32 %v7635, %v8072
        %v8137 = vadd.f32 %v7637, %v8073
        %v8138 = vadd.f32 %v7796, %v8074
        %v8139 = vadd.f32 %v7798, %v8075
        %v8140 = vadd.f32 %v7641, %v8076
        %v8141 = vadd.f32 %v7643, %v8077
        %v8142 = vadd.f32 %v7802, %v8078
        %v8143 = vadd.f32 %v7804, %v8079
        %v8144 = vadd.f32 %v7647, %v8080
        %v8145 = vadd.f32 %v7649, %v8081
        %v8146 = vadd.f32 %v7808, %v8082
        %v8147 = vadd.f32 %v7810, %v8083
        %v8148 = vadd.f32 %v7653, %v8084
        %v8149 = vadd.f32 %v7655, %v8085
        %v8150 = vadd.f32 %v7814, %v8086
        %v8151 = vadd.f32 %v7816, %v8087
        %v8152 = vadd.f32 %v7659, %v8088
        %v8153 = vadd.f32 %v7661, %v8089
        %v8154 = vadd.f32 %v7820, %v8090
        %v8155 = vadd.f32 %v7822, %v8091
        %v8156 = vadd.f32 %v7665, %v8092
        %v8157 = vadd.f32 %v7667, %v8093
        %v8158 = vadd.f32 %v7826, %v8094
        %v8159 = vadd.f32 %v7828, %v8095
        %v8160 = vadd.f32 %v7671, %v8096
        %v8161 = vadd.f32 %v7673, %v8097
        %v8162 = vadd.f32 %v7832, %v8098
        %v8163 = vadd.f32 %v7834, %v8099
        %v8164 = vadd.f32 %v7677, %v8100
        %v8165 = vadd.f32 %v7679, %v8101
        %v8166 = vadd.f32 %v7838, %v8102
        %v8167 = vadd.f32 %v7840, %v8103
        %v8168 = vadd.f32 %v7683, %v8104
        %v8169 = vadd.f32 %v7685, %v8105
        %v8170 = vadd.f32 %v7844, %v8106
        %v8171 = vadd.f32 %v7846, %v8107
        %v8172 = vadd.f32 %v7689, %v8108
        %v8173 = vadd.f32 %v7691, %v8109
        %v8174 = vadd.f32 %v7850, %v8110
        %v8175 = vadd.f32 %v7852, %v8111
        %v8176 = vadd.f32 %v7695, %v8112
        %v8177 = vadd.f32 %v7697, %v8113
        %v8178 = vadd.f32 %v7856, %v8114
        %v8179 = vadd.f32 %v7858, %v8115
        %v8180 = vmul.f32 %v8116, 0.7978846
        %v8181 = vmul.f32 %v8117, 0.7978846
        %v8182 = vmul.f32 %v8118, 0.7978846
        %v8183 = vmul.f32 %v8119, 0.7978846
        %v8184 = vmul.f32 %v8120, 0.7978846
        %v8185 = vmul.f32 %v8121, 0.7978846
        %v8186 = vmul.f32 %v8122, 0.7978846
        %v8187 = vmul.f32 %v8123, 0.7978846
        %v8188 = vmul.f32 %v8124, 0.7978846
        %v8189 = vmul.f32 %v8125, 0.7978846
        %v8190 = vmul.f32 %v8126, 0.7978846
        %v8191 = vmul.f32 %v8127, 0.7978846
        %v8192 = vmul.f32 %v8128, 0.7978846
        %v8193 = vmul.f32 %v8129, 0.7978846
        %v8194 = vmul.f32 %v8130, 0.7978846
        %v8195 = vmul.f32 %v8131, 0.7978846
        %v8196 = vmul.f32 %v8132, 0.7978846
        %v8197 = vmul.f32 %v8133, 0.7978846
        %v8198 = vmul.f32 %v8134, 0.7978846
        %v8199 = vmul.f32 %v8135, 0.7978846
        %v8200 = vmul.f32 %v8136, 0.7978846
        %v8201 = vmul.f32 %v8137, 0.7978846
        %v8202 = vmul.f32 %v8138, 0.7978846
        %v8203 = vmul.f32 %v8139, 0.7978846
        %v8204 = vmul.f32 %v8140, 0.7978846
        %v8205 = vmul.f32 %v8141, 0.7978846
        %v8206 = vmul.f32 %v8142, 0.7978846
        %v8207 = vmul.f32 %v8143, 0.7978846
        %v8208 = vmul.f32 %v8144, 0.7978846
        %v8209 = vmul.f32 %v8145, 0.7978846
        %v8210 = vmul.f32 %v8146, 0.7978846
        %v8211 = vmul.f32 %v8147, 0.7978846
        %v8212 = vmul.f32 %v8148, 0.7978846
        %v8213 = vmul.f32 %v8149, 0.7978846
        %v8214 = vmul.f32 %v8150, 0.7978846
        %v8215 = vmul.f32 %v8151, 0.7978846
        %v8216 = vmul.f32 %v8152, 0.7978846
        %v8217 = vmul.f32 %v8153, 0.7978846
        %v8218 = vmul.f32 %v8154, 0.7978846
        %v8219 = vmul.f32 %v8155, 0.7978846
        %v8220 = vmul.f32 %v8156, 0.7978846
        %v8221 = vmul.f32 %v8157, 0.7978846
        %v8222 = vmul.f32 %v8158, 0.7978846
        %v8223 = vmul.f32 %v8159, 0.7978846
        %v8224 = vmul.f32 %v8160, 0.7978846
        %v8225 = vmul.f32 %v8161, 0.7978846
        %v8226 = vmul.f32 %v8162, 0.7978846
        %v8227 = vmul.f32 %v8163, 0.7978846
        %v8228 = vmul.f32 %v8164, 0.7978846
        %v8229 = vmul.f32 %v8165, 0.7978846
        %v8230 = vmul.f32 %v8166, 0.7978846
        %v8231 = vmul.f32 %v8167, 0.7978846
        %v8232 = vmul.f32 %v8168, 0.7978846
        %v8233 = vmul.f32 %v8169, 0.7978846
        %v8234 = vmul.f32 %v8170, 0.7978846
        %v8235 = vmul.f32 %v8171, 0.7978846
        %v8236 = vmul.f32 %v8172, 0.7978846
        %v8237 = vmul.f32 %v8173, 0.7978846
        %v8238 = vmul.f32 %v8174, 0.7978846
        %v8239 = vmul.f32 %v8175, 0.7978846
        %v8240 = vmul.f32 %v8176, 0.7978846
        %v8241 = vmul.f32 %v8177, 0.7978846
        %v8242 = vmul.f32 %v8178, 0.7978846
        %v8243 = vmul.f32 %v8179, 0.7978846
        %v8244 = vtanh.pop %v8180
        %v8245 = vtanh.pop %v8181
        %v8246 = vtanh.pop %v8182
        %v8247 = vtanh.pop %v8183
        %v8248 = vtanh.pop %v8184
        %v8249 = vtanh.pop %v8185
        %v8250 = vtanh.pop %v8186
        %v8251 = vtanh.pop %v8187
        %v8252 = vtanh.pop %v8188
        %v8253 = vtanh.pop %v8189
        %v8254 = vtanh.pop %v8190
        %v8255 = vtanh.pop %v8191
        %v8256 = vtanh.pop %v8192
        %v8257 = vtanh.pop %v8193
        %v8258 = vtanh.pop %v8194
        %v8259 = vtanh.pop %v8195
        %v8260 = vtanh.pop %v8196
        %v8261 = vtanh.pop %v8197
        %v8262 = vtanh.pop %v8198
        %v8263 = vtanh.pop %v8199
        %v8264 = vtanh.pop %v8200
        %v8265 = vtanh.pop %v8201
        %v8266 = vtanh.pop %v8202
        %v8267 = vtanh.pop %v8203
        %v8268 = vtanh.pop %v8204
        %v8269 = vtanh.pop %v8205
        %v8270 = vtanh.pop %v8206
        %v8271 = vtanh.pop %v8207
        %v8272 = vtanh.pop %v8208
        %v8273 = vtanh.pop %v8209
        %v8274 = vtanh.pop %v8210
        %v8275 = vtanh.pop %v8211
        %v8276 = vtanh.pop %v8212
        %v8277 = vtanh.pop %v8213
        %v8278 = vtanh.pop %v8214
        %v8279 = vtanh.pop %v8215
        %v8280 = vtanh.pop %v8216
        %v8281 = vtanh.pop %v8217
        %v8282 = vtanh.pop %v8218
        %v8283 = vtanh.pop %v8219
        %v8284 = vtanh.pop %v8220
        %v8285 = vtanh.pop %v8221
        %v8286 = vtanh.pop %v8222
        %v8287 = vtanh.pop %v8223
        %v8288 = vtanh.pop %v8224
        %v8289 = vtanh.pop %v8225
        %v8290 = vtanh.pop %v8226
        %v8291 = vtanh.pop %v8227
        %v8292 = vtanh.pop %v8228
        %v8293 = vtanh.pop %v8229
        %v8294 = vtanh.pop %v8230
        %v8295 = vtanh.pop %v8231
        %v8296 = vtanh.pop %v8232
        %v8297 = vtanh.pop %v8233
        %v8298 = vtanh.pop %v8234
        %v8299 = vtanh.pop %v8235
        %v8300 = vtanh.pop %v8236
        %v8301 = vtanh.pop %v8237
        %v8302 = vtanh.pop %v8238
        %v8303 = vtanh.pop %v8239
        %v8304 = vtanh.pop %v8240
        %v8305 = vtanh.pop %v8241
        %v8306 = vtanh.pop %v8242
        %v8307 = vtanh.pop %v8243
        %v8308 = vadd.f32 %v8244, 1.0
        %v8309 = vadd.f32 %v8245, 1.0
        %v8310 = vadd.f32 %v8246, 1.0
        %v8311 = vadd.f32 %v8247, 1.0
        %v8312 = vadd.f32 %v8248, 1.0
        %v8313 = vadd.f32 %v8249, 1.0
        %v8314 = vadd.f32 %v8250, 1.0
        %v8315 = vadd.f32 %v8251, 1.0
        %v8316 = vadd.f32 %v8252, 1.0
        %v8317 = vadd.f32 %v8253, 1.0
        %v8318 = vadd.f32 %v8254, 1.0
        %v8319 = vadd.f32 %v8255, 1.0
        %v8320 = vadd.f32 %v8256, 1.0
        %v8321 = vadd.f32 %v8257, 1.0
        %v8322 = vadd.f32 %v8258, 1.0
        %v8323 = vadd.f32 %v8259, 1.0
        %v8324 = vadd.f32 %v8260, 1.0
        %v8325 = vadd.f32 %v8261, 1.0
        %v8326 = vadd.f32 %v8262, 1.0
        %v8327 = vadd.f32 %v8263, 1.0
        %v8328 = vadd.f32 %v8264, 1.0
        %v8329 = vadd.f32 %v8265, 1.0
        %v8330 = vadd.f32 %v8266, 1.0
        %v8331 = vadd.f32 %v8267, 1.0
        %v8332 = vadd.f32 %v8268, 1.0
        %v8333 = vadd.f32 %v8269, 1.0
        %v8334 = vadd.f32 %v8270, 1.0
        %v8335 = vadd.f32 %v8271, 1.0
        %v8336 = vadd.f32 %v8272, 1.0
        %v8337 = vadd.f32 %v8273, 1.0
        %v8338 = vadd.f32 %v8274, 1.0
        %v8339 = vadd.f32 %v8275, 1.0
        %v8340 = vadd.f32 %v8276, 1.0
        %v8341 = vadd.f32 %v8277, 1.0
        %v8342 = vadd.f32 %v8278, 1.0
        %v8343 = vadd.f32 %v8279, 1.0
        %v8344 = vadd.f32 %v8280, 1.0
        %v8345 = vadd.f32 %v8281, 1.0
        %v8346 = vadd.f32 %v8282, 1.0
        %v8347 = vadd.f32 %v8283, 1.0
        %v8348 = vadd.f32 %v8284, 1.0
        %v8349 = vadd.f32 %v8285, 1.0
        %v8350 = vadd.f32 %v8286, 1.0
        %v8351 = vadd.f32 %v8287, 1.0
        %v8352 = vadd.f32 %v8288, 1.0
        %v8353 = vadd.f32 %v8289, 1.0
        %v8354 = vadd.f32 %v8290, 1.0
        %v8355 = vadd.f32 %v8291, 1.0
        %v8356 = vadd.f32 %v8292, 1.0
        %v8357 = vadd.f32 %v8293, 1.0
        %v8358 = vadd.f32 %v8294, 1.0
        %v8359 = vadd.f32 %v8295, 1.0
        %v8360 = vadd.f32 %v8296, 1.0
        %v8361 = vadd.f32 %v8297, 1.0
        %v8362 = vadd.f32 %v8298, 1.0
        %v8363 = vadd.f32 %v8299, 1.0
        %v8364 = vadd.f32 %v8300, 1.0
        %v8365 = vadd.f32 %v8301, 1.0
        %v8366 = vadd.f32 %v8302, 1.0
        %v8367 = vadd.f32 %v8303, 1.0
        %v8368 = vadd.f32 %v8304, 1.0
        %v8369 = vadd.f32 %v8305, 1.0
        %v8370 = vadd.f32 %v8306, 1.0
        %v8371 = vadd.f32 %v8307, 1.0
        %v8372 = vmul.f32 %v7860, %v8308
        %v8373 = vmul.f32 %v7861, %v8309
        %v8374 = vmul.f32 %v7862, %v8310
        %v8375 = vmul.f32 %v7863, %v8311
        %v8376 = vmul.f32 %v7864, %v8312
        %v8377 = vmul.f32 %v7865, %v8313
        %v8378 = vmul.f32 %v7866, %v8314
        %v8379 = vmul.f32 %v7867, %v8315
        %v8380 = vmul.f32 %v7868, %v8316
        %v8381 = vmul.f32 %v7869, %v8317
        %v8382 = vmul.f32 %v7870, %v8318
        %v8383 = vmul.f32 %v7871, %v8319
        %v8384 = vmul.f32 %v7872, %v8320
        %v8385 = vmul.f32 %v7873, %v8321
        %v8386 = vmul.f32 %v7874, %v8322
        %v8387 = vmul.f32 %v7875, %v8323
        %v8388 = vmul.f32 %v7876, %v8324
        %v8389 = vmul.f32 %v7877, %v8325
        %v8390 = vmul.f32 %v7878, %v8326
        %v8391 = vmul.f32 %v7879, %v8327
        %v8392 = vmul.f32 %v7880, %v8328
        %v8393 = vmul.f32 %v7881, %v8329
        %v8394 = vmul.f32 %v7882, %v8330
        %v8395 = vmul.f32 %v7883, %v8331
        %v8396 = vmul.f32 %v7884, %v8332
        %v8397 = vmul.f32 %v7885, %v8333
        %v8398 = vmul.f32 %v7886, %v8334
        %v8399 = vmul.f32 %v7887, %v8335
        %v8400 = vmul.f32 %v7888, %v8336
        %v8401 = vmul.f32 %v7889, %v8337
        %v8402 = vmul.f32 %v7890, %v8338
        %v8403 = vmul.f32 %v7891, %v8339
        %v8404 = vmul.f32 %v7892, %v8340
        %v8405 = vmul.f32 %v7893, %v8341
        %v8406 = vmul.f32 %v7894, %v8342
        %v8407 = vmul.f32 %v7895, %v8343
        %v8408 = vmul.f32 %v7896, %v8344
        %v8409 = vmul.f32 %v7897, %v8345
        %v8410 = vmul.f32 %v7898, %v8346
        %v8411 = vmul.f32 %v7899, %v8347
        %v8412 = vmul.f32 %v7900, %v8348
        %v8413 = vmul.f32 %v7901, %v8349
        %v8414 = vmul.f32 %v7902, %v8350
        %v8415 = vmul.f32 %v7903, %v8351
        %v8416 = vmul.f32 %v7904, %v8352
        %v8417 = vmul.f32 %v7905, %v8353
        %v8418 = vmul.f32 %v7906, %v8354
        %v8419 = vmul.f32 %v7907, %v8355
        %v8420 = vmul.f32 %v7908, %v8356
        %v8421 = vmul.f32 %v7909, %v8357
        %v8422 = vmul.f32 %v7910, %v8358
        %v8423 = vmul.f32 %v7911, %v8359
        %v8424 = vmul.f32 %v7912, %v8360
        %v8425 = vmul.f32 %v7913, %v8361
        %v8426 = vmul.f32 %v7914, %v8362
        %v8427 = vmul.f32 %v7915, %v8363
        %v8428 = vmul.f32 %v7916, %v8364
        %v8429 = vmul.f32 %v7917, %v8365
        %v8430 = vmul.f32 %v7918, %v8366
        %v8431 = vmul.f32 %v7919, %v8367
        %v8432 = vmul.f32 %v7920, %v8368
        %v8433 = vmul.f32 %v7921, %v8369
        %v8434 = vmul.f32 %v7922, %v8370
        %v8435 = vmul.f32 %v7923, %v8371
        %v8436 = vld [vmem:[#allocation20] sm:$0xff]
        %v8437 = vld [vmem:[#allocation20 + $0x8] sm:$0xff]
        %v8438 = vld [vmem:[#allocation20 + $0x10] sm:$0xff]
        %v8439 = vld [vmem:[#allocation20 + $0x18] sm:$0xff]
        %v8440 = vld [vmem:[#allocation20 + $0x20] sm:$0xff]
        %v8441 = vld [vmem:[#allocation20 + $0x28] sm:$0xff]
        %v8442 = vld [vmem:[#allocation20 + $0x30] sm:$0xff]
        %v8443 = vld [vmem:[#allocation20 + $0x38] sm:$0xff]
        %v8444 = vld [vmem:[#allocation20 + $0x40] sm:$0xff]
        %v8445 = vld [vmem:[#allocation20 + $0x48] sm:$0xff]
        %v8446 = vld [vmem:[#allocation20 + $0x50] sm:$0xff]
        %v8447 = vld [vmem:[#allocation20 + $0x58] sm:$0xff]
        %v8448 = vld [vmem:[#allocation20 + $0x60] sm:$0xff]
        %v8449 = vld [vmem:[#allocation20 + $0x68] sm:$0xff]
        %v8450 = vld [vmem:[#allocation20 + $0x70] sm:$0xff]
        %v8451 = vld [vmem:[#allocation20 + $0x78] sm:$0xff]
        %v8452 = vld [vmem:[#allocation20 + $0x80] sm:$0xff]
        %v8453 = vld [vmem:[#allocation20 + $0x88] sm:$0xff]
        %v8454 = vld [vmem:[#allocation20 + $0x90] sm:$0xff]
        %v8455 = vld [vmem:[#allocation20 + $0x98] sm:$0xff]
        %v8456 = vld [vmem:[#allocation20 + $0xa0] sm:$0xff]
        %v8457 = vld [vmem:[#allocation20 + $0xa8] sm:$0xff]
        %v8458 = vld [vmem:[#allocation20 + $0xb0] sm:$0xff]
        %v8459 = vld [vmem:[#allocation20 + $0xb8] sm:$0xff]
        %v8460 = vld [vmem:[#allocation20 + $0xc0] sm:$0xff]
        %v8461 = vld [vmem:[#allocation20 + $0xc8] sm:$0xff]
        %v8462 = vld [vmem:[#allocation20 + $0xd0] sm:$0xff]
        %v8463 = vld [vmem:[#allocation20 + $0xd8] sm:$0xff]
        %v8464 = vld [vmem:[#allocation20 + $0xe0] sm:$0xff]
        %v8465 = vld [vmem:[#allocation20 + $0xe8] sm:$0xff]
        %v8466 = vld [vmem:[#allocation20 + $0xf0] sm:$0xff]
        %v8467 = vld [vmem:[#allocation20 + $0xf8] sm:$0xff]
        %v8468 = vld [vmem:[#allocation20 + $0x100] sm:$0xff]
        %v8469 = vld [vmem:[#allocation20 + $0x108] sm:$0xff]
        %v8470 = vld [vmem:[#allocation20 + $0x110] sm:$0xff]
        %v8471 = vld [vmem:[#allocation20 + $0x118] sm:$0xff]
        %v8472 = vld [vmem:[#allocation20 + $0x120] sm:$0xff]
        %v8473 = vld [vmem:[#allocation20 + $0x128] sm:$0xff]
        %v8474 = vld [vmem:[#allocation20 + $0x130] sm:$0xff]
        %v8475 = vld [vmem:[#allocation20 + $0x138] sm:$0xff]
        %v8476 = vld [vmem:[#allocation20 + $0x140] sm:$0xff]
        %v8477 = vld [vmem:[#allocation20 + $0x148] sm:$0xff]
        %v8478 = vld [vmem:[#allocation20 + $0x150] sm:$0xff]
        %v8479 = vld [vmem:[#allocation20 + $0x158] sm:$0xff]
        %v8480 = vld [vmem:[#allocation20 + $0x160] sm:$0xff]
        %v8481 = vld [vmem:[#allocation20 + $0x168] sm:$0xff]
        %v8482 = vld [vmem:[#allocation20 + $0x170] sm:$0xff]
        %v8483 = vld [vmem:[#allocation20 + $0x178] sm:$0xff]
        %v8484 = vld [vmem:[#allocation20 + $0x180] sm:$0xff]
        %v8485 = vld [vmem:[#allocation20 + $0x188] sm:$0xff]
        %v8486 = vld [vmem:[#allocation20 + $0x190] sm:$0xff]
        %v8487 = vld [vmem:[#allocation20 + $0x198] sm:$0xff]
        %v8488 = vld [vmem:[#allocation20 + $0x1a0] sm:$0xff]
        %v8489 = vld [vmem:[#allocation20 + $0x1a8] sm:$0xff]
        %v8490 = vld [vmem:[#allocation20 + $0x1b0] sm:$0xff]
        %v8491 = vld [vmem:[#allocation20 + $0x1b8] sm:$0xff]
        %v8492 = vld [vmem:[#allocation20 + $0x1c0] sm:$0xff]
        %v8493 = vld [vmem:[#allocation20 + $0x1c8] sm:$0xff]
        %v8494 = vld [vmem:[#allocation20 + $0x1d0] sm:$0xff]
        %v8495 = vld [vmem:[#allocation20 + $0x1d8] sm:$0xff]
        %v8496 = vld [vmem:[#allocation20 + $0x1e0] sm:$0xff]
        %v8497 = vld [vmem:[#allocation20 + $0x1e8] sm:$0xff]
        %v8498 = vld [vmem:[#allocation20 + $0x1f0] sm:$0xff]
        %v8499 = vld [vmem:[#allocation20 + $0x1f8] sm:$0xff]
        %v8500 = vld [vmem:[%s16] sm:$0x1]
        %v8502 = vlaneseq
        %v8503 = vshrl.u32 %v8502, 7
        %v8504 = vsub.s32 0, %v8503
        %v8505 = vrot.slane %v8500, %v8504
        %8507 = vmatprep.subr.mxu0 0.0
        %8508 = vmatpush1.msra.mxu0 %v8451
        %8509 = vmatprep.subr.mxu0 0.0
        %8510 = vmatpush1.msra.mxu0 %v8450
        %8511 = vmatprep.subr.mxu0 0.0
        %8512 = vmatpush1.msra.mxu0 %v8449
        %8513 = vmatprep.subr.mxu0 0.0
        %8514 = vmatpush1.msra.mxu0 %v8448
        %8515 = vmatprep.subr.mxu0 0.0
        %8516 = vmatpush1.msra.mxu0 %v8447
        %8517 = vmatprep.subr.mxu0 0.0
        %8518 = vmatpush1.msra.mxu0 %v8446
        %8519 = vmatprep.subr.mxu0 0.0
        %8520 = vmatpush1.msra.mxu0 %v8445
        %8521 = vmatprep.subr.mxu0 0.0
        %8522 = vmatpush1.msra.mxu0 %v8444
        %8523 = vmatprep.subr.mxu0 0.0
        %8524 = vmatpush1.msra.mxu0 %v8443
        %8525 = vmatprep.subr.mxu0 0.0
        %8526 = vmatpush1.msra.mxu0 %v8442
        %8527 = vmatprep.subr.mxu0 0.0
        %8528 = vmatpush1.msra.mxu0 %v8441
        %8529 = vmatprep.subr.mxu0 0.0
        %8530 = vmatpush1.msra.mxu0 %v8440
        %8531 = vmatprep.subr.mxu0 0.0
        %8532 = vmatpush1.msra.mxu0 %v8439
        %8533 = vmatprep.subr.mxu0 0.0
        %8534 = vmatpush1.msra.mxu0 %v8438
        %8535 = vmatprep.subr.mxu0 0.0
        %8536 = vmatpush1.msra.mxu0 %v8437
        %8537 = vmatprep.subr.mxu0 0.0
        %8538 = vmatpush1.msra.mxu0 %v8436
        %8539 = vmatprep.subr.mxu0 0.0
        %8540 = vmatpush2.msra.mxu0 %v8467
        %8541 = vmatprep.subr.mxu0 0.0
        %8542 = vmatpush2.msra.mxu0 %v8466
        %8543 = vmatprep.subr.mxu0 0.0
        %8544 = vmatpush2.msra.mxu0 %v8465
        %8545 = vmatprep.subr.mxu0 0.0
        %8546 = vmatpush2.msra.mxu0 %v8464
        %8547 = vmatprep.subr.mxu0 0.0
        %8548 = vmatpush2.msra.mxu0 %v8463
        %8549 = vmatprep.subr.mxu0 0.0
        %8550 = vmatpush2.msra.mxu0 %v8462
        %8551 = vmatprep.subr.mxu0 0.0
        %8552 = vmatpush2.msra.mxu0 %v8461
        %8553 = vmatprep.subr.mxu0 0.0
        %8554 = vmatpush2.msra.mxu0 %v8460
        %8555 = vmatprep.subr.mxu0 0.0
        %8556 = vmatpush2.msra.mxu0 %v8459
        %8557 = vmatprep.subr.mxu0 0.0
        %8558 = vmatpush2.msra.mxu0 %v8458
        %8559 = vmatprep.subr.mxu0 0.0
        %8560 = vmatpush2.msra.mxu0 %v8457
        %8561 = vmatprep.subr.mxu0 0.0
        %8562 = vmatpush2.msra.mxu0 %v8456
        %8563 = vmatprep.subr.mxu0 0.0
        %8564 = vmatpush2.msra.mxu0 %v8455
        %8565 = vmatprep.subr.mxu0 0.0
        %8566 = vmatpush2.msra.mxu0 %v8454
        %8567 = vmatprep.subr.mxu0 0.0
        %8568 = vmatpush2.msra.mxu0 %v8453
        %8569 = vmatprep.subr.mxu0 0.0
        %8570 = vmatpush2.msra.mxu0 %v8452
        %8571 = vmatprep.mubr.f32.mxu0 %v8373
        %8572 = vmatmul.mubr.f32.gmra.mxu0 %v8372
        %v8573 = vpop.f32.mrf.mxu0
        %v8574 = vadd.f32 %v8505, %v8573
        %v8575 = vpop.f32.mrf.mxu0
        %8576 = vmatprep.mubr.f32.mxu0 %v8377
        %8577 = vmatmul.mubr.f32.gmra.mxu0 %v8376
        %v8578 = vpop.f32.mrf.mxu0
        %v8579 = vadd.f32 %v8505, %v8578
        %v8580 = vpop.f32.mrf.mxu0
        %8581 = vmatprep.mubr.f32.mxu0 %v8381
        %8582 = vmatmul.mubr.f32.gmra.mxu0 %v8380
        %v8583 = vpop.f32.mrf.mxu0
        %v8584 = vadd.f32 %v8505, %v8583
        %v8585 = vpop.f32.mrf.mxu0
        %8586 = vmatprep.mubr.f32.mxu0 %v8385
        %8587 = vmatmul.mubr.f32.gmra.mxu0 %v8384
        %v8588 = vpop.f32.mrf.mxu0
        %v8589 = vadd.f32 %v8505, %v8588
        %v8590 = vpop.f32.mrf.mxu0
        %8591 = vmatprep.mubr.f32.mxu0 %v8389
        %8592 = vmatmul.mubr.f32.gmra.mxu0 %v8388
        %v8593 = vpop.f32.mrf.mxu0
        %v8594 = vadd.f32 %v8505, %v8593
        %v8595 = vpop.f32.mrf.mxu0
        %8596 = vmatprep.mubr.f32.mxu0 %v8393
        %8597 = vmatmul.mubr.f32.gmra.mxu0 %v8392
        %v8598 = vpop.f32.mrf.mxu0
        %v8599 = vadd.f32 %v8505, %v8598
        %v8600 = vpop.f32.mrf.mxu0
        %8601 = vmatprep.mubr.f32.mxu0 %v8397
        %8602 = vmatmul.mubr.f32.gmra.mxu0 %v8396
        %v8603 = vpop.f32.mrf.mxu0
        %v8604 = vadd.f32 %v8505, %v8603
        %v8605 = vpop.f32.mrf.mxu0
        %8606 = vmatprep.mubr.f32.mxu0 %v8401
        %8607 = vmatmul.mubr.f32.gmra.mxu0 %v8400
        %v8608 = vpop.f32.mrf.mxu0
        %v8609 = vadd.f32 %v8505, %v8608
        %v8610 = vpop.f32.mrf.mxu0
        %8611 = vmatprep.mubr.f32.mxu0 %v8405
        %8612 = vmatmul.mubr.f32.gmra.mxu0 %v8404
        %v8613 = vpop.f32.mrf.mxu0
        %v8614 = vadd.f32 %v8505, %v8613
        %v8615 = vpop.f32.mrf.mxu0
        %8616 = vmatprep.mubr.f32.mxu0 %v8409
        %8617 = vmatmul.mubr.f32.gmra.mxu0 %v8408
        %v8618 = vpop.f32.mrf.mxu0
        %v8619 = vadd.f32 %v8505, %v8618
        %v8620 = vpop.f32.mrf.mxu0
        %8621 = vmatprep.mubr.f32.mxu0 %v8413
        %8622 = vmatmul.mubr.f32.gmra.mxu0 %v8412
        %v8623 = vpop.f32.mrf.mxu0
        %v8624 = vadd.f32 %v8505, %v8623
        %v8625 = vpop.f32.mrf.mxu0
        %8626 = vmatprep.mubr.f32.mxu0 %v8417
        %8627 = vmatmul.mubr.f32.gmra.mxu0 %v8416
        %v8628 = vpop.f32.mrf.mxu0
        %v8629 = vadd.f32 %v8505, %v8628
        %v8630 = vpop.f32.mrf.mxu0
        %8631 = vmatprep.mubr.f32.mxu0 %v8421
        %8632 = vmatmul.mubr.f32.gmra.mxu0 %v8420
        %v8633 = vpop.f32.mrf.mxu0
        %v8634 = vadd.f32 %v8505, %v8633
        %v8635 = vpop.f32.mrf.mxu0
        %8636 = vmatprep.mubr.f32.mxu0 %v8425
        %8637 = vmatmul.mubr.f32.gmra.mxu0 %v8424
        %v8638 = vpop.f32.mrf.mxu0
        %v8639 = vadd.f32 %v8505, %v8638
        %v8640 = vpop.f32.mrf.mxu0
        %8641 = vmatprep.mubr.f32.mxu0 %v8429
        %8642 = vmatmul.mubr.f32.gmra.mxu0 %v8428
        %v8643 = vpop.f32.mrf.mxu0
        %v8644 = vadd.f32 %v8505, %v8643
        %v8645 = vpop.f32.mrf.mxu0
        %8646 = vmatprep.mubr.f32.mxu0 %v8433
        %8647 = vmatmul.mubr.f32.gmra.mxu0 %v8432
        %v8648 = vpop.f32.mrf.mxu0
        %v8649 = vadd.f32 %v8505, %v8648
        %v8650 = vpop.f32.mrf.mxu0
        %8651 = vdwg.mxu0
        %8652 = vmatprep.subr.mxu0 0.0
        %8653 = vmatpush1.msra.mxu0 %v8483
        %8654 = vmatprep.subr.mxu0 0.0
        %8655 = vmatpush1.msra.mxu0 %v8482
        %8656 = vmatprep.subr.mxu0 0.0
        %8657 = vmatpush1.msra.mxu0 %v8481
        %8658 = vmatprep.subr.mxu0 0.0
        %8659 = vmatpush1.msra.mxu0 %v8480
        %8660 = vmatprep.subr.mxu0 0.0
        %8661 = vmatpush1.msra.mxu0 %v8479
        %8662 = vmatprep.subr.mxu0 0.0
        %8663 = vmatpush1.msra.mxu0 %v8478
        %8664 = vmatprep.subr.mxu0 0.0
        %8665 = vmatpush1.msra.mxu0 %v8477
        %8666 = vmatprep.subr.mxu0 0.0
        %8667 = vmatpush1.msra.mxu0 %v8476
        %8668 = vmatprep.subr.mxu0 0.0
        %8669 = vmatpush1.msra.mxu0 %v8475
        %8670 = vmatprep.subr.mxu0 0.0
        %8671 = vmatpush1.msra.mxu0 %v8474
        %8672 = vmatprep.subr.mxu0 0.0
        %8673 = vmatpush1.msra.mxu0 %v8473
        %8674 = vmatprep.subr.mxu0 0.0
        %8675 = vmatpush1.msra.mxu0 %v8472
        %8676 = vmatprep.subr.mxu0 0.0
        %8677 = vmatpush1.msra.mxu0 %v8471
        %8678 = vmatprep.subr.mxu0 0.0
        %8679 = vmatpush1.msra.mxu0 %v8470
        %8680 = vmatprep.subr.mxu0 0.0
        %8681 = vmatpush1.msra.mxu0 %v8469
        %8682 = vmatprep.subr.mxu0 0.0
        %8683 = vmatpush1.msra.mxu0 %v8468
        %8684 = vmatprep.subr.mxu0 0.0
        %8685 = vmatpush2.msra.mxu0 %v8499
        %8686 = vmatprep.subr.mxu0 0.0
        %8687 = vmatpush2.msra.mxu0 %v8498
        %8688 = vmatprep.subr.mxu0 0.0
        %8689 = vmatpush2.msra.mxu0 %v8497
        %8690 = vmatprep.subr.mxu0 0.0
        %8691 = vmatpush2.msra.mxu0 %v8496
        %8692 = vmatprep.subr.mxu0 0.0
        %8693 = vmatpush2.msra.mxu0 %v8495
        %8694 = vmatprep.subr.mxu0 0.0
        %8695 = vmatpush2.msra.mxu0 %v8494
        %8696 = vmatprep.subr.mxu0 0.0
        %8697 = vmatpush2.msra.mxu0 %v8493
        %8698 = vmatprep.subr.mxu0 0.0
        %8699 = vmatpush2.msra.mxu0 %v8492
        %8700 = vmatprep.subr.mxu0 0.0
        %8701 = vmatpush2.msra.mxu0 %v8491
        %8702 = vmatprep.subr.mxu0 0.0
        %8703 = vmatpush2.msra.mxu0 %v8490
        %8704 = vmatprep.subr.mxu0 0.0
        %8705 = vmatpush2.msra.mxu0 %v8489
        %8706 = vmatprep.subr.mxu0 0.0
        %8707 = vmatpush2.msra.mxu0 %v8488
        %8708 = vmatprep.subr.mxu0 0.0
        %8709 = vmatpush2.msra.mxu0 %v8487
        %8710 = vmatprep.subr.mxu0 0.0
        %8711 = vmatpush2.msra.mxu0 %v8486
        %8712 = vmatprep.subr.mxu0 0.0
        %8713 = vmatpush2.msra.mxu0 %v8485
        %8714 = vmatprep.subr.mxu0 0.0
        %8715 = vmatpush2.msra.mxu0 %v8484
        %8716 = vmatprep.mubr.f32.mxu0 %v8375
        %8717 = vmatmul.mubr.f32.gmra.mxu0 %v8374
        %v8718 = vpop.f32.mrf.mxu0
        %v8719 = vadd.f32 %v8574, %v8718
        %v8720 = vpop.f32.mrf.mxu0
        %8721 = vmatprep.mubr.f32.mxu0 %v8379
        %8722 = vmatmul.mubr.f32.gmra.mxu0 %v8378
        %v8723 = vpop.f32.mrf.mxu0
        %v8724 = vadd.f32 %v8579, %v8723
        %v8725 = vpop.f32.mrf.mxu0
        %8726 = vmatprep.mubr.f32.mxu0 %v8383
        %8727 = vmatmul.mubr.f32.gmra.mxu0 %v8382
        %v8728 = vpop.f32.mrf.mxu0
        %v8729 = vadd.f32 %v8584, %v8728
        %v8730 = vpop.f32.mrf.mxu0
        %8731 = vmatprep.mubr.f32.mxu0 %v8387
        %8732 = vmatmul.mubr.f32.gmra.mxu0 %v8386
        %v8733 = vpop.f32.mrf.mxu0
        %v8734 = vadd.f32 %v8589, %v8733
        %v8735 = vpop.f32.mrf.mxu0
        %8736 = vmatprep.mubr.f32.mxu0 %v8391
        %8737 = vmatmul.mubr.f32.gmra.mxu0 %v8390
        %v8738 = vpop.f32.mrf.mxu0
        %v8739 = vadd.f32 %v8594, %v8738
        %v8740 = vpop.f32.mrf.mxu0
        %8741 = vmatprep.mubr.f32.mxu0 %v8395
        %8742 = vmatmul.mubr.f32.gmra.mxu0 %v8394
        %v8743 = vpop.f32.mrf.mxu0
        %v8744 = vadd.f32 %v8599, %v8743
        %v8745 = vpop.f32.mrf.mxu0
        %8746 = vmatprep.mubr.f32.mxu0 %v8399
        %8747 = vmatmul.mubr.f32.gmra.mxu0 %v8398
        %v8748 = vpop.f32.mrf.mxu0
        %v8749 = vadd.f32 %v8604, %v8748
        %v8750 = vpop.f32.mrf.mxu0
        %8751 = vmatprep.mubr.f32.mxu0 %v8403
        %8752 = vmatmul.mubr.f32.gmra.mxu0 %v8402
        %v8753 = vpop.f32.mrf.mxu0
        %v8754 = vadd.f32 %v8609, %v8753
        %v8755 = vpop.f32.mrf.mxu0
        %8756 = vmatprep.mubr.f32.mxu0 %v8407
        %8757 = vmatmul.mubr.f32.gmra.mxu0 %v8406
        %v8758 = vpop.f32.mrf.mxu0
        %v8759 = vadd.f32 %v8614, %v8758
        %v8760 = vpop.f32.mrf.mxu0
        %8761 = vmatprep.mubr.f32.mxu0 %v8411
        %8762 = vmatmul.mubr.f32.gmra.mxu0 %v8410
        %v8763 = vpop.f32.mrf.mxu0
        %v8764 = vadd.f32 %v8619, %v8763
        %v8765 = vpop.f32.mrf.mxu0
        %8766 = vmatprep.mubr.f32.mxu0 %v8415
        %8767 = vmatmul.mubr.f32.gmra.mxu0 %v8414
        %v8768 = vpop.f32.mrf.mxu0
        %v8769 = vadd.f32 %v8624, %v8768
        %v8770 = vpop.f32.mrf.mxu0
        %8771 = vmatprep.mubr.f32.mxu0 %v8419
        %8772 = vmatmul.mubr.f32.gmra.mxu0 %v8418
        %v8773 = vpop.f32.mrf.mxu0
        %v8774 = vadd.f32 %v8629, %v8773
        %v8775 = vpop.f32.mrf.mxu0
        %8776 = vmatprep.mubr.f32.mxu0 %v8423
        %8777 = vmatmul.mubr.f32.gmra.mxu0 %v8422
        %v8778 = vpop.f32.mrf.mxu0
        %v8779 = vadd.f32 %v8634, %v8778
        %v8780 = vpop.f32.mrf.mxu0
        %8781 = vmatprep.mubr.f32.mxu0 %v8427
        %8782 = vmatmul.mubr.f32.gmra.mxu0 %v8426
        %v8783 = vpop.f32.mrf.mxu0
        %v8784 = vadd.f32 %v8639, %v8783
        %v8785 = vpop.f32.mrf.mxu0
        %8786 = vmatprep.mubr.f32.mxu0 %v8431
        %8787 = vmatmul.mubr.f32.gmra.mxu0 %v8430
        %v8788 = vpop.f32.mrf.mxu0
        %v8789 = vadd.f32 %v8644, %v8788
        %v8790 = vpop.f32.mrf.mxu0
        %8791 = vmatprep.mubr.f32.mxu0 %v8435
        %8792 = vmatmul.mubr.f32.gmra.mxu0 %v8434
        %v8793 = vpop.f32.mrf.mxu0
        %v8794 = vadd.f32 %v8649, %v8793
        %v8795 = vpop.f32.mrf.mxu0
        %8796 = vdwg.mxu0
        %v8797 = vadd.f32 %v7214, %v8719
        %v8798 = vadd.f32 %v7215, %v8724
        %v8799 = vadd.f32 %v7216, %v8729
        %v8800 = vadd.f32 %v7217, %v8734
        %v8801 = vadd.f32 %v7218, %v8739
        %v8802 = vadd.f32 %v7219, %v8744
        %v8803 = vadd.f32 %v7220, %v8749
        %v8804 = vadd.f32 %v7221, %v8754
        %v8805 = vadd.f32 %v7222, %v8759
        %v8806 = vadd.f32 %v7223, %v8764
        %v8807 = vadd.f32 %v7224, %v8769
        %v8808 = vadd.f32 %v7225, %v8774
        %v8809 = vadd.f32 %v7226, %v8779
        %v8810 = vadd.f32 %v7227, %v8784
        %v8811 = vadd.f32 %v7228, %v8789
        %v8812 = vadd.f32 %v7229, %v8794
        %8813 = vst [vmem:[%s671] sm:$0xff] %v8797
        %8814 = vst [vmem:[%s671 + $0x8] sm:$0xff] %v8798
        %8815 = vst [vmem:[%s671 + $0x10] sm:$0xff] %v8799
        %8816 = vst [vmem:[%s671 + $0x18] sm:$0xff] %v8800
        %8817 = vst [vmem:[%s671 + $0x20] sm:$0xff] %v8801
        %8818 = vst [vmem:[%s671 + $0x28] sm:$0xff] %v8802
        %8819 = vst [vmem:[%s671 + $0x30] sm:$0xff] %v8803
        %8820 = vst [vmem:[%s671 + $0x38] sm:$0xff] %v8804
        %8821 = vst [vmem:[%s671 + $0x40] sm:$0xff] %v8805
        %8822 = vst [vmem:[%s671 + $0x48] sm:$0xff] %v8806
        %8823 = vst [vmem:[%s671 + $0x50] sm:$0xff] %v8807
        %8824 = vst [vmem:[%s671 + $0x58] sm:$0xff] %v8808
        %8825 = vst [vmem:[%s671 + $0x60] sm:$0xff] %v8809
        %8826 = vst [vmem:[%s671 + $0x68] sm:$0xff] %v8810
        %8827 = vst [vmem:[%s671 + $0x70] sm:$0xff] %v8811
        %8828 = vst [vmem:[%s671 + $0x78] sm:$0xff] %v8812
        %s8829 = sand.u32 %s423, 1
        %s8830 = scalar_lea.sflag [#allocation11], %s8829
        %s8831 = sand.u32 %s423, 1
        %s8832 = smul.addr %s8831, 128
        %s8833 = scalar_lea.vmem [#allocation21], %s8832
        // Predicated region
        $region124: #{tpu_custom_call.1} parent=87 // pred_check
          %p8834 = pneg %p433
        $region125: #{tpu_custom_call.1} parent=87 // pred_check_branch
          %8836 = sbr.rel (%p8834) target = $region127
        $region126: #{tpu_custom_call.1} parent=87 // pred_region
          %s8837 = smul.u32 16, %s42
          %s8839 = ssub.s32 2048, 2048
          %8840 = vsyncadd %s8830, %s8839
          %s8841 = smul.addr %s41, 32
          %s8842 = sadd.s32 %s8837, %s8841
          %s8843 = smul.addr %s8842, 128
          %s8844 = scalar_lea.hbm %s17, %s8843
          %s8845 = sshll.u32 %s8833, 4
          %s8846 = int_to_ptr.vmem [resolvable:$true] %s8845
          %8851 = dma.vmem_to_hbm [thread:$0]  %s8846, 2048, %s8844, %s8830, 128, 128, 8
        $region127: #{tpu_custom_call.1} parent=87 // pred_fallthru
          _
      $region88: #{tpu_custom_call.1} parent=5 // pred_fallthru
        _
      %p8852 = scmp.le.s32.totalorder 2, %s32
      // Predicated region
      $region128: #{tpu_custom_call.1} parent=5 // pred_check
        %p8853 = pneg %p8852
      $region129: #{tpu_custom_call.1} parent=5 // pred_check_branch
        %8855 = sbr.rel (%p8853) target = $region131
      $region130: #{tpu_custom_call.1} parent=5 // pred_region
        %s8856 = ssub.s32 %s32, 2
        // Predicated region
        $region132: #{tpu_custom_call.1} parent=130 // pred_check
          %p8857 = pneg %p439
        $region133: #{tpu_custom_call.1} parent=130 // pred_check_branch
          %8859 = sbr.rel (%p8857) target = $region135
        $region134: #{tpu_custom_call.1} parent=130 // pred_region
          %s8860 = sand.u32 %s424, 1
          %s8861 = scalar_lea.sflag [#allocation11], %s8860
          %s8862 = sand.u32 %s424, 1
          %s8863 = smul.addr %s8862, 128
          %s8864 = scalar_lea.vmem [#allocation21], %s8863
          %8865 = dma.done %s8861, 2048
        $region135: #{tpu_custom_call.1} parent=130 // pred_fallthru
          _
      $region131: #{tpu_custom_call.1} parent=5 // pred_fallthru
        _
    $region6: #{tpu_custom_call.1} parent=1 // loop_footer
      %s36 = sadd.s32 1, %s32
    $region7: #{tpu_custom_call.1} parent=1 // loop_footer_branch
      %31 = sbr.rel target = $region3
    $region8: #{tpu_custom_call.1} parent=1 // loop_exit
      _
    %8866 = vsyncpa [#allocation10], 1
    %s8867 = scalar_lea.sflag [#allocation10], 1
    %8868 = vsyncpa %s8867, 1
    %8869 = vsyncpa [#allocation13], 1
    %8870 = vsyncpa [#allocation16], 1
    %8871 = vsyncpa [#allocation19], 1
    %8872 = vsyncpa [#allocation11], 1
    %s8873 = scalar_lea.sflag [#allocation11], 1
    %8874 = vsyncpa %s8873, 1

</llo_original>
